<compile_context>
chip_gen: v7x
topology: tpu7x:2x2x1
jax: 0.10.0
libtpu: 0.0.40
codegen_flags: <defaults>
</compile_context>

<pallas_src>
import functools

import jax
import jax.numpy as jnp
from jax import lax
from jax.experimental import pallas as pl
from jax.experimental.pallas import tpu as pltpu

EPS = 1e-5
LANE = 128
VMEM_LIMIT = 32 * 1024 * 1024  # safe on v5e/v6e (128 MiB) and v7x (64 MiB)


# ------------------------------ small helpers ------------------------------ #

def _round_up(x, m):
    return (x + m - 1) // m * m


def _pad_last(a, target):
    d = target - a.shape[-1]
    if d == 0:
        return a
    return jnp.pad(a, [(0, 0)] * (a.ndim - 1) + [(0, d)])


def _pad_last2(a, t0, t1):
    d0, d1 = t0 - a.shape[-2], t1 - a.shape[-1]
    if d0 == 0 and d1 == 0:
        return a
    return jnp.pad(a, [(0, 0)] * (a.ndim - 2) + [(0, d0), (0, d1)])


def _pick_row_tile(total, target=512):
    """Largest multiple of 8 <= target that divides `total` (fallback: total)."""
    t = min(target, total)
    t -= t % 8
    while t >= 8 and total % t:
        t -= 8
    return t if t >= 8 else total


def _bn_scale_shift(s, ss, count, gamma, beta):
    # torch training-mode BN: biased variance over N*H*W, folded to scale/shift.
    # TODO(synk): E[x^2]-E[x]^2 in f32 is fine at demo scale; use Welford-style
    #             per-tile combination for very large N*H*W.
    mean = s / count
    var = ss / count - mean * mean
    inv = lax.rsqrt(var + EPS)
    scale = gamma * inv
    shift = beta - mean * scale
    return scale, shift                      # each (1, Cpad)


# ----------------------------- Pallas kernels ------------------------------ #

def _conv1_stats_kernel(x_ref, w1_ref, y1_ref, s_ref, ss_ref):
    """conv1 (1x1 as matmul) over a flat row tile + per-step partial BN1 sums."""
    y = jnp.dot(x_ref[...], w1_ref[...], preferred_element_type=jnp.float32)
    y1_ref[...] = y
    cp = y.shape[-1]
    s_ref[...] = jnp.sum(y, axis=0).reshape(1, 1, cp)
    ss_ref[...] = jnp.sum(y * y, axis=0).reshape(1, 1, cp)


def _bn1_conv2_stats_kernel(h, w, y1_ref, mask_ref, sc1_ref, sh1_ref, w2_ref,
                            y2_ref, s_ref, ss_ref):
    """BN1 + ReLU + 3x3 conv (stride 1, pad 1) on one image in padded-flat
    layout.  The 9 taps are contiguous row-offset slices concatenated along the
    lane axis -> one matmul with K = 9*Cp.  Emits per-step partial BN2 sums."""
    wp2 = w + 2
    l_out = h * wp2
    r_tot = y1_ref.shape[1]
    cp = y2_ref.shape[-1]

    mask = mask_ref[...]                                         # (R_tot, 1)
    # normalize + relu; mask keeps the zero halo (= conv zero padding) zero.
    a1 = jnp.maximum(y1_ref[0] * sc1_ref[...] + sh1_ref[...], 0.0) * mask

    # tap (ky,kx): output flat index j' = wp2+1+j reads input flat index
    # j' + (ky-1)*wp2 + (kx-1) = ky*wp2 + kx + j  -> pure row-offset slices.
    taps = [a1[ky * wp2 + kx: ky * wp2 + kx + l_out, :]
            for ky in range(3) for kx in range(3)]
    patches = jnp.concatenate(taps, axis=-1)                     # (l_out, 9*Cp)
    o = jnp.dot(patches, w2_ref[...], preferred_element_type=jnp.float32)

    # zero the non-interior outputs (halo / wrap positions), then place the
    # l_out computed rows back at padded-flat offset wp2+1.
    o = o * mask[wp2 + 1: wp2 + 1 + l_out, :]
    y2_ref[0] = jnp.pad(o, ((wp2 + 1, r_tot - l_out - wp2 - 1), (0, 0)))

    s_ref[...] = jnp.sum(o, axis=0).reshape(1, 1, cp)
    ss_ref[...] = jnp.sum(o * o, axis=0).reshape(1, 1, cp)


def _bn2_conv3_stats_kernel(y2_ref, mask_ref, sc2_ref, sh2_ref, w3_ref,
                            s_ref, ss_ref):
    """BN2 + ReLU + conv3 (1x1), emitting only per-step partial BN3 sums
    (y3 is never written to HBM)."""
    co = w3_ref.shape[-1]
    a2 = jnp.maximum(y2_ref[0] * sc2_ref[...] + sh2_ref[...], 0.0) * mask_ref[...]
    y3 = jnp.dot(a2, w3_ref[...], preferred_element_type=jnp.float32)
    s_ref[...] = jnp.sum(y3, axis=0).reshape(1, 1, co)
    ss_ref[...] = jnp.sum(y3 * y3, axis=0).reshape(1, 1, co)


def _bn2_conv3_bn3_add_relu_kernel(y2_ref, xid_ref, sc2_ref, sh2_ref, w3_ref,
                                   sc3_ref, sh3_ref, o_ref):
    """Recompute the cheap conv3, then BN3 + identity add + ReLU (fused tail).
    Non-interior rows are garbage but are cropped after the call."""
    a2 = jnp.maximum(y2_ref[0] * sc2_ref[...] + sh2_ref[...], 0.0)
    y3 = jnp.dot(a2, w3_ref[...], preferred_element_type=jnp.float32)
    o_ref[0] = jnp.maximum(y3 * sc3_ref[...] + sh3_ref[...] + xid_ref[0], 0.0)


# -------------------------------- wrapper ----------------------------------- #

def bottleneck_forward(x_nchw, params):
    """Bottleneck forward.  x_nchw: (N, Cin, H, W), Cin == planes*4, stride=1."""
    w1, w2, w3 = params["w1"], params["w2"], params["w3"]        # torch OIHW
    g1a, b1a = params["g1"], params["b1"]
    g2a, b2a = params["g2"], params["b2"]
    g3a, b3a = params["g3"], params["b3"]

    n, cin, h, w = x_nchw.shape
    p = w1.shape[0]                          # planes
    cout = w3.shape[0]                       # planes * expansion
    assert cin == cout, "identity residual requires inplanes == planes*expansion"

    f32 = jnp.float32
    m = n * h * w                            # true element count per channel
    hp2, wp2 = h + 2, w + 2
    r_img = hp2 * wp2                        # flat rows of the 1-px-padded image
    r_tot = _round_up(r_img + 2, 8)          # + >=2 spare rows for the tap overflow
    l_out = h * wp2

    cin_p = _round_up(cin, LANE)
    p_p = _round_up(p, LANE)
    cout_p = _round_up(cout, LANE)           # == cin_p since cin == cout

    # ---- canonical padded-flat NHWC layout (halo + spare rows + pad ch = 0) ----
    x_nhwc = jnp.transpose(x_nchw, (0, 2, 3, 1)).astype(f32)
    x_pf = jnp.pad(x_nhwc, ((0, 0), (1, 1), (1, 1), (0, 0))).reshape(n, r_img, cin)
    x_pf = jnp.pad(x_pf, ((0, 0), (0, r_tot - r_img), (0, cin_p - cin)))
    x_flat = x_pf.reshape(n * r_tot, cin_p)                      # (N*R_tot, Cin_p)

    # tiny channel-independent interior mask over the padded-flat row index
    ridx = jnp.arange(r_tot)
    rr, cc = ridx // wp2, ridx % wp2
    interior = (ridx < r_img) & (rr >= 1) & (rr <= h) & (cc >= 1) & (cc <= w)
    mask = interior.astype(f32).reshape(r_tot, 1)                # (R_tot, 1)

    # ---- lane-dense weights / BN params ----
    w1_mat = _pad_last2(w1.reshape(p, cin).T.astype(f32), cin_p, p_p)     # (Cin_p, P_p)
    w2_taps = jnp.transpose(w2.astype(f32), (2, 3, 1, 0)).reshape(9, p, p)
    w2_cat = _pad_last2(w2_taps, p_p, p_p).reshape(9 * p_p, p_p)          # (9*P_p, P_p)
    w3_mat = _pad_last2(w3.reshape(cout, p).T.astype(f32), p_p, cout_p)   # (P_p, Cout_p)

    g1p = _pad_last(g1a.astype(f32), p_p).reshape(1, -1)
    b1p = _pad_last(b1a.astype(f32), p_p).reshape(1, -1)
    g2p = _pad_last(g2a.astype(f32), p_p).reshape(1, -1)
    b2p = _pad_last(b2a.astype(f32), p_p).reshape(1, -1)
    g3p = _pad_last(g3a.astype(f32), cout_p).reshape(1, -1)
    b3p = _pad_last(b3a.astype(f32), cout_p).reshape(1, -1)

    cparams = pltpu.CompilerParams(dimension_semantics=("parallel",),
                                   vmem_limit_bytes=VMEM_LIMIT)

    vecs = lambda c: pl.BlockSpec((1, c), lambda i: (0, 0))           # noqa: E731
    part = lambda c: pl.BlockSpec((1, 1, c), lambda i: (i, 0, 0))     # noqa: E731
    img = lambda r, c: pl.BlockSpec((1, r, c), lambda i: (i, 0, 0))   # noqa: E731
    maskspec = pl.BlockSpec((r_tot, 1), lambda i: (0, 0))

    # ---------------- pass 1: conv1 (1x1) + partial BN1 sums ----------------
    total_rows = n * r_tot
    tm = _pick_row_tile(total_rows)
    steps1 = total_rows // tm
    y1, s1p, ss1p = pl.pallas_call(
        _conv1_stats_kernel,
        grid=(steps1,),
        in_specs=[pl.BlockSpec((tm, cin_p), lambda i: (i, 0)),
                  pl.BlockSpec((cin_p, p_p), lambda i: (0, 0))],
        out_specs=(pl.BlockSpec((tm, p_p), lambda i: (i, 0)),
                   part(p_p), part(p_p)),
        out_shape=(jax.ShapeDtypeStruct((total_rows, p_p), f32),
                   jax.ShapeDtypeStruct((steps1, 1, p_p), f32),
                   jax.ShapeDtypeStruct((steps1, 1, p_p), f32)),
        compiler_params=cparams,
    )(x_flat, w1_mat)
    sc1, sh1 = _bn_scale_shift(jnp.sum(s1p, axis=0), jnp.sum(ss1p, axis=0),
                               float(m), g1p, b1p)

    # -------- pass 2: BN1 + ReLU + conv2 (3x3, K=9*Cp) + partial BN2 sums --------
    y1_3d = y1.reshape(n, r_tot, p_p)        # free reshape, no extra HBM traffic
    y2, s2p, ss2p = pl.pallas_call(
        functools.partial(_bn1_conv2_stats_kernel, h, w),
        grid=(n,),
        in_specs=[img(r_tot, p_p), maskspec, vecs(p_p), vecs(p_p),
                  pl.BlockSpec((9 * p_p, p_p), lambda i: (0, 0))],
        out_specs=(img(r_tot, p_p), part(p_p), part(p_p)),
        out_shape=(jax.ShapeDtypeStruct((n, r_tot, p_p), f32),
                   jax.ShapeDtypeStruct((n, 1, p_p), f32),
                   jax.ShapeDtypeStruct((n, 1, p_p), f32)),
        compiler_params=cparams,
    )(y1_3d, mask, sc1, sh1, w2_cat)
    sc2, sh2 = _bn_scale_shift(jnp.sum(s2p, axis=0), jnp.sum(ss2p, axis=0),
                               float(m), g2p, b2p)

    # ---------- pass 3: BN2 + ReLU + conv3 -> partial BN3 sums only ----------
    s3p, ss3p = pl.pallas_call(
        _bn2_conv3_stats_kernel,
        grid=(n,),
        in_specs=[img(r_tot, p_p), maskspec, vecs(p_p), vecs(p_p),
                  pl.BlockSpec((p_p, cout_p), lambda i: (0, 0))],
        out_specs=(part(cout_p), part(cout_p)),
        out_shape=(jax.ShapeDtypeStruct((n, 1, cout_p), f32),
                   jax.ShapeDtypeStruct((n, 1, cout_p), f32)),
        compiler_params=cparams,
    )(y2, mask, sc2, sh2, w3_mat)
    sc3, sh3 = _bn_scale_shift(jnp.sum(s3p, axis=0), jnp.sum(ss3p, axis=0),
                               float(m), g3p, b3p)

    # ------ pass 4: BN2 + ReLU + conv3 (recompute) + BN3 + identity + ReLU ------
    x_pf3 = x_flat.reshape(n, r_tot, cin_p)
    out_pf = pl.pallas_call(
        _bn2_conv3_bn3_add_relu_kernel,
        grid=(n,),
        in_specs=[img(r_tot, p_p), img(r_tot, cin_p),
                  vecs(p_p), vecs(p_p),
                  pl.BlockSpec((p_p, cout_p), lambda i: (0, 0)),
                  vecs(cout_p), vecs(cout_p)],
        out_specs=img(r_tot, cout_p),
        out_shape=jax.ShapeDtypeStruct((n, r_tot, cout_p), f32),
        compiler_params=cparams,
    )(y2, x_pf3, sc2, sh2, w3_mat, sc3, sh3)

    # strip halo / spare rows / channel padding, NHWC -> NCHW once at the end
    core = out_pf[:, :r_img, :].reshape(n, hp2, wp2, cout_p)
    out_nhwc = core[:, 1:h + 1, 1:w + 1, :cout]
    return jnp.transpose(out_nhwc, (0, 3, 1, 2))


# -------------------------- pure-JAX reference ------------------------------ #

def _ref_forward(x_nchw, params):
    def conv(x, wgt, pad):
        return lax.conv_general_dilated(
            x, wgt, (1, 1), [(pad, pad), (pad, pad)],
            dimension_numbers=("NCHW", "OIHW", "NCHW"))

    def bn(x, g, b):
        mean = jnp.mean(x, axis=(0, 2, 3), keepdims=True)
        var = jnp.mean((x - mean) ** 2, axis=(0, 2, 3), keepdims=True)
        return ((x - mean) * lax.rsqrt(var + EPS)
                * g.reshape(1, -1, 1, 1) + b.reshape(1, -1, 1, 1))

    out = jax.nn.relu(bn(conv(x_nchw, params["w1"], 0), params["g1"], params["b1"]))
    out = jax.nn.relu(bn(conv(out, params["w2"], 1), params["g2"], params["b2"]))
    out = bn(conv(out, params["w3"], 0), params["g3"], params["b3"])
    return jax.nn.relu(out + x_nchw)


# ---------------------------------- main ------------------------------------ #

if __name__ == "__main__":
    # Identity residual requires inplanes == planes * expansion (expansion = 4).
    N, H, W = 2, 16, 16
    planes = 4
    inplanes = planes * 4          # 16
    cout = planes * 4              # 16

    key = jax.random.PRNGKey(0)
    k_x, k1, k2, k3 = jax.random.split(key, 4)

    params = {
        # conv weights in PyTorch OIHW layout, deterministic init
        "w1": 0.1 * jax.random.normal(k1, (planes, inplanes, 1, 1), jnp.float32),
        "w2": 0.1 * jax.random.normal(k2, (planes, planes, 3, 3), jnp.float32),
        "w3": 0.1 * jax.random.normal(k3, (cout, planes, 1, 1), jnp.float32),
        # BatchNorm affine params: torch default init (gamma=1, beta=0)
        "g1": jnp.ones((planes,), jnp.float32), "b1": jnp.zeros((planes,), jnp.float32),
        "g2": jnp.ones((planes,), jnp.float32), "b2": jnp.zeros((planes,), jnp.float32),
        "g3": jnp.ones((cout,), jnp.float32), "b3": jnp.zeros((cout,), jnp.float32),
    }

    x = jax.random.normal(k_x, (N, inplanes, H, W), jnp.float32)

    out = jax.block_until_ready(jax.jit(bottleneck_forward)(x, params))
    ref = jax.block_until_ready(_ref_forward(x, params))

    assert out.shape == (N, cout, H, W), out.shape
    err = float(jnp.max(jnp.abs(out - ref)))
    assert jnp.allclose(out, ref, atol=1e-4, rtol=1e-4), f"max abs err = {err}"

    print("KERNEL_OK")
</pallas_src>

<mosaic_0001>
module attributes {stable_mosaic.version = 11 : i64} {
  func.func @_conv1_stats_kernel(%arg0: i32, %arg1: memref<328x128xf32, #tpu.memory_space<vmem>>, %arg2: memref<128x128xf32, #tpu.memory_space<vmem>>, %arg3: memref<328x128xf32, #tpu.memory_space<vmem>>, %arg4: memref<1x1x128xf32, #tpu.memory_space<vmem>>, %arg5: memref<1x1x128xf32, #tpu.memory_space<vmem>>) attributes {dimension_semantics = [#tpu.dimension_semantics<parallel>], iteration_bounds = array<i64: 2>, scalar_prefetch = 0 : i64, scratch_operands = 0 : i64, tpu.core_type = #tpu.core_type<tc>, window_params = [{transform_indices = @transform_0, window_bounds = array<i64: 328, 128>}, {pipeline_mode = #tpu.pipeline_mode<synchronous>, transform_indices = @transform_1, window_bounds = array<i64: 128, 128>}, {transform_indices = @transform_2, window_bounds = array<i64: 328, 128>}, {transform_indices = @transform_3, window_bounds = array<i64: 1, 1, 128>}, {transform_indices = @transform_4, window_bounds = array<i64: 1, 1, 128>}]} {
    %c0 = arith.constant 0 : index
    %c0_0 = arith.constant 0 : index
    %0 = vector.load %arg1[%c0, %c0_0] : memref<328x128xf32, #tpu.memory_space<vmem>>, vector<328x128xf32>
    %c0_1 = arith.constant 0 : index
    %c0_2 = arith.constant 0 : index
    %1 = vector.load %arg2[%c0_1, %c0_2] : memref<128x128xf32, #tpu.memory_space<vmem>>, vector<128x128xf32>
    %cst = arith.constant dense<0.000000e+00> : vector<328x128xf32>
    %2 = tpu.matmul %0, %1, %cst {dimension_numbers = #tpu.dot_dimension_numbers<[1], [0], [0], [1], [0, 0, 1, 1], [], []>} : vector<328x128xf32>, vector<128x128xf32>, vector<328x128xf32> -> vector<328x128xf32>
    %c0_3 = arith.constant 0 : index
    %c0_4 = arith.constant 0 : index
    %3 = vector.load %arg3[%c0_3, %c0_4] : memref<328x128xf32, #tpu.memory_space<vmem>>, vector<328x128xf32>
    tpu.vector_store %arg3[%c0_3, %c0_4], %2 {strides = array<i32>} : memref<328x128xf32, #tpu.memory_space<vmem>>, vector<328x128xf32>,
    %cst_5 = arith.constant dense<0.000000e+00> : vector<128xf32>
    %4 = vector.multi_reduction <add>, %2, %cst_5 [0] : vector<328x128xf32> to vector<128xf32>
    %5 = vector.shape_cast %4 : vector<128xf32> to vector<1x1x128xf32>
    %c0_6 = arith.constant 0 : index
    %c0_7 = arith.constant 0 : index
    %c0_8 = arith.constant 0 : index
    %6 = vector.load %arg4[%c0_6, %c0_7, %c0_8] : memref<1x1x128xf32, #tpu.memory_space<vmem>>, vector<1x1x128xf32>
    tpu.vector_store %arg4[%c0_6, %c0_7, %c0_8], %5 {strides = array<i32>} : memref<1x1x128xf32, #tpu.memory_space<vmem>>, vector<1x1x128xf32>,
    %7 = arith.mulf %2, %2 : vector<328x128xf32>
    %cst_9 = arith.constant dense<0.000000e+00> : vector<128xf32>
    %8 = vector.multi_reduction <add>, %7, %cst_9 [0] : vector<328x128xf32> to vector<128xf32>
    %9 = vector.shape_cast %8 : vector<128xf32> to vector<1x1x128xf32>
    %c0_10 = arith.constant 0 : index
    %c0_11 = arith.constant 0 : index
    %c0_12 = arith.constant 0 : index
    %10 = vector.load %arg5[%c0_10, %c0_11, %c0_12] : memref<1x1x128xf32, #tpu.memory_space<vmem>>, vector<1x1x128xf32>
    tpu.vector_store %arg5[%c0_10, %c0_11, %c0_12], %9 {strides = array<i32>} : memref<1x1x128xf32, #tpu.memory_space<vmem>>, vector<1x1x128xf32>,
    return
  }
  func.func @transform_0(%arg0: i32) -> (i32, i32) {
    %c0_i32 = arith.constant 0 : i32
    %c0_i32_0 = arith.constant 0 : i32
    return %arg0, %c0_i32 : i32, i32
  }
  func.func @transform_1(%arg0: i32) -> (i32, i32) {
    %c0_i32 = arith.constant 0 : i32
    %c0_i32_0 = arith.constant 0 : i32
    %c0_i32_1 = arith.constant 0 : i32
    return %c0_i32, %c0_i32_0 : i32, i32
  }
  func.func @transform_2(%arg0: i32) -> (i32, i32) {
    %c0_i32 = arith.constant 0 : i32
    %c0_i32_0 = arith.constant 0 : i32
    return %arg0, %c0_i32 : i32, i32
  }
  func.func @transform_3(%arg0: i32) -> (i32, i32, i32) {
    %c0_i32 = arith.constant 0 : i32
    %c0_i32_0 = arith.constant 0 : i32
    %c0_i32_1 = arith.constant 0 : i32
    return %arg0, %c0_i32, %c0_i32_0 : i32, i32, i32
  }
  func.func @transform_4(%arg0: i32) -> (i32, i32, i32) {
    %c0_i32 = arith.constant 0 : i32
    %c0_i32_0 = arith.constant 0 : i32
    %c0_i32_1 = arith.constant 0 : i32
    return %arg0, %c0_i32, %c0_i32_0 : i32, i32, i32
  }
}

module attributes {stable_mosaic.version = 11 : i64} {
  func.func @_bn1_conv2_stats_kernel(%arg0: i32, %arg1: memref<1x328x128xf32, #tpu.memory_space<vmem>>, %arg2: memref<328x1xf32, #tpu.memory_space<vmem>>, %arg3: memref<1x128xf32, #tpu.memory_space<vmem>>, %arg4: memref<1x128xf32, #tpu.memory_space<vmem>>, %arg5: memref<1152x128xf32, #tpu.memory_space<vmem>>, %arg6: memref<1x328x128xf32, #tpu.memory_space<vmem>>, %arg7: memref<1x1x128xf32, #tpu.memory_space<vmem>>, %arg8: memref<1x1x128xf32, #tpu.memory_space<vmem>>) attributes {dimension_semantics = [#tpu.dimension_semantics<parallel>], iteration_bounds = array<i64: 2>, scalar_prefetch = 0 : i64, scratch_operands = 0 : i64, tpu.core_type = #tpu.core_type<tc>, window_params = [{transform_indices = @transform_0, window_bounds = array<i64: 1, 328, 128>}, {pipeline_mode = #tpu.pipeline_mode<synchronous>, transform_indices = @transform_1, window_bounds = array<i64: 328, 1>}, {pipeline_mode = #tpu.pipeline_mode<synchronous>, transform_indices = @transform_2, window_bounds = array<i64: 1, 128>}, {pipeline_mode = #tpu.pipeline_mode<synchronous>, transform_indices = @transform_3, window_bounds = array<i64: 1, 128>}, {pipeline_mode = #tpu.pipeline_mode<synchronous>, transform_indices = @transform_4, window_bounds = array<i64: 1152, 128>}, {transform_indices = @transform_5, window_bounds = array<i64: 1, 328, 128>}, {transform_indices = @transform_6, window_bounds = array<i64: 1, 1, 128>}, {transform_indices = @transform_7, window_bounds = array<i64: 1, 1, 128>}]} {
    %c0 = arith.constant 0 : index
    %c0_0 = arith.constant 0 : index
    %0 = vector.load %arg2[%c0, %c0_0] : memref<328x1xf32, #tpu.memory_space<vmem>>, vector<328x1xf32>
    %c0_1 = arith.constant 0 : index
    %c0_2 = arith.constant 0 : index
    %c0_3 = arith.constant 0 : index
    %1 = vector.load %arg1[%c0_1, %c0_2, %c0_3] : memref<1x328x128xf32, #tpu.memory_space<vmem>>, vector<1x328x128xf32>
    %2 = vector.shape_cast %1 : vector<1x328x128xf32> to vector<328x128xf32>
    %c0_4 = arith.constant 0 : index
    %c0_5 = arith.constant 0 : index
    %3 = vector.load %arg3[%c0_4, %c0_5] : memref<1x128xf32, #tpu.memory_space<vmem>>, vector<1x128xf32>
    %4 = vector.broadcast %3 : vector<1x128xf32> to vector<328x128xf32>
    %5 = arith.mulf %2, %4 : vector<328x128xf32>
    %c0_6 = arith.constant 0 : index
    %c0_7 = arith.constant 0 : index
    %6 = vector.load %arg4[%c0_6, %c0_7] : memref<1x128xf32, #tpu.memory_space<vmem>>, vector<1x128xf32>
    %7 = vector.broadcast %6 : vector<1x128xf32> to vector<328x128xf32>
    %8 = arith.addf %5, %7 : vector<328x128xf32>
    %cst = arith.constant 0.000000e+00 : f32
    %9 = vector.broadcast %cst : f32 to vector<328x128xf32>
    %10 = arith.maximumf %8, %9 : vector<328x128xf32>
    %11 = vector.broadcast %0 : vector<328x1xf32> to vector<328x128xf32>
    %12 = arith.mulf %10, %11 : vector<328x128xf32>
    %13 = vector.extract_strided_slice %12 {offsets = [0, 0], sizes = [288, 128], strides = [1, 1]} : vector<328x128xf32> to vector<288x128xf32>
    %14 = vector.extract_strided_slice %12 {offsets = [1, 0], sizes = [288, 128], strides = [1, 1]} : vector<328x128xf32> to vector<288x128xf32>
    %15 = vector.extract_strided_slice %12 {offsets = [2, 0], sizes = [288, 128], strides = [1, 1]} : vector<328x128xf32> to vector<288x128xf32>
    %16 = vector.extract_strided_slice %12 {offsets = [18, 0], sizes = [288, 128], strides = [1, 1]} : vector<328x128xf32> to vector<288x128xf32>
    %17 = vector.extract_strided_slice %12 {offsets = [19, 0], sizes = [288, 128], strides = [1, 1]} : vector<328x128xf32> to vector<288x128xf32>
    %18 = vector.extract_strided_slice %12 {offsets = [20, 0], sizes = [288, 128], strides = [1, 1]} : vector<328x128xf32> to vector<288x128xf32>
    %19 = vector.extract_strided_slice %12 {offsets = [36, 0], sizes = [288, 128], strides = [1, 1]} : vector<328x128xf32> to vector<288x128xf32>
    %20 = vector.extract_strided_slice %12 {offsets = [37, 0], sizes = [288, 128], strides = [1, 1]} : vector<328x128xf32> to vector<288x128xf32>
    %21 = vector.extract_strided_slice %12 {offsets = [38, 0], sizes = [288, 128], strides = [1, 1]} : vector<328x128xf32> to vector<288x128xf32>
    %22 = tpu.concatenate %13, %14, %15, %16, %17, %18, %19, %20, %21 in 1 : vector<288x128xf32>, vector<288x128xf32>, vector<288x128xf32>, vector<288x128xf32>, vector<288x128xf32>, vector<288x128xf32>, vector<288x128xf32>, vector<288x128xf32>, vector<288x128xf32> -> vector<288x1152xf32>
    %c0_8 = arith.constant 0 : index
    %c0_9 = arith.constant 0 : index
    %23 = vector.load %arg5[%c0_8, %c0_9] : memref<1152x128xf32, #tpu.memory_space<vmem>>, vector<1152x128xf32>
    %cst_10 = arith.constant dense<0.000000e+00> : vector<288x128xf32>
    %24 = tpu.matmul %22, %23, %cst_10 {dimension_numbers = #tpu.dot_dimension_numbers<[1], [0], [0], [1], [0, 0, 1, 1], [], []>} : vector<288x1152xf32>, vector<1152x128xf32>, vector<288x128xf32> -> vector<288x128xf32>
    %25 = vector.extract_strided_slice %0 {offsets = [19, 0], sizes = [288, 1], strides = [1, 1]} : vector<328x1xf32> to vector<288x1xf32>
    %26 = vector.broadcast %25 : vector<288x1xf32> to vector<288x128xf32>
    %27 = arith.mulf %24, %26 : vector<288x128xf32>
    %c0_i32 = arith.constant 0 : i32
    %28 = arith.sitofp %c0_i32 : i32 to f32
    %29 = vector.broadcast %28 : f32 to vector<19x128xf32>
    %30 = tpu.concatenate %29, %27 in 0 : vector<19x128xf32>, vector<288x128xf32> -> vector<307x128xf32>
    %31 = vector.broadcast %28 : f32 to vector<21x128xf32>
    %32 = tpu.concatenate %30, %31 in 0 : vector<307x128xf32>, vector<21x128xf32> -> vector<328x128xf32>
    %c0_11 = arith.constant 0 : index
    %c0_12 = arith.constant 0 : index
    %c0_13 = arith.constant 0 : index
    %33 = vector.load %arg6[%c0_11, %c0_12, %c0_13] : memref<1x328x128xf32, #tpu.memory_space<vmem>>, vector<1x328x128xf32>
    %34 = vector.shape_cast %33 : vector<1x328x128xf32> to vector<328x128xf32>
    %35 = vector.shape_cast %32 : vector<328x128xf32> to vector<1x328x128xf32>
    tpu.vector_store %arg6[%c0_11, %c0_12, %c0_13], %35 {strides = array<i32>} : memref<1x328x128xf32, #tpu.memory_space<vmem>>, vector<1x328x128xf32>,
    %cst_14 = arith.constant dense<0.000000e+00> : vector<128xf32>
    %36 = vector.multi_reduction <add>, %27, %cst_14 [0] : vector<288x128xf32> to vector<128xf32>
    %37 = vector.shape_cast %36 : vector<128xf32> to vector<1x1x128xf32>
    %c0_15 = arith.constant 0 : index
    %c0_16 = arith.constant 0 : index
    %c0_17 = arith.constant 0 : index
    %38 = vector.load %arg7[%c0_15, %c0_16, %c0_17] : memref<1x1x128xf32, #tpu.memory_space<vmem>>, vector<1x1x128xf32>
    tpu.vector_store %arg7[%c0_15, %c0_16, %c0_17], %37 {strides = array<i32>} : memref<1x1x128xf32, #tpu.memory_space<vmem>>, vector<1x1x128xf32>,
    %39 = arith.mulf %27, %27 : vector<288x128xf32>
    %cst_18 = arith.constant dense<0.000000e+00> : vector<128xf32>
    %40 = vector.multi_reduction <add>, %39, %cst_18 [0] : vector<288x128xf32> to vector<128xf32>
    %41 = vector.shape_cast %40 : vector<128xf32> to vector<1x1x128xf32>
    %c0_19 = arith.constant 0 : index
    %c0_20 = arith.constant 0 : index
    %c0_21 = arith.constant 0 : index
    %42 = vector.load %arg8[%c0_19, %c0_20, %c0_21] : memref<1x1x128xf32, #tpu.memory_space<vmem>>, vector<1x1x128xf32>
    tpu.vector_store %arg8[%c0_19, %c0_20, %c0_21], %41 {strides = array<i32>} : memref<1x1x128xf32, #tpu.memory_space<vmem>>, vector<1x1x128xf32>,
    return
  }
  func.func @transform_0(%arg0: i32) -> (i32, i32, i32) {
    %c0_i32 = arith.constant 0 : i32
    %c0_i32_0 = arith.constant 0 : i32
    %c0_i32_1 = arith.constant 0 : i32
    return %arg0, %c0_i32, %c0_i32_0 : i32, i32, i32
  }
  func.func @transform_1(%arg0: i32) -> (i32, i32) {
    %c0_i32 = arith.constant 0 : i32
    %c0_i32_0 = arith.constant 0 : i32
    %c0_i32_1 = arith.constant 0 : i32
    return %c0_i32, %c0_i32_0 : i32, i32
  }
  func.func @transform_2(%arg0: i32) -> (i32, i32) {
    %c0_i32 = arith.constant 0 : i32
    %c0_i32_0 = arith.constant 0 : i32
    %c0_i32_1 = arith.constant 0 : i32
    return %c0_i32, %c0_i32_0 : i32, i32
  }
  func.func @transform_3(%arg0: i32) -> (i32, i32) {
    %c0_i32 = arith.constant 0 : i32
    %c0_i32_0 = arith.constant 0 : i32
    %c0_i32_1 = arith.constant 0 : i32
    return %c0_i32, %c0_i32_0 : i32, i32
  }
  func.func @transform_4(%arg0: i32) -> (i32, i32) {
    %c0_i32 = arith.constant 0 : i32
    %c0_i32_0 = arith.constant 0 : i32
    %c0_i32_1 = arith.constant 0 : i32
    return %c0_i32, %c0_i32_0 : i32, i32
  }
  func.func @transform_5(%arg0: i32) -> (i32, i32, i32) {
    %c0_i32 = arith.constant 0 : i32
    %c0_i32_0 = arith.constant 0 : i32
    %c0_i32_1 = arith.constant 0 : i32
    return %arg0, %c0_i32, %c0_i32_0 : i32, i32, i32
  }
  func.func @transform_6(%arg0: i32) -> (i32, i32, i32) {
    %c0_i32 = arith.constant 0 : i32
    %c0_i32_0 = arith.constant 0 : i32
    %c0_i32_1 = arith.constant 0 : i32
    return %arg0, %c0_i32, %c0_i32_0 : i32, i32, i32
  }
  func.func @transform_7(%arg0: i32) -> (i32, i32, i32) {
    %c0_i32 = arith.constant 0 : i32
    %c0_i32_0 = arith.constant 0 : i32
    %c0_i32_1 = arith.constant 0 : i32
    return %arg0, %c0_i32, %c0_i32_0 : i32, i32, i32
  }
}

module attributes {stable_mosaic.version = 11 : i64} {
  func.func @_bn2_conv3_stats_kernel(%arg0: i32, %arg1: memref<1x328x128xf32, #tpu.memory_space<vmem>>, %arg2: memref<328x1xf32, #tpu.memory_space<vmem>>, %arg3: memref<1x128xf32, #tpu.memory_space<vmem>>, %arg4: memref<1x128xf32, #tpu.memory_space<vmem>>, %arg5: memref<128x128xf32, #tpu.memory_space<vmem>>, %arg6: memref<1x1x128xf32, #tpu.memory_space<vmem>>, %arg7: memref<1x1x128xf32, #tpu.memory_space<vmem>>) attributes {dimension_semantics = [#tpu.dimension_semantics<parallel>], iteration_bounds = array<i64: 2>, scalar_prefetch = 0 : i64, scratch_operands = 0 : i64, tpu.core_type = #tpu.core_type<tc>, window_params = [{transform_indices = @transform_0, window_bounds = array<i64: 1, 328, 128>}, {pipeline_mode = #tpu.pipeline_mode<synchronous>, transform_indices = @transform_1, window_bounds = array<i64: 328, 1>}, {pipeline_mode = #tpu.pipeline_mode<synchronous>, transform_indices = @transform_2, window_bounds = array<i64: 1, 128>}, {pipeline_mode = #tpu.pipeline_mode<synchronous>, transform_indices = @transform_3, window_bounds = array<i64: 1, 128>}, {pipeline_mode = #tpu.pipeline_mode<synchronous>, transform_indices = @transform_4, window_bounds = array<i64: 128, 128>}, {transform_indices = @transform_5, window_bounds = array<i64: 1, 1, 128>}, {transform_indices = @transform_6, window_bounds = array<i64: 1, 1, 128>}]} {
    %c0 = arith.constant 0 : index
    %c0_0 = arith.constant 0 : index
    %c0_1 = arith.constant 0 : index
    %0 = vector.load %arg1[%c0, %c0_0, %c0_1] : memref<1x328x128xf32, #tpu.memory_space<vmem>>, vector<1x328x128xf32>
    %1 = vector.shape_cast %0 : vector<1x328x128xf32> to vector<328x128xf32>
    %c0_2 = arith.constant 0 : index
    %c0_3 = arith.constant 0 : index
    %2 = vector.load %arg3[%c0_2, %c0_3] : memref<1x128xf32, #tpu.memory_space<vmem>>, vector<1x128xf32>
    %3 = vector.broadcast %2 : vector<1x128xf32> to vector<328x128xf32>
    %4 = arith.mulf %1, %3 : vector<328x128xf32>
    %c0_4 = arith.constant 0 : index
    %c0_5 = arith.constant 0 : index
    %5 = vector.load %arg4[%c0_4, %c0_5] : memref<1x128xf32, #tpu.memory_space<vmem>>, vector<1x128xf32>
    %6 = vector.broadcast %5 : vector<1x128xf32> to vector<328x128xf32>
    %7 = arith.addf %4, %6 : vector<328x128xf32>
    %cst = arith.constant 0.000000e+00 : f32
    %8 = vector.broadcast %cst : f32 to vector<328x128xf32>
    %9 = arith.maximumf %7, %8 : vector<328x128xf32>
    %c0_6 = arith.constant 0 : index
    %c0_7 = arith.constant 0 : index
    %10 = vector.load %arg2[%c0_6, %c0_7] : memref<328x1xf32, #tpu.memory_space<vmem>>, vector<328x1xf32>
    %11 = vector.broadcast %10 : vector<328x1xf32> to vector<328x128xf32>
    %12 = arith.mulf %9, %11 : vector<328x128xf32>
    %c0_8 = arith.constant 0 : index
    %c0_9 = arith.constant 0 : index
    %13 = vector.load %arg5[%c0_8, %c0_9] : memref<128x128xf32, #tpu.memory_space<vmem>>, vector<128x128xf32>
    %cst_10 = arith.constant dense<0.000000e+00> : vector<328x128xf32>
    %14 = tpu.matmul %12, %13, %cst_10 {dimension_numbers = #tpu.dot_dimension_numbers<[1], [0], [0], [1], [0, 0, 1, 1], [], []>} : vector<328x128xf32>, vector<128x128xf32>, vector<328x128xf32> -> vector<328x128xf32>
    %cst_11 = arith.constant dense<0.000000e+00> : vector<128xf32>
    %15 = vector.multi_reduction <add>, %14, %cst_11 [0] : vector<328x128xf32> to vector<128xf32>
    %16 = vector.shape_cast %15 : vector<128xf32> to vector<1x1x128xf32>
    %c0_12 = arith.constant 0 : index
    %c0_13 = arith.constant 0 : index
    %c0_14 = arith.constant 0 : index
    %17 = vector.load %arg6[%c0_12, %c0_13, %c0_14] : memref<1x1x128xf32, #tpu.memory_space<vmem>>, vector<1x1x128xf32>
    tpu.vector_store %arg6[%c0_12, %c0_13, %c0_14], %16 {strides = array<i32>} : memref<1x1x128xf32, #tpu.memory_space<vmem>>, vector<1x1x128xf32>,
    %18 = arith.mulf %14, %14 : vector<328x128xf32>
    %cst_15 = arith.constant dense<0.000000e+00> : vector<128xf32>
    %19 = vector.multi_reduction <add>, %18, %cst_15 [0] : vector<328x128xf32> to vector<128xf32>
    %20 = vector.shape_cast %19 : vector<128xf32> to vector<1x1x128xf32>
    %c0_16 = arith.constant 0 : index
    %c0_17 = arith.constant 0 : index
    %c0_18 = arith.constant 0 : index
    %21 = vector.load %arg7[%c0_16, %c0_17, %c0_18] : memref<1x1x128xf32, #tpu.memory_space<vmem>>, vector<1x1x128xf32>
    tpu.vector_store %arg7[%c0_16, %c0_17, %c0_18], %20 {strides = array<i32>} : memref<1x1x128xf32, #tpu.memory_space<vmem>>, vector<1x1x128xf32>,
    return
  }
  func.func @transform_0(%arg0: i32) -> (i32, i32, i32) {
    %c0_i32 = arith.constant 0 : i32
    %c0_i32_0 = arith.constant 0 : i32
    %c0_i32_1 = arith.constant 0 : i32
    return %arg0, %c0_i32, %c0_i32_0 : i32, i32, i32
  }
  func.func @transform_1(%arg0: i32) -> (i32, i32) {
    %c0_i32 = arith.constant 0 : i32
    %c0_i32_0 = arith.constant 0 : i32
    %c0_i32_1 = arith.constant 0 : i32
    return %c0_i32, %c0_i32_0 : i32, i32
  }
  func.func @transform_2(%arg0: i32) -> (i32, i32) {
    %c0_i32 = arith.constant 0 : i32
    %c0_i32_0 = arith.constant 0 : i32
    %c0_i32_1 = arith.constant 0 : i32
    return %c0_i32, %c0_i32_0 : i32, i32
  }
  func.func @transform_3(%arg0: i32) -> (i32, i32) {
    %c0_i32 = arith.constant 0 : i32
    %c0_i32_0 = arith.constant 0 : i32
    %c0_i32_1 = arith.constant 0 : i32
    return %c0_i32, %c0_i32_0 : i32, i32
  }
  func.func @transform_4(%arg0: i32) -> (i32, i32) {
    %c0_i32 = arith.constant 0 : i32
    %c0_i32_0 = arith.constant 0 : i32
    %c0_i32_1 = arith.constant 0 : i32
    return %c0_i32, %c0_i32_0 : i32, i32
  }
  func.func @transform_5(%arg0: i32) -> (i32, i32, i32) {
    %c0_i32 = arith.constant 0 : i32
    %c0_i32_0 = arith.constant 0 : i32
    %c0_i32_1 = arith.constant 0 : i32
    return %arg0, %c0_i32, %c0_i32_0 : i32, i32, i32
  }
  func.func @transform_6(%arg0: i32) -> (i32, i32, i32) {
    %c0_i32 = arith.constant 0 : i32
    %c0_i32_0 = arith.constant 0 : i32
    %c0_i32_1 = arith.constant 0 : i32
    return %arg0, %c0_i32, %c0_i32_0 : i32, i32, i32
  }
}

module attributes {stable_mosaic.version = 11 : i64} {
  func.func @_bn2_conv3_bn3_add_relu_kernel(%arg0: i32, %arg1: memref<1x328x128xf32, #tpu.memory_space<vmem>>, %arg2: memref<1x328x128xf32, #tpu.memory_space<vmem>>, %arg3: memref<1x128xf32, #tpu.memory_space<vmem>>, %arg4: memref<1x128xf32, #tpu.memory_space<vmem>>, %arg5: memref<128x128xf32, #tpu.memory_space<vmem>>, %arg6: memref<1x128xf32, #tpu.memory_space<vmem>>, %arg7: memref<1x128xf32, #tpu.memory_space<vmem>>, %arg8: memref<1x328x128xf32, #tpu.memory_space<vmem>>) attributes {dimension_semantics = [#tpu.dimension_semantics<parallel>], iteration_bounds = array<i64: 2>, scalar_prefetch = 0 : i64, scratch_operands = 0 : i64, tpu.core_type = #tpu.core_type<tc>, window_params = [{transform_indices = @transform_0, window_bounds = array<i64: 1, 328, 128>}, {transform_indices = @transform_1, window_bounds = array<i64: 1, 328, 128>}, {pipeline_mode = #tpu.pipeline_mode<synchronous>, transform_indices = @transform_2, window_bounds = array<i64: 1, 128>}, {pipeline_mode = #tpu.pipeline_mode<synchronous>, transform_indices = @transform_3, window_bounds = array<i64: 1, 128>}, {pipeline_mode = #tpu.pipeline_mode<synchronous>, transform_indices = @transform_4, window_bounds = array<i64: 128, 128>}, {pipeline_mode = #tpu.pipeline_mode<synchronous>, transform_indices = @transform_5, window_bounds = array<i64: 1, 128>}, {pipeline_mode = #tpu.pipeline_mode<synchronous>, transform_indices = @transform_6, window_bounds = array<i64: 1, 128>}, {transform_indices = @transform_7, window_bounds = array<i64: 1, 328, 128>}]} {
    %c0 = arith.constant 0 : index
    %c0_0 = arith.constant 0 : index
    %c0_1 = arith.constant 0 : index
    %0 = vector.load %arg1[%c0, %c0_0, %c0_1] : memref<1x328x128xf32, #tpu.memory_space<vmem>>, vector<1x328x128xf32>
    %1 = vector.shape_cast %0 : vector<1x328x128xf32> to vector<328x128xf32>
    %c0_2 = arith.constant 0 : index
    %c0_3 = arith.constant 0 : index
    %2 = vector.load %arg3[%c0_2, %c0_3] : memref<1x128xf32, #tpu.memory_space<vmem>>, vector<1x128xf32>
    %3 = vector.broadcast %2 : vector<1x128xf32> to vector<328x128xf32>
    %4 = arith.mulf %1, %3 : vector<328x128xf32>
    %c0_4 = arith.constant 0 : index
    %c0_5 = arith.constant 0 : index
    %5 = vector.load %arg4[%c0_4, %c0_5] : memref<1x128xf32, #tpu.memory_space<vmem>>, vector<1x128xf32>
    %6 = vector.broadcast %5 : vector<1x128xf32> to vector<328x128xf32>
    %7 = arith.addf %4, %6 : vector<328x128xf32>
    %cst = arith.constant 0.000000e+00 : f32
    %8 = vector.broadcast %cst : f32 to vector<328x128xf32>
    %9 = arith.maximumf %7, %8 : vector<328x128xf32>
    %c0_6 = arith.constant 0 : index
    %c0_7 = arith.constant 0 : index
    %10 = vector.load %arg5[%c0_6, %c0_7] : memref<128x128xf32, #tpu.memory_space<vmem>>, vector<128x128xf32>
    %cst_8 = arith.constant dense<0.000000e+00> : vector<328x128xf32>
    %11 = tpu.matmul %9, %10, %cst_8 {dimension_numbers = #tpu.dot_dimension_numbers<[1], [0], [0], [1], [0, 0, 1, 1], [], []>} : vector<328x128xf32>, vector<128x128xf32>, vector<328x128xf32> -> vector<328x128xf32>
    %c0_9 = arith.constant 0 : index
    %c0_10 = arith.constant 0 : index
    %12 = vector.load %arg6[%c0_9, %c0_10] : memref<1x128xf32, #tpu.memory_space<vmem>>, vector<1x128xf32>
    %13 = vector.broadcast %12 : vector<1x128xf32> to vector<328x128xf32>
    %14 = arith.mulf %11, %13 : vector<328x128xf32>
    %c0_11 = arith.constant 0 : index
    %c0_12 = arith.constant 0 : index
    %15 = vector.load %arg7[%c0_11, %c0_12] : memref<1x128xf32, #tpu.memory_space<vmem>>, vector<1x128xf32>
    %16 = vector.broadcast %15 : vector<1x128xf32> to vector<328x128xf32>
    %17 = arith.addf %14, %16 : vector<328x128xf32>
    %c0_13 = arith.constant 0 : index
    %c0_14 = arith.constant 0 : index
    %c0_15 = arith.constant 0 : index
    %18 = vector.load %arg2[%c0_13, %c0_14, %c0_15] : memref<1x328x128xf32, #tpu.memory_space<vmem>>, vector<1x328x128xf32>
    %19 = vector.shape_cast %18 : vector<1x328x128xf32> to vector<328x128xf32>
    %20 = arith.addf %17, %19 : vector<328x128xf32>
    %cst_16 = arith.constant 0.000000e+00 : f32
    %21 = vector.broadcast %cst_16 : f32 to vector<328x128xf32>
    %22 = arith.maximumf %20, %21 : vector<328x128xf32>
    %c0_17 = arith.constant 0 : index
    %c0_18 = arith.constant 0 : index
    %c0_19 = arith.constant 0 : index
    %23 = vector.load %arg8[%c0_17, %c0_18, %c0_19] : memref<1x328x128xf32, #tpu.memory_space<vmem>>, vector<1x328x128xf32>
    %24 = vector.shape_cast %23 : vector<1x328x128xf32> to vector<328x128xf32>
    %25 = vector.shape_cast %22 : vector<328x128xf32> to vector<1x328x128xf32>
    tpu.vector_store %arg8[%c0_17, %c0_18, %c0_19], %25 {strides = array<i32>} : memref<1x328x128xf32, #tpu.memory_space<vmem>>, vector<1x328x128xf32>,
    return
  }
  func.func @transform_0(%arg0: i32) -> (i32, i32, i32) {
    %c0_i32 = arith.constant 0 : i32
    %c0_i32_0 = arith.constant 0 : i32
    %c0_i32_1 = arith.constant 0 : i32
    return %arg0, %c0_i32, %c0_i32_0 : i32, i32, i32
  }
  func.func @transform_1(%arg0: i32) -> (i32, i32, i32) {
    %c0_i32 = arith.constant 0 : i32
    %c0_i32_0 = arith.constant 0 : i32
    %c0_i32_1 = arith.constant 0 : i32
    return %arg0, %c0_i32, %c0_i32_0 : i32, i32, i32
  }
  func.func @transform_2(%arg0: i32) -> (i32, i32) {
    %c0_i32 = arith.constant 0 : i32
    %c0_i32_0 = arith.constant 0 : i32
    %c0_i32_1 = arith.constant 0 : i32
    return %c0_i32, %c0_i32_0 : i32, i32
  }
  func.func @transform_3(%arg0: i32) -> (i32, i32) {
    %c0_i32 = arith.constant 0 : i32
    %c0_i32_0 = arith.constant 0 : i32
    %c0_i32_1 = arith.constant 0 : i32
    return %c0_i32, %c0_i32_0 : i32, i32
  }
  func.func @transform_4(%arg0: i32) -> (i32, i32) {
    %c0_i32 = arith.constant 0 : i32
    %c0_i32_0 = arith.constant 0 : i32
    %c0_i32_1 = arith.constant 0 : i32
    return %c0_i32, %c0_i32_0 : i32, i32
  }
  func.func @transform_5(%arg0: i32) -> (i32, i32) {
    %c0_i32 = arith.constant 0 : i32
    %c0_i32_0 = arith.constant 0 : i32
    %c0_i32_1 = arith.constant 0 : i32
    return %c0_i32, %c0_i32_0 : i32, i32
  }
  func.func @transform_6(%arg0: i32) -> (i32, i32) {
    %c0_i32 = arith.constant 0 : i32
    %c0_i32_0 = arith.constant 0 : i32
    %c0_i32_1 = arith.constant 0 : i32
    return %c0_i32, %c0_i32_0 : i32, i32
  }
  func.func @transform_7(%arg0: i32) -> (i32, i32, i32) {
    %c0_i32 = arith.constant 0 : i32
    %c0_i32_0 = arith.constant 0 : i32
    %c0_i32_1 = arith.constant 0 : i32
    return %arg0, %c0_i32, %c0_i32_0 : i32, i32, i32
  }
}

</mosaic_0001>

<llo_original>
// kernel: bottleneck_forward.4
$region0: #{bottleneck_forward.4}
  #allocation0 [shape = 'u32[]', space=smem, size = 0x4, offset = 0x4, fixed_abs, tag = 'smem constant byte address 0x4 - core index']
  #allocation1 [shape = 'u32[144,128]{1,0:T(1,128)}', space=vmem, size = 0x12000, scoped, tag = 'internal scratch']
  %s0 = inlined_call_operand.vmem [shape: f32[656,128], index: 0, kind: input, shape index: {}]
  %s1 = inlined_call_operand.vmem [shape: f32[128,128], index: 1, kind: input, shape index: {}]
  %s2 = inlined_call_operand.vmem [shape: f32[656,128], index: 2, kind: output, shape index: {0}]
  %s3 = inlined_call_operand.vmem [shape: f32[2,1,128], index: 3, kind: output, shape index: {1}]
  %s4 = inlined_call_operand.vmem [shape: f32[2,1,128], index: 4, kind: output, shape index: {2}]
  %5 = xla_tuple %s2, %s3, %s4
  %s6 = sld [smem:[#allocation0]]
  $region57: #{bottleneck_forward.4} parent=0
    _
  %s8 = ssub.s32 1, %s6
  %s9 = scalar_select 0, %s8, %s6
  loop: start=0, step=1, limit=4
  $region2: #{bottleneck_forward.4} parent=0 // loop_pre_header
    _
  $region3: #{bottleneck_forward.4} parent=0 // loop_header
    %s11 = sphi 0, %s15
    %p12 = scmp.ge.s32.totalorder %s11, 4
    %s21 = sphi 0, %s23
    %s24 = sphi 0, %s21
    %s25 = sphi 0, %s24
    %s41 = sphi 0, %s25
    %s45 = sphi 0, %s45
    %s47 = sphi 0, %s45
    %s48 = sphi 0, %s47
    %s62 = sphi 0, %s48
    %s68 = sphi 0, %s70
    %s71 = sphi 0, %s68
    %s72 = sphi 0, %s71
    %s88 = sphi 0, %s72
    %s94 = sphi 0, %s96
    %s97 = sphi 0, %s94
    %s98 = sphi 0, %s97
    %s114 = sphi 0, %s98
    %s120 = sphi 0, %s122
    %s123 = sphi 0, %s120
    %s124 = sphi 0, %s123
    %s140 = sphi 0, %s124
  $region4: #{bottleneck_forward.4} parent=0 // loop_header_branch
    %14 = sbr.rel (%p12) target = $region8
  $region5: #{bottleneck_forward.4} parent=0 // loop_body
    %s16 = ssub.s32 %s11, 1
    %s17 = ssub.s32 %s11, 2
    %s18 = sadd.s32 %s11, 1
    %s19 = ssub.s32 %s11, %s18
    %p20 = scmp.eq.s32.totalorder %s19, 0
    %s22 = sadd.s32 %s21, 1
    %s23 = scalar_select %p20, %s21, %s22
    %p26 = pneg %p20
    %p27 = scmp.eq.s32.totalorder %s11, 1
    %p28 = por %p26, %p27
    %p29 = scmp.ne.s32.totalorder %s21, %s24
    %p30 = scmp.eq.s32.totalorder %s11, 0
    %p31 = por %p29, %p30
    %p32 = scmp.ne.s32.totalorder %s21, %s24
    %p33 = scmp.eq.s32.totalorder %s16, 1
    %p34 = por %p32, %p33
    %p35 = scmp.ne.s32.totalorder %s24, %s25
    %p36 = scmp.eq.s32.totalorder %s16, 0
    %p37 = por %p35, %p36
    %p38 = scmp.ne.s32.totalorder %s24, %s25
    %p39 = scmp.eq.s32.totalorder %s17, 1
    %p40 = por %p38, %p39
    %p42 = scmp.ne.s32.totalorder %s25, %s41
    %p43 = scmp.eq.s32.totalorder %s17, 0
    %p44 = por %p42, %p43
    %s46 = sadd.s32 %s45, 1
    %p49 = scmp.eq.s32.totalorder %s11, 1
    %p50 = scmp.ne.s32.totalorder %s45, %s47
    %p51 = scmp.eq.s32.totalorder %s11, 0
    %p52 = por %p50, %p51
    %p53 = scmp.ne.s32.totalorder %s45, %s47
    %p54 = scmp.eq.s32.totalorder %s16, 1
    %p55 = por %p53, %p54
    %p56 = scmp.ne.s32.totalorder %s47, %s48
    %p57 = scmp.eq.s32.totalorder %s16, 0
    %p58 = por %p56, %p57
    %p59 = scmp.ne.s32.totalorder %s47, %s48
    %p60 = scmp.eq.s32.totalorder %s17, 1
    %p61 = por %p59, %p60
    %p63 = scmp.ne.s32.totalorder %s48, %s62
    %p64 = scmp.eq.s32.totalorder %s17, 0
    %p65 = por %p63, %p64
    %s66 = ssub.s32 %s11, %s18
    %p67 = scmp.eq.s32.totalorder %s66, 0
    %s69 = sadd.s32 %s68, 1
    %s70 = scalar_select %p67, %s68, %s69
    %p73 = pneg %p67
    %p74 = scmp.eq.s32.totalorder %s11, 1
    %p75 = por %p73, %p74
    %p76 = scmp.ne.s32.totalorder %s68, %s71
    %p77 = scmp.eq.s32.totalorder %s11, 0
    %p78 = por %p76, %p77
    %p79 = scmp.ne.s32.totalorder %s68, %s71
    %p80 = scmp.eq.s32.totalorder %s16, 1
    %p81 = por %p79, %p80
    %p82 = scmp.ne.s32.totalorder %s71, %s72
    %p83 = scmp.eq.s32.totalorder %s16, 0
    %p84 = por %p82, %p83
    %p85 = scmp.ne.s32.totalorder %s71, %s72
    %p86 = scmp.eq.s32.totalorder %s17, 1
    %p87 = por %p85, %p86
    %p89 = scmp.ne.s32.totalorder %s72, %s88
    %p90 = scmp.eq.s32.totalorder %s17, 0
    %p91 = por %p89, %p90
    %s92 = ssub.s32 %s11, %s18
    %p93 = scmp.eq.s32.totalorder %s92, 0
    %s95 = sadd.s32 %s94, 1
    %s96 = scalar_select %p93, %s94, %s95
    %p99 = pneg %p93
    %p100 = scmp.eq.s32.totalorder %s11, 1
    %p101 = por %p99, %p100
    %p102 = scmp.ne.s32.totalorder %s94, %s97
    %p103 = scmp.eq.s32.totalorder %s11, 0
    %p104 = por %p102, %p103
    %p105 = scmp.ne.s32.totalorder %s94, %s97
    %p106 = scmp.eq.s32.totalorder %s16, 1
    %p107 = por %p105, %p106
    %p108 = scmp.ne.s32.totalorder %s97, %s98
    %p109 = scmp.eq.s32.totalorder %s16, 0
    %p110 = por %p108, %p109
    %p111 = scmp.ne.s32.totalorder %s97, %s98
    %p112 = scmp.eq.s32.totalorder %s17, 1
    %p113 = por %p111, %p112
    %p115 = scmp.ne.s32.totalorder %s98, %s114
    %p116 = scmp.eq.s32.totalorder %s17, 0
    %p117 = por %p115, %p116
    %s118 = ssub.s32 %s11, %s18
    %p119 = scmp.eq.s32.totalorder %s118, 0
    %s121 = sadd.s32 %s120, 1
    %s122 = scalar_select %p119, %s120, %s121
    %p125 = pneg %p119
    %p126 = scmp.eq.s32.totalorder %s11, 1
    %p127 = por %p125, %p126
    %p128 = scmp.ne.s32.totalorder %s120, %s123
    %p129 = scmp.eq.s32.totalorder %s11, 0
    %p130 = por %p128, %p129
    %p131 = scmp.ne.s32.totalorder %s120, %s123
    %p132 = scmp.eq.s32.totalorder %s16, 1
    %p133 = por %p131, %p132
    %p134 = scmp.ne.s32.totalorder %s123, %s124
    %p135 = scmp.eq.s32.totalorder %s16, 0
    %p136 = por %p134, %p135
    %p137 = scmp.ne.s32.totalorder %s123, %s124
    %p138 = scmp.eq.s32.totalorder %s17, 1
    %p139 = por %p137, %p138
    %p141 = scmp.ne.s32.totalorder %s124, %s140
    %p142 = scmp.eq.s32.totalorder %s17, 0
    %p143 = por %p141, %p142
    %p144 = scmp.le.s32.totalorder 1, %s11
    %p145 = scmp.lt.s32.totalorder %s11, 3
    %p146 = pnand %p144, %p145
    %p147 = pneg %p146
    // Predicated region
    $region9: #{bottleneck_forward.4} parent=5 // pred_check
      _
    $region10: #{bottleneck_forward.4} parent=5 // pred_check_branch
      %149 = sbr.rel (%p146) target = $region12
    $region11: #{bottleneck_forward.4} parent=5 // pred_region
      %s150 = ssub.s32 %s11, 1
      // Predicated region
      $region13: #{bottleneck_forward.4} parent=11 // pred_check
        %p151 = pneg %p58
      $region14: #{bottleneck_forward.4} parent=11 // pred_check_branch
        %153 = sbr.rel (%p151) target = $region16
      $region15: #{bottleneck_forward.4} parent=11 // pred_region
        _
      $region16: #{bottleneck_forward.4} parent=11 // pred_fallthru
        _
    $region12: #{bottleneck_forward.4} parent=5 // pred_fallthru
      _
    %p154 = scmp.lt.s32.totalorder %s11, 2
    // Predicated region
    $region17: #{bottleneck_forward.4} parent=5 // pred_check
      %p155 = pneg %p154
    $region18: #{bottleneck_forward.4} parent=5 // pred_check_branch
      %157 = sbr.rel (%p155) target = $region20
    $region19: #{bottleneck_forward.4} parent=5 // pred_region
      // Predicated region
      $region21: #{bottleneck_forward.4} parent=19 // pred_check
        %p158 = pneg %p31
      $region22: #{bottleneck_forward.4} parent=19 // pred_check_branch
        %160 = sbr.rel (%p158) target = $region24
      $region23: #{bottleneck_forward.4} parent=19 // pred_region
        %s161 = smul.u32 41, %s11
        %p162 = scmp.lt.s32.totalorder %s161, 81
        %s163 = scalar_select %p162, %s161, 81
        %s164 = smul.addr %s163, 8
        %s165 = scalar_lea.vmem %s0, %s164
        %s166 = smul.u32 41, %s11
      $region24: #{bottleneck_forward.4} parent=19 // pred_fallthru
        _
    $region20: #{bottleneck_forward.4} parent=5 // pred_fallthru
      _
    %p167 = scmp.le.s32.totalorder 1, %s11
    %p168 = scmp.lt.s32.totalorder %s11, 3
    %p169 = pnand %p167, %p168
    %p170 = pneg %p169
    // Predicated region
    $region25: #{bottleneck_forward.4} parent=5 // pred_check
      _
    $region26: #{bottleneck_forward.4} parent=5 // pred_check_branch
      %172 = sbr.rel (%p169) target = $region28
    $region27: #{bottleneck_forward.4} parent=5 // pred_region
      %s173 = ssub.s32 %s11, 1
      %s174 = smul.u32 41, %s16
      %p175 = scmp.lt.s32.totalorder %s174, 81
      %s176 = scalar_select %p175, %s174, 81
      %s177 = smul.addr %s176, 8
      %s178 = scalar_lea.vmem %s0, %s177
      %p179 = pneg %p37
      %p180 = pneg %p34
      %p181 = pneg %p58
      %p182 = pneg %p55
      %p183 = pneg %p84
      %p184 = pneg %p81
      %s185 = smul.u32 41, %s16
      %p186 = scmp.lt.s32.totalorder %s185, 81
      %s187 = scalar_select %p186, %s185, 81
      %s188 = smul.addr %s187, 8
      %s189 = scalar_lea.vmem %s2, %s188
      %p190 = pneg %p110
      %p191 = pneg %p107
      %p192 = scmp.lt.s32.totalorder %s16, 1
      %s193 = scalar_select %p192, %s16, 1
      %s194 = scalar_lea.vmem %s3, %s193
      %p195 = pneg %p136
      %p196 = pneg %p133
      %p197 = scmp.lt.s32.totalorder %s16, 1
      %s198 = scalar_select %p197, %s16, 1
      %s199 = scalar_lea.vmem %s4, %s198
      %s200 = smul.u32 41, %s16
      %p201 = scmp.lt.s32.totalorder %s200, 81
      %s202 = scalar_select %p201, %s200, 81
      %s203 = smul.addr %s202, 8
      %s204 = scalar_lea.vmem %s0, %s203
      %s205 = smul.u32 41, %s16
      %s206 = smul.u32 41, %s16
      %p207 = scmp.lt.s32.totalorder %s206, 81
      %s208 = scalar_select %p207, %s206, 81
      %s209 = smul.addr %s208, 8
      %s210 = scalar_lea.vmem %s2, %s209
      %s211 = smul.u32 41, %s16
      %p212 = scmp.lt.s32.totalorder %s16, 1
      %s213 = scalar_select %p212, %s16, 1
      %s214 = scalar_lea.vmem %s3, %s213
      %p215 = scmp.lt.s32.totalorder %s16, 1
      %s216 = scalar_select %p215, %s16, 1
      %s217 = scalar_lea.vmem %s4, %s216
      %v218 = vld [vmem:[%s204] sm:$0xff]
      %v219 = vld [vmem:[%s204 + $0x8] sm:$0xff]
      %v220 = vld [vmem:[%s204 + $0x10] sm:$0xff]
      %v221 = vld [vmem:[%s204 + $0x18] sm:$0xff]
      %v222 = vld [vmem:[%s204 + $0x20] sm:$0xff]
      %v223 = vld [vmem:[%s204 + $0x28] sm:$0xff]
      %v224 = vld [vmem:[%s204 + $0x30] sm:$0xff]
      %v225 = vld [vmem:[%s204 + $0x38] sm:$0xff]
      %v226 = vld [vmem:[%s204 + $0x40] sm:$0xff]
      %v227 = vld [vmem:[%s204 + $0x48] sm:$0xff]
      %v228 = vld [vmem:[%s204 + $0x50] sm:$0xff]
      %v229 = vld [vmem:[%s204 + $0x58] sm:$0xff]
      %v230 = vld [vmem:[%s204 + $0x60] sm:$0xff]
      %v231 = vld [vmem:[%s204 + $0x68] sm:$0xff]
      %v232 = vld [vmem:[%s204 + $0x70] sm:$0xff]
      %v233 = vld [vmem:[%s204 + $0x78] sm:$0xff]
      %v234 = vld [vmem:[%s204 + $0x80] sm:$0xff]
      %v235 = vld [vmem:[%s204 + $0x88] sm:$0xff]
      %v236 = vld [vmem:[%s204 + $0x90] sm:$0xff]
      %v237 = vld [vmem:[%s204 + $0x98] sm:$0xff]
      %v238 = vld [vmem:[%s204 + $0xa0] sm:$0xff]
      %v239 = vld [vmem:[%s204 + $0xa8] sm:$0xff]
      %v240 = vld [vmem:[%s204 + $0xb0] sm:$0xff]
      %v241 = vld [vmem:[%s204 + $0xb8] sm:$0xff]
      %v242 = vld [vmem:[%s204 + $0xc0] sm:$0xff]
      %v243 = vld [vmem:[%s204 + $0xc8] sm:$0xff]
      %v244 = vld [vmem:[%s204 + $0xd0] sm:$0xff]
      %v245 = vld [vmem:[%s204 + $0xd8] sm:$0xff]
      %v246 = vld [vmem:[%s204 + $0xe0] sm:$0xff]
      %v247 = vld [vmem:[%s204 + $0xe8] sm:$0xff]
      %v248 = vld [vmem:[%s204 + $0xf0] sm:$0xff]
      %v249 = vld [vmem:[%s204 + $0xf8] sm:$0xff]
      %v250 = vld [vmem:[%s204 + $0x100] sm:$0xff]
      %v251 = vld [vmem:[%s204 + $0x108] sm:$0xff]
      %v252 = vld [vmem:[%s204 + $0x110] sm:$0xff]
      %v253 = vld [vmem:[%s204 + $0x118] sm:$0xff]
      %v254 = vld [vmem:[%s204 + $0x120] sm:$0xff]
      %v255 = vld [vmem:[%s204 + $0x128] sm:$0xff]
      %v256 = vld [vmem:[%s204 + $0x130] sm:$0xff]
      %v257 = vld [vmem:[%s204 + $0x138] sm:$0xff]
      %v258 = vld [vmem:[%s204 + $0x140] sm:$0xff]
      %v259 = vld [vmem:[%s1] sm:$0xff]
      %v260 = vld [vmem:[%s1 + $0x8] sm:$0xff]
      %v261 = vld [vmem:[%s1 + $0x10] sm:$0xff]
      %v262 = vld [vmem:[%s1 + $0x18] sm:$0xff]
      %v263 = vld [vmem:[%s1 + $0x20] sm:$0xff]
      %v264 = vld [vmem:[%s1 + $0x28] sm:$0xff]
      %v265 = vld [vmem:[%s1 + $0x30] sm:$0xff]
      %v266 = vld [vmem:[%s1 + $0x38] sm:$0xff]
      %v267 = vld [vmem:[%s1 + $0x40] sm:$0xff]
      %v268 = vld [vmem:[%s1 + $0x48] sm:$0xff]
      %v269 = vld [vmem:[%s1 + $0x50] sm:$0xff]
      %v270 = vld [vmem:[%s1 + $0x58] sm:$0xff]
      %v271 = vld [vmem:[%s1 + $0x60] sm:$0xff]
      %v272 = vld [vmem:[%s1 + $0x68] sm:$0xff]
      %v273 = vld [vmem:[%s1 + $0x70] sm:$0xff]
      %v274 = vld [vmem:[%s1 + $0x78] sm:$0xff]
      %275 = vmatprep.subr.mxu0 0.0
      %276 = vmatpush1.msra.mxu0 %v259
      %277 = vmatprep.subr.mxu0 0.0
      %278 = vmatpush1.msra.mxu0 %v260
      %279 = vmatprep.subr.mxu0 0.0
      %280 = vmatpush1.msra.mxu0 %v261
      %281 = vmatprep.subr.mxu0 0.0
      %282 = vmatpush1.msra.mxu0 %v262
      %283 = vmatprep.subr.mxu0 0.0
      %284 = vmatpush1.msra.mxu0 %v263
      %285 = vmatprep.subr.mxu0 0.0
      %286 = vmatpush1.msra.mxu0 %v264
      %287 = vmatprep.subr.mxu0 0.0
      %288 = vmatpush1.msra.mxu0 %v265
      %289 = vmatprep.subr.mxu0 0.0
      %290 = vmatpush1.msra.mxu0 %v266
      %291 = vmatprep.subr.mxu0 0.0
      %292 = vmatpush1.msra.mxu0 %v267
      %293 = vmatprep.subr.mxu0 0.0
      %294 = vmatpush1.msra.mxu0 %v268
      %295 = vmatprep.subr.mxu0 0.0
      %296 = vmatpush1.msra.mxu0 %v269
      %297 = vmatprep.subr.mxu0 0.0
      %298 = vmatpush1.msra.mxu0 %v270
      %299 = vmatprep.subr.mxu0 0.0
      %300 = vmatpush1.msra.mxu0 %v271
      %301 = vmatprep.subr.mxu0 0.0
      %302 = vmatpush1.msra.mxu0 %v272
      %303 = vmatprep.subr.mxu0 0.0
      %304 = vmatpush1.msra.mxu0 %v273
      %305 = vmatprep.subr.mxu0 0.0
      %306 = vmatpush1.msra.mxu0 %v274
      %307 = vmatprep.subr.mxu0 0.0
      %308 = vmatpush1.msra.mxu0 0.0
      %309 = vmatprep.subr.mxu0 0.0
      %310 = vmatpush1.msra.mxu0 0.0
      %311 = vmatprep.subr.mxu0 0.0
      %312 = vmatpush1.msra.mxu0 0.0
      %313 = vmatprep.subr.mxu0 0.0
      %314 = vmatpush1.msra.mxu0 0.0
      %315 = vmatprep.subr.mxu0 0.0
      %316 = vmatpush1.msra.mxu0 0.0
      %317 = vmatprep.subr.mxu0 0.0
      %318 = vmatpush1.msra.mxu0 0.0
      %319 = vmatprep.subr.mxu0 0.0
      %320 = vmatpush1.msra.mxu0 0.0
      %321 = vmatprep.subr.mxu0 0.0
      %322 = vmatpush1.msra.mxu0 0.0
      %323 = vmatprep.subr.mxu0 0.0
      %324 = vmatpush1.msra.mxu0 0.0
      %325 = vmatprep.subr.mxu0 0.0
      %326 = vmatpush1.msra.mxu0 0.0
      %327 = vmatprep.subr.mxu0 0.0
      %328 = vmatpush1.msra.mxu0 0.0
      %329 = vmatprep.subr.mxu0 0.0
      %330 = vmatpush1.msra.mxu0 0.0
      %331 = vmatprep.subr.mxu0 0.0
      %332 = vmatpush1.msra.mxu0 0.0
      %333 = vmatprep.subr.mxu0 0.0
      %334 = vmatpush1.msra.mxu0 0.0
      %335 = vmatprep.subr.mxu0 0.0
      %336 = vmatpush1.msra.mxu0 0.0
      %337 = vmatprep.subr.mxu0 0.0
      %338 = vmatpush1.msra.mxu0 0.0
      %339 = vmatprep.mubr.f32.mxu0 0.0
      %340 = vmatmul.mubr.f32.gmra.mrb[0].mxu0 %v218
      %v341 = vpop.f32.mrb[0].mxu0
      %v342 = vadd.f32 0.0, %v341
      %v343 = vpop.f32.mrb[0].mxu0
      %344 = vmatprep.mubr.f32.mxu0 0.0
      %345 = vmatmul.mubr.f32.gmra.mrb[0].mxu0 %v219
      %v346 = vpop.f32.mrb[0].mxu0
      %v347 = vadd.f32 0.0, %v346
      %v348 = vpop.f32.mrb[0].mxu0
      %349 = vmatprep.mubr.f32.mxu0 0.0
      %350 = vmatmul.mubr.f32.gmra.mrb[0].mxu0 %v220
      %v351 = vpop.f32.mrb[0].mxu0
      %v352 = vadd.f32 0.0, %v351
      %v353 = vpop.f32.mrb[0].mxu0
      %354 = vmatprep.mubr.f32.mxu0 0.0
      %355 = vmatmul.mubr.f32.gmra.mrb[0].mxu0 %v221
      %v356 = vpop.f32.mrb[0].mxu0
      %v357 = vadd.f32 0.0, %v356
      %v358 = vpop.f32.mrb[0].mxu0
      %359 = vmatprep.mubr.f32.mxu0 0.0
      %360 = vmatmul.mubr.f32.gmra.mrb[0].mxu0 %v222
      %v361 = vpop.f32.mrb[0].mxu0
      %v362 = vadd.f32 0.0, %v361
      %v363 = vpop.f32.mrb[0].mxu0
      %364 = vmatprep.mubr.f32.mxu0 0.0
      %365 = vmatmul.mubr.f32.gmra.mrb[0].mxu0 %v223
      %v366 = vpop.f32.mrb[0].mxu0
      %v367 = vadd.f32 0.0, %v366
      %v368 = vpop.f32.mrb[0].mxu0
      %369 = vmatprep.mubr.f32.mxu0 0.0
      %370 = vmatmul.mubr.f32.gmra.mrb[0].mxu0 %v224
      %v371 = vpop.f32.mrb[0].mxu0
      %v372 = vadd.f32 0.0, %v371
      %v373 = vpop.f32.mrb[0].mxu0
      %374 = vmatprep.mubr.f32.mxu0 0.0
      %375 = vmatmul.mubr.f32.gmra.mrb[0].mxu0 %v225
      %v376 = vpop.f32.mrb[0].mxu0
      %v377 = vadd.f32 0.0, %v376
      %v378 = vpop.f32.mrb[0].mxu0
      %379 = vmatprep.mubr.f32.mxu0 0.0
      %380 = vmatmul.mubr.f32.gmra.mrb[0].mxu0 %v226
      %v381 = vpop.f32.mrb[0].mxu0
      %v382 = vadd.f32 0.0, %v381
      %v383 = vpop.f32.mrb[0].mxu0
      %384 = vmatprep.mubr.f32.mxu0 0.0
      %385 = vmatmul.mubr.f32.gmra.mrb[0].mxu0 %v227
      %v386 = vpop.f32.mrb[0].mxu0
      %v387 = vadd.f32 0.0, %v386
      %v388 = vpop.f32.mrb[0].mxu0
      %389 = vmatprep.mubr.f32.mxu0 0.0
      %390 = vmatmul.mubr.f32.gmra.mrb[0].mxu0 %v228
      %v391 = vpop.f32.mrb[0].mxu0
      %v392 = vadd.f32 0.0, %v391
      %v393 = vpop.f32.mrb[0].mxu0
      %394 = vmatprep.mubr.f32.mxu0 0.0
      %395 = vmatmul.mubr.f32.gmra.mrb[0].mxu0 %v229
      %v396 = vpop.f32.mrb[0].mxu0
      %v397 = vadd.f32 0.0, %v396
      %v398 = vpop.f32.mrb[0].mxu0
      %399 = vmatprep.mubr.f32.mxu0 0.0
      %400 = vmatmul.mubr.f32.gmra.mrb[0].mxu0 %v230
      %v401 = vpop.f32.mrb[0].mxu0
      %v402 = vadd.f32 0.0, %v401
      %v403 = vpop.f32.mrb[0].mxu0
      %404 = vmatprep.mubr.f32.mxu0 0.0
      %405 = vmatmul.mubr.f32.gmra.mrb[0].mxu0 %v231
      %v406 = vpop.f32.mrb[0].mxu0
      %v407 = vadd.f32 0.0, %v406
      %v408 = vpop.f32.mrb[0].mxu0
      %409 = vmatprep.mubr.f32.mxu0 0.0
      %410 = vmatmul.mubr.f32.gmra.mrb[0].mxu0 %v232
      %v411 = vpop.f32.mrb[0].mxu0
      %v412 = vadd.f32 0.0, %v411
      %v413 = vpop.f32.mrb[0].mxu0
      %414 = vmatprep.mubr.f32.mxu0 0.0
      %415 = vmatmul.mubr.f32.gmra.mrb[0].mxu0 %v233
      %v416 = vpop.f32.mrb[0].mxu0
      %v417 = vadd.f32 0.0, %v416
      %v418 = vpop.f32.mrb[0].mxu0
      %419 = vmatprep.mubr.f32.mxu0 0.0
      %420 = vmatmul.mubr.f32.gmra.mrb[0].mxu0 %v234
      %v421 = vpop.f32.mrb[0].mxu0
      %v422 = vadd.f32 0.0, %v421
      %v423 = vpop.f32.mrb[0].mxu0
      %424 = vmatprep.mubr.f32.mxu0 0.0
      %425 = vmatmul.mubr.f32.gmra.mrb[0].mxu0 %v235
      %v426 = vpop.f32.mrb[0].mxu0
      %v427 = vadd.f32 0.0, %v426
      %v428 = vpop.f32.mrb[0].mxu0
      %429 = vmatprep.mubr.f32.mxu0 0.0
      %430 = vmatmul.mubr.f32.gmra.mrb[0].mxu0 %v236
      %v431 = vpop.f32.mrb[0].mxu0
      %v432 = vadd.f32 0.0, %v431
      %v433 = vpop.f32.mrb[0].mxu0
      %434 = vmatprep.mubr.f32.mxu0 0.0
      %435 = vmatmul.mubr.f32.gmra.mrb[0].mxu0 %v237
      %v436 = vpop.f32.mrb[0].mxu0
      %v437 = vadd.f32 0.0, %v436
      %v438 = vpop.f32.mrb[0].mxu0
      %439 = vmatprep.mubr.f32.mxu0 0.0
      %440 = vmatmul.mubr.f32.gmra.mrb[0].mxu0 %v238
      %v441 = vpop.f32.mrb[0].mxu0
      %v442 = vadd.f32 0.0, %v441
      %v443 = vpop.f32.mrb[0].mxu0
      %444 = vmatprep.mubr.f32.mxu0 0.0
      %445 = vmatmul.mubr.f32.gmra.mrb[0].mxu0 %v239
      %v446 = vpop.f32.mrb[0].mxu0
      %v447 = vadd.f32 0.0, %v446
      %v448 = vpop.f32.mrb[0].mxu0
      %449 = vmatprep.mubr.f32.mxu0 0.0
      %450 = vmatmul.mubr.f32.gmra.mrb[0].mxu0 %v240
      %v451 = vpop.f32.mrb[0].mxu0
      %v452 = vadd.f32 0.0, %v451
      %v453 = vpop.f32.mrb[0].mxu0
      %454 = vmatprep.mubr.f32.mxu0 0.0
      %455 = vmatmul.mubr.f32.gmra.mrb[0].mxu0 %v241
      %v456 = vpop.f32.mrb[0].mxu0
      %v457 = vadd.f32 0.0, %v456
      %v458 = vpop.f32.mrb[0].mxu0
      %459 = vmatprep.mubr.f32.mxu0 0.0
      %460 = vmatmul.mubr.f32.gmra.mrb[0].mxu0 %v242
      %v461 = vpop.f32.mrb[0].mxu0
      %v462 = vadd.f32 0.0, %v461
      %v463 = vpop.f32.mrb[0].mxu0
      %464 = vmatprep.mubr.f32.mxu0 0.0
      %465 = vmatmul.mubr.f32.gmra.mrb[0].mxu0 %v243
      %v466 = vpop.f32.mrb[0].mxu0
      %v467 = vadd.f32 0.0, %v466
      %v468 = vpop.f32.mrb[0].mxu0
      %469 = vmatprep.mubr.f32.mxu0 0.0
      %470 = vmatmul.mubr.f32.gmra.mrb[0].mxu0 %v244
      %v471 = vpop.f32.mrb[0].mxu0
      %v472 = vadd.f32 0.0, %v471
      %v473 = vpop.f32.mrb[0].mxu0
      %474 = vmatprep.mubr.f32.mxu0 0.0
      %475 = vmatmul.mubr.f32.gmra.mrb[0].mxu0 %v245
      %v476 = vpop.f32.mrb[0].mxu0
      %v477 = vadd.f32 0.0, %v476
      %v478 = vpop.f32.mrb[0].mxu0
      %479 = vmatprep.mubr.f32.mxu0 0.0
      %480 = vmatmul.mubr.f32.gmra.mrb[0].mxu0 %v246
      %v481 = vpop.f32.mrb[0].mxu0
      %v482 = vadd.f32 0.0, %v481
      %v483 = vpop.f32.mrb[0].mxu0
      %484 = vmatprep.mubr.f32.mxu0 0.0
      %485 = vmatmul.mubr.f32.gmra.mrb[0].mxu0 %v247
      %v486 = vpop.f32.mrb[0].mxu0
      %v487 = vadd.f32 0.0, %v486
      %v488 = vpop.f32.mrb[0].mxu0
      %489 = vmatprep.mubr.f32.mxu0 0.0
      %490 = vmatmul.mubr.f32.gmra.mrb[0].mxu0 %v248
      %v491 = vpop.f32.mrb[0].mxu0
      %v492 = vadd.f32 0.0, %v491
      %v493 = vpop.f32.mrb[0].mxu0
      %494 = vmatprep.mubr.f32.mxu0 0.0
      %495 = vmatmul.mubr.f32.gmra.mrb[0].mxu0 %v249
      %v496 = vpop.f32.mrb[0].mxu0
      %v497 = vadd.f32 0.0, %v496
      %v498 = vpop.f32.mrb[0].mxu0
      %499 = vmatprep.mubr.f32.mxu0 0.0
      %500 = vmatmul.mubr.f32.gmra.mrb[0].mxu0 %v250
      %v501 = vpop.f32.mrb[0].mxu0
      %v502 = vadd.f32 0.0, %v501
      %v503 = vpop.f32.mrb[0].mxu0
      %504 = vmatprep.mubr.f32.mxu0 0.0
      %505 = vmatmul.mubr.f32.gmra.mrb[0].mxu0 %v251
      %v506 = vpop.f32.mrb[0].mxu0
      %v507 = vadd.f32 0.0, %v506
      %v508 = vpop.f32.mrb[0].mxu0
      %509 = vmatprep.mubr.f32.mxu0 0.0
      %510 = vmatmul.mubr.f32.gmra.mrb[0].mxu0 %v252
      %v511 = vpop.f32.mrb[0].mxu0
      %v512 = vadd.f32 0.0, %v511
      %v513 = vpop.f32.mrb[0].mxu0
      %514 = vmatprep.mubr.f32.mxu0 0.0
      %515 = vmatmul.mubr.f32.gmra.mrb[0].mxu0 %v253
      %v516 = vpop.f32.mrb[0].mxu0
      %v517 = vadd.f32 0.0, %v516
      %v518 = vpop.f32.mrb[0].mxu0
      %519 = vmatprep.mubr.f32.mxu0 0.0
      %520 = vmatmul.mubr.f32.gmra.mrb[0].mxu0 %v254
      %v521 = vpop.f32.mrb[0].mxu0
      %v522 = vadd.f32 0.0, %v521
      %v523 = vpop.f32.mrb[0].mxu0
      %524 = vmatprep.mubr.f32.mxu0 0.0
      %525 = vmatmul.mubr.f32.gmra.mrb[0].mxu0 %v255
      %v526 = vpop.f32.mrb[0].mxu0
      %v527 = vadd.f32 0.0, %v526
      %v528 = vpop.f32.mrb[0].mxu0
      %529 = vmatprep.mubr.f32.mxu0 0.0
      %530 = vmatmul.mubr.f32.gmra.mrb[0].mxu0 %v256
      %v531 = vpop.f32.mrb[0].mxu0
      %v532 = vadd.f32 0.0, %v531
      %v533 = vpop.f32.mrb[0].mxu0
      %534 = vmatprep.mubr.f32.mxu0 0.0
      %535 = vmatmul.mubr.f32.gmra.mrb[0].mxu0 %v257
      %v536 = vpop.f32.mrb[0].mxu0
      %v537 = vadd.f32 0.0, %v536
      %v538 = vpop.f32.mrb[0].mxu0
      %539 = vmatprep.mubr.f32.mxu0 0.0
      %540 = vmatmul.mubr.f32.gmra.mrb[0].mxu0 %v258
      %v541 = vpop.f32.mrb[0].mxu0
      %v542 = vadd.f32 0.0, %v541
      %v543 = vpop.f32.mrb[0].mxu0
      %544 = vdwg.mxu0
      %545 = vst [vmem:[%s210] sm:$0xff] %v342
      %546 = vst [vmem:[%s210 + $0x8] sm:$0xff] %v347
      %547 = vst [vmem:[%s210 + $0x10] sm:$0xff] %v352
      %548 = vst [vmem:[%s210 + $0x18] sm:$0xff] %v357
      %549 = vst [vmem:[%s210 + $0x20] sm:$0xff] %v362
      %550 = vst [vmem:[%s210 + $0x28] sm:$0xff] %v367
      %551 = vst [vmem:[%s210 + $0x30] sm:$0xff] %v372
      %552 = vst [vmem:[%s210 + $0x38] sm:$0xff] %v377
      %553 = vst [vmem:[%s210 + $0x40] sm:$0xff] %v382
      %554 = vst [vmem:[%s210 + $0x48] sm:$0xff] %v387
      %555 = vst [vmem:[%s210 + $0x50] sm:$0xff] %v392
      %556 = vst [vmem:[%s210 + $0x58] sm:$0xff] %v397
      %557 = vst [vmem:[%s210 + $0x60] sm:$0xff] %v402
      %558 = vst [vmem:[%s210 + $0x68] sm:$0xff] %v407
      %559 = vst [vmem:[%s210 + $0x70] sm:$0xff] %v412
      %560 = vst [vmem:[%s210 + $0x78] sm:$0xff] %v417
      %561 = vst [vmem:[%s210 + $0x80] sm:$0xff] %v422
      %562 = vst [vmem:[%s210 + $0x88] sm:$0xff] %v427
      %563 = vst [vmem:[%s210 + $0x90] sm:$0xff] %v432
      %564 = vst [vmem:[%s210 + $0x98] sm:$0xff] %v437
      %565 = vst [vmem:[%s210 + $0xa0] sm:$0xff] %v442
      %566 = vst [vmem:[%s210 + $0xa8] sm:$0xff] %v447
      %567 = vst [vmem:[%s210 + $0xb0] sm:$0xff] %v452
      %568 = vst [vmem:[%s210 + $0xb8] sm:$0xff] %v457
      %569 = vst [vmem:[%s210 + $0xc0] sm:$0xff] %v462
      %570 = vst [vmem:[%s210 + $0xc8] sm:$0xff] %v467
      %571 = vst [vmem:[%s210 + $0xd0] sm:$0xff] %v472
      %572 = vst [vmem:[%s210 + $0xd8] sm:$0xff] %v477
      %573 = vst [vmem:[%s210 + $0xe0] sm:$0xff] %v482
      %574 = vst [vmem:[%s210 + $0xe8] sm:$0xff] %v487
      %575 = vst [vmem:[%s210 + $0xf0] sm:$0xff] %v492
      %576 = vst [vmem:[%s210 + $0xf8] sm:$0xff] %v497
      %577 = vst [vmem:[%s210 + $0x100] sm:$0xff] %v502
      %578 = vst [vmem:[%s210 + $0x108] sm:$0xff] %v507
      %579 = vst [vmem:[%s210 + $0x110] sm:$0xff] %v512
      %580 = vst [vmem:[%s210 + $0x118] sm:$0xff] %v517
      %581 = vst [vmem:[%s210 + $0x120] sm:$0xff] %v522
      %582 = vst [vmem:[%s210 + $0x128] sm:$0xff] %v527
      %583 = vst [vmem:[%s210 + $0x130] sm:$0xff] %v532
      %584 = vst [vmem:[%s210 + $0x138] sm:$0xff] %v537
      %585 = vst [vmem:[%s210 + $0x140] sm:$0xff] %v542
      %v586 = vadd.f32 %v342, %v347
      %v587 = vadd.f32 %v586, %v352
      %v588 = vadd.f32 %v587, %v357
      %v589 = vadd.f32 %v588, %v362
      %v590 = vadd.f32 %v589, %v367
      %v591 = vadd.f32 %v590, %v372
      %v592 = vadd.f32 %v591, %v377
      %v593 = vadd.f32 %v592, %v382
      %v594 = vadd.f32 %v593, %v387
      %v595 = vadd.f32 %v594, %v392
      %v596 = vadd.f32 %v595, %v397
      %v597 = vadd.f32 %v596, %v402
      %v598 = vadd.f32 %v597, %v407
      %v599 = vadd.f32 %v598, %v412
      %v600 = vadd.f32 %v599, %v417
      %v601 = vadd.f32 %v600, %v422
      %v602 = vadd.f32 %v601, %v427
      %v603 = vadd.f32 %v602, %v432
      %v604 = vadd.f32 %v603, %v437
      %v605 = vadd.f32 %v604, %v442
      %v606 = vadd.f32 %v605, %v447
      %v607 = vadd.f32 %v606, %v452
      %v608 = vadd.f32 %v607, %v457
      %v609 = vadd.f32 %v608, %v462
      %v610 = vadd.f32 %v609, %v467
      %v611 = vadd.f32 %v610, %v472
      %v612 = vadd.f32 %v611, %v477
      %v613 = vadd.f32 %v612, %v482
      %v614 = vadd.f32 %v613, %v487
      %v615 = vadd.f32 %v614, %v492
      %v616 = vadd.f32 %v615, %v497
      %v617 = vadd.f32 %v616, %v502
      %v618 = vadd.f32 %v617, %v507
      %v619 = vadd.f32 %v618, %v512
      %v620 = vadd.f32 %v619, %v517
      %v621 = vadd.f32 %v620, %v522
      %v622 = vadd.f32 %v621, %v527
      %v623 = vadd.f32 %v622, %v532
      %v624 = vadd.f32 %v623, %v537
      %v625 = vadd.f32 %v624, %v542
      %v626 = vrot.slane %v625, 4
      %v627 = vadd.f32 %v625, %v626
      %v628 = vrot.slane %v627, 2
      %v629 = vadd.f32 %v627, %v628
      %v630 = vrot.slane %v629, 1
      %v631 = vadd.f32 %v629, %v630
      %632 = vst [vmem:[%s214] sm:$0x1] %v631
      %v633 = vmul.f32 %v342, %v342
      %v634 = vmul.f32 %v347, %v347
      %v635 = vmul.f32 %v352, %v352
      %v636 = vmul.f32 %v357, %v357
      %v637 = vmul.f32 %v362, %v362
      %v638 = vmul.f32 %v367, %v367
      %v639 = vmul.f32 %v372, %v372
      %v640 = vmul.f32 %v377, %v377
      %v641 = vmul.f32 %v382, %v382
      %v642 = vmul.f32 %v387, %v387
      %v643 = vmul.f32 %v392, %v392
      %v644 = vmul.f32 %v397, %v397
      %v645 = vmul.f32 %v402, %v402
      %v646 = vmul.f32 %v407, %v407
      %v647 = vmul.f32 %v412, %v412
      %v648 = vmul.f32 %v417, %v417
      %v649 = vmul.f32 %v422, %v422
      %v650 = vmul.f32 %v427, %v427
      %v651 = vmul.f32 %v432, %v432
      %v652 = vmul.f32 %v437, %v437
      %v653 = vmul.f32 %v442, %v442
      %v654 = vmul.f32 %v447, %v447
      %v655 = vmul.f32 %v452, %v452
      %v656 = vmul.f32 %v457, %v457
      %v657 = vmul.f32 %v462, %v462
      %v658 = vmul.f32 %v467, %v467
      %v659 = vmul.f32 %v472, %v472
      %v660 = vmul.f32 %v477, %v477
      %v661 = vmul.f32 %v482, %v482
      %v662 = vmul.f32 %v487, %v487
      %v663 = vmul.f32 %v492, %v492
      %v664 = vmul.f32 %v497, %v497
      %v665 = vmul.f32 %v502, %v502
      %v666 = vmul.f32 %v507, %v507
      %v667 = vmul.f32 %v512, %v512
      %v668 = vmul.f32 %v517, %v517
      %v669 = vmul.f32 %v522, %v522
      %v670 = vmul.f32 %v527, %v527
      %v671 = vmul.f32 %v532, %v532
      %v672 = vmul.f32 %v537, %v537
      %v673 = vmul.f32 %v542, %v542
      %v674 = vadd.f32 %v633, %v634
      %v675 = vadd.f32 %v674, %v635
      %v676 = vadd.f32 %v675, %v636
      %v677 = vadd.f32 %v676, %v637
      %v678 = vadd.f32 %v677, %v638
      %v679 = vadd.f32 %v678, %v639
      %v680 = vadd.f32 %v679, %v640
      %v681 = vadd.f32 %v680, %v641
      %v682 = vadd.f32 %v681, %v642
      %v683 = vadd.f32 %v682, %v643
      %v684 = vadd.f32 %v683, %v644
      %v685 = vadd.f32 %v684, %v645
      %v686 = vadd.f32 %v685, %v646
      %v687 = vadd.f32 %v686, %v647
      %v688 = vadd.f32 %v687, %v648
      %v689 = vadd.f32 %v688, %v649
      %v690 = vadd.f32 %v689, %v650
      %v691 = vadd.f32 %v690, %v651
      %v692 = vadd.f32 %v691, %v652
      %v693 = vadd.f32 %v692, %v653
      %v694 = vadd.f32 %v693, %v654
      %v695 = vadd.f32 %v694, %v655
      %v696 = vadd.f32 %v695, %v656
      %v697 = vadd.f32 %v696, %v657
      %v698 = vadd.f32 %v697, %v658
      %v699 = vadd.f32 %v698, %v659
      %v700 = vadd.f32 %v699, %v660
      %v701 = vadd.f32 %v700, %v661
      %v702 = vadd.f32 %v701, %v662
      %v703 = vadd.f32 %v702, %v663
      %v704 = vadd.f32 %v703, %v664
      %v705 = vadd.f32 %v704, %v665
      %v706 = vadd.f32 %v705, %v666
      %v707 = vadd.f32 %v706, %v667
      %v708 = vadd.f32 %v707, %v668
      %v709 = vadd.f32 %v708, %v669
      %v710 = vadd.f32 %v709, %v670
      %v711 = vadd.f32 %v710, %v671
      %v712 = vadd.f32 %v711, %v672
      %v713 = vadd.f32 %v712, %v673
      %v714 = vrot.slane %v713, 4
      %v715 = vadd.f32 %v713, %v714
      %v716 = vrot.slane %v715, 2
      %v717 = vadd.f32 %v715, %v716
      %v718 = vrot.slane %v717, 1
      %v719 = vadd.f32 %v717, %v718
      %720 = vst [vmem:[%s217] sm:$0x1] %v719
      %s721 = smul.u32 41, %s16
      %p722 = scmp.lt.s32.totalorder %s721, 81
      %s723 = scalar_select %p722, %s721, 81
      %s724 = smul.addr %s723, 8
      %s725 = scalar_lea.vmem %s2, %s724
      %p726 = scmp.lt.s32.totalorder %s16, 1
      %s727 = scalar_select %p726, %s16, 1
      %s728 = scalar_lea.vmem %s3, %s727
      %p729 = scmp.lt.s32.totalorder %s16, 1
      %s730 = scalar_select %p729, %s16, 1
      %s731 = scalar_lea.vmem %s4, %s730
      // Predicated region
      $region29: #{bottleneck_forward.4} parent=27 // pred_check
        %p732 = pneg %p81
      $region30: #{bottleneck_forward.4} parent=27 // pred_check_branch
        %734 = sbr.rel (%p732) target = $region32
      $region31: #{bottleneck_forward.4} parent=27 // pred_region
        %s735 = smul.u32 41, %s16
      $region32: #{bottleneck_forward.4} parent=27 // pred_fallthru
        _
      // Predicated region
      $region33: #{bottleneck_forward.4} parent=27 // pred_check
        %p736 = pneg %p107
      $region34: #{bottleneck_forward.4} parent=27 // pred_check_branch
        %738 = sbr.rel (%p736) target = $region36
      $region35: #{bottleneck_forward.4} parent=27 // pred_region
        _
      $region36: #{bottleneck_forward.4} parent=27 // pred_fallthru
        _
      // Predicated region
      $region37: #{bottleneck_forward.4} parent=27 // pred_check
        %p739 = pneg %p133
      $region38: #{bottleneck_forward.4} parent=27 // pred_check_branch
        %741 = sbr.rel (%p739) target = $region40
      $region39: #{bottleneck_forward.4} parent=27 // pred_region
        _
      $region40: #{bottleneck_forward.4} parent=27 // pred_fallthru
        _
    $region28: #{bottleneck_forward.4} parent=5 // pred_fallthru
      _
    %p742 = scmp.le.s32.totalorder 2, %s11
    // Predicated region
    $region41: #{bottleneck_forward.4} parent=5 // pred_check
      %p743 = pneg %p742
    $region42: #{bottleneck_forward.4} parent=5 // pred_check_branch
      %745 = sbr.rel (%p743) target = $region44
    $region43: #{bottleneck_forward.4} parent=5 // pred_region
      %s746 = ssub.s32 %s11, 2
      // Predicated region
      $region45: #{bottleneck_forward.4} parent=43 // pred_check
        %p747 = pneg %p87
      $region46: #{bottleneck_forward.4} parent=43 // pred_check_branch
        %749 = sbr.rel (%p747) target = $region48
      $region47: #{bottleneck_forward.4} parent=43 // pred_region
        %s750 = smul.u32 41, %s17
        %p751 = scmp.lt.s32.totalorder %s750, 81
        %s752 = scalar_select %p751, %s750, 81
        %s753 = smul.addr %s752, 8
        %s754 = scalar_lea.vmem %s2, %s753
      $region48: #{bottleneck_forward.4} parent=43 // pred_fallthru
        _
      // Predicated region
      $region49: #{bottleneck_forward.4} parent=43 // pred_check
        %p755 = pneg %p113
      $region50: #{bottleneck_forward.4} parent=43 // pred_check_branch
        %757 = sbr.rel (%p755) target = $region52
      $region51: #{bottleneck_forward.4} parent=43 // pred_region
        %p758 = scmp.lt.s32.totalorder %s17, 1
        %s759 = scalar_select %p758, %s17, 1
        %s760 = scalar_lea.vmem %s3, %s759
      $region52: #{bottleneck_forward.4} parent=43 // pred_fallthru
        _
      // Predicated region
      $region53: #{bottleneck_forward.4} parent=43 // pred_check
        %p761 = pneg %p139
      $region54: #{bottleneck_forward.4} parent=43 // pred_check_branch
        %763 = sbr.rel (%p761) target = $region56
      $region55: #{bottleneck_forward.4} parent=43 // pred_region
        %p764 = scmp.lt.s32.totalorder %s17, 1
        %s765 = scalar_select %p764, %s17, 1
        %s766 = scalar_lea.vmem %s4, %s765
      $region56: #{bottleneck_forward.4} parent=43 // pred_fallthru
        _
    $region44: #{bottleneck_forward.4} parent=5 // pred_fallthru
      _
  $region6: #{bottleneck_forward.4} parent=0 // loop_footer
    %s15 = sadd.s32 1, %s11
  $region7: #{bottleneck_forward.4} parent=0 // loop_footer_branch
    %10 = sbr.rel target = $region3
  $region8: #{bottleneck_forward.4} parent=0 // loop_exit
    _

// kernel: bottleneck_forward.6
$region0: #{bottleneck_forward.6}
  #allocation0 [shape = 'u32[]', space=smem, size = 0x4, offset = 0x4, fixed_abs, tag = 'smem constant byte address 0x4 - core index']
  #allocation1 [shape = 'u32[144,128]{1,0:T(1,128)}', space=vmem, size = 0x12000, scoped, tag = 'internal scratch']
  %s0 = inlined_call_operand.vmem [shape: f32[2,328,128], index: 0, kind: input, shape index: {}]
  %s1 = inlined_call_operand.vmem [shape: f32[328,1], index: 1, kind: input, shape index: {}]
  %s2 = inlined_call_operand.vmem [shape: f32[1,128], index: 2, kind: input, shape index: {}]
  %s3 = inlined_call_operand.vmem [shape: f32[1,128], index: 3, kind: input, shape index: {}]
  %s4 = inlined_call_operand.vmem [shape: f32[128,128], index: 4, kind: input, shape index: {}]
  %s5 = inlined_call_operand.vmem [shape: f32[2,1,128], index: 5, kind: output, shape index: {0}]
  %s6 = inlined_call_operand.vmem [shape: f32[2,1,128], index: 6, kind: output, shape index: {1}]
  %7 = xla_tuple %s5, %s6
  %s8 = sld [smem:[#allocation0]]
  $region61: #{bottleneck_forward.6} parent=0
    _
  %s10 = ssub.s32 1, %s8
  %s11 = scalar_select 0, %s10, %s8
  loop: start=0, step=1, limit=4
  $region2: #{bottleneck_forward.6} parent=0 // loop_pre_header
    _
  $region3: #{bottleneck_forward.6} parent=0 // loop_header
    %s13 = sphi 0, %s17
    %p14 = scmp.ge.s32.totalorder %s13, 4
    %s23 = sphi 0, %s25
    %s26 = sphi 0, %s23
    %s27 = sphi 0, %s26
    %s43 = sphi 0, %s27
    %s47 = sphi 0, %s47
    %s49 = sphi 0, %s47
    %s50 = sphi 0, %s49
    %s64 = sphi 0, %s50
    %s68 = sphi 0, %s68
    %s70 = sphi 0, %s68
    %s71 = sphi 0, %s70
    %s85 = sphi 0, %s71
    %s89 = sphi 0, %s89
    %s91 = sphi 0, %s89
    %s92 = sphi 0, %s91
    %s106 = sphi 0, %s92
    %s110 = sphi 0, %s110
    %s112 = sphi 0, %s110
    %s113 = sphi 0, %s112
    %s127 = sphi 0, %s113
    %s133 = sphi 0, %s135
    %s136 = sphi 0, %s133
    %s137 = sphi 0, %s136
    %s153 = sphi 0, %s137
    %s159 = sphi 0, %s161
    %s162 = sphi 0, %s159
    %s163 = sphi 0, %s162
    %s179 = sphi 0, %s163
  $region4: #{bottleneck_forward.6} parent=0 // loop_header_branch
    %16 = sbr.rel (%p14) target = $region8
  $region5: #{bottleneck_forward.6} parent=0 // loop_body
    %s18 = ssub.s32 %s13, 1
    %s19 = ssub.s32 %s13, 2
    %s20 = sadd.s32 %s13, 1
    %s21 = ssub.s32 %s13, %s20
    %p22 = scmp.eq.s32.totalorder %s21, 0
    %s24 = sadd.s32 %s23, 1
    %s25 = scalar_select %p22, %s23, %s24
    %p28 = pneg %p22
    %p29 = scmp.eq.s32.totalorder %s13, 1
    %p30 = por %p28, %p29
    %p31 = scmp.ne.s32.totalorder %s23, %s26
    %p32 = scmp.eq.s32.totalorder %s13, 0
    %p33 = por %p31, %p32
    %p34 = scmp.ne.s32.totalorder %s23, %s26
    %p35 = scmp.eq.s32.totalorder %s18, 1
    %p36 = por %p34, %p35
    %p37 = scmp.ne.s32.totalorder %s26, %s27
    %p38 = scmp.eq.s32.totalorder %s18, 0
    %p39 = por %p37, %p38
    %p40 = scmp.ne.s32.totalorder %s26, %s27
    %p41 = scmp.eq.s32.totalorder %s19, 1
    %p42 = por %p40, %p41
    %p44 = scmp.ne.s32.totalorder %s27, %s43
    %p45 = scmp.eq.s32.totalorder %s19, 0
    %p46 = por %p44, %p45
    %s48 = sadd.s32 %s47, 1
    %p51 = scmp.eq.s32.totalorder %s13, 1
    %p52 = scmp.ne.s32.totalorder %s47, %s49
    %p53 = scmp.eq.s32.totalorder %s13, 0
    %p54 = por %p52, %p53
    %p55 = scmp.ne.s32.totalorder %s47, %s49
    %p56 = scmp.eq.s32.totalorder %s18, 1
    %p57 = por %p55, %p56
    %p58 = scmp.ne.s32.totalorder %s49, %s50
    %p59 = scmp.eq.s32.totalorder %s18, 0
    %p60 = por %p58, %p59
    %p61 = scmp.ne.s32.totalorder %s49, %s50
    %p62 = scmp.eq.s32.totalorder %s19, 1
    %p63 = por %p61, %p62
    %p65 = scmp.ne.s32.totalorder %s50, %s64
    %p66 = scmp.eq.s32.totalorder %s19, 0
    %p67 = por %p65, %p66
    %s69 = sadd.s32 %s68, 1
    %p72 = scmp.eq.s32.totalorder %s13, 1
    %p73 = scmp.ne.s32.totalorder %s68, %s70
    %p74 = scmp.eq.s32.totalorder %s13, 0
    %p75 = por %p73, %p74
    %p76 = scmp.ne.s32.totalorder %s68, %s70
    %p77 = scmp.eq.s32.totalorder %s18, 1
    %p78 = por %p76, %p77
    %p79 = scmp.ne.s32.totalorder %s70, %s71
    %p80 = scmp.eq.s32.totalorder %s18, 0
    %p81 = por %p79, %p80
    %p82 = scmp.ne.s32.totalorder %s70, %s71
    %p83 = scmp.eq.s32.totalorder %s19, 1
    %p84 = por %p82, %p83
    %p86 = scmp.ne.s32.totalorder %s71, %s85
    %p87 = scmp.eq.s32.totalorder %s19, 0
    %p88 = por %p86, %p87
    %s90 = sadd.s32 %s89, 1
    %p93 = scmp.eq.s32.totalorder %s13, 1
    %p94 = scmp.ne.s32.totalorder %s89, %s91
    %p95 = scmp.eq.s32.totalorder %s13, 0
    %p96 = por %p94, %p95
    %p97 = scmp.ne.s32.totalorder %s89, %s91
    %p98 = scmp.eq.s32.totalorder %s18, 1
    %p99 = por %p97, %p98
    %p100 = scmp.ne.s32.totalorder %s91, %s92
    %p101 = scmp.eq.s32.totalorder %s18, 0
    %p102 = por %p100, %p101
    %p103 = scmp.ne.s32.totalorder %s91, %s92
    %p104 = scmp.eq.s32.totalorder %s19, 1
    %p105 = por %p103, %p104
    %p107 = scmp.ne.s32.totalorder %s92, %s106
    %p108 = scmp.eq.s32.totalorder %s19, 0
    %p109 = por %p107, %p108
    %s111 = sadd.s32 %s110, 1
    %p114 = scmp.eq.s32.totalorder %s13, 1
    %p115 = scmp.ne.s32.totalorder %s110, %s112
    %p116 = scmp.eq.s32.totalorder %s13, 0
    %p117 = por %p115, %p116
    %p118 = scmp.ne.s32.totalorder %s110, %s112
    %p119 = scmp.eq.s32.totalorder %s18, 1
    %p120 = por %p118, %p119
    %p121 = scmp.ne.s32.totalorder %s112, %s113
    %p122 = scmp.eq.s32.totalorder %s18, 0
    %p123 = por %p121, %p122
    %p124 = scmp.ne.s32.totalorder %s112, %s113
    %p125 = scmp.eq.s32.totalorder %s19, 1
    %p126 = por %p124, %p125
    %p128 = scmp.ne.s32.totalorder %s113, %s127
    %p129 = scmp.eq.s32.totalorder %s19, 0
    %p130 = por %p128, %p129
    %s131 = ssub.s32 %s13, %s20
    %p132 = scmp.eq.s32.totalorder %s131, 0
    %s134 = sadd.s32 %s133, 1
    %s135 = scalar_select %p132, %s133, %s134
    %p138 = pneg %p132
    %p139 = scmp.eq.s32.totalorder %s13, 1
    %p140 = por %p138, %p139
    %p141 = scmp.ne.s32.totalorder %s133, %s136
    %p142 = scmp.eq.s32.totalorder %s13, 0
    %p143 = por %p141, %p142
    %p144 = scmp.ne.s32.totalorder %s133, %s136
    %p145 = scmp.eq.s32.totalorder %s18, 1
    %p146 = por %p144, %p145
    %p147 = scmp.ne.s32.totalorder %s136, %s137
    %p148 = scmp.eq.s32.totalorder %s18, 0
    %p149 = por %p147, %p148
    %p150 = scmp.ne.s32.totalorder %s136, %s137
    %p151 = scmp.eq.s32.totalorder %s19, 1
    %p152 = por %p150, %p151
    %p154 = scmp.ne.s32.totalorder %s137, %s153
    %p155 = scmp.eq.s32.totalorder %s19, 0
    %p156 = por %p154, %p155
    %s157 = ssub.s32 %s13, %s20
    %p158 = scmp.eq.s32.totalorder %s157, 0
    %s160 = sadd.s32 %s159, 1
    %s161 = scalar_select %p158, %s159, %s160
    %p164 = pneg %p158
    %p165 = scmp.eq.s32.totalorder %s13, 1
    %p166 = por %p164, %p165
    %p167 = scmp.ne.s32.totalorder %s159, %s162
    %p168 = scmp.eq.s32.totalorder %s13, 0
    %p169 = por %p167, %p168
    %p170 = scmp.ne.s32.totalorder %s159, %s162
    %p171 = scmp.eq.s32.totalorder %s18, 1
    %p172 = por %p170, %p171
    %p173 = scmp.ne.s32.totalorder %s162, %s163
    %p174 = scmp.eq.s32.totalorder %s18, 0
    %p175 = por %p173, %p174
    %p176 = scmp.ne.s32.totalorder %s162, %s163
    %p177 = scmp.eq.s32.totalorder %s19, 1
    %p178 = por %p176, %p177
    %p180 = scmp.ne.s32.totalorder %s163, %s179
    %p181 = scmp.eq.s32.totalorder %s19, 0
    %p182 = por %p180, %p181
    %p183 = scmp.le.s32.totalorder 1, %s13
    %p184 = scmp.lt.s32.totalorder %s13, 3
    %p185 = pnand %p183, %p184
    %p186 = pneg %p185
    // Predicated region
    $region9: #{bottleneck_forward.6} parent=5 // pred_check
      _
    $region10: #{bottleneck_forward.6} parent=5 // pred_check_branch
      %188 = sbr.rel (%p185) target = $region12
    $region11: #{bottleneck_forward.6} parent=5 // pred_region
      %s189 = ssub.s32 %s13, 1
      // Predicated region
      $region13: #{bottleneck_forward.6} parent=11 // pred_check
        %p190 = pneg %p60
      $region14: #{bottleneck_forward.6} parent=11 // pred_check_branch
        %192 = sbr.rel (%p190) target = $region16
      $region15: #{bottleneck_forward.6} parent=11 // pred_region
        _
      $region16: #{bottleneck_forward.6} parent=11 // pred_fallthru
        _
      // Predicated region
      $region17: #{bottleneck_forward.6} parent=11 // pred_check
        %p193 = pneg %p81
      $region18: #{bottleneck_forward.6} parent=11 // pred_check_branch
        %195 = sbr.rel (%p193) target = $region20
      $region19: #{bottleneck_forward.6} parent=11 // pred_region
        _
      $region20: #{bottleneck_forward.6} parent=11 // pred_fallthru
        _
      // Predicated region
      $region21: #{bottleneck_forward.6} parent=11 // pred_check
        %p196 = pneg %p102
      $region22: #{bottleneck_forward.6} parent=11 // pred_check_branch
        %198 = sbr.rel (%p196) target = $region24
      $region23: #{bottleneck_forward.6} parent=11 // pred_region
        _
      $region24: #{bottleneck_forward.6} parent=11 // pred_fallthru
        _
      // Predicated region
      $region25: #{bottleneck_forward.6} parent=11 // pred_check
        %p199 = pneg %p123
      $region26: #{bottleneck_forward.6} parent=11 // pred_check_branch
        %201 = sbr.rel (%p199) target = $region28
      $region27: #{bottleneck_forward.6} parent=11 // pred_region
        _
      $region28: #{bottleneck_forward.6} parent=11 // pred_fallthru
        _
    $region12: #{bottleneck_forward.6} parent=5 // pred_fallthru
      _
    %p202 = scmp.lt.s32.totalorder %s13, 2
    // Predicated region
    $region29: #{bottleneck_forward.6} parent=5 // pred_check
      %p203 = pneg %p202
    $region30: #{bottleneck_forward.6} parent=5 // pred_check_branch
      %205 = sbr.rel (%p203) target = $region32
    $region31: #{bottleneck_forward.6} parent=5 // pred_region
      // Predicated region
      $region33: #{bottleneck_forward.6} parent=31 // pred_check
        %p206 = pneg %p33
      $region34: #{bottleneck_forward.6} parent=31 // pred_check_branch
        %208 = sbr.rel (%p206) target = $region36
      $region35: #{bottleneck_forward.6} parent=31 // pred_region
        %p209 = scmp.lt.s32.totalorder %s13, 1
        %s210 = scalar_select %p209, %s13, 1
        %s211 = smul.addr %s210, 41
        %s212 = smul.addr %s211, 8
        %s213 = scalar_lea.vmem %s0, %s212
      $region36: #{bottleneck_forward.6} parent=31 // pred_fallthru
        _
    $region32: #{bottleneck_forward.6} parent=5 // pred_fallthru
      _
    %p214 = scmp.le.s32.totalorder 1, %s13
    %p215 = scmp.lt.s32.totalorder %s13, 3
    %p216 = pnand %p214, %p215
    %p217 = pneg %p216
    // Predicated region
    $region37: #{bottleneck_forward.6} parent=5 // pred_check
      _
    $region38: #{bottleneck_forward.6} parent=5 // pred_check_branch
      %219 = sbr.rel (%p216) target = $region40
    $region39: #{bottleneck_forward.6} parent=5 // pred_region
      %s220 = ssub.s32 %s13, 1
      %p221 = scmp.lt.s32.totalorder %s18, 1
      %s222 = scalar_select %p221, %s18, 1
      %s223 = smul.addr %s222, 41
      %s224 = smul.addr %s223, 8
      %s225 = scalar_lea.vmem %s0, %s224
      %p226 = pneg %p39
      %p227 = pneg %p36
      %p228 = pneg %p60
      %p229 = pneg %p57
      %p230 = pneg %p81
      %p231 = pneg %p78
      %p232 = pneg %p102
      %p233 = pneg %p99
      %p234 = pneg %p123
      %p235 = pneg %p120
      %p236 = pneg %p149
      %p237 = pneg %p146
      %p238 = scmp.lt.s32.totalorder %s18, 1
      %s239 = scalar_select %p238, %s18, 1
      %s240 = scalar_lea.vmem %s5, %s239
      %p241 = pneg %p175
      %p242 = pneg %p172
      %p243 = scmp.lt.s32.totalorder %s18, 1
      %s244 = scalar_select %p243, %s18, 1
      %s245 = scalar_lea.vmem %s6, %s244
      %p246 = scmp.lt.s32.totalorder %s18, 1
      %s247 = scalar_select %p246, %s18, 1
      %s248 = smul.addr %s247, 41
      %s249 = smul.addr %s248, 8
      %s250 = scalar_lea.vmem %s0, %s249
      %p251 = scmp.lt.s32.totalorder %s18, 1
      %s252 = scalar_select %p251, %s18, 1
      %s253 = scalar_lea.vmem %s5, %s252
      %p254 = scmp.lt.s32.totalorder %s18, 1
      %s255 = scalar_select %p254, %s18, 1
      %s256 = scalar_lea.vmem %s6, %s255
      %v257 = vld [vmem:[%s250] sm:$0xff]
      %v258 = vld [vmem:[%s250 + $0x8] sm:$0xff]
      %v259 = vld [vmem:[%s250 + $0x10] sm:$0xff]
      %v260 = vld [vmem:[%s250 + $0x18] sm:$0xff]
      %v261 = vld [vmem:[%s250 + $0x20] sm:$0xff]
      %v262 = vld [vmem:[%s250 + $0x28] sm:$0xff]
      %v263 = vld [vmem:[%s250 + $0x30] sm:$0xff]
      %v264 = vld [vmem:[%s250 + $0x38] sm:$0xff]
      %v265 = vld [vmem:[%s250 + $0x40] sm:$0xff]
      %v266 = vld [vmem:[%s250 + $0x48] sm:$0xff]
      %v267 = vld [vmem:[%s250 + $0x50] sm:$0xff]
      %v268 = vld [vmem:[%s250 + $0x58] sm:$0xff]
      %v269 = vld [vmem:[%s250 + $0x60] sm:$0xff]
      %v270 = vld [vmem:[%s250 + $0x68] sm:$0xff]
      %v271 = vld [vmem:[%s250 + $0x70] sm:$0xff]
      %v272 = vld [vmem:[%s250 + $0x78] sm:$0xff]
      %v273 = vld [vmem:[%s250 + $0x80] sm:$0xff]
      %v274 = vld [vmem:[%s250 + $0x88] sm:$0xff]
      %v275 = vld [vmem:[%s250 + $0x90] sm:$0xff]
      %v276 = vld [vmem:[%s250 + $0x98] sm:$0xff]
      %v277 = vld [vmem:[%s250 + $0xa0] sm:$0xff]
      %v278 = vld [vmem:[%s250 + $0xa8] sm:$0xff]
      %v279 = vld [vmem:[%s250 + $0xb0] sm:$0xff]
      %v280 = vld [vmem:[%s250 + $0xb8] sm:$0xff]
      %v281 = vld [vmem:[%s250 + $0xc0] sm:$0xff]
      %v282 = vld [vmem:[%s250 + $0xc8] sm:$0xff]
      %v283 = vld [vmem:[%s250 + $0xd0] sm:$0xff]
      %v284 = vld [vmem:[%s250 + $0xd8] sm:$0xff]
      %v285 = vld [vmem:[%s250 + $0xe0] sm:$0xff]
      %v286 = vld [vmem:[%s250 + $0xe8] sm:$0xff]
      %v287 = vld [vmem:[%s250 + $0xf0] sm:$0xff]
      %v288 = vld [vmem:[%s250 + $0xf8] sm:$0xff]
      %v289 = vld [vmem:[%s250 + $0x100] sm:$0xff]
      %v290 = vld [vmem:[%s250 + $0x108] sm:$0xff]
      %v291 = vld [vmem:[%s250 + $0x110] sm:$0xff]
      %v292 = vld [vmem:[%s250 + $0x118] sm:$0xff]
      %v293 = vld [vmem:[%s250 + $0x120] sm:$0xff]
      %v294 = vld [vmem:[%s250 + $0x128] sm:$0xff]
      %v295 = vld [vmem:[%s250 + $0x130] sm:$0xff]
      %v296 = vld [vmem:[%s250 + $0x138] sm:$0xff]
      %v297 = vld [vmem:[%s250 + $0x140] sm:$0xff]
      %v298 = vld [vmem:[%s2] sm:$0x1]
      %v300 = vlaneseq
      %v301 = vshrl.u32 %v300, 7
      %v302 = vsub.s32 0, %v301
      %v303 = vrot.slane %v298, %v302
      %v305 = vmul.f32 %v257, %v303
      %v306 = vmul.f32 %v258, %v303
      %v307 = vmul.f32 %v259, %v303
      %v308 = vmul.f32 %v260, %v303
      %v309 = vmul.f32 %v261, %v303
      %v310 = vmul.f32 %v262, %v303
      %v311 = vmul.f32 %v263, %v303
      %v312 = vmul.f32 %v264, %v303
      %v313 = vmul.f32 %v265, %v303
      %v314 = vmul.f32 %v266, %v303
      %v315 = vmul.f32 %v267, %v303
      %v316 = vmul.f32 %v268, %v303
      %v317 = vmul.f32 %v269, %v303
      %v318 = vmul.f32 %v270, %v303
      %v319 = vmul.f32 %v271, %v303
      %v320 = vmul.f32 %v272, %v303
      %v321 = vmul.f32 %v273, %v303
      %v322 = vmul.f32 %v274, %v303
      %v323 = vmul.f32 %v275, %v303
      %v324 = vmul.f32 %v276, %v303
      %v325 = vmul.f32 %v277, %v303
      %v326 = vmul.f32 %v278, %v303
      %v327 = vmul.f32 %v279, %v303
      %v328 = vmul.f32 %v280, %v303
      %v329 = vmul.f32 %v281, %v303
      %v330 = vmul.f32 %v282, %v303
      %v331 = vmul.f32 %v283, %v303
      %v332 = vmul.f32 %v284, %v303
      %v333 = vmul.f32 %v285, %v303
      %v334 = vmul.f32 %v286, %v303
      %v335 = vmul.f32 %v287, %v303
      %v336 = vmul.f32 %v288, %v303
      %v337 = vmul.f32 %v289, %v303
      %v338 = vmul.f32 %v290, %v303
      %v339 = vmul.f32 %v291, %v303
      %v340 = vmul.f32 %v292, %v303
      %v341 = vmul.f32 %v293, %v303
      %v342 = vmul.f32 %v294, %v303
      %v343 = vmul.f32 %v295, %v303
      %v344 = vmul.f32 %v296, %v303
      %v345 = vmul.f32 %v297, %v303
      %v346 = vld [vmem:[%s3] sm:$0x1]
      %v348 = vlaneseq
      %v349 = vshrl.u32 %v348, 7
      %v350 = vsub.s32 0, %v349
      %v351 = vrot.slane %v346, %v350
      %v353 = vadd.f32 %v305, %v351
      %v354 = vadd.f32 %v306, %v351
      %v355 = vadd.f32 %v307, %v351
      %v356 = vadd.f32 %v308, %v351
      %v357 = vadd.f32 %v309, %v351
      %v358 = vadd.f32 %v310, %v351
      %v359 = vadd.f32 %v311, %v351
      %v360 = vadd.f32 %v312, %v351
      %v361 = vadd.f32 %v313, %v351
      %v362 = vadd.f32 %v314, %v351
      %v363 = vadd.f32 %v315, %v351
      %v364 = vadd.f32 %v316, %v351
      %v365 = vadd.f32 %v317, %v351
      %v366 = vadd.f32 %v318, %v351
      %v367 = vadd.f32 %v319, %v351
      %v368 = vadd.f32 %v320, %v351
      %v369 = vadd.f32 %v321, %v351
      %v370 = vadd.f32 %v322, %v351
      %v371 = vadd.f32 %v323, %v351
      %v372 = vadd.f32 %v324, %v351
      %v373 = vadd.f32 %v325, %v351
      %v374 = vadd.f32 %v326, %v351
      %v375 = vadd.f32 %v327, %v351
      %v376 = vadd.f32 %v328, %v351
      %v377 = vadd.f32 %v329, %v351
      %v378 = vadd.f32 %v330, %v351
      %v379 = vadd.f32 %v331, %v351
      %v380 = vadd.f32 %v332, %v351
      %v381 = vadd.f32 %v333, %v351
      %v382 = vadd.f32 %v334, %v351
      %v383 = vadd.f32 %v335, %v351
      %v384 = vadd.f32 %v336, %v351
      %v385 = vadd.f32 %v337, %v351
      %v386 = vadd.f32 %v338, %v351
      %v387 = vadd.f32 %v339, %v351
      %v388 = vadd.f32 %v340, %v351
      %v389 = vadd.f32 %v341, %v351
      %v390 = vadd.f32 %v342, %v351
      %v391 = vadd.f32 %v343, %v351
      %v392 = vadd.f32 %v344, %v351
      %v393 = vadd.f32 %v345, %v351
      %v394 = vmax.f32 %v353, 0.0
      %v395 = vmax.f32 %v354, 0.0
      %v396 = vmax.f32 %v355, 0.0
      %v397 = vmax.f32 %v356, 0.0
      %v398 = vmax.f32 %v357, 0.0
      %v399 = vmax.f32 %v358, 0.0
      %v400 = vmax.f32 %v359, 0.0
      %v401 = vmax.f32 %v360, 0.0
      %v402 = vmax.f32 %v361, 0.0
      %v403 = vmax.f32 %v362, 0.0
      %v404 = vmax.f32 %v363, 0.0
      %v405 = vmax.f32 %v364, 0.0
      %v406 = vmax.f32 %v365, 0.0
      %v407 = vmax.f32 %v366, 0.0
      %v408 = vmax.f32 %v367, 0.0
      %v409 = vmax.f32 %v368, 0.0
      %v410 = vmax.f32 %v369, 0.0
      %v411 = vmax.f32 %v370, 0.0
      %v412 = vmax.f32 %v371, 0.0
      %v413 = vmax.f32 %v372, 0.0
      %v414 = vmax.f32 %v373, 0.0
      %v415 = vmax.f32 %v374, 0.0
      %v416 = vmax.f32 %v375, 0.0
      %v417 = vmax.f32 %v376, 0.0
      %v418 = vmax.f32 %v377, 0.0
      %v419 = vmax.f32 %v378, 0.0
      %v420 = vmax.f32 %v379, 0.0
      %v421 = vmax.f32 %v380, 0.0
      %v422 = vmax.f32 %v381, 0.0
      %v423 = vmax.f32 %v382, 0.0
      %v424 = vmax.f32 %v383, 0.0
      %v425 = vmax.f32 %v384, 0.0
      %v426 = vmax.f32 %v385, 0.0
      %v427 = vmax.f32 %v386, 0.0
      %v428 = vmax.f32 %v387, 0.0
      %v429 = vmax.f32 %v388, 0.0
      %v430 = vmax.f32 %v389, 0.0
      %v431 = vmax.f32 %v390, 0.0
      %v432 = vmax.f32 %v391, 0.0
      %v433 = vmax.f32 %v392, 0.0
      %v434 = vmax.f32 %v393, 0.0
      %v435 = vld [vmem:[%s1] sm:$0xff]
      %v436 = vld [vmem:[%s1 + $0x8] sm:$0xff]
      %v437 = vld [vmem:[%s1 + $0x10] sm:$0xff]
      %v438 = vld [vmem:[%s1 + $0x18] sm:$0xff]
      %v439 = vld [vmem:[%s1 + $0x20] sm:$0xff]
      %v440 = vld [vmem:[%s1 + $0x28] sm:$0xff]
      %v441 = vld [vmem:[%s1 + $0x30] sm:$0xff]
      %v442 = vld [vmem:[%s1 + $0x38] sm:$0xff]
      %v443 = vld [vmem:[%s1 + $0x40] sm:$0xff]
      %v444 = vld [vmem:[%s1 + $0x48] sm:$0xff]
      %v445 = vld [vmem:[%s1 + $0x50] sm:$0xff]
      %v446 = vld [vmem:[%s1 + $0x58] sm:$0xff]
      %v447 = vld [vmem:[%s1 + $0x60] sm:$0xff]
      %v448 = vld [vmem:[%s1 + $0x68] sm:$0xff]
      %v449 = vld [vmem:[%s1 + $0x70] sm:$0xff]
      %v450 = vld [vmem:[%s1 + $0x78] sm:$0xff]
      %v451 = vld [vmem:[%s1 + $0x80] sm:$0xff]
      %v452 = vld [vmem:[%s1 + $0x88] sm:$0xff]
      %v453 = vld [vmem:[%s1 + $0x90] sm:$0xff]
      %v454 = vld [vmem:[%s1 + $0x98] sm:$0xff]
      %v455 = vld [vmem:[%s1 + $0xa0] sm:$0xff]
      %v456 = vld [vmem:[%s1 + $0xa8] sm:$0xff]
      %v457 = vld [vmem:[%s1 + $0xb0] sm:$0xff]
      %v458 = vld [vmem:[%s1 + $0xb8] sm:$0xff]
      %v459 = vld [vmem:[%s1 + $0xc0] sm:$0xff]
      %v460 = vld [vmem:[%s1 + $0xc8] sm:$0xff]
      %v461 = vld [vmem:[%s1 + $0xd0] sm:$0xff]
      %v462 = vld [vmem:[%s1 + $0xd8] sm:$0xff]
      %v463 = vld [vmem:[%s1 + $0xe0] sm:$0xff]
      %v464 = vld [vmem:[%s1 + $0xe8] sm:$0xff]
      %v465 = vld [vmem:[%s1 + $0xf0] sm:$0xff]
      %v466 = vld [vmem:[%s1 + $0xf8] sm:$0xff]
      %v467 = vld [vmem:[%s1 + $0x100] sm:$0xff]
      %v468 = vld [vmem:[%s1 + $0x108] sm:$0xff]
      %v469 = vld [vmem:[%s1 + $0x110] sm:$0xff]
      %v470 = vld [vmem:[%s1 + $0x118] sm:$0xff]
      %v471 = vld [vmem:[%s1 + $0x120] sm:$0xff]
      %v472 = vld [vmem:[%s1 + $0x128] sm:$0xff]
      %v473 = vld [vmem:[%s1 + $0x130] sm:$0xff]
      %v474 = vld [vmem:[%s1 + $0x138] sm:$0xff]
      %v475 = vld [vmem:[%s1 + $0x140] sm:$0xff]
      %477 = vset.pattern.permute.xlu0 0
      %478 = vperm.xlu0 %477, %v435
      %v479 = vpop.permute.xlu0 %478
      %482 = vset.pattern.permute.xlu0 0
      %483 = vperm.xlu0 %482, %v436
      %v484 = vpop.permute.xlu0 %483
      %487 = vset.pattern.permute.xlu0 0
      %488 = vperm.xlu0 %487, %v437
      %v489 = vpop.permute.xlu0 %488
      %492 = vset.pattern.permute.xlu0 0
      %493 = vperm.xlu0 %492, %v438
      %v494 = vpop.permute.xlu0 %493
      %497 = vset.pattern.permute.xlu0 0
      %498 = vperm.xlu0 %497, %v439
      %v499 = vpop.permute.xlu0 %498
      %502 = vset.pattern.permute.xlu0 0
      %503 = vperm.xlu0 %502, %v440
      %v504 = vpop.permute.xlu0 %503
      %507 = vset.pattern.permute.xlu0 0
      %508 = vperm.xlu0 %507, %v441
      %v509 = vpop.permute.xlu0 %508
      %512 = vset.pattern.permute.xlu0 0
      %513 = vperm.xlu0 %512, %v442
      %v514 = vpop.permute.xlu0 %513
      %517 = vset.pattern.permute.xlu0 0
      %518 = vperm.xlu0 %517, %v443
      %v519 = vpop.permute.xlu0 %518
      %522 = vset.pattern.permute.xlu0 0
      %523 = vperm.xlu0 %522, %v444
      %v524 = vpop.permute.xlu0 %523
      %527 = vset.pattern.permute.xlu0 0
      %528 = vperm.xlu0 %527, %v445
      %v529 = vpop.permute.xlu0 %528
      %532 = vset.pattern.permute.xlu0 0
      %533 = vperm.xlu0 %532, %v446
      %v534 = vpop.permute.xlu0 %533
      %537 = vset.pattern.permute.xlu0 0
      %538 = vperm.xlu0 %537, %v447
      %v539 = vpop.permute.xlu0 %538
      %542 = vset.pattern.permute.xlu0 0
      %543 = vperm.xlu0 %542, %v448
      %v544 = vpop.permute.xlu0 %543
      %547 = vset.pattern.permute.xlu0 0
      %548 = vperm.xlu0 %547, %v449
      %v549 = vpop.permute.xlu0 %548
      %552 = vset.pattern.permute.xlu0 0
      %553 = vperm.xlu0 %552, %v450
      %v554 = vpop.permute.xlu0 %553
      %557 = vset.pattern.permute.xlu0 0
      %558 = vperm.xlu0 %557, %v451
      %v559 = vpop.permute.xlu0 %558
      %562 = vset.pattern.permute.xlu0 0
      %563 = vperm.xlu0 %562, %v452
      %v564 = vpop.permute.xlu0 %563
      %567 = vset.pattern.permute.xlu0 0
      %568 = vperm.xlu0 %567, %v453
      %v569 = vpop.permute.xlu0 %568
      %572 = vset.pattern.permute.xlu0 0
      %573 = vperm.xlu0 %572, %v454
      %v574 = vpop.permute.xlu0 %573
      %577 = vset.pattern.permute.xlu0 0
      %578 = vperm.xlu0 %577, %v455
      %v579 = vpop.permute.xlu0 %578
      %582 = vset.pattern.permute.xlu0 0
      %583 = vperm.xlu0 %582, %v456
      %v584 = vpop.permute.xlu0 %583
      %587 = vset.pattern.permute.xlu0 0
      %588 = vperm.xlu0 %587, %v457
      %v589 = vpop.permute.xlu0 %588
      %592 = vset.pattern.permute.xlu0 0
      %593 = vperm.xlu0 %592, %v458
      %v594 = vpop.permute.xlu0 %593
      %597 = vset.pattern.permute.xlu0 0
      %598 = vperm.xlu0 %597, %v459
      %v599 = vpop.permute.xlu0 %598
      %602 = vset.pattern.permute.xlu0 0
      %603 = vperm.xlu0 %602, %v460
      %v604 = vpop.permute.xlu0 %603
      %607 = vset.pattern.permute.xlu0 0
      %608 = vperm.xlu0 %607, %v461
      %v609 = vpop.permute.xlu0 %608
      %612 = vset.pattern.permute.xlu0 0
      %613 = vperm.xlu0 %612, %v462
      %v614 = vpop.permute.xlu0 %613
      %617 = vset.pattern.permute.xlu0 0
      %618 = vperm.xlu0 %617, %v463
      %v619 = vpop.permute.xlu0 %618
      %622 = vset.pattern.permute.xlu0 0
      %623 = vperm.xlu0 %622, %v464
      %v624 = vpop.permute.xlu0 %623
      %627 = vset.pattern.permute.xlu0 0
      %628 = vperm.xlu0 %627, %v465
      %v629 = vpop.permute.xlu0 %628
      %632 = vset.pattern.permute.xlu0 0
      %633 = vperm.xlu0 %632, %v466
      %v634 = vpop.permute.xlu0 %633
      %637 = vset.pattern.permute.xlu0 0
      %638 = vperm.xlu0 %637, %v467
      %v639 = vpop.permute.xlu0 %638
      %642 = vset.pattern.permute.xlu0 0
      %643 = vperm.xlu0 %642, %v468
      %v644 = vpop.permute.xlu0 %643
      %647 = vset.pattern.permute.xlu0 0
      %648 = vperm.xlu0 %647, %v469
      %v649 = vpop.permute.xlu0 %648
      %652 = vset.pattern.permute.xlu0 0
      %653 = vperm.xlu0 %652, %v470
      %v654 = vpop.permute.xlu0 %653
      %657 = vset.pattern.permute.xlu0 0
      %658 = vperm.xlu0 %657, %v471
      %v659 = vpop.permute.xlu0 %658
      %662 = vset.pattern.permute.xlu0 0
      %663 = vperm.xlu0 %662, %v472
      %v664 = vpop.permute.xlu0 %663
      %667 = vset.pattern.permute.xlu0 0
      %668 = vperm.xlu0 %667, %v473
      %v669 = vpop.permute.xlu0 %668
      %672 = vset.pattern.permute.xlu0 0
      %673 = vperm.xlu0 %672, %v474
      %v674 = vpop.permute.xlu0 %673
      %677 = vset.pattern.permute.xlu0 0
      %678 = vperm.xlu0 %677, %v475
      %v679 = vpop.permute.xlu0 %678
      %v681 = vmul.f32 %v394, %v479
      %v682 = vmul.f32 %v395, %v484
      %v683 = vmul.f32 %v396, %v489
      %v684 = vmul.f32 %v397, %v494
      %v685 = vmul.f32 %v398, %v499
      %v686 = vmul.f32 %v399, %v504
      %v687 = vmul.f32 %v400, %v509
      %v688 = vmul.f32 %v401, %v514
      %v689 = vmul.f32 %v402, %v519
      %v690 = vmul.f32 %v403, %v524
      %v691 = vmul.f32 %v404, %v529
      %v692 = vmul.f32 %v405, %v534
      %v693 = vmul.f32 %v406, %v539
      %v694 = vmul.f32 %v407, %v544
      %v695 = vmul.f32 %v408, %v549
      %v696 = vmul.f32 %v409, %v554
      %v697 = vmul.f32 %v410, %v559
      %v698 = vmul.f32 %v411, %v564
      %v699 = vmul.f32 %v412, %v569
      %v700 = vmul.f32 %v413, %v574
      %v701 = vmul.f32 %v414, %v579
      %v702 = vmul.f32 %v415, %v584
      %v703 = vmul.f32 %v416, %v589
      %v704 = vmul.f32 %v417, %v594
      %v705 = vmul.f32 %v418, %v599
      %v706 = vmul.f32 %v419, %v604
      %v707 = vmul.f32 %v420, %v609
      %v708 = vmul.f32 %v421, %v614
      %v709 = vmul.f32 %v422, %v619
      %v710 = vmul.f32 %v423, %v624
      %v711 = vmul.f32 %v424, %v629
      %v712 = vmul.f32 %v425, %v634
      %v713 = vmul.f32 %v426, %v639
      %v714 = vmul.f32 %v427, %v644
      %v715 = vmul.f32 %v428, %v649
      %v716 = vmul.f32 %v429, %v654
      %v717 = vmul.f32 %v430, %v659
      %v718 = vmul.f32 %v431, %v664
      %v719 = vmul.f32 %v432, %v669
      %v720 = vmul.f32 %v433, %v674
      %v721 = vmul.f32 %v434, %v679
      %v722 = vld [vmem:[%s4] sm:$0xff]
      %v723 = vld [vmem:[%s4 + $0x8] sm:$0xff]
      %v724 = vld [vmem:[%s4 + $0x10] sm:$0xff]
      %v725 = vld [vmem:[%s4 + $0x18] sm:$0xff]
      %v726 = vld [vmem:[%s4 + $0x20] sm:$0xff]
      %v727 = vld [vmem:[%s4 + $0x28] sm:$0xff]
      %v728 = vld [vmem:[%s4 + $0x30] sm:$0xff]
      %v729 = vld [vmem:[%s4 + $0x38] sm:$0xff]
      %v730 = vld [vmem:[%s4 + $0x40] sm:$0xff]
      %v731 = vld [vmem:[%s4 + $0x48] sm:$0xff]
      %v732 = vld [vmem:[%s4 + $0x50] sm:$0xff]
      %v733 = vld [vmem:[%s4 + $0x58] sm:$0xff]
      %v734 = vld [vmem:[%s4 + $0x60] sm:$0xff]
      %v735 = vld [vmem:[%s4 + $0x68] sm:$0xff]
      %v736 = vld [vmem:[%s4 + $0x70] sm:$0xff]
      %v737 = vld [vmem:[%s4 + $0x78] sm:$0xff]
      %738 = vmatprep.subr.mxu0 0.0
      %739 = vmatpush1.msra.mxu0 %v722
      %740 = vmatprep.subr.mxu0 0.0
      %741 = vmatpush1.msra.mxu0 %v723
      %742 = vmatprep.subr.mxu0 0.0
      %743 = vmatpush1.msra.mxu0 %v724
      %744 = vmatprep.subr.mxu0 0.0
      %745 = vmatpush1.msra.mxu0 %v725
      %746 = vmatprep.subr.mxu0 0.0
      %747 = vmatpush1.msra.mxu0 %v726
      %748 = vmatprep.subr.mxu0 0.0
      %749 = vmatpush1.msra.mxu0 %v727
      %750 = vmatprep.subr.mxu0 0.0
      %751 = vmatpush1.msra.mxu0 %v728
      %752 = vmatprep.subr.mxu0 0.0
      %753 = vmatpush1.msra.mxu0 %v729
      %754 = vmatprep.subr.mxu0 0.0
      %755 = vmatpush1.msra.mxu0 %v730
      %756 = vmatprep.subr.mxu0 0.0
      %757 = vmatpush1.msra.mxu0 %v731
      %758 = vmatprep.subr.mxu0 0.0
      %759 = vmatpush1.msra.mxu0 %v732
      %760 = vmatprep.subr.mxu0 0.0
      %761 = vmatpush1.msra.mxu0 %v733
      %762 = vmatprep.subr.mxu0 0.0
      %763 = vmatpush1.msra.mxu0 %v734
      %764 = vmatprep.subr.mxu0 0.0
      %765 = vmatpush1.msra.mxu0 %v735
      %766 = vmatprep.subr.mxu0 0.0
      %767 = vmatpush1.msra.mxu0 %v736
      %768 = vmatprep.subr.mxu0 0.0
      %769 = vmatpush1.msra.mxu0 %v737
      %770 = vmatprep.subr.mxu0 0.0
      %771 = vmatpush1.msra.mxu0 0.0
      %772 = vmatprep.subr.mxu0 0.0
      %773 = vmatpush1.msra.mxu0 0.0
      %774 = vmatprep.subr.mxu0 0.0
      %775 = vmatpush1.msra.mxu0 0.0
      %776 = vmatprep.subr.mxu0 0.0
      %777 = vmatpush1.msra.mxu0 0.0
      %778 = vmatprep.subr.mxu0 0.0
      %779 = vmatpush1.msra.mxu0 0.0
      %780 = vmatprep.subr.mxu0 0.0
      %781 = vmatpush1.msra.mxu0 0.0
      %782 = vmatprep.subr.mxu0 0.0
      %783 = vmatpush1.msra.mxu0 0.0
      %784 = vmatprep.subr.mxu0 0.0
      %785 = vmatpush1.msra.mxu0 0.0
      %786 = vmatprep.subr.mxu0 0.0
      %787 = vmatpush1.msra.mxu0 0.0
      %788 = vmatprep.subr.mxu0 0.0
      %789 = vmatpush1.msra.mxu0 0.0
      %790 = vmatprep.subr.mxu0 0.0
      %791 = vmatpush1.msra.mxu0 0.0
      %792 = vmatprep.subr.mxu0 0.0
      %793 = vmatpush1.msra.mxu0 0.0
      %794 = vmatprep.subr.mxu0 0.0
      %795 = vmatpush1.msra.mxu0 0.0
      %796 = vmatprep.subr.mxu0 0.0
      %797 = vmatpush1.msra.mxu0 0.0
      %798 = vmatprep.subr.mxu0 0.0
      %799 = vmatpush1.msra.mxu0 0.0
      %800 = vmatprep.subr.mxu0 0.0
      %801 = vmatpush1.msra.mxu0 0.0
      %802 = vmatprep.mubr.f32.mxu0 0.0
      %803 = vmatmul.mubr.f32.gmra.mrb[0].mxu0 %v681
      %v804 = vpop.f32.mrb[0].mxu0
      %v805 = vadd.f32 0.0, %v804
      %v806 = vpop.f32.mrb[0].mxu0
      %807 = vmatprep.mubr.f32.mxu0 0.0
      %808 = vmatmul.mubr.f32.gmra.mrb[0].mxu0 %v682
      %v809 = vpop.f32.mrb[0].mxu0
      %v810 = vadd.f32 0.0, %v809
      %v811 = vpop.f32.mrb[0].mxu0
      %812 = vmatprep.mubr.f32.mxu0 0.0
      %813 = vmatmul.mubr.f32.gmra.mrb[0].mxu0 %v683
      %v814 = vpop.f32.mrb[0].mxu0
      %v815 = vadd.f32 0.0, %v814
      %v816 = vpop.f32.mrb[0].mxu0
      %817 = vmatprep.mubr.f32.mxu0 0.0
      %818 = vmatmul.mubr.f32.gmra.mrb[0].mxu0 %v684
      %v819 = vpop.f32.mrb[0].mxu0
      %v820 = vadd.f32 0.0, %v819
      %v821 = vpop.f32.mrb[0].mxu0
      %822 = vmatprep.mubr.f32.mxu0 0.0
      %823 = vmatmul.mubr.f32.gmra.mrb[0].mxu0 %v685
      %v824 = vpop.f32.mrb[0].mxu0
      %v825 = vadd.f32 0.0, %v824
      %v826 = vpop.f32.mrb[0].mxu0
      %827 = vmatprep.mubr.f32.mxu0 0.0
      %828 = vmatmul.mubr.f32.gmra.mrb[0].mxu0 %v686
      %v829 = vpop.f32.mrb[0].mxu0
      %v830 = vadd.f32 0.0, %v829
      %v831 = vpop.f32.mrb[0].mxu0
      %832 = vmatprep.mubr.f32.mxu0 0.0
      %833 = vmatmul.mubr.f32.gmra.mrb[0].mxu0 %v687
      %v834 = vpop.f32.mrb[0].mxu0
      %v835 = vadd.f32 0.0, %v834
      %v836 = vpop.f32.mrb[0].mxu0
      %837 = vmatprep.mubr.f32.mxu0 0.0
      %838 = vmatmul.mubr.f32.gmra.mrb[0].mxu0 %v688
      %v839 = vpop.f32.mrb[0].mxu0
      %v840 = vadd.f32 0.0, %v839
      %v841 = vpop.f32.mrb[0].mxu0
      %842 = vmatprep.mubr.f32.mxu0 0.0
      %843 = vmatmul.mubr.f32.gmra.mrb[0].mxu0 %v689
      %v844 = vpop.f32.mrb[0].mxu0
      %v845 = vadd.f32 0.0, %v844
      %v846 = vpop.f32.mrb[0].mxu0
      %847 = vmatprep.mubr.f32.mxu0 0.0
      %848 = vmatmul.mubr.f32.gmra.mrb[0].mxu0 %v690
      %v849 = vpop.f32.mrb[0].mxu0
      %v850 = vadd.f32 0.0, %v849
      %v851 = vpop.f32.mrb[0].mxu0
      %852 = vmatprep.mubr.f32.mxu0 0.0
      %853 = vmatmul.mubr.f32.gmra.mrb[0].mxu0 %v691
      %v854 = vpop.f32.mrb[0].mxu0
      %v855 = vadd.f32 0.0, %v854
      %v856 = vpop.f32.mrb[0].mxu0
      %857 = vmatprep.mubr.f32.mxu0 0.0
      %858 = vmatmul.mubr.f32.gmra.mrb[0].mxu0 %v692
      %v859 = vpop.f32.mrb[0].mxu0
      %v860 = vadd.f32 0.0, %v859
      %v861 = vpop.f32.mrb[0].mxu0
      %862 = vmatprep.mubr.f32.mxu0 0.0
      %863 = vmatmul.mubr.f32.gmra.mrb[0].mxu0 %v693
      %v864 = vpop.f32.mrb[0].mxu0
      %v865 = vadd.f32 0.0, %v864
      %v866 = vpop.f32.mrb[0].mxu0
      %867 = vmatprep.mubr.f32.mxu0 0.0
      %868 = vmatmul.mubr.f32.gmra.mrb[0].mxu0 %v694
      %v869 = vpop.f32.mrb[0].mxu0
      %v870 = vadd.f32 0.0, %v869
      %v871 = vpop.f32.mrb[0].mxu0
      %872 = vmatprep.mubr.f32.mxu0 0.0
      %873 = vmatmul.mubr.f32.gmra.mrb[0].mxu0 %v695
      %v874 = vpop.f32.mrb[0].mxu0
      %v875 = vadd.f32 0.0, %v874
      %v876 = vpop.f32.mrb[0].mxu0
      %877 = vmatprep.mubr.f32.mxu0 0.0
      %878 = vmatmul.mubr.f32.gmra.mrb[0].mxu0 %v696
      %v879 = vpop.f32.mrb[0].mxu0
      %v880 = vadd.f32 0.0, %v879
      %v881 = vpop.f32.mrb[0].mxu0
      %882 = vmatprep.mubr.f32.mxu0 0.0
      %883 = vmatmul.mubr.f32.gmra.mrb[0].mxu0 %v697
      %v884 = vpop.f32.mrb[0].mxu0
      %v885 = vadd.f32 0.0, %v884
      %v886 = vpop.f32.mrb[0].mxu0
      %887 = vmatprep.mubr.f32.mxu0 0.0
      %888 = vmatmul.mubr.f32.gmra.mrb[0].mxu0 %v698
      %v889 = vpop.f32.mrb[0].mxu0
      %v890 = vadd.f32 0.0, %v889
      %v891 = vpop.f32.mrb[0].mxu0
      %892 = vmatprep.mubr.f32.mxu0 0.0
      %893 = vmatmul.mubr.f32.gmra.mrb[0].mxu0 %v699
      %v894 = vpop.f32.mrb[0].mxu0
      %v895 = vadd.f32 0.0, %v894
      %v896 = vpop.f32.mrb[0].mxu0
      %897 = vmatprep.mubr.f32.mxu0 0.0
      %898 = vmatmul.mubr.f32.gmra.mrb[0].mxu0 %v700
      %v899 = vpop.f32.mrb[0].mxu0
      %v900 = vadd.f32 0.0, %v899
      %v901 = vpop.f32.mrb[0].mxu0
      %902 = vmatprep.mubr.f32.mxu0 0.0
      %903 = vmatmul.mubr.f32.gmra.mrb[0].mxu0 %v701
      %v904 = vpop.f32.mrb[0].mxu0
      %v905 = vadd.f32 0.0, %v904
      %v906 = vpop.f32.mrb[0].mxu0
      %907 = vmatprep.mubr.f32.mxu0 0.0
      %908 = vmatmul.mubr.f32.gmra.mrb[0].mxu0 %v702
      %v909 = vpop.f32.mrb[0].mxu0
      %v910 = vadd.f32 0.0, %v909
      %v911 = vpop.f32.mrb[0].mxu0
      %912 = vmatprep.mubr.f32.mxu0 0.0
      %913 = vmatmul.mubr.f32.gmra.mrb[0].mxu0 %v703
      %v914 = vpop.f32.mrb[0].mxu0
      %v915 = vadd.f32 0.0, %v914
      %v916 = vpop.f32.mrb[0].mxu0
      %917 = vmatprep.mubr.f32.mxu0 0.0
      %918 = vmatmul.mubr.f32.gmra.mrb[0].mxu0 %v704
      %v919 = vpop.f32.mrb[0].mxu0
      %v920 = vadd.f32 0.0, %v919
      %v921 = vpop.f32.mrb[0].mxu0
      %922 = vmatprep.mubr.f32.mxu0 0.0
      %923 = vmatmul.mubr.f32.gmra.mrb[0].mxu0 %v705
      %v924 = vpop.f32.mrb[0].mxu0
      %v925 = vadd.f32 0.0, %v924
      %v926 = vpop.f32.mrb[0].mxu0
      %927 = vmatprep.mubr.f32.mxu0 0.0
      %928 = vmatmul.mubr.f32.gmra.mrb[0].mxu0 %v706
      %v929 = vpop.f32.mrb[0].mxu0
      %v930 = vadd.f32 0.0, %v929
      %v931 = vpop.f32.mrb[0].mxu0
      %932 = vmatprep.mubr.f32.mxu0 0.0
      %933 = vmatmul.mubr.f32.gmra.mrb[0].mxu0 %v707
      %v934 = vpop.f32.mrb[0].mxu0
      %v935 = vadd.f32 0.0, %v934
      %v936 = vpop.f32.mrb[0].mxu0
      %937 = vmatprep.mubr.f32.mxu0 0.0
      %938 = vmatmul.mubr.f32.gmra.mrb[0].mxu0 %v708
      %v939 = vpop.f32.mrb[0].mxu0
      %v940 = vadd.f32 0.0, %v939
      %v941 = vpop.f32.mrb[0].mxu0
      %942 = vmatprep.mubr.f32.mxu0 0.0
      %943 = vmatmul.mubr.f32.gmra.mrb[0].mxu0 %v709
      %v944 = vpop.f32.mrb[0].mxu0
      %v945 = vadd.f32 0.0, %v944
      %v946 = vpop.f32.mrb[0].mxu0
      %947 = vmatprep.mubr.f32.mxu0 0.0
      %948 = vmatmul.mubr.f32.gmra.mrb[0].mxu0 %v710
      %v949 = vpop.f32.mrb[0].mxu0
      %v950 = vadd.f32 0.0, %v949
      %v951 = vpop.f32.mrb[0].mxu0
      %952 = vmatprep.mubr.f32.mxu0 0.0
      %953 = vmatmul.mubr.f32.gmra.mrb[0].mxu0 %v711
      %v954 = vpop.f32.mrb[0].mxu0
      %v955 = vadd.f32 0.0, %v954
      %v956 = vpop.f32.mrb[0].mxu0
      %957 = vmatprep.mubr.f32.mxu0 0.0
      %958 = vmatmul.mubr.f32.gmra.mrb[0].mxu0 %v712
      %v959 = vpop.f32.mrb[0].mxu0
      %v960 = vadd.f32 0.0, %v959
      %v961 = vpop.f32.mrb[0].mxu0
      %962 = vmatprep.mubr.f32.mxu0 0.0
      %963 = vmatmul.mubr.f32.gmra.mrb[0].mxu0 %v713
      %v964 = vpop.f32.mrb[0].mxu0
      %v965 = vadd.f32 0.0, %v964
      %v966 = vpop.f32.mrb[0].mxu0
      %967 = vmatprep.mubr.f32.mxu0 0.0
      %968 = vmatmul.mubr.f32.gmra.mrb[0].mxu0 %v714
      %v969 = vpop.f32.mrb[0].mxu0
      %v970 = vadd.f32 0.0, %v969
      %v971 = vpop.f32.mrb[0].mxu0
      %972 = vmatprep.mubr.f32.mxu0 0.0
      %973 = vmatmul.mubr.f32.gmra.mrb[0].mxu0 %v715
      %v974 = vpop.f32.mrb[0].mxu0
      %v975 = vadd.f32 0.0, %v974
      %v976 = vpop.f32.mrb[0].mxu0
      %977 = vmatprep.mubr.f32.mxu0 0.0
      %978 = vmatmul.mubr.f32.gmra.mrb[0].mxu0 %v716
      %v979 = vpop.f32.mrb[0].mxu0
      %v980 = vadd.f32 0.0, %v979
      %v981 = vpop.f32.mrb[0].mxu0
      %982 = vmatprep.mubr.f32.mxu0 0.0
      %983 = vmatmul.mubr.f32.gmra.mrb[0].mxu0 %v717
      %v984 = vpop.f32.mrb[0].mxu0
      %v985 = vadd.f32 0.0, %v984
      %v986 = vpop.f32.mrb[0].mxu0
      %987 = vmatprep.mubr.f32.mxu0 0.0
      %988 = vmatmul.mubr.f32.gmra.mrb[0].mxu0 %v718
      %v989 = vpop.f32.mrb[0].mxu0
      %v990 = vadd.f32 0.0, %v989
      %v991 = vpop.f32.mrb[0].mxu0
      %992 = vmatprep.mubr.f32.mxu0 0.0
      %993 = vmatmul.mubr.f32.gmra.mrb[0].mxu0 %v719
      %v994 = vpop.f32.mrb[0].mxu0
      %v995 = vadd.f32 0.0, %v994
      %v996 = vpop.f32.mrb[0].mxu0
      %997 = vmatprep.mubr.f32.mxu0 0.0
      %998 = vmatmul.mubr.f32.gmra.mrb[0].mxu0 %v720
      %v999 = vpop.f32.mrb[0].mxu0
      %v1000 = vadd.f32 0.0, %v999
      %v1001 = vpop.f32.mrb[0].mxu0
      %1002 = vmatprep.mubr.f32.mxu0 0.0
      %1003 = vmatmul.mubr.f32.gmra.mrb[0].mxu0 %v721
      %v1004 = vpop.f32.mrb[0].mxu0
      %v1005 = vadd.f32 0.0, %v1004
      %v1006 = vpop.f32.mrb[0].mxu0
      %1007 = vdwg.mxu0
      %v1008 = vadd.f32 %v805, %v810
      %v1009 = vadd.f32 %v1008, %v815
      %v1010 = vadd.f32 %v1009, %v820
      %v1011 = vadd.f32 %v1010, %v825
      %v1012 = vadd.f32 %v1011, %v830
      %v1013 = vadd.f32 %v1012, %v835
      %v1014 = vadd.f32 %v1013, %v840
      %v1015 = vadd.f32 %v1014, %v845
      %v1016 = vadd.f32 %v1015, %v850
      %v1017 = vadd.f32 %v1016, %v855
      %v1018 = vadd.f32 %v1017, %v860
      %v1019 = vadd.f32 %v1018, %v865
      %v1020 = vadd.f32 %v1019, %v870
      %v1021 = vadd.f32 %v1020, %v875
      %v1022 = vadd.f32 %v1021, %v880
      %v1023 = vadd.f32 %v1022, %v885
      %v1024 = vadd.f32 %v1023, %v890
      %v1025 = vadd.f32 %v1024, %v895
      %v1026 = vadd.f32 %v1025, %v900
      %v1027 = vadd.f32 %v1026, %v905
      %v1028 = vadd.f32 %v1027, %v910
      %v1029 = vadd.f32 %v1028, %v915
      %v1030 = vadd.f32 %v1029, %v920
      %v1031 = vadd.f32 %v1030, %v925
      %v1032 = vadd.f32 %v1031, %v930
      %v1033 = vadd.f32 %v1032, %v935
      %v1034 = vadd.f32 %v1033, %v940
      %v1035 = vadd.f32 %v1034, %v945
      %v1036 = vadd.f32 %v1035, %v950
      %v1037 = vadd.f32 %v1036, %v955
      %v1038 = vadd.f32 %v1037, %v960
      %v1039 = vadd.f32 %v1038, %v965
      %v1040 = vadd.f32 %v1039, %v970
      %v1041 = vadd.f32 %v1040, %v975
      %v1042 = vadd.f32 %v1041, %v980
      %v1043 = vadd.f32 %v1042, %v985
      %v1044 = vadd.f32 %v1043, %v990
      %v1045 = vadd.f32 %v1044, %v995
      %v1046 = vadd.f32 %v1045, %v1000
      %v1047 = vadd.f32 %v1046, %v1005
      %v1048 = vrot.slane %v1047, 4
      %v1049 = vadd.f32 %v1047, %v1048
      %v1050 = vrot.slane %v1049, 2
      %v1051 = vadd.f32 %v1049, %v1050
      %v1052 = vrot.slane %v1051, 1
      %v1053 = vadd.f32 %v1051, %v1052
      %1054 = vst [vmem:[%s253] sm:$0x1] %v1053
      %v1055 = vmul.f32 %v805, %v805
      %v1056 = vmul.f32 %v810, %v810
      %v1057 = vmul.f32 %v815, %v815
      %v1058 = vmul.f32 %v820, %v820
      %v1059 = vmul.f32 %v825, %v825
      %v1060 = vmul.f32 %v830, %v830
      %v1061 = vmul.f32 %v835, %v835
      %v1062 = vmul.f32 %v840, %v840
      %v1063 = vmul.f32 %v845, %v845
      %v1064 = vmul.f32 %v850, %v850
      %v1065 = vmul.f32 %v855, %v855
      %v1066 = vmul.f32 %v860, %v860
      %v1067 = vmul.f32 %v865, %v865
      %v1068 = vmul.f32 %v870, %v870
      %v1069 = vmul.f32 %v875, %v875
      %v1070 = vmul.f32 %v880, %v880
      %v1071 = vmul.f32 %v885, %v885
      %v1072 = vmul.f32 %v890, %v890
      %v1073 = vmul.f32 %v895, %v895
      %v1074 = vmul.f32 %v900, %v900
      %v1075 = vmul.f32 %v905, %v905
      %v1076 = vmul.f32 %v910, %v910
      %v1077 = vmul.f32 %v915, %v915
      %v1078 = vmul.f32 %v920, %v920
      %v1079 = vmul.f32 %v925, %v925
      %v1080 = vmul.f32 %v930, %v930
      %v1081 = vmul.f32 %v935, %v935
      %v1082 = vmul.f32 %v940, %v940
      %v1083 = vmul.f32 %v945, %v945
      %v1084 = vmul.f32 %v950, %v950
      %v1085 = vmul.f32 %v955, %v955
      %v1086 = vmul.f32 %v960, %v960
      %v1087 = vmul.f32 %v965, %v965
      %v1088 = vmul.f32 %v970, %v970
      %v1089 = vmul.f32 %v975, %v975
      %v1090 = vmul.f32 %v980, %v980
      %v1091 = vmul.f32 %v985, %v985
      %v1092 = vmul.f32 %v990, %v990
      %v1093 = vmul.f32 %v995, %v995
      %v1094 = vmul.f32 %v1000, %v1000
      %v1095 = vmul.f32 %v1005, %v1005
      %v1096 = vadd.f32 %v1055, %v1056
      %v1097 = vadd.f32 %v1096, %v1057
      %v1098 = vadd.f32 %v1097, %v1058
      %v1099 = vadd.f32 %v1098, %v1059
      %v1100 = vadd.f32 %v1099, %v1060
      %v1101 = vadd.f32 %v1100, %v1061
      %v1102 = vadd.f32 %v1101, %v1062
      %v1103 = vadd.f32 %v1102, %v1063
      %v1104 = vadd.f32 %v1103, %v1064
      %v1105 = vadd.f32 %v1104, %v1065
      %v1106 = vadd.f32 %v1105, %v1066
      %v1107 = vadd.f32 %v1106, %v1067
      %v1108 = vadd.f32 %v1107, %v1068
      %v1109 = vadd.f32 %v1108, %v1069
      %v1110 = vadd.f32 %v1109, %v1070
      %v1111 = vadd.f32 %v1110, %v1071
      %v1112 = vadd.f32 %v1111, %v1072
      %v1113 = vadd.f32 %v1112, %v1073
      %v1114 = vadd.f32 %v1113, %v1074
      %v1115 = vadd.f32 %v1114, %v1075
      %v1116 = vadd.f32 %v1115, %v1076
      %v1117 = vadd.f32 %v1116, %v1077
      %v1118 = vadd.f32 %v1117, %v1078
      %v1119 = vadd.f32 %v1118, %v1079
      %v1120 = vadd.f32 %v1119, %v1080
      %v1121 = vadd.f32 %v1120, %v1081
      %v1122 = vadd.f32 %v1121, %v1082
      %v1123 = vadd.f32 %v1122, %v1083
      %v1124 = vadd.f32 %v1123, %v1084
      %v1125 = vadd.f32 %v1124, %v1085
      %v1126 = vadd.f32 %v1125, %v1086
      %v1127 = vadd.f32 %v1126, %v1087
      %v1128 = vadd.f32 %v1127, %v1088
      %v1129 = vadd.f32 %v1128, %v1089
      %v1130 = vadd.f32 %v1129, %v1090
      %v1131 = vadd.f32 %v1130, %v1091
      %v1132 = vadd.f32 %v1131, %v1092
      %v1133 = vadd.f32 %v1132, %v1093
      %v1134 = vadd.f32 %v1133, %v1094
      %v1135 = vadd.f32 %v1134, %v1095
      %v1136 = vrot.slane %v1135, 4
      %v1137 = vadd.f32 %v1135, %v1136
      %v1138 = vrot.slane %v1137, 2
      %v1139 = vadd.f32 %v1137, %v1138
      %v1140 = vrot.slane %v1139, 1
      %v1141 = vadd.f32 %v1139, %v1140
      %1142 = vst [vmem:[%s256] sm:$0x1] %v1141
      %p1143 = scmp.lt.s32.totalorder %s18, 1
      %s1144 = scalar_select %p1143, %s18, 1
      %s1145 = scalar_lea.vmem %s5, %s1144
      %p1146 = scmp.lt.s32.totalorder %s18, 1
      %s1147 = scalar_select %p1146, %s18, 1
      %s1148 = scalar_lea.vmem %s6, %s1147
      // Predicated region
      $region41: #{bottleneck_forward.6} parent=39 // pred_check
        %p1149 = pneg %p146
      $region42: #{bottleneck_forward.6} parent=39 // pred_check_branch
        %1151 = sbr.rel (%p1149) target = $region44
      $region43: #{bottleneck_forward.6} parent=39 // pred_region
        _
      $region44: #{bottleneck_forward.6} parent=39 // pred_fallthru
        _
      // Predicated region
      $region45: #{bottleneck_forward.6} parent=39 // pred_check
        %p1152 = pneg %p172
      $region46: #{bottleneck_forward.6} parent=39 // pred_check_branch
        %1154 = sbr.rel (%p1152) target = $region48
      $region47: #{bottleneck_forward.6} parent=39 // pred_region
        _
      $region48: #{bottleneck_forward.6} parent=39 // pred_fallthru
        _
    $region40: #{bottleneck_forward.6} parent=5 // pred_fallthru
      _
    %p1155 = scmp.le.s32.totalorder 2, %s13
    // Predicated region
    $region49: #{bottleneck_forward.6} parent=5 // pred_check
      %p1156 = pneg %p1155
    $region50: #{bottleneck_forward.6} parent=5 // pred_check_branch
      %1158 = sbr.rel (%p1156) target = $region52
    $region51: #{bottleneck_forward.6} parent=5 // pred_region
      %s1159 = ssub.s32 %s13, 2
      // Predicated region
      $region53: #{bottleneck_forward.6} parent=51 // pred_check
        %p1160 = pneg %p152
      $region54: #{bottleneck_forward.6} parent=51 // pred_check_branch
        %1162 = sbr.rel (%p1160) target = $region56
      $region55: #{bottleneck_forward.6} parent=51 // pred_region
        %p1163 = scmp.lt.s32.totalorder %s19, 1
        %s1164 = scalar_select %p1163, %s19, 1
        %s1165 = scalar_lea.vmem %s5, %s1164
      $region56: #{bottleneck_forward.6} parent=51 // pred_fallthru
        _
      // Predicated region
      $region57: #{bottleneck_forward.6} parent=51 // pred_check
        %p1166 = pneg %p178
      $region58: #{bottleneck_forward.6} parent=51 // pred_check_branch
        %1168 = sbr.rel (%p1166) target = $region60
      $region59: #{bottleneck_forward.6} parent=51 // pred_region
        %p1169 = scmp.lt.s32.totalorder %s19, 1
        %s1170 = scalar_select %p1169, %s19, 1
        %s1171 = scalar_lea.vmem %s6, %s1170
      $region60: #{bottleneck_forward.6} parent=51 // pred_fallthru
        _
    $region52: #{bottleneck_forward.6} parent=5 // pred_fallthru
      _
  $region6: #{bottleneck_forward.6} parent=0 // loop_footer
    %s17 = sadd.s32 1, %s13
  $region7: #{bottleneck_forward.6} parent=0 // loop_footer_branch
    %12 = sbr.rel target = $region3
  $region8: #{bottleneck_forward.6} parent=0 // loop_exit
    _

// kernel: bottleneck_forward.7
$region0: #{bottleneck_forward.7}
  #allocation0 [shape = 'u32[]', space=smem, size = 0x4, offset = 0x4, fixed_abs, tag = 'smem constant byte address 0x4 - core index']
  #allocation1 [shape = 'u32[144,128]{1,0:T(1,128)}', space=vmem, size = 0x12000, scoped, tag = 'internal scratch']
  %s0 = inlined_call_operand.vmem [shape: f32[2,328,128], index: 0, kind: input, shape index: {}]
  %s1 = inlined_call_operand.vmem [shape: f32[2,328,128], index: 1, kind: input, shape index: {}]
  %s2 = inlined_call_operand.vmem [shape: f32[1,128], index: 2, kind: input, shape index: {}]
  %s3 = inlined_call_operand.vmem [shape: f32[1,128], index: 3, kind: input, shape index: {}]
  %s4 = inlined_call_operand.vmem [shape: f32[128,128], index: 4, kind: input, shape index: {}]
  %s5 = inlined_call_operand.vmem [shape: f32[1,128], index: 5, kind: input, shape index: {}]
  %s6 = inlined_call_operand.vmem [shape: f32[1,128], index: 6, kind: input, shape index: {}]
  %s7 = inlined_call_operand.vmem [shape: f32[2,328,128], index: 7, kind: output, shape index: {}]
  %s8 = sld [smem:[#allocation0]]
  $region61: #{bottleneck_forward.7} parent=0
    _
  %s10 = ssub.s32 1, %s8
  %s11 = scalar_select 0, %s10, %s8
  loop: start=0, step=1, limit=4
  $region2: #{bottleneck_forward.7} parent=0 // loop_pre_header
    _
  $region3: #{bottleneck_forward.7} parent=0 // loop_header
    %s13 = sphi 0, %s17
    %p14 = scmp.ge.s32.totalorder %s13, 4
    %s23 = sphi 0, %s25
    %s26 = sphi 0, %s23
    %s27 = sphi 0, %s26
    %s43 = sphi 0, %s27
    %s49 = sphi 0, %s51
    %s52 = sphi 0, %s49
    %s53 = sphi 0, %s52
    %s69 = sphi 0, %s53
    %s73 = sphi 0, %s73
    %s75 = sphi 0, %s73
    %s76 = sphi 0, %s75
    %s90 = sphi 0, %s76
    %s94 = sphi 0, %s94
    %s96 = sphi 0, %s94
    %s97 = sphi 0, %s96
    %s111 = sphi 0, %s97
    %s115 = sphi 0, %s115
    %s117 = sphi 0, %s115
    %s118 = sphi 0, %s117
    %s132 = sphi 0, %s118
    %s136 = sphi 0, %s136
    %s138 = sphi 0, %s136
    %s139 = sphi 0, %s138
    %s153 = sphi 0, %s139
    %s157 = sphi 0, %s157
    %s159 = sphi 0, %s157
    %s160 = sphi 0, %s159
    %s174 = sphi 0, %s160
    %s180 = sphi 0, %s182
    %s183 = sphi 0, %s180
    %s184 = sphi 0, %s183
    %s200 = sphi 0, %s184
  $region4: #{bottleneck_forward.7} parent=0 // loop_header_branch
    %16 = sbr.rel (%p14) target = $region8
  $region5: #{bottleneck_forward.7} parent=0 // loop_body
    %s18 = ssub.s32 %s13, 1
    %s19 = ssub.s32 %s13, 2
    %s20 = sadd.s32 %s13, 1
    %s21 = ssub.s32 %s13, %s20
    %p22 = scmp.eq.s32.totalorder %s21, 0
    %s24 = sadd.s32 %s23, 1
    %s25 = scalar_select %p22, %s23, %s24
    %p28 = pneg %p22
    %p29 = scmp.eq.s32.totalorder %s13, 1
    %p30 = por %p28, %p29
    %p31 = scmp.ne.s32.totalorder %s23, %s26
    %p32 = scmp.eq.s32.totalorder %s13, 0
    %p33 = por %p31, %p32
    %p34 = scmp.ne.s32.totalorder %s23, %s26
    %p35 = scmp.eq.s32.totalorder %s18, 1
    %p36 = por %p34, %p35
    %p37 = scmp.ne.s32.totalorder %s26, %s27
    %p38 = scmp.eq.s32.totalorder %s18, 0
    %p39 = por %p37, %p38
    %p40 = scmp.ne.s32.totalorder %s26, %s27
    %p41 = scmp.eq.s32.totalorder %s19, 1
    %p42 = por %p40, %p41
    %p44 = scmp.ne.s32.totalorder %s27, %s43
    %p45 = scmp.eq.s32.totalorder %s19, 0
    %p46 = por %p44, %p45
    %s47 = ssub.s32 %s13, %s20
    %p48 = scmp.eq.s32.totalorder %s47, 0
    %s50 = sadd.s32 %s49, 1
    %s51 = scalar_select %p48, %s49, %s50
    %p54 = pneg %p48
    %p55 = scmp.eq.s32.totalorder %s13, 1
    %p56 = por %p54, %p55
    %p57 = scmp.ne.s32.totalorder %s49, %s52
    %p58 = scmp.eq.s32.totalorder %s13, 0
    %p59 = por %p57, %p58
    %p60 = scmp.ne.s32.totalorder %s49, %s52
    %p61 = scmp.eq.s32.totalorder %s18, 1
    %p62 = por %p60, %p61
    %p63 = scmp.ne.s32.totalorder %s52, %s53
    %p64 = scmp.eq.s32.totalorder %s18, 0
    %p65 = por %p63, %p64
    %p66 = scmp.ne.s32.totalorder %s52, %s53
    %p67 = scmp.eq.s32.totalorder %s19, 1
    %p68 = por %p66, %p67
    %p70 = scmp.ne.s32.totalorder %s53, %s69
    %p71 = scmp.eq.s32.totalorder %s19, 0
    %p72 = por %p70, %p71
    %s74 = sadd.s32 %s73, 1
    %p77 = scmp.eq.s32.totalorder %s13, 1
    %p78 = scmp.ne.s32.totalorder %s73, %s75
    %p79 = scmp.eq.s32.totalorder %s13, 0
    %p80 = por %p78, %p79
    %p81 = scmp.ne.s32.totalorder %s73, %s75
    %p82 = scmp.eq.s32.totalorder %s18, 1
    %p83 = por %p81, %p82
    %p84 = scmp.ne.s32.totalorder %s75, %s76
    %p85 = scmp.eq.s32.totalorder %s18, 0
    %p86 = por %p84, %p85
    %p87 = scmp.ne.s32.totalorder %s75, %s76
    %p88 = scmp.eq.s32.totalorder %s19, 1
    %p89 = por %p87, %p88
    %p91 = scmp.ne.s32.totalorder %s76, %s90
    %p92 = scmp.eq.s32.totalorder %s19, 0
    %p93 = por %p91, %p92
    %s95 = sadd.s32 %s94, 1
    %p98 = scmp.eq.s32.totalorder %s13, 1
    %p99 = scmp.ne.s32.totalorder %s94, %s96
    %p100 = scmp.eq.s32.totalorder %s13, 0
    %p101 = por %p99, %p100
    %p102 = scmp.ne.s32.totalorder %s94, %s96
    %p103 = scmp.eq.s32.totalorder %s18, 1
    %p104 = por %p102, %p103
    %p105 = scmp.ne.s32.totalorder %s96, %s97
    %p106 = scmp.eq.s32.totalorder %s18, 0
    %p107 = por %p105, %p106
    %p108 = scmp.ne.s32.totalorder %s96, %s97
    %p109 = scmp.eq.s32.totalorder %s19, 1
    %p110 = por %p108, %p109
    %p112 = scmp.ne.s32.totalorder %s97, %s111
    %p113 = scmp.eq.s32.totalorder %s19, 0
    %p114 = por %p112, %p113
    %s116 = sadd.s32 %s115, 1
    %p119 = scmp.eq.s32.totalorder %s13, 1
    %p120 = scmp.ne.s32.totalorder %s115, %s117
    %p121 = scmp.eq.s32.totalorder %s13, 0
    %p122 = por %p120, %p121
    %p123 = scmp.ne.s32.totalorder %s115, %s117
    %p124 = scmp.eq.s32.totalorder %s18, 1
    %p125 = por %p123, %p124
    %p126 = scmp.ne.s32.totalorder %s117, %s118
    %p127 = scmp.eq.s32.totalorder %s18, 0
    %p128 = por %p126, %p127
    %p129 = scmp.ne.s32.totalorder %s117, %s118
    %p130 = scmp.eq.s32.totalorder %s19, 1
    %p131 = por %p129, %p130
    %p133 = scmp.ne.s32.totalorder %s118, %s132
    %p134 = scmp.eq.s32.totalorder %s19, 0
    %p135 = por %p133, %p134
    %s137 = sadd.s32 %s136, 1
    %p140 = scmp.eq.s32.totalorder %s13, 1
    %p141 = scmp.ne.s32.totalorder %s136, %s138
    %p142 = scmp.eq.s32.totalorder %s13, 0
    %p143 = por %p141, %p142
    %p144 = scmp.ne.s32.totalorder %s136, %s138
    %p145 = scmp.eq.s32.totalorder %s18, 1
    %p146 = por %p144, %p145
    %p147 = scmp.ne.s32.totalorder %s138, %s139
    %p148 = scmp.eq.s32.totalorder %s18, 0
    %p149 = por %p147, %p148
    %p150 = scmp.ne.s32.totalorder %s138, %s139
    %p151 = scmp.eq.s32.totalorder %s19, 1
    %p152 = por %p150, %p151
    %p154 = scmp.ne.s32.totalorder %s139, %s153
    %p155 = scmp.eq.s32.totalorder %s19, 0
    %p156 = por %p154, %p155
    %s158 = sadd.s32 %s157, 1
    %p161 = scmp.eq.s32.totalorder %s13, 1
    %p162 = scmp.ne.s32.totalorder %s157, %s159
    %p163 = scmp.eq.s32.totalorder %s13, 0
    %p164 = por %p162, %p163
    %p165 = scmp.ne.s32.totalorder %s157, %s159
    %p166 = scmp.eq.s32.totalorder %s18, 1
    %p167 = por %p165, %p166
    %p168 = scmp.ne.s32.totalorder %s159, %s160
    %p169 = scmp.eq.s32.totalorder %s18, 0
    %p170 = por %p168, %p169
    %p171 = scmp.ne.s32.totalorder %s159, %s160
    %p172 = scmp.eq.s32.totalorder %s19, 1
    %p173 = por %p171, %p172
    %p175 = scmp.ne.s32.totalorder %s160, %s174
    %p176 = scmp.eq.s32.totalorder %s19, 0
    %p177 = por %p175, %p176
    %s178 = ssub.s32 %s13, %s20
    %p179 = scmp.eq.s32.totalorder %s178, 0
    %s181 = sadd.s32 %s180, 1
    %s182 = scalar_select %p179, %s180, %s181
    %p185 = pneg %p179
    %p186 = scmp.eq.s32.totalorder %s13, 1
    %p187 = por %p185, %p186
    %p188 = scmp.ne.s32.totalorder %s180, %s183
    %p189 = scmp.eq.s32.totalorder %s13, 0
    %p190 = por %p188, %p189
    %p191 = scmp.ne.s32.totalorder %s180, %s183
    %p192 = scmp.eq.s32.totalorder %s18, 1
    %p193 = por %p191, %p192
    %p194 = scmp.ne.s32.totalorder %s183, %s184
    %p195 = scmp.eq.s32.totalorder %s18, 0
    %p196 = por %p194, %p195
    %p197 = scmp.ne.s32.totalorder %s183, %s184
    %p198 = scmp.eq.s32.totalorder %s19, 1
    %p199 = por %p197, %p198
    %p201 = scmp.ne.s32.totalorder %s184, %s200
    %p202 = scmp.eq.s32.totalorder %s19, 0
    %p203 = por %p201, %p202
    %p204 = scmp.le.s32.totalorder 1, %s13
    %p205 = scmp.lt.s32.totalorder %s13, 3
    %p206 = pnand %p204, %p205
    %p207 = pneg %p206
    // Predicated region
    $region9: #{bottleneck_forward.7} parent=5 // pred_check
      _
    $region10: #{bottleneck_forward.7} parent=5 // pred_check_branch
      %209 = sbr.rel (%p206) target = $region12
    $region11: #{bottleneck_forward.7} parent=5 // pred_region
      %s210 = ssub.s32 %s13, 1
      // Predicated region
      $region13: #{bottleneck_forward.7} parent=11 // pred_check
        %p211 = pneg %p86
      $region14: #{bottleneck_forward.7} parent=11 // pred_check_branch
        %213 = sbr.rel (%p211) target = $region16
      $region15: #{bottleneck_forward.7} parent=11 // pred_region
        _
      $region16: #{bottleneck_forward.7} parent=11 // pred_fallthru
        _
      // Predicated region
      $region17: #{bottleneck_forward.7} parent=11 // pred_check
        %p214 = pneg %p107
      $region18: #{bottleneck_forward.7} parent=11 // pred_check_branch
        %216 = sbr.rel (%p214) target = $region20
      $region19: #{bottleneck_forward.7} parent=11 // pred_region
        _
      $region20: #{bottleneck_forward.7} parent=11 // pred_fallthru
        _
      // Predicated region
      $region21: #{bottleneck_forward.7} parent=11 // pred_check
        %p217 = pneg %p128
      $region22: #{bottleneck_forward.7} parent=11 // pred_check_branch
        %219 = sbr.rel (%p217) target = $region24
      $region23: #{bottleneck_forward.7} parent=11 // pred_region
        _
      $region24: #{bottleneck_forward.7} parent=11 // pred_fallthru
        _
      // Predicated region
      $region25: #{bottleneck_forward.7} parent=11 // pred_check
        %p220 = pneg %p149
      $region26: #{bottleneck_forward.7} parent=11 // pred_check_branch
        %222 = sbr.rel (%p220) target = $region28
      $region27: #{bottleneck_forward.7} parent=11 // pred_region
        _
      $region28: #{bottleneck_forward.7} parent=11 // pred_fallthru
        _
      // Predicated region
      $region29: #{bottleneck_forward.7} parent=11 // pred_check
        %p223 = pneg %p170
      $region30: #{bottleneck_forward.7} parent=11 // pred_check_branch
        %225 = sbr.rel (%p223) target = $region32
      $region31: #{bottleneck_forward.7} parent=11 // pred_region
        _
      $region32: #{bottleneck_forward.7} parent=11 // pred_fallthru
        _
    $region12: #{bottleneck_forward.7} parent=5 // pred_fallthru
      _
    %p226 = scmp.lt.s32.totalorder %s13, 2
    // Predicated region
    $region33: #{bottleneck_forward.7} parent=5 // pred_check
      %p227 = pneg %p226
    $region34: #{bottleneck_forward.7} parent=5 // pred_check_branch
      %229 = sbr.rel (%p227) target = $region36
    $region35: #{bottleneck_forward.7} parent=5 // pred_region
      // Predicated region
      $region37: #{bottleneck_forward.7} parent=35 // pred_check
        %p230 = pneg %p33
      $region38: #{bottleneck_forward.7} parent=35 // pred_check_branch
        %232 = sbr.rel (%p230) target = $region40
      $region39: #{bottleneck_forward.7} parent=35 // pred_region
        %p233 = scmp.lt.s32.totalorder %s13, 1
        %s234 = scalar_select %p233, %s13, 1
        %s235 = smul.addr %s234, 41
        %s236 = smul.addr %s235, 8
        %s237 = scalar_lea.vmem %s0, %s236
      $region40: #{bottleneck_forward.7} parent=35 // pred_fallthru
        _
      // Predicated region
      $region41: #{bottleneck_forward.7} parent=35 // pred_check
        %p238 = pneg %p59
      $region42: #{bottleneck_forward.7} parent=35 // pred_check_branch
        %240 = sbr.rel (%p238) target = $region44
      $region43: #{bottleneck_forward.7} parent=35 // pred_region
        %p241 = scmp.lt.s32.totalorder %s13, 1
        %s242 = scalar_select %p241, %s13, 1
        %s243 = smul.addr %s242, 41
        %s244 = smul.addr %s243, 8
        %s245 = scalar_lea.vmem %s1, %s244
      $region44: #{bottleneck_forward.7} parent=35 // pred_fallthru
        _
    $region36: #{bottleneck_forward.7} parent=5 // pred_fallthru
      _
    %p246 = scmp.le.s32.totalorder 1, %s13
    %p247 = scmp.lt.s32.totalorder %s13, 3
    %p248 = pnand %p246, %p247
    %p249 = pneg %p248
    // Predicated region
    $region45: #{bottleneck_forward.7} parent=5 // pred_check
      _
    $region46: #{bottleneck_forward.7} parent=5 // pred_check_branch
      %251 = sbr.rel (%p248) target = $region48
    $region47: #{bottleneck_forward.7} parent=5 // pred_region
      %s252 = ssub.s32 %s13, 1
      %p253 = scmp.lt.s32.totalorder %s18, 1
      %s254 = scalar_select %p253, %s18, 1
      %s255 = smul.addr %s254, 41
      %s256 = smul.addr %s255, 8
      %s257 = scalar_lea.vmem %s0, %s256
      %p258 = pneg %p39
      %p259 = pneg %p36
      %p260 = scmp.lt.s32.totalorder %s18, 1
      %s261 = scalar_select %p260, %s18, 1
      %s262 = smul.addr %s261, 41
      %s263 = smul.addr %s262, 8
      %s264 = scalar_lea.vmem %s1, %s263
      %p265 = pneg %p65
      %p266 = pneg %p62
      %p267 = pneg %p86
      %p268 = pneg %p83
      %p269 = pneg %p107
      %p270 = pneg %p104
      %p271 = pneg %p128
      %p272 = pneg %p125
      %p273 = pneg %p149
      %p274 = pneg %p146
      %p275 = pneg %p170
      %p276 = pneg %p167
      %p277 = pneg %p196
      %p278 = pneg %p193
      %p279 = scmp.lt.s32.totalorder %s18, 1
      %s280 = scalar_select %p279, %s18, 1
      %s281 = smul.addr %s280, 41
      %s282 = smul.addr %s281, 8
      %s283 = scalar_lea.vmem %s7, %s282
      %p284 = scmp.lt.s32.totalorder %s18, 1
      %s285 = scalar_select %p284, %s18, 1
      %s286 = smul.addr %s285, 41
      %s287 = smul.addr %s286, 8
      %s288 = scalar_lea.vmem %s0, %s287
      %p289 = scmp.lt.s32.totalorder %s18, 1
      %s290 = scalar_select %p289, %s18, 1
      %s291 = smul.addr %s290, 41
      %s292 = smul.addr %s291, 8
      %s293 = scalar_lea.vmem %s1, %s292
      %p294 = scmp.lt.s32.totalorder %s18, 1
      %s295 = scalar_select %p294, %s18, 1
      %s296 = smul.addr %s295, 41
      %s297 = smul.addr %s296, 8
      %s298 = scalar_lea.vmem %s7, %s297
      %v299 = vld [vmem:[%s288] sm:$0xff]
      %v300 = vld [vmem:[%s288 + $0x8] sm:$0xff]
      %v301 = vld [vmem:[%s288 + $0x10] sm:$0xff]
      %v302 = vld [vmem:[%s288 + $0x18] sm:$0xff]
      %v303 = vld [vmem:[%s288 + $0x20] sm:$0xff]
      %v304 = vld [vmem:[%s288 + $0x28] sm:$0xff]
      %v305 = vld [vmem:[%s288 + $0x30] sm:$0xff]
      %v306 = vld [vmem:[%s288 + $0x38] sm:$0xff]
      %v307 = vld [vmem:[%s288 + $0x40] sm:$0xff]
      %v308 = vld [vmem:[%s288 + $0x48] sm:$0xff]
      %v309 = vld [vmem:[%s288 + $0x50] sm:$0xff]
      %v310 = vld [vmem:[%s288 + $0x58] sm:$0xff]
      %v311 = vld [vmem:[%s288 + $0x60] sm:$0xff]
      %v312 = vld [vmem:[%s288 + $0x68] sm:$0xff]
      %v313 = vld [vmem:[%s288 + $0x70] sm:$0xff]
      %v314 = vld [vmem:[%s288 + $0x78] sm:$0xff]
      %v315 = vld [vmem:[%s288 + $0x80] sm:$0xff]
      %v316 = vld [vmem:[%s288 + $0x88] sm:$0xff]
      %v317 = vld [vmem:[%s288 + $0x90] sm:$0xff]
      %v318 = vld [vmem:[%s288 + $0x98] sm:$0xff]
      %v319 = vld [vmem:[%s288 + $0xa0] sm:$0xff]
      %v320 = vld [vmem:[%s288 + $0xa8] sm:$0xff]
      %v321 = vld [vmem:[%s288 + $0xb0] sm:$0xff]
      %v322 = vld [vmem:[%s288 + $0xb8] sm:$0xff]
      %v323 = vld [vmem:[%s288 + $0xc0] sm:$0xff]
      %v324 = vld [vmem:[%s288 + $0xc8] sm:$0xff]
      %v325 = vld [vmem:[%s288 + $0xd0] sm:$0xff]
      %v326 = vld [vmem:[%s288 + $0xd8] sm:$0xff]
      %v327 = vld [vmem:[%s288 + $0xe0] sm:$0xff]
      %v328 = vld [vmem:[%s288 + $0xe8] sm:$0xff]
      %v329 = vld [vmem:[%s288 + $0xf0] sm:$0xff]
      %v330 = vld [vmem:[%s288 + $0xf8] sm:$0xff]
      %v331 = vld [vmem:[%s288 + $0x100] sm:$0xff]
      %v332 = vld [vmem:[%s288 + $0x108] sm:$0xff]
      %v333 = vld [vmem:[%s288 + $0x110] sm:$0xff]
      %v334 = vld [vmem:[%s288 + $0x118] sm:$0xff]
      %v335 = vld [vmem:[%s288 + $0x120] sm:$0xff]
      %v336 = vld [vmem:[%s288 + $0x128] sm:$0xff]
      %v337 = vld [vmem:[%s288 + $0x130] sm:$0xff]
      %v338 = vld [vmem:[%s288 + $0x138] sm:$0xff]
      %v339 = vld [vmem:[%s288 + $0x140] sm:$0xff]
      %v340 = vld [vmem:[%s2] sm:$0x1]
      %v342 = vlaneseq
      %v343 = vshrl.u32 %v342, 7
      %v344 = vsub.s32 0, %v343
      %v345 = vrot.slane %v340, %v344
      %v347 = vmul.f32 %v299, %v345
      %v348 = vmul.f32 %v300, %v345
      %v349 = vmul.f32 %v301, %v345
      %v350 = vmul.f32 %v302, %v345
      %v351 = vmul.f32 %v303, %v345
      %v352 = vmul.f32 %v304, %v345
      %v353 = vmul.f32 %v305, %v345
      %v354 = vmul.f32 %v306, %v345
      %v355 = vmul.f32 %v307, %v345
      %v356 = vmul.f32 %v308, %v345
      %v357 = vmul.f32 %v309, %v345
      %v358 = vmul.f32 %v310, %v345
      %v359 = vmul.f32 %v311, %v345
      %v360 = vmul.f32 %v312, %v345
      %v361 = vmul.f32 %v313, %v345
      %v362 = vmul.f32 %v314, %v345
      %v363 = vmul.f32 %v315, %v345
      %v364 = vmul.f32 %v316, %v345
      %v365 = vmul.f32 %v317, %v345
      %v366 = vmul.f32 %v318, %v345
      %v367 = vmul.f32 %v319, %v345
      %v368 = vmul.f32 %v320, %v345
      %v369 = vmul.f32 %v321, %v345
      %v370 = vmul.f32 %v322, %v345
      %v371 = vmul.f32 %v323, %v345
      %v372 = vmul.f32 %v324, %v345
      %v373 = vmul.f32 %v325, %v345
      %v374 = vmul.f32 %v326, %v345
      %v375 = vmul.f32 %v327, %v345
      %v376 = vmul.f32 %v328, %v345
      %v377 = vmul.f32 %v329, %v345
      %v378 = vmul.f32 %v330, %v345
      %v379 = vmul.f32 %v331, %v345
      %v380 = vmul.f32 %v332, %v345
      %v381 = vmul.f32 %v333, %v345
      %v382 = vmul.f32 %v334, %v345
      %v383 = vmul.f32 %v335, %v345
      %v384 = vmul.f32 %v336, %v345
      %v385 = vmul.f32 %v337, %v345
      %v386 = vmul.f32 %v338, %v345
      %v387 = vmul.f32 %v339, %v345
      %v388 = vld [vmem:[%s3] sm:$0x1]
      %v390 = vlaneseq
      %v391 = vshrl.u32 %v390, 7
      %v392 = vsub.s32 0, %v391
      %v393 = vrot.slane %v388, %v392
      %v395 = vadd.f32 %v347, %v393
      %v396 = vadd.f32 %v348, %v393
      %v397 = vadd.f32 %v349, %v393
      %v398 = vadd.f32 %v350, %v393
      %v399 = vadd.f32 %v351, %v393
      %v400 = vadd.f32 %v352, %v393
      %v401 = vadd.f32 %v353, %v393
      %v402 = vadd.f32 %v354, %v393
      %v403 = vadd.f32 %v355, %v393
      %v404 = vadd.f32 %v356, %v393
      %v405 = vadd.f32 %v357, %v393
      %v406 = vadd.f32 %v358, %v393
      %v407 = vadd.f32 %v359, %v393
      %v408 = vadd.f32 %v360, %v393
      %v409 = vadd.f32 %v361, %v393
      %v410 = vadd.f32 %v362, %v393
      %v411 = vadd.f32 %v363, %v393
      %v412 = vadd.f32 %v364, %v393
      %v413 = vadd.f32 %v365, %v393
      %v414 = vadd.f32 %v366, %v393
      %v415 = vadd.f32 %v367, %v393
      %v416 = vadd.f32 %v368, %v393
      %v417 = vadd.f32 %v369, %v393
      %v418 = vadd.f32 %v370, %v393
      %v419 = vadd.f32 %v371, %v393
      %v420 = vadd.f32 %v372, %v393
      %v421 = vadd.f32 %v373, %v393
      %v422 = vadd.f32 %v374, %v393
      %v423 = vadd.f32 %v375, %v393
      %v424 = vadd.f32 %v376, %v393
      %v425 = vadd.f32 %v377, %v393
      %v426 = vadd.f32 %v378, %v393
      %v427 = vadd.f32 %v379, %v393
      %v428 = vadd.f32 %v380, %v393
      %v429 = vadd.f32 %v381, %v393
      %v430 = vadd.f32 %v382, %v393
      %v431 = vadd.f32 %v383, %v393
      %v432 = vadd.f32 %v384, %v393
      %v433 = vadd.f32 %v385, %v393
      %v434 = vadd.f32 %v386, %v393
      %v435 = vadd.f32 %v387, %v393
      %v436 = vmax.f32 %v395, 0.0
      %v437 = vmax.f32 %v396, 0.0
      %v438 = vmax.f32 %v397, 0.0
      %v439 = vmax.f32 %v398, 0.0
      %v440 = vmax.f32 %v399, 0.0
      %v441 = vmax.f32 %v400, 0.0
      %v442 = vmax.f32 %v401, 0.0
      %v443 = vmax.f32 %v402, 0.0
      %v444 = vmax.f32 %v403, 0.0
      %v445 = vmax.f32 %v404, 0.0
      %v446 = vmax.f32 %v405, 0.0
      %v447 = vmax.f32 %v406, 0.0
      %v448 = vmax.f32 %v407, 0.0
      %v449 = vmax.f32 %v408, 0.0
      %v450 = vmax.f32 %v409, 0.0
      %v451 = vmax.f32 %v410, 0.0
      %v452 = vmax.f32 %v411, 0.0
      %v453 = vmax.f32 %v412, 0.0
      %v454 = vmax.f32 %v413, 0.0
      %v455 = vmax.f32 %v414, 0.0
      %v456 = vmax.f32 %v415, 0.0
      %v457 = vmax.f32 %v416, 0.0
      %v458 = vmax.f32 %v417, 0.0
      %v459 = vmax.f32 %v418, 0.0
      %v460 = vmax.f32 %v419, 0.0
      %v461 = vmax.f32 %v420, 0.0
      %v462 = vmax.f32 %v421, 0.0
      %v463 = vmax.f32 %v422, 0.0
      %v464 = vmax.f32 %v423, 0.0
      %v465 = vmax.f32 %v424, 0.0
      %v466 = vmax.f32 %v425, 0.0
      %v467 = vmax.f32 %v426, 0.0
      %v468 = vmax.f32 %v427, 0.0
      %v469 = vmax.f32 %v428, 0.0
      %v470 = vmax.f32 %v429, 0.0
      %v471 = vmax.f32 %v430, 0.0
      %v472 = vmax.f32 %v431, 0.0
      %v473 = vmax.f32 %v432, 0.0
      %v474 = vmax.f32 %v433, 0.0
      %v475 = vmax.f32 %v434, 0.0
      %v476 = vmax.f32 %v435, 0.0
      %v477 = vld [vmem:[%s4] sm:$0xff]
      %v478 = vld [vmem:[%s4 + $0x8] sm:$0xff]
      %v479 = vld [vmem:[%s4 + $0x10] sm:$0xff]
      %v480 = vld [vmem:[%s4 + $0x18] sm:$0xff]
      %v481 = vld [vmem:[%s4 + $0x20] sm:$0xff]
      %v482 = vld [vmem:[%s4 + $0x28] sm:$0xff]
      %v483 = vld [vmem:[%s4 + $0x30] sm:$0xff]
      %v484 = vld [vmem:[%s4 + $0x38] sm:$0xff]
      %v485 = vld [vmem:[%s4 + $0x40] sm:$0xff]
      %v486 = vld [vmem:[%s4 + $0x48] sm:$0xff]
      %v487 = vld [vmem:[%s4 + $0x50] sm:$0xff]
      %v488 = vld [vmem:[%s4 + $0x58] sm:$0xff]
      %v489 = vld [vmem:[%s4 + $0x60] sm:$0xff]
      %v490 = vld [vmem:[%s4 + $0x68] sm:$0xff]
      %v491 = vld [vmem:[%s4 + $0x70] sm:$0xff]
      %v492 = vld [vmem:[%s4 + $0x78] sm:$0xff]
      %493 = vmatprep.subr.mxu0 0.0
      %494 = vmatpush1.msra.mxu0 %v477
      %495 = vmatprep.subr.mxu0 0.0
      %496 = vmatpush1.msra.mxu0 %v478
      %497 = vmatprep.subr.mxu0 0.0
      %498 = vmatpush1.msra.mxu0 %v479
      %499 = vmatprep.subr.mxu0 0.0
      %500 = vmatpush1.msra.mxu0 %v480
      %501 = vmatprep.subr.mxu0 0.0
      %502 = vmatpush1.msra.mxu0 %v481
      %503 = vmatprep.subr.mxu0 0.0
      %504 = vmatpush1.msra.mxu0 %v482
      %505 = vmatprep.subr.mxu0 0.0
      %506 = vmatpush1.msra.mxu0 %v483
      %507 = vmatprep.subr.mxu0 0.0
      %508 = vmatpush1.msra.mxu0 %v484
      %509 = vmatprep.subr.mxu0 0.0
      %510 = vmatpush1.msra.mxu0 %v485
      %511 = vmatprep.subr.mxu0 0.0
      %512 = vmatpush1.msra.mxu0 %v486
      %513 = vmatprep.subr.mxu0 0.0
      %514 = vmatpush1.msra.mxu0 %v487
      %515 = vmatprep.subr.mxu0 0.0
      %516 = vmatpush1.msra.mxu0 %v488
      %517 = vmatprep.subr.mxu0 0.0
      %518 = vmatpush1.msra.mxu0 %v489
      %519 = vmatprep.subr.mxu0 0.0
      %520 = vmatpush1.msra.mxu0 %v490
      %521 = vmatprep.subr.mxu0 0.0
      %522 = vmatpush1.msra.mxu0 %v491
      %523 = vmatprep.subr.mxu0 0.0
      %524 = vmatpush1.msra.mxu0 %v492
      %525 = vmatprep.subr.mxu0 0.0
      %526 = vmatpush1.msra.mxu0 0.0
      %527 = vmatprep.subr.mxu0 0.0
      %528 = vmatpush1.msra.mxu0 0.0
      %529 = vmatprep.subr.mxu0 0.0
      %530 = vmatpush1.msra.mxu0 0.0
      %531 = vmatprep.subr.mxu0 0.0
      %532 = vmatpush1.msra.mxu0 0.0
      %533 = vmatprep.subr.mxu0 0.0
      %534 = vmatpush1.msra.mxu0 0.0
      %535 = vmatprep.subr.mxu0 0.0
      %536 = vmatpush1.msra.mxu0 0.0
      %537 = vmatprep.subr.mxu0 0.0
      %538 = vmatpush1.msra.mxu0 0.0
      %539 = vmatprep.subr.mxu0 0.0
      %540 = vmatpush1.msra.mxu0 0.0
      %541 = vmatprep.subr.mxu0 0.0
      %542 = vmatpush1.msra.mxu0 0.0
      %543 = vmatprep.subr.mxu0 0.0
      %544 = vmatpush1.msra.mxu0 0.0
      %545 = vmatprep.subr.mxu0 0.0
      %546 = vmatpush1.msra.mxu0 0.0
      %547 = vmatprep.subr.mxu0 0.0
      %548 = vmatpush1.msra.mxu0 0.0
      %549 = vmatprep.subr.mxu0 0.0
      %550 = vmatpush1.msra.mxu0 0.0
      %551 = vmatprep.subr.mxu0 0.0
      %552 = vmatpush1.msra.mxu0 0.0
      %553 = vmatprep.subr.mxu0 0.0
      %554 = vmatpush1.msra.mxu0 0.0
      %555 = vmatprep.subr.mxu0 0.0
      %556 = vmatpush1.msra.mxu0 0.0
      %557 = vmatprep.mubr.f32.mxu0 0.0
      %558 = vmatmul.mubr.f32.gmra.mrb[0].mxu0 %v436
      %v559 = vpop.f32.mrb[0].mxu0
      %v560 = vadd.f32 0.0, %v559
      %v561 = vpop.f32.mrb[0].mxu0
      %562 = vmatprep.mubr.f32.mxu0 0.0
      %563 = vmatmul.mubr.f32.gmra.mrb[0].mxu0 %v437
      %v564 = vpop.f32.mrb[0].mxu0
      %v565 = vadd.f32 0.0, %v564
      %v566 = vpop.f32.mrb[0].mxu0
      %567 = vmatprep.mubr.f32.mxu0 0.0
      %568 = vmatmul.mubr.f32.gmra.mrb[0].mxu0 %v438
      %v569 = vpop.f32.mrb[0].mxu0
      %v570 = vadd.f32 0.0, %v569
      %v571 = vpop.f32.mrb[0].mxu0
      %572 = vmatprep.mubr.f32.mxu0 0.0
      %573 = vmatmul.mubr.f32.gmra.mrb[0].mxu0 %v439
      %v574 = vpop.f32.mrb[0].mxu0
      %v575 = vadd.f32 0.0, %v574
      %v576 = vpop.f32.mrb[0].mxu0
      %577 = vmatprep.mubr.f32.mxu0 0.0
      %578 = vmatmul.mubr.f32.gmra.mrb[0].mxu0 %v440
      %v579 = vpop.f32.mrb[0].mxu0
      %v580 = vadd.f32 0.0, %v579
      %v581 = vpop.f32.mrb[0].mxu0
      %582 = vmatprep.mubr.f32.mxu0 0.0
      %583 = vmatmul.mubr.f32.gmra.mrb[0].mxu0 %v441
      %v584 = vpop.f32.mrb[0].mxu0
      %v585 = vadd.f32 0.0, %v584
      %v586 = vpop.f32.mrb[0].mxu0
      %587 = vmatprep.mubr.f32.mxu0 0.0
      %588 = vmatmul.mubr.f32.gmra.mrb[0].mxu0 %v442
      %v589 = vpop.f32.mrb[0].mxu0
      %v590 = vadd.f32 0.0, %v589
      %v591 = vpop.f32.mrb[0].mxu0
      %592 = vmatprep.mubr.f32.mxu0 0.0
      %593 = vmatmul.mubr.f32.gmra.mrb[0].mxu0 %v443
      %v594 = vpop.f32.mrb[0].mxu0
      %v595 = vadd.f32 0.0, %v594
      %v596 = vpop.f32.mrb[0].mxu0
      %597 = vmatprep.mubr.f32.mxu0 0.0
      %598 = vmatmul.mubr.f32.gmra.mrb[0].mxu0 %v444
      %v599 = vpop.f32.mrb[0].mxu0
      %v600 = vadd.f32 0.0, %v599
      %v601 = vpop.f32.mrb[0].mxu0
      %602 = vmatprep.mubr.f32.mxu0 0.0
      %603 = vmatmul.mubr.f32.gmra.mrb[0].mxu0 %v445
      %v604 = vpop.f32.mrb[0].mxu0
      %v605 = vadd.f32 0.0, %v604
      %v606 = vpop.f32.mrb[0].mxu0
      %607 = vmatprep.mubr.f32.mxu0 0.0
      %608 = vmatmul.mubr.f32.gmra.mrb[0].mxu0 %v446
      %v609 = vpop.f32.mrb[0].mxu0
      %v610 = vadd.f32 0.0, %v609
      %v611 = vpop.f32.mrb[0].mxu0
      %612 = vmatprep.mubr.f32.mxu0 0.0
      %613 = vmatmul.mubr.f32.gmra.mrb[0].mxu0 %v447
      %v614 = vpop.f32.mrb[0].mxu0
      %v615 = vadd.f32 0.0, %v614
      %v616 = vpop.f32.mrb[0].mxu0
      %617 = vmatprep.mubr.f32.mxu0 0.0
      %618 = vmatmul.mubr.f32.gmra.mrb[0].mxu0 %v448
      %v619 = vpop.f32.mrb[0].mxu0
      %v620 = vadd.f32 0.0, %v619
      %v621 = vpop.f32.mrb[0].mxu0
      %622 = vmatprep.mubr.f32.mxu0 0.0
      %623 = vmatmul.mubr.f32.gmra.mrb[0].mxu0 %v449
      %v624 = vpop.f32.mrb[0].mxu0
      %v625 = vadd.f32 0.0, %v624
      %v626 = vpop.f32.mrb[0].mxu0
      %627 = vmatprep.mubr.f32.mxu0 0.0
      %628 = vmatmul.mubr.f32.gmra.mrb[0].mxu0 %v450
      %v629 = vpop.f32.mrb[0].mxu0
      %v630 = vadd.f32 0.0, %v629
      %v631 = vpop.f32.mrb[0].mxu0
      %632 = vmatprep.mubr.f32.mxu0 0.0
      %633 = vmatmul.mubr.f32.gmra.mrb[0].mxu0 %v451
      %v634 = vpop.f32.mrb[0].mxu0
      %v635 = vadd.f32 0.0, %v634
      %v636 = vpop.f32.mrb[0].mxu0
      %637 = vmatprep.mubr.f32.mxu0 0.0
      %638 = vmatmul.mubr.f32.gmra.mrb[0].mxu0 %v452
      %v639 = vpop.f32.mrb[0].mxu0
      %v640 = vadd.f32 0.0, %v639
      %v641 = vpop.f32.mrb[0].mxu0
      %642 = vmatprep.mubr.f32.mxu0 0.0
      %643 = vmatmul.mubr.f32.gmra.mrb[0].mxu0 %v453
      %v644 = vpop.f32.mrb[0].mxu0
      %v645 = vadd.f32 0.0, %v644
      %v646 = vpop.f32.mrb[0].mxu0
      %647 = vmatprep.mubr.f32.mxu0 0.0
      %648 = vmatmul.mubr.f32.gmra.mrb[0].mxu0 %v454
      %v649 = vpop.f32.mrb[0].mxu0
      %v650 = vadd.f32 0.0, %v649
      %v651 = vpop.f32.mrb[0].mxu0
      %652 = vmatprep.mubr.f32.mxu0 0.0
      %653 = vmatmul.mubr.f32.gmra.mrb[0].mxu0 %v455
      %v654 = vpop.f32.mrb[0].mxu0
      %v655 = vadd.f32 0.0, %v654
      %v656 = vpop.f32.mrb[0].mxu0
      %657 = vmatprep.mubr.f32.mxu0 0.0
      %658 = vmatmul.mubr.f32.gmra.mrb[0].mxu0 %v456
      %v659 = vpop.f32.mrb[0].mxu0
      %v660 = vadd.f32 0.0, %v659
      %v661 = vpop.f32.mrb[0].mxu0
      %662 = vmatprep.mubr.f32.mxu0 0.0
      %663 = vmatmul.mubr.f32.gmra.mrb[0].mxu0 %v457
      %v664 = vpop.f32.mrb[0].mxu0
      %v665 = vadd.f32 0.0, %v664
      %v666 = vpop.f32.mrb[0].mxu0
      %667 = vmatprep.mubr.f32.mxu0 0.0
      %668 = vmatmul.mubr.f32.gmra.mrb[0].mxu0 %v458
      %v669 = vpop.f32.mrb[0].mxu0
      %v670 = vadd.f32 0.0, %v669
      %v671 = vpop.f32.mrb[0].mxu0
      %672 = vmatprep.mubr.f32.mxu0 0.0
      %673 = vmatmul.mubr.f32.gmra.mrb[0].mxu0 %v459
      %v674 = vpop.f32.mrb[0].mxu0
      %v675 = vadd.f32 0.0, %v674
      %v676 = vpop.f32.mrb[0].mxu0
      %677 = vmatprep.mubr.f32.mxu0 0.0
      %678 = vmatmul.mubr.f32.gmra.mrb[0].mxu0 %v460
      %v679 = vpop.f32.mrb[0].mxu0
      %v680 = vadd.f32 0.0, %v679
      %v681 = vpop.f32.mrb[0].mxu0
      %682 = vmatprep.mubr.f32.mxu0 0.0
      %683 = vmatmul.mubr.f32.gmra.mrb[0].mxu0 %v461
      %v684 = vpop.f32.mrb[0].mxu0
      %v685 = vadd.f32 0.0, %v684
      %v686 = vpop.f32.mrb[0].mxu0
      %687 = vmatprep.mubr.f32.mxu0 0.0
      %688 = vmatmul.mubr.f32.gmra.mrb[0].mxu0 %v462
      %v689 = vpop.f32.mrb[0].mxu0
      %v690 = vadd.f32 0.0, %v689
      %v691 = vpop.f32.mrb[0].mxu0
      %692 = vmatprep.mubr.f32.mxu0 0.0
      %693 = vmatmul.mubr.f32.gmra.mrb[0].mxu0 %v463
      %v694 = vpop.f32.mrb[0].mxu0
      %v695 = vadd.f32 0.0, %v694
      %v696 = vpop.f32.mrb[0].mxu0
      %697 = vmatprep.mubr.f32.mxu0 0.0
      %698 = vmatmul.mubr.f32.gmra.mrb[0].mxu0 %v464
      %v699 = vpop.f32.mrb[0].mxu0
      %v700 = vadd.f32 0.0, %v699
      %v701 = vpop.f32.mrb[0].mxu0
      %702 = vmatprep.mubr.f32.mxu0 0.0
      %703 = vmatmul.mubr.f32.gmra.mrb[0].mxu0 %v465
      %v704 = vpop.f32.mrb[0].mxu0
      %v705 = vadd.f32 0.0, %v704
      %v706 = vpop.f32.mrb[0].mxu0
      %707 = vmatprep.mubr.f32.mxu0 0.0
      %708 = vmatmul.mubr.f32.gmra.mrb[0].mxu0 %v466
      %v709 = vpop.f32.mrb[0].mxu0
      %v710 = vadd.f32 0.0, %v709
      %v711 = vpop.f32.mrb[0].mxu0
      %712 = vmatprep.mubr.f32.mxu0 0.0
      %713 = vmatmul.mubr.f32.gmra.mrb[0].mxu0 %v467
      %v714 = vpop.f32.mrb[0].mxu0
      %v715 = vadd.f32 0.0, %v714
      %v716 = vpop.f32.mrb[0].mxu0
      %717 = vmatprep.mubr.f32.mxu0 0.0
      %718 = vmatmul.mubr.f32.gmra.mrb[0].mxu0 %v468
      %v719 = vpop.f32.mrb[0].mxu0
      %v720 = vadd.f32 0.0, %v719
      %v721 = vpop.f32.mrb[0].mxu0
      %722 = vmatprep.mubr.f32.mxu0 0.0
      %723 = vmatmul.mubr.f32.gmra.mrb[0].mxu0 %v469
      %v724 = vpop.f32.mrb[0].mxu0
      %v725 = vadd.f32 0.0, %v724
      %v726 = vpop.f32.mrb[0].mxu0
      %727 = vmatprep.mubr.f32.mxu0 0.0
      %728 = vmatmul.mubr.f32.gmra.mrb[0].mxu0 %v470
      %v729 = vpop.f32.mrb[0].mxu0
      %v730 = vadd.f32 0.0, %v729
      %v731 = vpop.f32.mrb[0].mxu0
      %732 = vmatprep.mubr.f32.mxu0 0.0
      %733 = vmatmul.mubr.f32.gmra.mrb[0].mxu0 %v471
      %v734 = vpop.f32.mrb[0].mxu0
      %v735 = vadd.f32 0.0, %v734
      %v736 = vpop.f32.mrb[0].mxu0
      %737 = vmatprep.mubr.f32.mxu0 0.0
      %738 = vmatmul.mubr.f32.gmra.mrb[0].mxu0 %v472
      %v739 = vpop.f32.mrb[0].mxu0
      %v740 = vadd.f32 0.0, %v739
      %v741 = vpop.f32.mrb[0].mxu0
      %742 = vmatprep.mubr.f32.mxu0 0.0
      %743 = vmatmul.mubr.f32.gmra.mrb[0].mxu0 %v473
      %v744 = vpop.f32.mrb[0].mxu0
      %v745 = vadd.f32 0.0, %v744
      %v746 = vpop.f32.mrb[0].mxu0
      %747 = vmatprep.mubr.f32.mxu0 0.0
      %748 = vmatmul.mubr.f32.gmra.mrb[0].mxu0 %v474
      %v749 = vpop.f32.mrb[0].mxu0
      %v750 = vadd.f32 0.0, %v749
      %v751 = vpop.f32.mrb[0].mxu0
      %752 = vmatprep.mubr.f32.mxu0 0.0
      %753 = vmatmul.mubr.f32.gmra.mrb[0].mxu0 %v475
      %v754 = vpop.f32.mrb[0].mxu0
      %v755 = vadd.f32 0.0, %v754
      %v756 = vpop.f32.mrb[0].mxu0
      %757 = vmatprep.mubr.f32.mxu0 0.0
      %758 = vmatmul.mubr.f32.gmra.mrb[0].mxu0 %v476
      %v759 = vpop.f32.mrb[0].mxu0
      %v760 = vadd.f32 0.0, %v759
      %v761 = vpop.f32.mrb[0].mxu0
      %762 = vdwg.mxu0
      %v763 = vld [vmem:[%s5] sm:$0x1]
      %v765 = vlaneseq
      %v766 = vshrl.u32 %v765, 7
      %v767 = vsub.s32 0, %v766
      %v768 = vrot.slane %v763, %v767
      %v770 = vmul.f32 %v560, %v768
      %v771 = vmul.f32 %v565, %v768
      %v772 = vmul.f32 %v570, %v768
      %v773 = vmul.f32 %v575, %v768
      %v774 = vmul.f32 %v580, %v768
      %v775 = vmul.f32 %v585, %v768
      %v776 = vmul.f32 %v590, %v768
      %v777 = vmul.f32 %v595, %v768
      %v778 = vmul.f32 %v600, %v768
      %v779 = vmul.f32 %v605, %v768
      %v780 = vmul.f32 %v610, %v768
      %v781 = vmul.f32 %v615, %v768
      %v782 = vmul.f32 %v620, %v768
      %v783 = vmul.f32 %v625, %v768
      %v784 = vmul.f32 %v630, %v768
      %v785 = vmul.f32 %v635, %v768
      %v786 = vmul.f32 %v640, %v768
      %v787 = vmul.f32 %v645, %v768
      %v788 = vmul.f32 %v650, %v768
      %v789 = vmul.f32 %v655, %v768
      %v790 = vmul.f32 %v660, %v768
      %v791 = vmul.f32 %v665, %v768
      %v792 = vmul.f32 %v670, %v768
      %v793 = vmul.f32 %v675, %v768
      %v794 = vmul.f32 %v680, %v768
      %v795 = vmul.f32 %v685, %v768
      %v796 = vmul.f32 %v690, %v768
      %v797 = vmul.f32 %v695, %v768
      %v798 = vmul.f32 %v700, %v768
      %v799 = vmul.f32 %v705, %v768
      %v800 = vmul.f32 %v710, %v768
      %v801 = vmul.f32 %v715, %v768
      %v802 = vmul.f32 %v720, %v768
      %v803 = vmul.f32 %v725, %v768
      %v804 = vmul.f32 %v730, %v768
      %v805 = vmul.f32 %v735, %v768
      %v806 = vmul.f32 %v740, %v768
      %v807 = vmul.f32 %v745, %v768
      %v808 = vmul.f32 %v750, %v768
      %v809 = vmul.f32 %v755, %v768
      %v810 = vmul.f32 %v760, %v768
      %v811 = vld [vmem:[%s6] sm:$0x1]
      %v813 = vlaneseq
      %v814 = vshrl.u32 %v813, 7
      %v815 = vsub.s32 0, %v814
      %v816 = vrot.slane %v811, %v815
      %v818 = vadd.f32 %v770, %v816
      %v819 = vadd.f32 %v771, %v816
      %v820 = vadd.f32 %v772, %v816
      %v821 = vadd.f32 %v773, %v816
      %v822 = vadd.f32 %v774, %v816
      %v823 = vadd.f32 %v775, %v816
      %v824 = vadd.f32 %v776, %v816
      %v825 = vadd.f32 %v777, %v816
      %v826 = vadd.f32 %v778, %v816
      %v827 = vadd.f32 %v779, %v816
      %v828 = vadd.f32 %v780, %v816
      %v829 = vadd.f32 %v781, %v816
      %v830 = vadd.f32 %v782, %v816
      %v831 = vadd.f32 %v783, %v816
      %v832 = vadd.f32 %v784, %v816
      %v833 = vadd.f32 %v785, %v816
      %v834 = vadd.f32 %v786, %v816
      %v835 = vadd.f32 %v787, %v816
      %v836 = vadd.f32 %v788, %v816
      %v837 = vadd.f32 %v789, %v816
      %v838 = vadd.f32 %v790, %v816
      %v839 = vadd.f32 %v791, %v816
      %v840 = vadd.f32 %v792, %v816
      %v841 = vadd.f32 %v793, %v816
      %v842 = vadd.f32 %v794, %v816
      %v843 = vadd.f32 %v795, %v816
      %v844 = vadd.f32 %v796, %v816
      %v845 = vadd.f32 %v797, %v816
      %v846 = vadd.f32 %v798, %v816
      %v847 = vadd.f32 %v799, %v816
      %v848 = vadd.f32 %v800, %v816
      %v849 = vadd.f32 %v801, %v816
      %v850 = vadd.f32 %v802, %v816
      %v851 = vadd.f32 %v803, %v816
      %v852 = vadd.f32 %v804, %v816
      %v853 = vadd.f32 %v805, %v816
      %v854 = vadd.f32 %v806, %v816
      %v855 = vadd.f32 %v807, %v816
      %v856 = vadd.f32 %v808, %v816
      %v857 = vadd.f32 %v809, %v816
      %v858 = vadd.f32 %v810, %v816
      %v859 = vld [vmem:[%s293] sm:$0xff]
      %v860 = vld [vmem:[%s293 + $0x8] sm:$0xff]
      %v861 = vld [vmem:[%s293 + $0x10] sm:$0xff]
      %v862 = vld [vmem:[%s293 + $0x18] sm:$0xff]
      %v863 = vld [vmem:[%s293 + $0x20] sm:$0xff]
      %v864 = vld [vmem:[%s293 + $0x28] sm:$0xff]
      %v865 = vld [vmem:[%s293 + $0x30] sm:$0xff]
      %v866 = vld [vmem:[%s293 + $0x38] sm:$0xff]
      %v867 = vld [vmem:[%s293 + $0x40] sm:$0xff]
      %v868 = vld [vmem:[%s293 + $0x48] sm:$0xff]
      %v869 = vld [vmem:[%s293 + $0x50] sm:$0xff]
      %v870 = vld [vmem:[%s293 + $0x58] sm:$0xff]
      %v871 = vld [vmem:[%s293 + $0x60] sm:$0xff]
      %v872 = vld [vmem:[%s293 + $0x68] sm:$0xff]
      %v873 = vld [vmem:[%s293 + $0x70] sm:$0xff]
      %v874 = vld [vmem:[%s293 + $0x78] sm:$0xff]
      %v875 = vld [vmem:[%s293 + $0x80] sm:$0xff]
      %v876 = vld [vmem:[%s293 + $0x88] sm:$0xff]
      %v877 = vld [vmem:[%s293 + $0x90] sm:$0xff]
      %v878 = vld [vmem:[%s293 + $0x98] sm:$0xff]
      %v879 = vld [vmem:[%s293 + $0xa0] sm:$0xff]
      %v880 = vld [vmem:[%s293 + $0xa8] sm:$0xff]
      %v881 = vld [vmem:[%s293 + $0xb0] sm:$0xff]
      %v882 = vld [vmem:[%s293 + $0xb8] sm:$0xff]
      %v883 = vld [vmem:[%s293 + $0xc0] sm:$0xff]
      %v884 = vld [vmem:[%s293 + $0xc8] sm:$0xff]
      %v885 = vld [vmem:[%s293 + $0xd0] sm:$0xff]
      %v886 = vld [vmem:[%s293 + $0xd8] sm:$0xff]
      %v887 = vld [vmem:[%s293 + $0xe0] sm:$0xff]
      %v888 = vld [vmem:[%s293 + $0xe8] sm:$0xff]
      %v889 = vld [vmem:[%s293 + $0xf0] sm:$0xff]
      %v890 = vld [vmem:[%s293 + $0xf8] sm:$0xff]
      %v891 = vld [vmem:[%s293 + $0x100] sm:$0xff]
      %v892 = vld [vmem:[%s293 + $0x108] sm:$0xff]
      %v893 = vld [vmem:[%s293 + $0x110] sm:$0xff]
      %v894 = vld [vmem:[%s293 + $0x118] sm:$0xff]
      %v895 = vld [vmem:[%s293 + $0x120] sm:$0xff]
      %v896 = vld [vmem:[%s293 + $0x128] sm:$0xff]
      %v897 = vld [vmem:[%s293 + $0x130] sm:$0xff]
      %v898 = vld [vmem:[%s293 + $0x138] sm:$0xff]
      %v899 = vld [vmem:[%s293 + $0x140] sm:$0xff]
      %v900 = vadd.f32 %v818, %v859
      %v901 = vadd.f32 %v819, %v860
      %v902 = vadd.f32 %v820, %v861
      %v903 = vadd.f32 %v821, %v862
      %v904 = vadd.f32 %v822, %v863
      %v905 = vadd.f32 %v823, %v864
      %v906 = vadd.f32 %v824, %v865
      %v907 = vadd.f32 %v825, %v866
      %v908 = vadd.f32 %v826, %v867
      %v909 = vadd.f32 %v827, %v868
      %v910 = vadd.f32 %v828, %v869
      %v911 = vadd.f32 %v829, %v870
      %v912 = vadd.f32 %v830, %v871
      %v913 = vadd.f32 %v831, %v872
      %v914 = vadd.f32 %v832, %v873
      %v915 = vadd.f32 %v833, %v874
      %v916 = vadd.f32 %v834, %v875
      %v917 = vadd.f32 %v835, %v876
      %v918 = vadd.f32 %v836, %v877
      %v919 = vadd.f32 %v837, %v878
      %v920 = vadd.f32 %v838, %v879
      %v921 = vadd.f32 %v839, %v880
      %v922 = vadd.f32 %v840, %v881
      %v923 = vadd.f32 %v841, %v882
      %v924 = vadd.f32 %v842, %v883
      %v925 = vadd.f32 %v843, %v884
      %v926 = vadd.f32 %v844, %v885
      %v927 = vadd.f32 %v845, %v886
      %v928 = vadd.f32 %v846, %v887
      %v929 = vadd.f32 %v847, %v888
      %v930 = vadd.f32 %v848, %v889
      %v931 = vadd.f32 %v849, %v890
      %v932 = vadd.f32 %v850, %v891
      %v933 = vadd.f32 %v851, %v892
      %v934 = vadd.f32 %v852, %v893
      %v935 = vadd.f32 %v853, %v894
      %v936 = vadd.f32 %v854, %v895
      %v937 = vadd.f32 %v855, %v896
      %v938 = vadd.f32 %v856, %v897
      %v939 = vadd.f32 %v857, %v898
      %v940 = vadd.f32 %v858, %v899
      %v941 = vmax.f32 %v900, 0.0
      %v942 = vmax.f32 %v901, 0.0
      %v943 = vmax.f32 %v902, 0.0
      %v944 = vmax.f32 %v903, 0.0
      %v945 = vmax.f32 %v904, 0.0
      %v946 = vmax.f32 %v905, 0.0
      %v947 = vmax.f32 %v906, 0.0
      %v948 = vmax.f32 %v907, 0.0
      %v949 = vmax.f32 %v908, 0.0
      %v950 = vmax.f32 %v909, 0.0
      %v951 = vmax.f32 %v910, 0.0
      %v952 = vmax.f32 %v911, 0.0
      %v953 = vmax.f32 %v912, 0.0
      %v954 = vmax.f32 %v913, 0.0
      %v955 = vmax.f32 %v914, 0.0
      %v956 = vmax.f32 %v915, 0.0
      %v957 = vmax.f32 %v916, 0.0
      %v958 = vmax.f32 %v917, 0.0
      %v959 = vmax.f32 %v918, 0.0
      %v960 = vmax.f32 %v919, 0.0
      %v961 = vmax.f32 %v920, 0.0
      %v962 = vmax.f32 %v921, 0.0
      %v963 = vmax.f32 %v922, 0.0
      %v964 = vmax.f32 %v923, 0.0
      %v965 = vmax.f32 %v924, 0.0
      %v966 = vmax.f32 %v925, 0.0
      %v967 = vmax.f32 %v926, 0.0
      %v968 = vmax.f32 %v927, 0.0
      %v969 = vmax.f32 %v928, 0.0
      %v970 = vmax.f32 %v929, 0.0
      %v971 = vmax.f32 %v930, 0.0
      %v972 = vmax.f32 %v931, 0.0
      %v973 = vmax.f32 %v932, 0.0
      %v974 = vmax.f32 %v933, 0.0
      %v975 = vmax.f32 %v934, 0.0
      %v976 = vmax.f32 %v935, 0.0
      %v977 = vmax.f32 %v936, 0.0
      %v978 = vmax.f32 %v937, 0.0
      %v979 = vmax.f32 %v938, 0.0
      %v980 = vmax.f32 %v939, 0.0
      %v981 = vmax.f32 %v940, 0.0
      %982 = vst [vmem:[%s298] sm:$0xff] %v941
      %983 = vst [vmem:[%s298 + $0x8] sm:$0xff] %v942
      %984 = vst [vmem:[%s298 + $0x10] sm:$0xff] %v943
      %985 = vst [vmem:[%s298 + $0x18] sm:$0xff] %v944
      %986 = vst [vmem:[%s298 + $0x20] sm:$0xff] %v945
      %987 = vst [vmem:[%s298 + $0x28] sm:$0xff] %v946
      %988 = vst [vmem:[%s298 + $0x30] sm:$0xff] %v947
      %989 = vst [vmem:[%s298 + $0x38] sm:$0xff] %v948
      %990 = vst [vmem:[%s298 + $0x40] sm:$0xff] %v949
      %991 = vst [vmem:[%s298 + $0x48] sm:$0xff] %v950
      %992 = vst [vmem:[%s298 + $0x50] sm:$0xff] %v951
      %993 = vst [vmem:[%s298 + $0x58] sm:$0xff] %v952
      %994 = vst [vmem:[%s298 + $0x60] sm:$0xff] %v953
      %995 = vst [vmem:[%s298 + $0x68] sm:$0xff] %v954
      %996 = vst [vmem:[%s298 + $0x70] sm:$0xff] %v955
      %997 = vst [vmem:[%s298 + $0x78] sm:$0xff] %v956
      %998 = vst [vmem:[%s298 + $0x80] sm:$0xff] %v957
      %999 = vst [vmem:[%s298 + $0x88] sm:$0xff] %v958
      %1000 = vst [vmem:[%s298 + $0x90] sm:$0xff] %v959
      %1001 = vst [vmem:[%s298 + $0x98] sm:$0xff] %v960
      %1002 = vst [vmem:[%s298 + $0xa0] sm:$0xff] %v961
      %1003 = vst [vmem:[%s298 + $0xa8] sm:$0xff] %v962
      %1004 = vst [vmem:[%s298 + $0xb0] sm:$0xff] %v963
      %1005 = vst [vmem:[%s298 + $0xb8] sm:$0xff] %v964
      %1006 = vst [vmem:[%s298 + $0xc0] sm:$0xff] %v965
      %1007 = vst [vmem:[%s298 + $0xc8] sm:$0xff] %v966
      %1008 = vst [vmem:[%s298 + $0xd0] sm:$0xff] %v967
      %1009 = vst [vmem:[%s298 + $0xd8] sm:$0xff] %v968
      %1010 = vst [vmem:[%s298 + $0xe0] sm:$0xff] %v969
      %1011 = vst [vmem:[%s298 + $0xe8] sm:$0xff] %v970
      %1012 = vst [vmem:[%s298 + $0xf0] sm:$0xff] %v971
      %1013 = vst [vmem:[%s298 + $0xf8] sm:$0xff] %v972
      %1014 = vst [vmem:[%s298 + $0x100] sm:$0xff] %v973
      %1015 = vst [vmem:[%s298 + $0x108] sm:$0xff] %v974
      %1016 = vst [vmem:[%s298 + $0x110] sm:$0xff] %v975
      %1017 = vst [vmem:[%s298 + $0x118] sm:$0xff] %v976
      %1018 = vst [vmem:[%s298 + $0x120] sm:$0xff] %v977
      %1019 = vst [vmem:[%s298 + $0x128] sm:$0xff] %v978
      %1020 = vst [vmem:[%s298 + $0x130] sm:$0xff] %v979
      %1021 = vst [vmem:[%s298 + $0x138] sm:$0xff] %v980
      %1022 = vst [vmem:[%s298 + $0x140] sm:$0xff] %v981
      %p1023 = scmp.lt.s32.totalorder %s18, 1
      %s1024 = scalar_select %p1023, %s18, 1
      %s1025 = smul.addr %s1024, 41
      %s1026 = smul.addr %s1025, 8
      %s1027 = scalar_lea.vmem %s7, %s1026
      // Predicated region
      $region49: #{bottleneck_forward.7} parent=47 // pred_check
        %p1028 = pneg %p193
      $region50: #{bottleneck_forward.7} parent=47 // pred_check_branch
        %1030 = sbr.rel (%p1028) target = $region52
      $region51: #{bottleneck_forward.7} parent=47 // pred_region
        _
      $region52: #{bottleneck_forward.7} parent=47 // pred_fallthru
        _
    $region48: #{bottleneck_forward.7} parent=5 // pred_fallthru
      _
    %p1031 = scmp.le.s32.totalorder 2, %s13
    // Predicated region
    $region53: #{bottleneck_forward.7} parent=5 // pred_check
      %p1032 = pneg %p1031
    $region54: #{bottleneck_forward.7} parent=5 // pred_check_branch
      %1034 = sbr.rel (%p1032) target = $region56
    $region55: #{bottleneck_forward.7} parent=5 // pred_region
      %s1035 = ssub.s32 %s13, 2
      // Predicated region
      $region57: #{bottleneck_forward.7} parent=55 // pred_check
        %p1036 = pneg %p199
      $region58: #{bottleneck_forward.7} parent=55 // pred_check_branch
        %1038 = sbr.rel (%p1036) target = $region60
      $region59: #{bottleneck_forward.7} parent=55 // pred_region
        %p1039 = scmp.lt.s32.totalorder %s19, 1
        %s1040 = scalar_select %p1039, %s19, 1
        %s1041 = smul.addr %s1040, 41
        %s1042 = smul.addr %s1041, 8
        %s1043 = scalar_lea.vmem %s7, %s1042
      $region60: #{bottleneck_forward.7} parent=55 // pred_fallthru
        _
    $region56: #{bottleneck_forward.7} parent=5 // pred_fallthru
      _
  $region6: #{bottleneck_forward.7} parent=0 // loop_footer
    %s17 = sadd.s32 1, %s13
  $region7: #{bottleneck_forward.7} parent=0 // loop_footer_branch
    %12 = sbr.rel target = $region3
  $region8: #{bottleneck_forward.7} parent=0 // loop_exit
    _

// kernel: bottleneck_forward.5
$region0: #{bottleneck_forward.5}
  #allocation0 [shape = 'u32[]', space=smem, size = 0x4, offset = 0x4, fixed_abs, tag = 'smem constant byte address 0x4 - core index']
  #allocation1 [shape = 'u32[144,128]{1,0:T(1,128)}', space=vmem, size = 0x12000, scoped, tag = 'internal scratch']
  %s0 = inlined_call_operand.vmem [shape: f32[2,328,128], index: 0, kind: input, shape index: {}]
  %s1 = inlined_call_operand.vmem [shape: f32[328,1], index: 1, kind: input, shape index: {}]
  %s2 = inlined_call_operand.vmem [shape: f32[1,128], index: 2, kind: input, shape index: {}]
  %s3 = inlined_call_operand.vmem [shape: f32[1,128], index: 3, kind: input, shape index: {}]
  %s4 = inlined_call_operand.vmem [shape: f32[1152,128], index: 4, kind: input, shape index: {}]
  %s5 = inlined_call_operand.vmem [shape: f32[2,328,128], index: 5, kind: output, shape index: {0}]
  %s6 = inlined_call_operand.vmem [shape: f32[2,1,128], index: 6, kind: output, shape index: {1}]
  %s7 = inlined_call_operand.vmem [shape: f32[2,1,128], index: 7, kind: output, shape index: {2}]
  %8 = xla_tuple %s5, %s6, %s7
  %s9 = sld [smem:[#allocation0]]
  $region69: #{bottleneck_forward.5} parent=0
    _
  %s11 = ssub.s32 1, %s9
  %s12 = scalar_select 0, %s11, %s9
  loop: start=0, step=1, limit=4
  $region2: #{bottleneck_forward.5} parent=0 // loop_pre_header
    _
  $region3: #{bottleneck_forward.5} parent=0 // loop_header
    %s14 = sphi 0, %s18
    %p15 = scmp.ge.s32.totalorder %s14, 4
    %s24 = sphi 0, %s26
    %s27 = sphi 0, %s24
    %s28 = sphi 0, %s27
    %s44 = sphi 0, %s28
    %s48 = sphi 0, %s48
    %s50 = sphi 0, %s48
    %s51 = sphi 0, %s50
    %s65 = sphi 0, %s51
    %s69 = sphi 0, %s69
    %s71 = sphi 0, %s69
    %s72 = sphi 0, %s71
    %s86 = sphi 0, %s72
    %s90 = sphi 0, %s90
    %s92 = sphi 0, %s90
    %s93 = sphi 0, %s92
    %s107 = sphi 0, %s93
    %s111 = sphi 0, %s111
    %s113 = sphi 0, %s111
    %s114 = sphi 0, %s113
    %s128 = sphi 0, %s114
    %s134 = sphi 0, %s136
    %s137 = sphi 0, %s134
    %s138 = sphi 0, %s137
    %s154 = sphi 0, %s138
    %s160 = sphi 0, %s162
    %s163 = sphi 0, %s160
    %s164 = sphi 0, %s163
    %s180 = sphi 0, %s164
    %s186 = sphi 0, %s188
    %s189 = sphi 0, %s186
    %s190 = sphi 0, %s189
    %s206 = sphi 0, %s190
  $region4: #{bottleneck_forward.5} parent=0 // loop_header_branch
    %17 = sbr.rel (%p15) target = $region8
  $region5: #{bottleneck_forward.5} parent=0 // loop_body
    %s19 = ssub.s32 %s14, 1
    %s20 = ssub.s32 %s14, 2
    %s21 = sadd.s32 %s14, 1
    %s22 = ssub.s32 %s14, %s21
    %p23 = scmp.eq.s32.totalorder %s22, 0
    %s25 = sadd.s32 %s24, 1
    %s26 = scalar_select %p23, %s24, %s25
    %p29 = pneg %p23
    %p30 = scmp.eq.s32.totalorder %s14, 1
    %p31 = por %p29, %p30
    %p32 = scmp.ne.s32.totalorder %s24, %s27
    %p33 = scmp.eq.s32.totalorder %s14, 0
    %p34 = por %p32, %p33
    %p35 = scmp.ne.s32.totalorder %s24, %s27
    %p36 = scmp.eq.s32.totalorder %s19, 1
    %p37 = por %p35, %p36
    %p38 = scmp.ne.s32.totalorder %s27, %s28
    %p39 = scmp.eq.s32.totalorder %s19, 0
    %p40 = por %p38, %p39
    %p41 = scmp.ne.s32.totalorder %s27, %s28
    %p42 = scmp.eq.s32.totalorder %s20, 1
    %p43 = por %p41, %p42
    %p45 = scmp.ne.s32.totalorder %s28, %s44
    %p46 = scmp.eq.s32.totalorder %s20, 0
    %p47 = por %p45, %p46
    %s49 = sadd.s32 %s48, 1
    %p52 = scmp.eq.s32.totalorder %s14, 1
    %p53 = scmp.ne.s32.totalorder %s48, %s50
    %p54 = scmp.eq.s32.totalorder %s14, 0
    %p55 = por %p53, %p54
    %p56 = scmp.ne.s32.totalorder %s48, %s50
    %p57 = scmp.eq.s32.totalorder %s19, 1
    %p58 = por %p56, %p57
    %p59 = scmp.ne.s32.totalorder %s50, %s51
    %p60 = scmp.eq.s32.totalorder %s19, 0
    %p61 = por %p59, %p60
    %p62 = scmp.ne.s32.totalorder %s50, %s51
    %p63 = scmp.eq.s32.totalorder %s20, 1
    %p64 = por %p62, %p63
    %p66 = scmp.ne.s32.totalorder %s51, %s65
    %p67 = scmp.eq.s32.totalorder %s20, 0
    %p68 = por %p66, %p67
    %s70 = sadd.s32 %s69, 1
    %p73 = scmp.eq.s32.totalorder %s14, 1
    %p74 = scmp.ne.s32.totalorder %s69, %s71
    %p75 = scmp.eq.s32.totalorder %s14, 0
    %p76 = por %p74, %p75
    %p77 = scmp.ne.s32.totalorder %s69, %s71
    %p78 = scmp.eq.s32.totalorder %s19, 1
    %p79 = por %p77, %p78
    %p80 = scmp.ne.s32.totalorder %s71, %s72
    %p81 = scmp.eq.s32.totalorder %s19, 0
    %p82 = por %p80, %p81
    %p83 = scmp.ne.s32.totalorder %s71, %s72
    %p84 = scmp.eq.s32.totalorder %s20, 1
    %p85 = por %p83, %p84
    %p87 = scmp.ne.s32.totalorder %s72, %s86
    %p88 = scmp.eq.s32.totalorder %s20, 0
    %p89 = por %p87, %p88
    %s91 = sadd.s32 %s90, 1
    %p94 = scmp.eq.s32.totalorder %s14, 1
    %p95 = scmp.ne.s32.totalorder %s90, %s92
    %p96 = scmp.eq.s32.totalorder %s14, 0
    %p97 = por %p95, %p96
    %p98 = scmp.ne.s32.totalorder %s90, %s92
    %p99 = scmp.eq.s32.totalorder %s19, 1
    %p100 = por %p98, %p99
    %p101 = scmp.ne.s32.totalorder %s92, %s93
    %p102 = scmp.eq.s32.totalorder %s19, 0
    %p103 = por %p101, %p102
    %p104 = scmp.ne.s32.totalorder %s92, %s93
    %p105 = scmp.eq.s32.totalorder %s20, 1
    %p106 = por %p104, %p105
    %p108 = scmp.ne.s32.totalorder %s93, %s107
    %p109 = scmp.eq.s32.totalorder %s20, 0
    %p110 = por %p108, %p109
    %s112 = sadd.s32 %s111, 1
    %p115 = scmp.eq.s32.totalorder %s14, 1
    %p116 = scmp.ne.s32.totalorder %s111, %s113
    %p117 = scmp.eq.s32.totalorder %s14, 0
    %p118 = por %p116, %p117
    %p119 = scmp.ne.s32.totalorder %s111, %s113
    %p120 = scmp.eq.s32.totalorder %s19, 1
    %p121 = por %p119, %p120
    %p122 = scmp.ne.s32.totalorder %s113, %s114
    %p123 = scmp.eq.s32.totalorder %s19, 0
    %p124 = por %p122, %p123
    %p125 = scmp.ne.s32.totalorder %s113, %s114
    %p126 = scmp.eq.s32.totalorder %s20, 1
    %p127 = por %p125, %p126
    %p129 = scmp.ne.s32.totalorder %s114, %s128
    %p130 = scmp.eq.s32.totalorder %s20, 0
    %p131 = por %p129, %p130
    %s132 = ssub.s32 %s14, %s21
    %p133 = scmp.eq.s32.totalorder %s132, 0
    %s135 = sadd.s32 %s134, 1
    %s136 = scalar_select %p133, %s134, %s135
    %p139 = pneg %p133
    %p140 = scmp.eq.s32.totalorder %s14, 1
    %p141 = por %p139, %p140
    %p142 = scmp.ne.s32.totalorder %s134, %s137
    %p143 = scmp.eq.s32.totalorder %s14, 0
    %p144 = por %p142, %p143
    %p145 = scmp.ne.s32.totalorder %s134, %s137
    %p146 = scmp.eq.s32.totalorder %s19, 1
    %p147 = por %p145, %p146
    %p148 = scmp.ne.s32.totalorder %s137, %s138
    %p149 = scmp.eq.s32.totalorder %s19, 0
    %p150 = por %p148, %p149
    %p151 = scmp.ne.s32.totalorder %s137, %s138
    %p152 = scmp.eq.s32.totalorder %s20, 1
    %p153 = por %p151, %p152
    %p155 = scmp.ne.s32.totalorder %s138, %s154
    %p156 = scmp.eq.s32.totalorder %s20, 0
    %p157 = por %p155, %p156
    %s158 = ssub.s32 %s14, %s21
    %p159 = scmp.eq.s32.totalorder %s158, 0
    %s161 = sadd.s32 %s160, 1
    %s162 = scalar_select %p159, %s160, %s161
    %p165 = pneg %p159
    %p166 = scmp.eq.s32.totalorder %s14, 1
    %p167 = por %p165, %p166
    %p168 = scmp.ne.s32.totalorder %s160, %s163
    %p169 = scmp.eq.s32.totalorder %s14, 0
    %p170 = por %p168, %p169
    %p171 = scmp.ne.s32.totalorder %s160, %s163
    %p172 = scmp.eq.s32.totalorder %s19, 1
    %p173 = por %p171, %p172
    %p174 = scmp.ne.s32.totalorder %s163, %s164
    %p175 = scmp.eq.s32.totalorder %s19, 0
    %p176 = por %p174, %p175
    %p177 = scmp.ne.s32.totalorder %s163, %s164
    %p178 = scmp.eq.s32.totalorder %s20, 1
    %p179 = por %p177, %p178
    %p181 = scmp.ne.s32.totalorder %s164, %s180
    %p182 = scmp.eq.s32.totalorder %s20, 0
    %p183 = por %p181, %p182
    %s184 = ssub.s32 %s14, %s21
    %p185 = scmp.eq.s32.totalorder %s184, 0
    %s187 = sadd.s32 %s186, 1
    %s188 = scalar_select %p185, %s186, %s187
    %p191 = pneg %p185
    %p192 = scmp.eq.s32.totalorder %s14, 1
    %p193 = por %p191, %p192
    %p194 = scmp.ne.s32.totalorder %s186, %s189
    %p195 = scmp.eq.s32.totalorder %s14, 0
    %p196 = por %p194, %p195
    %p197 = scmp.ne.s32.totalorder %s186, %s189
    %p198 = scmp.eq.s32.totalorder %s19, 1
    %p199 = por %p197, %p198
    %p200 = scmp.ne.s32.totalorder %s189, %s190
    %p201 = scmp.eq.s32.totalorder %s19, 0
    %p202 = por %p200, %p201
    %p203 = scmp.ne.s32.totalorder %s189, %s190
    %p204 = scmp.eq.s32.totalorder %s20, 1
    %p205 = por %p203, %p204
    %p207 = scmp.ne.s32.totalorder %s190, %s206
    %p208 = scmp.eq.s32.totalorder %s20, 0
    %p209 = por %p207, %p208
    %p210 = scmp.le.s32.totalorder 1, %s14
    %p211 = scmp.lt.s32.totalorder %s14, 3
    %p212 = pnand %p210, %p211
    %p213 = pneg %p212
    // Predicated region
    $region9: #{bottleneck_forward.5} parent=5 // pred_check
      _
    $region10: #{bottleneck_forward.5} parent=5 // pred_check_branch
      %215 = sbr.rel (%p212) target = $region12
    $region11: #{bottleneck_forward.5} parent=5 // pred_region
      %s216 = ssub.s32 %s14, 1
      // Predicated region
      $region13: #{bottleneck_forward.5} parent=11 // pred_check
        %p217 = pneg %p61
      $region14: #{bottleneck_forward.5} parent=11 // pred_check_branch
        %219 = sbr.rel (%p217) target = $region16
      $region15: #{bottleneck_forward.5} parent=11 // pred_region
        _
      $region16: #{bottleneck_forward.5} parent=11 // pred_fallthru
        _
      // Predicated region
      $region17: #{bottleneck_forward.5} parent=11 // pred_check
        %p220 = pneg %p82
      $region18: #{bottleneck_forward.5} parent=11 // pred_check_branch
        %222 = sbr.rel (%p220) target = $region20
      $region19: #{bottleneck_forward.5} parent=11 // pred_region
        _
      $region20: #{bottleneck_forward.5} parent=11 // pred_fallthru
        _
      // Predicated region
      $region21: #{bottleneck_forward.5} parent=11 // pred_check
        %p223 = pneg %p103
      $region22: #{bottleneck_forward.5} parent=11 // pred_check_branch
        %225 = sbr.rel (%p223) target = $region24
      $region23: #{bottleneck_forward.5} parent=11 // pred_region
        _
      $region24: #{bottleneck_forward.5} parent=11 // pred_fallthru
        _
      // Predicated region
      $region25: #{bottleneck_forward.5} parent=11 // pred_check
        %p226 = pneg %p124
      $region26: #{bottleneck_forward.5} parent=11 // pred_check_branch
        %228 = sbr.rel (%p226) target = $region28
      $region27: #{bottleneck_forward.5} parent=11 // pred_region
        _
      $region28: #{bottleneck_forward.5} parent=11 // pred_fallthru
        _
    $region12: #{bottleneck_forward.5} parent=5 // pred_fallthru
      _
    %p229 = scmp.lt.s32.totalorder %s14, 2
    // Predicated region
    $region29: #{bottleneck_forward.5} parent=5 // pred_check
      %p230 = pneg %p229
    $region30: #{bottleneck_forward.5} parent=5 // pred_check_branch
      %232 = sbr.rel (%p230) target = $region32
    $region31: #{bottleneck_forward.5} parent=5 // pred_region
      // Predicated region
      $region33: #{bottleneck_forward.5} parent=31 // pred_check
        %p233 = pneg %p34
      $region34: #{bottleneck_forward.5} parent=31 // pred_check_branch
        %235 = sbr.rel (%p233) target = $region36
      $region35: #{bottleneck_forward.5} parent=31 // pred_region
        %p236 = scmp.lt.s32.totalorder %s14, 1
        %s237 = scalar_select %p236, %s14, 1
        %s238 = smul.addr %s237, 41
        %s239 = smul.addr %s238, 8
        %s240 = scalar_lea.vmem %s0, %s239
      $region36: #{bottleneck_forward.5} parent=31 // pred_fallthru
        _
    $region32: #{bottleneck_forward.5} parent=5 // pred_fallthru
      _
    %p241 = scmp.le.s32.totalorder 1, %s14
    %p242 = scmp.lt.s32.totalorder %s14, 3
    %p243 = pnand %p241, %p242
    %p244 = pneg %p243
    // Predicated region
    $region37: #{bottleneck_forward.5} parent=5 // pred_check
      _
    $region38: #{bottleneck_forward.5} parent=5 // pred_check_branch
      %246 = sbr.rel (%p243) target = $region40
    $region39: #{bottleneck_forward.5} parent=5 // pred_region
      %s247 = ssub.s32 %s14, 1
      %p248 = scmp.lt.s32.totalorder %s19, 1
      %s249 = scalar_select %p248, %s19, 1
      %s250 = smul.addr %s249, 41
      %s251 = smul.addr %s250, 8
      %s252 = scalar_lea.vmem %s0, %s251
      %p253 = pneg %p40
      %p254 = pneg %p37
      %p255 = pneg %p61
      %p256 = pneg %p58
      %p257 = pneg %p82
      %p258 = pneg %p79
      %p259 = pneg %p103
      %p260 = pneg %p100
      %p261 = pneg %p124
      %p262 = pneg %p121
      %p263 = pneg %p150
      %p264 = pneg %p147
      %p265 = scmp.lt.s32.totalorder %s19, 1
      %s266 = scalar_select %p265, %s19, 1
      %s267 = smul.addr %s266, 41
      %s268 = smul.addr %s267, 8
      %s269 = scalar_lea.vmem %s5, %s268
      %p270 = pneg %p176
      %p271 = pneg %p173
      %p272 = scmp.lt.s32.totalorder %s19, 1
      %s273 = scalar_select %p272, %s19, 1
      %s274 = scalar_lea.vmem %s6, %s273
      %p275 = pneg %p202
      %p276 = pneg %p199
      %p277 = scmp.lt.s32.totalorder %s19, 1
      %s278 = scalar_select %p277, %s19, 1
      %s279 = scalar_lea.vmem %s7, %s278
      %p280 = scmp.lt.s32.totalorder %s19, 1
      %s281 = scalar_select %p280, %s19, 1
      %s282 = smul.addr %s281, 41
      %s283 = smul.addr %s282, 8
      %s284 = scalar_lea.vmem %s0, %s283
      %p285 = scmp.lt.s32.totalorder %s19, 1
      %s286 = scalar_select %p285, %s19, 1
      %s287 = smul.addr %s286, 41
      %s288 = smul.addr %s287, 8
      %s289 = scalar_lea.vmem %s5, %s288
      %p290 = scmp.lt.s32.totalorder %s19, 1
      %s291 = scalar_select %p290, %s19, 1
      %s292 = scalar_lea.vmem %s6, %s291
      %p293 = scmp.lt.s32.totalorder %s19, 1
      %s294 = scalar_select %p293, %s19, 1
      %s295 = scalar_lea.vmem %s7, %s294
      %v296 = vld [vmem:[%s1] sm:$0xff]
      %v297 = vld [vmem:[%s1 + $0x8] sm:$0xff]
      %v298 = vld [vmem:[%s1 + $0x10] sm:$0xff]
      %v299 = vld [vmem:[%s1 + $0x18] sm:$0xff]
      %v300 = vld [vmem:[%s1 + $0x20] sm:$0xff]
      %v301 = vld [vmem:[%s1 + $0x28] sm:$0xff]
      %v302 = vld [vmem:[%s1 + $0x30] sm:$0xff]
      %v303 = vld [vmem:[%s1 + $0x38] sm:$0xff]
      %v304 = vld [vmem:[%s1 + $0x40] sm:$0xff]
      %v305 = vld [vmem:[%s1 + $0x48] sm:$0xff]
      %v306 = vld [vmem:[%s1 + $0x50] sm:$0xff]
      %v307 = vld [vmem:[%s1 + $0x58] sm:$0xff]
      %v308 = vld [vmem:[%s1 + $0x60] sm:$0xff]
      %v309 = vld [vmem:[%s1 + $0x68] sm:$0xff]
      %v310 = vld [vmem:[%s1 + $0x70] sm:$0xff]
      %v311 = vld [vmem:[%s1 + $0x78] sm:$0xff]
      %v312 = vld [vmem:[%s1 + $0x80] sm:$0xff]
      %v313 = vld [vmem:[%s1 + $0x88] sm:$0xff]
      %v314 = vld [vmem:[%s1 + $0x90] sm:$0xff]
      %v315 = vld [vmem:[%s1 + $0x98] sm:$0xff]
      %v316 = vld [vmem:[%s1 + $0xa0] sm:$0xff]
      %v317 = vld [vmem:[%s1 + $0xa8] sm:$0xff]
      %v318 = vld [vmem:[%s1 + $0xb0] sm:$0xff]
      %v319 = vld [vmem:[%s1 + $0xb8] sm:$0xff]
      %v320 = vld [vmem:[%s1 + $0xc0] sm:$0xff]
      %v321 = vld [vmem:[%s1 + $0xc8] sm:$0xff]
      %v322 = vld [vmem:[%s1 + $0xd0] sm:$0xff]
      %v323 = vld [vmem:[%s1 + $0xd8] sm:$0xff]
      %v324 = vld [vmem:[%s1 + $0xe0] sm:$0xff]
      %v325 = vld [vmem:[%s1 + $0xe8] sm:$0xff]
      %v326 = vld [vmem:[%s1 + $0xf0] sm:$0xff]
      %v327 = vld [vmem:[%s1 + $0xf8] sm:$0xff]
      %v328 = vld [vmem:[%s1 + $0x100] sm:$0xff]
      %v329 = vld [vmem:[%s1 + $0x108] sm:$0xff]
      %v330 = vld [vmem:[%s1 + $0x110] sm:$0xff]
      %v331 = vld [vmem:[%s1 + $0x118] sm:$0xff]
      %v332 = vld [vmem:[%s1 + $0x120] sm:$0xff]
      %v333 = vld [vmem:[%s1 + $0x128] sm:$0xff]
      %v334 = vld [vmem:[%s1 + $0x130] sm:$0xff]
      %v335 = vld [vmem:[%s1 + $0x138] sm:$0xff]
      %v336 = vld [vmem:[%s1 + $0x140] sm:$0xff]
      %v337 = vld [vmem:[%s284] sm:$0xff]
      %v338 = vld [vmem:[%s284 + $0x8] sm:$0xff]
      %v339 = vld [vmem:[%s284 + $0x10] sm:$0xff]
      %v340 = vld [vmem:[%s284 + $0x18] sm:$0xff]
      %v341 = vld [vmem:[%s284 + $0x20] sm:$0xff]
      %v342 = vld [vmem:[%s284 + $0x28] sm:$0xff]
      %v343 = vld [vmem:[%s284 + $0x30] sm:$0xff]
      %v344 = vld [vmem:[%s284 + $0x38] sm:$0xff]
      %v345 = vld [vmem:[%s284 + $0x40] sm:$0xff]
      %v346 = vld [vmem:[%s284 + $0x48] sm:$0xff]
      %v347 = vld [vmem:[%s284 + $0x50] sm:$0xff]
      %v348 = vld [vmem:[%s284 + $0x58] sm:$0xff]
      %v349 = vld [vmem:[%s284 + $0x60] sm:$0xff]
      %v350 = vld [vmem:[%s284 + $0x68] sm:$0xff]
      %v351 = vld [vmem:[%s284 + $0x70] sm:$0xff]
      %v352 = vld [vmem:[%s284 + $0x78] sm:$0xff]
      %v353 = vld [vmem:[%s284 + $0x80] sm:$0xff]
      %v354 = vld [vmem:[%s284 + $0x88] sm:$0xff]
      %v355 = vld [vmem:[%s284 + $0x90] sm:$0xff]
      %v356 = vld [vmem:[%s284 + $0x98] sm:$0xff]
      %v357 = vld [vmem:[%s284 + $0xa0] sm:$0xff]
      %v358 = vld [vmem:[%s284 + $0xa8] sm:$0xff]
      %v359 = vld [vmem:[%s284 + $0xb0] sm:$0xff]
      %v360 = vld [vmem:[%s284 + $0xb8] sm:$0xff]
      %v361 = vld [vmem:[%s284 + $0xc0] sm:$0xff]
      %v362 = vld [vmem:[%s284 + $0xc8] sm:$0xff]
      %v363 = vld [vmem:[%s284 + $0xd0] sm:$0xff]
      %v364 = vld [vmem:[%s284 + $0xd8] sm:$0xff]
      %v365 = vld [vmem:[%s284 + $0xe0] sm:$0xff]
      %v366 = vld [vmem:[%s284 + $0xe8] sm:$0xff]
      %v367 = vld [vmem:[%s284 + $0xf0] sm:$0xff]
      %v368 = vld [vmem:[%s284 + $0xf8] sm:$0xff]
      %v369 = vld [vmem:[%s284 + $0x100] sm:$0xff]
      %v370 = vld [vmem:[%s284 + $0x108] sm:$0xff]
      %v371 = vld [vmem:[%s284 + $0x110] sm:$0xff]
      %v372 = vld [vmem:[%s284 + $0x118] sm:$0xff]
      %v373 = vld [vmem:[%s284 + $0x120] sm:$0xff]
      %v374 = vld [vmem:[%s284 + $0x128] sm:$0xff]
      %v375 = vld [vmem:[%s284 + $0x130] sm:$0xff]
      %v376 = vld [vmem:[%s284 + $0x138] sm:$0xff]
      %v377 = vld [vmem:[%s284 + $0x140] sm:$0xff]
      %v378 = vld [vmem:[%s2] sm:$0x1]
      %v380 = vlaneseq
      %v381 = vshrl.u32 %v380, 7
      %v382 = vsub.s32 0, %v381
      %v383 = vrot.slane %v378, %v382
      %v385 = vmul.f32 %v337, %v383
      %v386 = vmul.f32 %v338, %v383
      %v387 = vmul.f32 %v339, %v383
      %v388 = vmul.f32 %v340, %v383
      %v389 = vmul.f32 %v341, %v383
      %v390 = vmul.f32 %v342, %v383
      %v391 = vmul.f32 %v343, %v383
      %v392 = vmul.f32 %v344, %v383
      %v393 = vmul.f32 %v345, %v383
      %v394 = vmul.f32 %v346, %v383
      %v395 = vmul.f32 %v347, %v383
      %v396 = vmul.f32 %v348, %v383
      %v397 = vmul.f32 %v349, %v383
      %v398 = vmul.f32 %v350, %v383
      %v399 = vmul.f32 %v351, %v383
      %v400 = vmul.f32 %v352, %v383
      %v401 = vmul.f32 %v353, %v383
      %v402 = vmul.f32 %v354, %v383
      %v403 = vmul.f32 %v355, %v383
      %v404 = vmul.f32 %v356, %v383
      %v405 = vmul.f32 %v357, %v383
      %v406 = vmul.f32 %v358, %v383
      %v407 = vmul.f32 %v359, %v383
      %v408 = vmul.f32 %v360, %v383
      %v409 = vmul.f32 %v361, %v383
      %v410 = vmul.f32 %v362, %v383
      %v411 = vmul.f32 %v363, %v383
      %v412 = vmul.f32 %v364, %v383
      %v413 = vmul.f32 %v365, %v383
      %v414 = vmul.f32 %v366, %v383
      %v415 = vmul.f32 %v367, %v383
      %v416 = vmul.f32 %v368, %v383
      %v417 = vmul.f32 %v369, %v383
      %v418 = vmul.f32 %v370, %v383
      %v419 = vmul.f32 %v371, %v383
      %v420 = vmul.f32 %v372, %v383
      %v421 = vmul.f32 %v373, %v383
      %v422 = vmul.f32 %v374, %v383
      %v423 = vmul.f32 %v375, %v383
      %v424 = vmul.f32 %v376, %v383
      %v425 = vmul.f32 %v377, %v383
      %v426 = vld [vmem:[%s3] sm:$0x1]
      %v428 = vlaneseq
      %v429 = vshrl.u32 %v428, 7
      %v430 = vsub.s32 0, %v429
      %v431 = vrot.slane %v426, %v430
      %v433 = vadd.f32 %v385, %v431
      %v434 = vadd.f32 %v386, %v431
      %v435 = vadd.f32 %v387, %v431
      %v436 = vadd.f32 %v388, %v431
      %v437 = vadd.f32 %v389, %v431
      %v438 = vadd.f32 %v390, %v431
      %v439 = vadd.f32 %v391, %v431
      %v440 = vadd.f32 %v392, %v431
      %v441 = vadd.f32 %v393, %v431
      %v442 = vadd.f32 %v394, %v431
      %v443 = vadd.f32 %v395, %v431
      %v444 = vadd.f32 %v396, %v431
      %v445 = vadd.f32 %v397, %v431
      %v446 = vadd.f32 %v398, %v431
      %v447 = vadd.f32 %v399, %v431
      %v448 = vadd.f32 %v400, %v431
      %v449 = vadd.f32 %v401, %v431
      %v450 = vadd.f32 %v402, %v431
      %v451 = vadd.f32 %v403, %v431
      %v452 = vadd.f32 %v404, %v431
      %v453 = vadd.f32 %v405, %v431
      %v454 = vadd.f32 %v406, %v431
      %v455 = vadd.f32 %v407, %v431
      %v456 = vadd.f32 %v408, %v431
      %v457 = vadd.f32 %v409, %v431
      %v458 = vadd.f32 %v410, %v431
      %v459 = vadd.f32 %v411, %v431
      %v460 = vadd.f32 %v412, %v431
      %v461 = vadd.f32 %v413, %v431
      %v462 = vadd.f32 %v414, %v431
      %v463 = vadd.f32 %v415, %v431
      %v464 = vadd.f32 %v416, %v431
      %v465 = vadd.f32 %v417, %v431
      %v466 = vadd.f32 %v418, %v431
      %v467 = vadd.f32 %v419, %v431
      %v468 = vadd.f32 %v420, %v431
      %v469 = vadd.f32 %v421, %v431
      %v470 = vadd.f32 %v422, %v431
      %v471 = vadd.f32 %v423, %v431
      %v472 = vadd.f32 %v424, %v431
      %v473 = vadd.f32 %v425, %v431
      %v474 = vmax.f32 %v433, 0.0
      %v475 = vmax.f32 %v434, 0.0
      %v476 = vmax.f32 %v435, 0.0
      %v477 = vmax.f32 %v436, 0.0
      %v478 = vmax.f32 %v437, 0.0
      %v479 = vmax.f32 %v438, 0.0
      %v480 = vmax.f32 %v439, 0.0
      %v481 = vmax.f32 %v440, 0.0
      %v482 = vmax.f32 %v441, 0.0
      %v483 = vmax.f32 %v442, 0.0
      %v484 = vmax.f32 %v443, 0.0
      %v485 = vmax.f32 %v444, 0.0
      %v486 = vmax.f32 %v445, 0.0
      %v487 = vmax.f32 %v446, 0.0
      %v488 = vmax.f32 %v447, 0.0
      %v489 = vmax.f32 %v448, 0.0
      %v490 = vmax.f32 %v449, 0.0
      %v491 = vmax.f32 %v450, 0.0
      %v492 = vmax.f32 %v451, 0.0
      %v493 = vmax.f32 %v452, 0.0
      %v494 = vmax.f32 %v453, 0.0
      %v495 = vmax.f32 %v454, 0.0
      %v496 = vmax.f32 %v455, 0.0
      %v497 = vmax.f32 %v456, 0.0
      %v498 = vmax.f32 %v457, 0.0
      %v499 = vmax.f32 %v458, 0.0
      %v500 = vmax.f32 %v459, 0.0
      %v501 = vmax.f32 %v460, 0.0
      %v502 = vmax.f32 %v461, 0.0
      %v503 = vmax.f32 %v462, 0.0
      %v504 = vmax.f32 %v463, 0.0
      %v505 = vmax.f32 %v464, 0.0
      %v506 = vmax.f32 %v465, 0.0
      %v507 = vmax.f32 %v466, 0.0
      %v508 = vmax.f32 %v467, 0.0
      %v509 = vmax.f32 %v468, 0.0
      %v510 = vmax.f32 %v469, 0.0
      %v511 = vmax.f32 %v470, 0.0
      %v512 = vmax.f32 %v471, 0.0
      %v513 = vmax.f32 %v472, 0.0
      %v514 = vmax.f32 %v473, 0.0
      %516 = vset.pattern.permute.xlu0 0
      %517 = vperm.xlu0 %516, %v296
      %v518 = vpop.permute.xlu0 %517
      %521 = vset.pattern.permute.xlu0 0
      %522 = vperm.xlu0 %521, %v297
      %v523 = vpop.permute.xlu0 %522
      %526 = vset.pattern.permute.xlu0 0
      %527 = vperm.xlu0 %526, %v298
      %v528 = vpop.permute.xlu0 %527
      %531 = vset.pattern.permute.xlu0 0
      %532 = vperm.xlu0 %531, %v299
      %v533 = vpop.permute.xlu0 %532
      %536 = vset.pattern.permute.xlu0 0
      %537 = vperm.xlu0 %536, %v300
      %v538 = vpop.permute.xlu0 %537
      %541 = vset.pattern.permute.xlu0 0
      %542 = vperm.xlu0 %541, %v301
      %v543 = vpop.permute.xlu0 %542
      %546 = vset.pattern.permute.xlu0 0
      %547 = vperm.xlu0 %546, %v302
      %v548 = vpop.permute.xlu0 %547
      %551 = vset.pattern.permute.xlu0 0
      %552 = vperm.xlu0 %551, %v303
      %v553 = vpop.permute.xlu0 %552
      %556 = vset.pattern.permute.xlu0 0
      %557 = vperm.xlu0 %556, %v304
      %v558 = vpop.permute.xlu0 %557
      %561 = vset.pattern.permute.xlu0 0
      %562 = vperm.xlu0 %561, %v305
      %v563 = vpop.permute.xlu0 %562
      %566 = vset.pattern.permute.xlu0 0
      %567 = vperm.xlu0 %566, %v306
      %v568 = vpop.permute.xlu0 %567
      %571 = vset.pattern.permute.xlu0 0
      %572 = vperm.xlu0 %571, %v307
      %v573 = vpop.permute.xlu0 %572
      %576 = vset.pattern.permute.xlu0 0
      %577 = vperm.xlu0 %576, %v308
      %v578 = vpop.permute.xlu0 %577
      %581 = vset.pattern.permute.xlu0 0
      %582 = vperm.xlu0 %581, %v309
      %v583 = vpop.permute.xlu0 %582
      %586 = vset.pattern.permute.xlu0 0
      %587 = vperm.xlu0 %586, %v310
      %v588 = vpop.permute.xlu0 %587
      %591 = vset.pattern.permute.xlu0 0
      %592 = vperm.xlu0 %591, %v311
      %v593 = vpop.permute.xlu0 %592
      %596 = vset.pattern.permute.xlu0 0
      %597 = vperm.xlu0 %596, %v312
      %v598 = vpop.permute.xlu0 %597
      %601 = vset.pattern.permute.xlu0 0
      %602 = vperm.xlu0 %601, %v313
      %v603 = vpop.permute.xlu0 %602
      %606 = vset.pattern.permute.xlu0 0
      %607 = vperm.xlu0 %606, %v314
      %v608 = vpop.permute.xlu0 %607
      %611 = vset.pattern.permute.xlu0 0
      %612 = vperm.xlu0 %611, %v315
      %v613 = vpop.permute.xlu0 %612
      %616 = vset.pattern.permute.xlu0 0
      %617 = vperm.xlu0 %616, %v316
      %v618 = vpop.permute.xlu0 %617
      %621 = vset.pattern.permute.xlu0 0
      %622 = vperm.xlu0 %621, %v317
      %v623 = vpop.permute.xlu0 %622
      %626 = vset.pattern.permute.xlu0 0
      %627 = vperm.xlu0 %626, %v318
      %v628 = vpop.permute.xlu0 %627
      %631 = vset.pattern.permute.xlu0 0
      %632 = vperm.xlu0 %631, %v319
      %v633 = vpop.permute.xlu0 %632
      %636 = vset.pattern.permute.xlu0 0
      %637 = vperm.xlu0 %636, %v320
      %v638 = vpop.permute.xlu0 %637
      %641 = vset.pattern.permute.xlu0 0
      %642 = vperm.xlu0 %641, %v321
      %v643 = vpop.permute.xlu0 %642
      %646 = vset.pattern.permute.xlu0 0
      %647 = vperm.xlu0 %646, %v322
      %v648 = vpop.permute.xlu0 %647
      %651 = vset.pattern.permute.xlu0 0
      %652 = vperm.xlu0 %651, %v323
      %v653 = vpop.permute.xlu0 %652
      %656 = vset.pattern.permute.xlu0 0
      %657 = vperm.xlu0 %656, %v324
      %v658 = vpop.permute.xlu0 %657
      %661 = vset.pattern.permute.xlu0 0
      %662 = vperm.xlu0 %661, %v325
      %v663 = vpop.permute.xlu0 %662
      %666 = vset.pattern.permute.xlu0 0
      %667 = vperm.xlu0 %666, %v326
      %v668 = vpop.permute.xlu0 %667
      %671 = vset.pattern.permute.xlu0 0
      %672 = vperm.xlu0 %671, %v327
      %v673 = vpop.permute.xlu0 %672
      %676 = vset.pattern.permute.xlu0 0
      %677 = vperm.xlu0 %676, %v328
      %v678 = vpop.permute.xlu0 %677
      %681 = vset.pattern.permute.xlu0 0
      %682 = vperm.xlu0 %681, %v329
      %v683 = vpop.permute.xlu0 %682
      %686 = vset.pattern.permute.xlu0 0
      %687 = vperm.xlu0 %686, %v330
      %v688 = vpop.permute.xlu0 %687
      %691 = vset.pattern.permute.xlu0 0
      %692 = vperm.xlu0 %691, %v331
      %v693 = vpop.permute.xlu0 %692
      %696 = vset.pattern.permute.xlu0 0
      %697 = vperm.xlu0 %696, %v332
      %v698 = vpop.permute.xlu0 %697
      %701 = vset.pattern.permute.xlu0 0
      %702 = vperm.xlu0 %701, %v333
      %v703 = vpop.permute.xlu0 %702
      %706 = vset.pattern.permute.xlu0 0
      %707 = vperm.xlu0 %706, %v334
      %v708 = vpop.permute.xlu0 %707
      %711 = vset.pattern.permute.xlu0 0
      %712 = vperm.xlu0 %711, %v335
      %v713 = vpop.permute.xlu0 %712
      %716 = vset.pattern.permute.xlu0 0
      %717 = vperm.xlu0 %716, %v336
      %v718 = vpop.permute.xlu0 %717
      %v720 = vmul.f32 %v474, %v518
      %v721 = vmul.f32 %v475, %v523
      %v722 = vmul.f32 %v476, %v528
      %v723 = vmul.f32 %v477, %v533
      %v724 = vmul.f32 %v478, %v538
      %v725 = vmul.f32 %v479, %v543
      %v726 = vmul.f32 %v480, %v548
      %v727 = vmul.f32 %v481, %v553
      %v728 = vmul.f32 %v482, %v558
      %v729 = vmul.f32 %v483, %v563
      %v730 = vmul.f32 %v484, %v568
      %v731 = vmul.f32 %v485, %v573
      %v732 = vmul.f32 %v486, %v578
      %v733 = vmul.f32 %v487, %v583
      %v734 = vmul.f32 %v488, %v588
      %v735 = vmul.f32 %v489, %v593
      %v736 = vmul.f32 %v490, %v598
      %v737 = vmul.f32 %v491, %v603
      %v738 = vmul.f32 %v492, %v608
      %v739 = vmul.f32 %v493, %v613
      %v740 = vmul.f32 %v494, %v618
      %v741 = vmul.f32 %v495, %v623
      %v742 = vmul.f32 %v496, %v628
      %v743 = vmul.f32 %v497, %v633
      %v744 = vmul.f32 %v498, %v638
      %v745 = vmul.f32 %v499, %v643
      %v746 = vmul.f32 %v500, %v648
      %v747 = vmul.f32 %v501, %v653
      %v748 = vmul.f32 %v502, %v658
      %v749 = vmul.f32 %v503, %v663
      %v750 = vmul.f32 %v504, %v668
      %v751 = vmul.f32 %v505, %v673
      %v752 = vmul.f32 %v506, %v678
      %v753 = vmul.f32 %v507, %v683
      %v754 = vmul.f32 %v508, %v688
      %v755 = vmul.f32 %v509, %v693
      %v756 = vmul.f32 %v510, %v698
      %v757 = vmul.f32 %v511, %v703
      %v758 = vmul.f32 %v512, %v708
      %v759 = vmul.f32 %v513, %v713
      %v760 = vmul.f32 %v514, %v718
      %vm798 = vcmask 1046528
      %v799 = vrot.slane %v720, 1
      %v800 = vrot.slane %v721, 1
      %v801 = vsel %vm798, %v799, %v800
      %v802 = vrot.slane %v722, 1
      %v803 = vsel %vm798, %v800, %v802
      %v804 = vrot.slane %v723, 1
      %v805 = vsel %vm798, %v802, %v804
      %v806 = vrot.slane %v724, 1
      %v807 = vsel %vm798, %v804, %v806
      %v808 = vrot.slane %v725, 1
      %v809 = vsel %vm798, %v806, %v808
      %v810 = vrot.slane %v726, 1
      %v811 = vsel %vm798, %v808, %v810
      %v812 = vrot.slane %v727, 1
      %v813 = vsel %vm798, %v810, %v812
      %v814 = vrot.slane %v728, 1
      %v815 = vsel %vm798, %v812, %v814
      %v816 = vrot.slane %v729, 1
      %v817 = vsel %vm798, %v814, %v816
      %v818 = vrot.slane %v730, 1
      %v819 = vsel %vm798, %v816, %v818
      %v820 = vrot.slane %v731, 1
      %v821 = vsel %vm798, %v818, %v820
      %v822 = vrot.slane %v732, 1
      %v823 = vsel %vm798, %v820, %v822
      %v824 = vrot.slane %v733, 1
      %v825 = vsel %vm798, %v822, %v824
      %v826 = vrot.slane %v734, 1
      %v827 = vsel %vm798, %v824, %v826
      %v828 = vrot.slane %v735, 1
      %v829 = vsel %vm798, %v826, %v828
      %v830 = vrot.slane %v736, 1
      %v831 = vsel %vm798, %v828, %v830
      %v832 = vrot.slane %v737, 1
      %v833 = vsel %vm798, %v830, %v832
      %v834 = vrot.slane %v738, 1
      %v835 = vsel %vm798, %v832, %v834
      %v836 = vrot.slane %v739, 1
      %v837 = vsel %vm798, %v834, %v836
      %v838 = vrot.slane %v740, 1
      %v839 = vsel %vm798, %v836, %v838
      %v840 = vrot.slane %v741, 1
      %v841 = vsel %vm798, %v838, %v840
      %v842 = vrot.slane %v742, 1
      %v843 = vsel %vm798, %v840, %v842
      %v844 = vrot.slane %v743, 1
      %v845 = vsel %vm798, %v842, %v844
      %v846 = vrot.slane %v744, 1
      %v847 = vsel %vm798, %v844, %v846
      %v848 = vrot.slane %v745, 1
      %v849 = vsel %vm798, %v846, %v848
      %v850 = vrot.slane %v746, 1
      %v851 = vsel %vm798, %v848, %v850
      %v852 = vrot.slane %v747, 1
      %v853 = vsel %vm798, %v850, %v852
      %v854 = vrot.slane %v748, 1
      %v855 = vsel %vm798, %v852, %v854
      %v856 = vrot.slane %v749, 1
      %v857 = vsel %vm798, %v854, %v856
      %v858 = vrot.slane %v750, 1
      %v859 = vsel %vm798, %v856, %v858
      %v860 = vrot.slane %v751, 1
      %v861 = vsel %vm798, %v858, %v860
      %v862 = vrot.slane %v752, 1
      %v863 = vsel %vm798, %v860, %v862
      %v864 = vrot.slane %v753, 1
      %v865 = vsel %vm798, %v862, %v864
      %v866 = vrot.slane %v754, 1
      %v867 = vsel %vm798, %v864, %v866
      %v868 = vrot.slane %v755, 1
      %v869 = vsel %vm798, %v866, %v868
      %v870 = vrot.slane %v756, 1
      %v871 = vsel %vm798, %v868, %v870
      %vm908 = vcmask 1045504
      %v909 = vrot.slane %v720, 2
      %v910 = vrot.slane %v721, 2
      %v911 = vsel %vm908, %v909, %v910
      %v912 = vrot.slane %v722, 2
      %v913 = vsel %vm908, %v910, %v912
      %v914 = vrot.slane %v723, 2
      %v915 = vsel %vm908, %v912, %v914
      %v916 = vrot.slane %v724, 2
      %v917 = vsel %vm908, %v914, %v916
      %v918 = vrot.slane %v725, 2
      %v919 = vsel %vm908, %v916, %v918
      %v920 = vrot.slane %v726, 2
      %v921 = vsel %vm908, %v918, %v920
      %v922 = vrot.slane %v727, 2
      %v923 = vsel %vm908, %v920, %v922
      %v924 = vrot.slane %v728, 2
      %v925 = vsel %vm908, %v922, %v924
      %v926 = vrot.slane %v729, 2
      %v927 = vsel %vm908, %v924, %v926
      %v928 = vrot.slane %v730, 2
      %v929 = vsel %vm908, %v926, %v928
      %v930 = vrot.slane %v731, 2
      %v931 = vsel %vm908, %v928, %v930
      %v932 = vrot.slane %v732, 2
      %v933 = vsel %vm908, %v930, %v932
      %v934 = vrot.slane %v733, 2
      %v935 = vsel %vm908, %v932, %v934
      %v936 = vrot.slane %v734, 2
      %v937 = vsel %vm908, %v934, %v936
      %v938 = vrot.slane %v735, 2
      %v939 = vsel %vm908, %v936, %v938
      %v940 = vrot.slane %v736, 2
      %v941 = vsel %vm908, %v938, %v940
      %v942 = vrot.slane %v737, 2
      %v943 = vsel %vm908, %v940, %v942
      %v944 = vrot.slane %v738, 2
      %v945 = vsel %vm908, %v942, %v944
      %v946 = vrot.slane %v739, 2
      %v947 = vsel %vm908, %v944, %v946
      %v948 = vrot.slane %v740, 2
      %v949 = vsel %vm908, %v946, %v948
      %v950 = vrot.slane %v741, 2
      %v951 = vsel %vm908, %v948, %v950
      %v952 = vrot.slane %v742, 2
      %v953 = vsel %vm908, %v950, %v952
      %v954 = vrot.slane %v743, 2
      %v955 = vsel %vm908, %v952, %v954
      %v956 = vrot.slane %v744, 2
      %v957 = vsel %vm908, %v954, %v956
      %v958 = vrot.slane %v745, 2
      %v959 = vsel %vm908, %v956, %v958
      %v960 = vrot.slane %v746, 2
      %v961 = vsel %vm908, %v958, %v960
      %v962 = vrot.slane %v747, 2
      %v963 = vsel %vm908, %v960, %v962
      %v964 = vrot.slane %v748, 2
      %v965 = vsel %vm908, %v962, %v964
      %v966 = vrot.slane %v749, 2
      %v967 = vsel %vm908, %v964, %v966
      %v968 = vrot.slane %v750, 2
      %v969 = vsel %vm908, %v966, %v968
      %v970 = vrot.slane %v751, 2
      %v971 = vsel %vm908, %v968, %v970
      %v972 = vrot.slane %v752, 2
      %v973 = vsel %vm908, %v970, %v972
      %v974 = vrot.slane %v753, 2
      %v975 = vsel %vm908, %v972, %v974
      %v976 = vrot.slane %v754, 2
      %v977 = vsel %vm908, %v974, %v976
      %v978 = vrot.slane %v755, 2
      %v979 = vsel %vm908, %v976, %v978
      %v980 = vrot.slane %v756, 2
      %v981 = vsel %vm908, %v978, %v980
      %v1020 = vrot.slane %v757, 2
      %v1021 = vsel %vm908, %v980, %v1020
      %v1022 = vrot.slane %v758, 2
      %v1023 = vsel %vm908, %v1020, %v1022
      %vm1026 = vcmask 1044480
      %v1027 = vrot.slane %v722, 3
      %v1028 = vrot.slane %v723, 3
      %v1029 = vsel %vm1026, %v1027, %v1028
      %v1030 = vrot.slane %v724, 3
      %v1031 = vsel %vm1026, %v1028, %v1030
      %v1032 = vrot.slane %v725, 3
      %v1033 = vsel %vm1026, %v1030, %v1032
      %v1034 = vrot.slane %v726, 3
      %v1035 = vsel %vm1026, %v1032, %v1034
      %v1036 = vrot.slane %v727, 3
      %v1037 = vsel %vm1026, %v1034, %v1036
      %v1038 = vrot.slane %v728, 3
      %v1039 = vsel %vm1026, %v1036, %v1038
      %v1040 = vrot.slane %v729, 3
      %v1041 = vsel %vm1026, %v1038, %v1040
      %v1042 = vrot.slane %v730, 3
      %v1043 = vsel %vm1026, %v1040, %v1042
      %v1044 = vrot.slane %v731, 3
      %v1045 = vsel %vm1026, %v1042, %v1044
      %v1046 = vrot.slane %v732, 3
      %v1047 = vsel %vm1026, %v1044, %v1046
      %v1048 = vrot.slane %v733, 3
      %v1049 = vsel %vm1026, %v1046, %v1048
      %v1050 = vrot.slane %v734, 3
      %v1051 = vsel %vm1026, %v1048, %v1050
      %v1052 = vrot.slane %v735, 3
      %v1053 = vsel %vm1026, %v1050, %v1052
      %v1054 = vrot.slane %v736, 3
      %v1055 = vsel %vm1026, %v1052, %v1054
      %v1056 = vrot.slane %v737, 3
      %v1057 = vsel %vm1026, %v1054, %v1056
      %v1058 = vrot.slane %v738, 3
      %v1059 = vsel %vm1026, %v1056, %v1058
      %v1060 = vrot.slane %v739, 3
      %v1061 = vsel %vm1026, %v1058, %v1060
      %v1062 = vrot.slane %v740, 3
      %v1063 = vsel %vm1026, %v1060, %v1062
      %v1064 = vrot.slane %v741, 3
      %v1065 = vsel %vm1026, %v1062, %v1064
      %v1066 = vrot.slane %v742, 3
      %v1067 = vsel %vm1026, %v1064, %v1066
      %v1068 = vrot.slane %v743, 3
      %v1069 = vsel %vm1026, %v1066, %v1068
      %v1070 = vrot.slane %v744, 3
      %v1071 = vsel %vm1026, %v1068, %v1070
      %v1072 = vrot.slane %v745, 3
      %v1073 = vsel %vm1026, %v1070, %v1072
      %v1074 = vrot.slane %v746, 3
      %v1075 = vsel %vm1026, %v1072, %v1074
      %v1076 = vrot.slane %v747, 3
      %v1077 = vsel %vm1026, %v1074, %v1076
      %v1078 = vrot.slane %v748, 3
      %v1079 = vsel %vm1026, %v1076, %v1078
      %v1080 = vrot.slane %v749, 3
      %v1081 = vsel %vm1026, %v1078, %v1080
      %v1082 = vrot.slane %v750, 3
      %v1083 = vsel %vm1026, %v1080, %v1082
      %v1084 = vrot.slane %v751, 3
      %v1085 = vsel %vm1026, %v1082, %v1084
      %v1086 = vrot.slane %v752, 3
      %v1087 = vsel %vm1026, %v1084, %v1086
      %v1088 = vrot.slane %v753, 3
      %v1089 = vsel %vm1026, %v1086, %v1088
      %v1090 = vrot.slane %v754, 3
      %v1091 = vsel %vm1026, %v1088, %v1090
      %v1092 = vrot.slane %v755, 3
      %v1093 = vsel %vm1026, %v1090, %v1092
      %v1094 = vrot.slane %v756, 3
      %v1095 = vsel %vm1026, %v1092, %v1094
      %v1096 = vrot.slane %v757, 3
      %v1097 = vsel %vm1026, %v1094, %v1096
      %v1098 = vrot.slane %v758, 3
      %v1099 = vsel %vm1026, %v1096, %v1098
      %vm1136 = vcmask 1043456
      %v1137 = vrot.slane %v722, 4
      %v1138 = vrot.slane %v723, 4
      %v1139 = vsel %vm1136, %v1137, %v1138
      %v1140 = vrot.slane %v724, 4
      %v1141 = vsel %vm1136, %v1138, %v1140
      %v1142 = vrot.slane %v725, 4
      %v1143 = vsel %vm1136, %v1140, %v1142
      %v1144 = vrot.slane %v726, 4
      %v1145 = vsel %vm1136, %v1142, %v1144
      %v1146 = vrot.slane %v727, 4
      %v1147 = vsel %vm1136, %v1144, %v1146
      %v1148 = vrot.slane %v728, 4
      %v1149 = vsel %vm1136, %v1146, %v1148
      %v1150 = vrot.slane %v729, 4
      %v1151 = vsel %vm1136, %v1148, %v1150
      %v1152 = vrot.slane %v730, 4
      %v1153 = vsel %vm1136, %v1150, %v1152
      %v1154 = vrot.slane %v731, 4
      %v1155 = vsel %vm1136, %v1152, %v1154
      %v1156 = vrot.slane %v732, 4
      %v1157 = vsel %vm1136, %v1154, %v1156
      %v1158 = vrot.slane %v733, 4
      %v1159 = vsel %vm1136, %v1156, %v1158
      %v1160 = vrot.slane %v734, 4
      %v1161 = vsel %vm1136, %v1158, %v1160
      %v1162 = vrot.slane %v735, 4
      %v1163 = vsel %vm1136, %v1160, %v1162
      %v1164 = vrot.slane %v736, 4
      %v1165 = vsel %vm1136, %v1162, %v1164
      %v1166 = vrot.slane %v737, 4
      %v1167 = vsel %vm1136, %v1164, %v1166
      %v1168 = vrot.slane %v738, 4
      %v1169 = vsel %vm1136, %v1166, %v1168
      %v1170 = vrot.slane %v739, 4
      %v1171 = vsel %vm1136, %v1168, %v1170
      %v1172 = vrot.slane %v740, 4
      %v1173 = vsel %vm1136, %v1170, %v1172
      %v1174 = vrot.slane %v741, 4
      %v1175 = vsel %vm1136, %v1172, %v1174
      %v1176 = vrot.slane %v742, 4
      %v1177 = vsel %vm1136, %v1174, %v1176
      %v1178 = vrot.slane %v743, 4
      %v1179 = vsel %vm1136, %v1176, %v1178
      %v1180 = vrot.slane %v744, 4
      %v1181 = vsel %vm1136, %v1178, %v1180
      %v1182 = vrot.slane %v745, 4
      %v1183 = vsel %vm1136, %v1180, %v1182
      %v1184 = vrot.slane %v746, 4
      %v1185 = vsel %vm1136, %v1182, %v1184
      %v1186 = vrot.slane %v747, 4
      %v1187 = vsel %vm1136, %v1184, %v1186
      %v1188 = vrot.slane %v748, 4
      %v1189 = vsel %vm1136, %v1186, %v1188
      %v1190 = vrot.slane %v749, 4
      %v1191 = vsel %vm1136, %v1188, %v1190
      %v1192 = vrot.slane %v750, 4
      %v1193 = vsel %vm1136, %v1190, %v1192
      %v1194 = vrot.slane %v751, 4
      %v1195 = vsel %vm1136, %v1192, %v1194
      %v1196 = vrot.slane %v752, 4
      %v1197 = vsel %vm1136, %v1194, %v1196
      %v1198 = vrot.slane %v753, 4
      %v1199 = vsel %vm1136, %v1196, %v1198
      %v1200 = vrot.slane %v754, 4
      %v1201 = vsel %vm1136, %v1198, %v1200
      %v1202 = vrot.slane %v755, 4
      %v1203 = vsel %vm1136, %v1200, %v1202
      %v1204 = vrot.slane %v756, 4
      %v1205 = vsel %vm1136, %v1202, %v1204
      %v1206 = vrot.slane %v757, 4
      %v1207 = vsel %vm1136, %v1204, %v1206
      %v1208 = vrot.slane %v758, 4
      %v1209 = vsel %vm1136, %v1206, %v1208
      %v1248 = vrot.slane %v759, 4
      %v1249 = vsel %vm1136, %v1208, %v1248
      %v1250 = vrot.slane %v760, 4
      %v1251 = vsel %vm1136, %v1248, %v1250
      %vm1254 = vcmask 1042432
      %v1255 = vrot.slane %v724, 5
      %v1256 = vrot.slane %v725, 5
      %v1257 = vsel %vm1254, %v1255, %v1256
      %v1258 = vrot.slane %v726, 5
      %v1259 = vsel %vm1254, %v1256, %v1258
      %v1260 = vrot.slane %v727, 5
      %v1261 = vsel %vm1254, %v1258, %v1260
      %v1262 = vrot.slane %v728, 5
      %v1263 = vsel %vm1254, %v1260, %v1262
      %v1264 = vrot.slane %v729, 5
      %v1265 = vsel %vm1254, %v1262, %v1264
      %v1266 = vrot.slane %v730, 5
      %v1267 = vsel %vm1254, %v1264, %v1266
      %v1268 = vrot.slane %v731, 5
      %v1269 = vsel %vm1254, %v1266, %v1268
      %v1270 = vrot.slane %v732, 5
      %v1271 = vsel %vm1254, %v1268, %v1270
      %v1272 = vrot.slane %v733, 5
      %v1273 = vsel %vm1254, %v1270, %v1272
      %v1274 = vrot.slane %v734, 5
      %v1275 = vsel %vm1254, %v1272, %v1274
      %v1276 = vrot.slane %v735, 5
      %v1277 = vsel %vm1254, %v1274, %v1276
      %v1278 = vrot.slane %v736, 5
      %v1279 = vsel %vm1254, %v1276, %v1278
      %v1280 = vrot.slane %v737, 5
      %v1281 = vsel %vm1254, %v1278, %v1280
      %v1282 = vrot.slane %v738, 5
      %v1283 = vsel %vm1254, %v1280, %v1282
      %v1284 = vrot.slane %v739, 5
      %v1285 = vsel %vm1254, %v1282, %v1284
      %v1286 = vrot.slane %v740, 5
      %v1287 = vsel %vm1254, %v1284, %v1286
      %v1288 = vrot.slane %v741, 5
      %v1289 = vsel %vm1254, %v1286, %v1288
      %v1290 = vrot.slane %v742, 5
      %v1291 = vsel %vm1254, %v1288, %v1290
      %v1292 = vrot.slane %v743, 5
      %v1293 = vsel %vm1254, %v1290, %v1292
      %v1294 = vrot.slane %v744, 5
      %v1295 = vsel %vm1254, %v1292, %v1294
      %v1296 = vrot.slane %v745, 5
      %v1297 = vsel %vm1254, %v1294, %v1296
      %v1298 = vrot.slane %v746, 5
      %v1299 = vsel %vm1254, %v1296, %v1298
      %v1300 = vrot.slane %v747, 5
      %v1301 = vsel %vm1254, %v1298, %v1300
      %v1302 = vrot.slane %v748, 5
      %v1303 = vsel %vm1254, %v1300, %v1302
      %v1304 = vrot.slane %v749, 5
      %v1305 = vsel %vm1254, %v1302, %v1304
      %v1306 = vrot.slane %v750, 5
      %v1307 = vsel %vm1254, %v1304, %v1306
      %v1308 = vrot.slane %v751, 5
      %v1309 = vsel %vm1254, %v1306, %v1308
      %v1310 = vrot.slane %v752, 5
      %v1311 = vsel %vm1254, %v1308, %v1310
      %v1312 = vrot.slane %v753, 5
      %v1313 = vsel %vm1254, %v1310, %v1312
      %v1314 = vrot.slane %v754, 5
      %v1315 = vsel %vm1254, %v1312, %v1314
      %v1316 = vrot.slane %v755, 5
      %v1317 = vsel %vm1254, %v1314, %v1316
      %v1318 = vrot.slane %v756, 5
      %v1319 = vsel %vm1254, %v1316, %v1318
      %v1320 = vrot.slane %v757, 5
      %v1321 = vsel %vm1254, %v1318, %v1320
      %v1322 = vrot.slane %v758, 5
      %v1323 = vsel %vm1254, %v1320, %v1322
      %v1324 = vrot.slane %v759, 5
      %v1325 = vsel %vm1254, %v1322, %v1324
      %v1326 = vrot.slane %v760, 5
      %v1327 = vsel %vm1254, %v1324, %v1326
      %vm1364 = vcmask 1041408
      %v1365 = vrot.slane %v724, 6
      %v1366 = vrot.slane %v725, 6
      %v1367 = vsel %vm1364, %v1365, %v1366
      %v1368 = vrot.slane %v726, 6
      %v1369 = vsel %vm1364, %v1366, %v1368
      %v1370 = vrot.slane %v727, 6
      %v1371 = vsel %vm1364, %v1368, %v1370
      %v1372 = vrot.slane %v728, 6
      %v1373 = vsel %vm1364, %v1370, %v1372
      %v1374 = vrot.slane %v729, 6
      %v1375 = vsel %vm1364, %v1372, %v1374
      %v1376 = vrot.slane %v730, 6
      %v1377 = vsel %vm1364, %v1374, %v1376
      %v1378 = vrot.slane %v731, 6
      %v1379 = vsel %vm1364, %v1376, %v1378
      %v1380 = vrot.slane %v732, 6
      %v1381 = vsel %vm1364, %v1378, %v1380
      %v1382 = vrot.slane %v733, 6
      %v1383 = vsel %vm1364, %v1380, %v1382
      %v1384 = vrot.slane %v734, 6
      %v1385 = vsel %vm1364, %v1382, %v1384
      %v1386 = vrot.slane %v735, 6
      %v1387 = vsel %vm1364, %v1384, %v1386
      %v1388 = vrot.slane %v736, 6
      %v1389 = vsel %vm1364, %v1386, %v1388
      %v1390 = vrot.slane %v737, 6
      %v1391 = vsel %vm1364, %v1388, %v1390
      %v1392 = vrot.slane %v738, 6
      %v1393 = vsel %vm1364, %v1390, %v1392
      %v1394 = vrot.slane %v739, 6
      %v1395 = vsel %vm1364, %v1392, %v1394
      %v1396 = vrot.slane %v740, 6
      %v1397 = vsel %vm1364, %v1394, %v1396
      %v1398 = vrot.slane %v741, 6
      %v1399 = vsel %vm1364, %v1396, %v1398
      %v1400 = vrot.slane %v742, 6
      %v1401 = vsel %vm1364, %v1398, %v1400
      %v1402 = vrot.slane %v743, 6
      %v1403 = vsel %vm1364, %v1400, %v1402
      %v1404 = vrot.slane %v744, 6
      %v1405 = vsel %vm1364, %v1402, %v1404
      %v1406 = vrot.slane %v745, 6
      %v1407 = vsel %vm1364, %v1404, %v1406
      %v1408 = vrot.slane %v746, 6
      %v1409 = vsel %vm1364, %v1406, %v1408
      %v1410 = vrot.slane %v747, 6
      %v1411 = vsel %vm1364, %v1408, %v1410
      %v1412 = vrot.slane %v748, 6
      %v1413 = vsel %vm1364, %v1410, %v1412
      %v1414 = vrot.slane %v749, 6
      %v1415 = vsel %vm1364, %v1412, %v1414
      %v1416 = vrot.slane %v750, 6
      %v1417 = vsel %vm1364, %v1414, %v1416
      %v1418 = vrot.slane %v751, 6
      %v1419 = vsel %vm1364, %v1416, %v1418
      %v1420 = vrot.slane %v752, 6
      %v1421 = vsel %vm1364, %v1418, %v1420
      %v1422 = vrot.slane %v753, 6
      %v1423 = vsel %vm1364, %v1420, %v1422
      %v1424 = vrot.slane %v754, 6
      %v1425 = vsel %vm1364, %v1422, %v1424
      %v1426 = vrot.slane %v755, 6
      %v1427 = vsel %vm1364, %v1424, %v1426
      %v1428 = vrot.slane %v756, 6
      %v1429 = vsel %vm1364, %v1426, %v1428
      %v1430 = vrot.slane %v757, 6
      %v1431 = vsel %vm1364, %v1428, %v1430
      %v1432 = vrot.slane %v758, 6
      %v1433 = vsel %vm1364, %v1430, %v1432
      %v1434 = vrot.slane %v759, 6
      %v1435 = vsel %vm1364, %v1432, %v1434
      %v1436 = vrot.slane %v760, 6
      %v1437 = vsel %vm1364, %v1434, %v1436
      %v1474 = vld [vmem:[%s4] sm:$0xff]
      %v1475 = vld [vmem:[%s4 + $0x8] sm:$0xff]
      %v1476 = vld [vmem:[%s4 + $0x10] sm:$0xff]
      %v1477 = vld [vmem:[%s4 + $0x18] sm:$0xff]
      %v1478 = vld [vmem:[%s4 + $0x20] sm:$0xff]
      %v1479 = vld [vmem:[%s4 + $0x28] sm:$0xff]
      %v1480 = vld [vmem:[%s4 + $0x30] sm:$0xff]
      %v1481 = vld [vmem:[%s4 + $0x38] sm:$0xff]
      %v1482 = vld [vmem:[%s4 + $0x40] sm:$0xff]
      %v1483 = vld [vmem:[%s4 + $0x48] sm:$0xff]
      %v1484 = vld [vmem:[%s4 + $0x50] sm:$0xff]
      %v1485 = vld [vmem:[%s4 + $0x58] sm:$0xff]
      %v1486 = vld [vmem:[%s4 + $0x60] sm:$0xff]
      %v1487 = vld [vmem:[%s4 + $0x68] sm:$0xff]
      %v1488 = vld [vmem:[%s4 + $0x70] sm:$0xff]
      %v1489 = vld [vmem:[%s4 + $0x78] sm:$0xff]
      %v1490 = vld [vmem:[%s4 + $0x80] sm:$0xff]
      %v1491 = vld [vmem:[%s4 + $0x88] sm:$0xff]
      %v1492 = vld [vmem:[%s4 + $0x90] sm:$0xff]
      %v1493 = vld [vmem:[%s4 + $0x98] sm:$0xff]
      %v1494 = vld [vmem:[%s4 + $0xa0] sm:$0xff]
      %v1495 = vld [vmem:[%s4 + $0xa8] sm:$0xff]
      %v1496 = vld [vmem:[%s4 + $0xb0] sm:$0xff]
      %v1497 = vld [vmem:[%s4 + $0xb8] sm:$0xff]
      %v1498 = vld [vmem:[%s4 + $0xc0] sm:$0xff]
      %v1499 = vld [vmem:[%s4 + $0xc8] sm:$0xff]
      %v1500 = vld [vmem:[%s4 + $0xd0] sm:$0xff]
      %v1501 = vld [vmem:[%s4 + $0xd8] sm:$0xff]
      %v1502 = vld [vmem:[%s4 + $0xe0] sm:$0xff]
      %v1503 = vld [vmem:[%s4 + $0xe8] sm:$0xff]
      %v1504 = vld [vmem:[%s4 + $0xf0] sm:$0xff]
      %v1505 = vld [vmem:[%s4 + $0xf8] sm:$0xff]
      %v1506 = vld [vmem:[%s4 + $0x100] sm:$0xff]
      %v1507 = vld [vmem:[%s4 + $0x108] sm:$0xff]
      %v1508 = vld [vmem:[%s4 + $0x110] sm:$0xff]
      %v1509 = vld [vmem:[%s4 + $0x118] sm:$0xff]
      %v1510 = vld [vmem:[%s4 + $0x120] sm:$0xff]
      %v1511 = vld [vmem:[%s4 + $0x128] sm:$0xff]
      %v1512 = vld [vmem:[%s4 + $0x130] sm:$0xff]
      %v1513 = vld [vmem:[%s4 + $0x138] sm:$0xff]
      %v1514 = vld [vmem:[%s4 + $0x140] sm:$0xff]
      %v1515 = vld [vmem:[%s4 + $0x148] sm:$0xff]
      %v1516 = vld [vmem:[%s4 + $0x150] sm:$0xff]
      %v1517 = vld [vmem:[%s4 + $0x158] sm:$0xff]
      %v1518 = vld [vmem:[%s4 + $0x160] sm:$0xff]
      %v1519 = vld [vmem:[%s4 + $0x168] sm:$0xff]
      %v1520 = vld [vmem:[%s4 + $0x170] sm:$0xff]
      %v1521 = vld [vmem:[%s4 + $0x178] sm:$0xff]
      %v1522 = vld [vmem:[%s4 + $0x180] sm:$0xff]
      %v1523 = vld [vmem:[%s4 + $0x188] sm:$0xff]
      %v1524 = vld [vmem:[%s4 + $0x190] sm:$0xff]
      %v1525 = vld [vmem:[%s4 + $0x198] sm:$0xff]
      %v1526 = vld [vmem:[%s4 + $0x1a0] sm:$0xff]
      %v1527 = vld [vmem:[%s4 + $0x1a8] sm:$0xff]
      %v1528 = vld [vmem:[%s4 + $0x1b0] sm:$0xff]
      %v1529 = vld [vmem:[%s4 + $0x1b8] sm:$0xff]
      %v1530 = vld [vmem:[%s4 + $0x1c0] sm:$0xff]
      %v1531 = vld [vmem:[%s4 + $0x1c8] sm:$0xff]
      %v1532 = vld [vmem:[%s4 + $0x1d0] sm:$0xff]
      %v1533 = vld [vmem:[%s4 + $0x1d8] sm:$0xff]
      %v1534 = vld [vmem:[%s4 + $0x1e0] sm:$0xff]
      %v1535 = vld [vmem:[%s4 + $0x1e8] sm:$0xff]
      %v1536 = vld [vmem:[%s4 + $0x1f0] sm:$0xff]
      %v1537 = vld [vmem:[%s4 + $0x1f8] sm:$0xff]
      %v1538 = vld [vmem:[%s4 + $0x200] sm:$0xff]
      %v1539 = vld [vmem:[%s4 + $0x208] sm:$0xff]
      %v1540 = vld [vmem:[%s4 + $0x210] sm:$0xff]
      %v1541 = vld [vmem:[%s4 + $0x218] sm:$0xff]
      %v1542 = vld [vmem:[%s4 + $0x220] sm:$0xff]
      %v1543 = vld [vmem:[%s4 + $0x228] sm:$0xff]
      %v1544 = vld [vmem:[%s4 + $0x230] sm:$0xff]
      %v1545 = vld [vmem:[%s4 + $0x238] sm:$0xff]
      %v1546 = vld [vmem:[%s4 + $0x240] sm:$0xff]
      %v1547 = vld [vmem:[%s4 + $0x248] sm:$0xff]
      %v1548 = vld [vmem:[%s4 + $0x250] sm:$0xff]
      %v1549 = vld [vmem:[%s4 + $0x258] sm:$0xff]
      %v1550 = vld [vmem:[%s4 + $0x260] sm:$0xff]
      %v1551 = vld [vmem:[%s4 + $0x268] sm:$0xff]
      %v1552 = vld [vmem:[%s4 + $0x270] sm:$0xff]
      %v1553 = vld [vmem:[%s4 + $0x278] sm:$0xff]
      %v1554 = vld [vmem:[%s4 + $0x280] sm:$0xff]
      %v1555 = vld [vmem:[%s4 + $0x288] sm:$0xff]
      %v1556 = vld [vmem:[%s4 + $0x290] sm:$0xff]
      %v1557 = vld [vmem:[%s4 + $0x298] sm:$0xff]
      %v1558 = vld [vmem:[%s4 + $0x2a0] sm:$0xff]
      %v1559 = vld [vmem:[%s4 + $0x2a8] sm:$0xff]
      %v1560 = vld [vmem:[%s4 + $0x2b0] sm:$0xff]
      %v1561 = vld [vmem:[%s4 + $0x2b8] sm:$0xff]
      %v1562 = vld [vmem:[%s4 + $0x2c0] sm:$0xff]
      %v1563 = vld [vmem:[%s4 + $0x2c8] sm:$0xff]
      %v1564 = vld [vmem:[%s4 + $0x2d0] sm:$0xff]
      %v1565 = vld [vmem:[%s4 + $0x2d8] sm:$0xff]
      %v1566 = vld [vmem:[%s4 + $0x2e0] sm:$0xff]
      %v1567 = vld [vmem:[%s4 + $0x2e8] sm:$0xff]
      %v1568 = vld [vmem:[%s4 + $0x2f0] sm:$0xff]
      %v1569 = vld [vmem:[%s4 + $0x2f8] sm:$0xff]
      %v1570 = vld [vmem:[%s4 + $0x300] sm:$0xff]
      %v1571 = vld [vmem:[%s4 + $0x308] sm:$0xff]
      %v1572 = vld [vmem:[%s4 + $0x310] sm:$0xff]
      %v1573 = vld [vmem:[%s4 + $0x318] sm:$0xff]
      %v1574 = vld [vmem:[%s4 + $0x320] sm:$0xff]
      %v1575 = vld [vmem:[%s4 + $0x328] sm:$0xff]
      %v1576 = vld [vmem:[%s4 + $0x330] sm:$0xff]
      %v1577 = vld [vmem:[%s4 + $0x338] sm:$0xff]
      %v1578 = vld [vmem:[%s4 + $0x340] sm:$0xff]
      %v1579 = vld [vmem:[%s4 + $0x348] sm:$0xff]
      %v1580 = vld [vmem:[%s4 + $0x350] sm:$0xff]
      %v1581 = vld [vmem:[%s4 + $0x358] sm:$0xff]
      %v1582 = vld [vmem:[%s4 + $0x360] sm:$0xff]
      %v1583 = vld [vmem:[%s4 + $0x368] sm:$0xff]
      %v1584 = vld [vmem:[%s4 + $0x370] sm:$0xff]
      %v1585 = vld [vmem:[%s4 + $0x378] sm:$0xff]
      %v1586 = vld [vmem:[%s4 + $0x380] sm:$0xff]
      %v1587 = vld [vmem:[%s4 + $0x388] sm:$0xff]
      %v1588 = vld [vmem:[%s4 + $0x390] sm:$0xff]
      %v1589 = vld [vmem:[%s4 + $0x398] sm:$0xff]
      %v1590 = vld [vmem:[%s4 + $0x3a0] sm:$0xff]
      %v1591 = vld [vmem:[%s4 + $0x3a8] sm:$0xff]
      %v1592 = vld [vmem:[%s4 + $0x3b0] sm:$0xff]
      %v1593 = vld [vmem:[%s4 + $0x3b8] sm:$0xff]
      %v1594 = vld [vmem:[%s4 + $0x3c0] sm:$0xff]
      %v1595 = vld [vmem:[%s4 + $0x3c8] sm:$0xff]
      %v1596 = vld [vmem:[%s4 + $0x3d0] sm:$0xff]
      %v1597 = vld [vmem:[%s4 + $0x3d8] sm:$0xff]
      %v1598 = vld [vmem:[%s4 + $0x3e0] sm:$0xff]
      %v1599 = vld [vmem:[%s4 + $0x3e8] sm:$0xff]
      %v1600 = vld [vmem:[%s4 + $0x3f0] sm:$0xff]
      %v1601 = vld [vmem:[%s4 + $0x3f8] sm:$0xff]
      %v1602 = vld [vmem:[%s4 + $0x400] sm:$0xff]
      %v1603 = vld [vmem:[%s4 + $0x408] sm:$0xff]
      %v1604 = vld [vmem:[%s4 + $0x410] sm:$0xff]
      %v1605 = vld [vmem:[%s4 + $0x418] sm:$0xff]
      %v1606 = vld [vmem:[%s4 + $0x420] sm:$0xff]
      %v1607 = vld [vmem:[%s4 + $0x428] sm:$0xff]
      %v1608 = vld [vmem:[%s4 + $0x430] sm:$0xff]
      %v1609 = vld [vmem:[%s4 + $0x438] sm:$0xff]
      %v1610 = vld [vmem:[%s4 + $0x440] sm:$0xff]
      %v1611 = vld [vmem:[%s4 + $0x448] sm:$0xff]
      %v1612 = vld [vmem:[%s4 + $0x450] sm:$0xff]
      %v1613 = vld [vmem:[%s4 + $0x458] sm:$0xff]
      %v1614 = vld [vmem:[%s4 + $0x460] sm:$0xff]
      %v1615 = vld [vmem:[%s4 + $0x468] sm:$0xff]
      %v1616 = vld [vmem:[%s4 + $0x470] sm:$0xff]
      %v1617 = vld [vmem:[%s4 + $0x478] sm:$0xff]
      %1618 = vmatprep.subr.mxu0 0.0
      %1619 = vmatpush1.msra.mxu0 %v1474
      %1620 = vmatprep.subr.mxu0 0.0
      %1621 = vmatpush1.msra.mxu0 %v1475
      %1622 = vmatprep.subr.mxu0 0.0
      %1623 = vmatpush1.msra.mxu0 %v1476
      %1624 = vmatprep.subr.mxu0 0.0
      %1625 = vmatpush1.msra.mxu0 %v1477
      %1626 = vmatprep.subr.mxu0 0.0
      %1627 = vmatpush1.msra.mxu0 %v1478
      %1628 = vmatprep.subr.mxu0 0.0
      %1629 = vmatpush1.msra.mxu0 %v1479
      %1630 = vmatprep.subr.mxu0 0.0
      %1631 = vmatpush1.msra.mxu0 %v1480
      %1632 = vmatprep.subr.mxu0 0.0
      %1633 = vmatpush1.msra.mxu0 %v1481
      %1634 = vmatprep.subr.mxu0 0.0
      %1635 = vmatpush1.msra.mxu0 %v1482
      %1636 = vmatprep.subr.mxu0 0.0
      %1637 = vmatpush1.msra.mxu0 %v1483
      %1638 = vmatprep.subr.mxu0 0.0
      %1639 = vmatpush1.msra.mxu0 %v1484
      %1640 = vmatprep.subr.mxu0 0.0
      %1641 = vmatpush1.msra.mxu0 %v1485
      %1642 = vmatprep.subr.mxu0 0.0
      %1643 = vmatpush1.msra.mxu0 %v1486
      %1644 = vmatprep.subr.mxu0 0.0
      %1645 = vmatpush1.msra.mxu0 %v1487
      %1646 = vmatprep.subr.mxu0 0.0
      %1647 = vmatpush1.msra.mxu0 %v1488
      %1648 = vmatprep.subr.mxu0 0.0
      %1649 = vmatpush1.msra.mxu0 %v1489
      %1650 = vmatprep.subr.mxu0 0.0
      %1651 = vmatpush1.msra.mxu0 %v1490
      %1652 = vmatprep.subr.mxu0 0.0
      %1653 = vmatpush1.msra.mxu0 %v1491
      %1654 = vmatprep.subr.mxu0 0.0
      %1655 = vmatpush1.msra.mxu0 %v1492
      %1656 = vmatprep.subr.mxu0 0.0
      %1657 = vmatpush1.msra.mxu0 %v1493
      %1658 = vmatprep.subr.mxu0 0.0
      %1659 = vmatpush1.msra.mxu0 %v1494
      %1660 = vmatprep.subr.mxu0 0.0
      %1661 = vmatpush1.msra.mxu0 %v1495
      %1662 = vmatprep.subr.mxu0 0.0
      %1663 = vmatpush1.msra.mxu0 %v1496
      %1664 = vmatprep.subr.mxu0 0.0
      %1665 = vmatpush1.msra.mxu0 %v1497
      %1666 = vmatprep.subr.mxu0 0.0
      %1667 = vmatpush1.msra.mxu0 %v1498
      %1668 = vmatprep.subr.mxu0 0.0
      %1669 = vmatpush1.msra.mxu0 %v1499
      %1670 = vmatprep.subr.mxu0 0.0
      %1671 = vmatpush1.msra.mxu0 %v1500
      %1672 = vmatprep.subr.mxu0 0.0
      %1673 = vmatpush1.msra.mxu0 %v1501
      %1674 = vmatprep.subr.mxu0 0.0
      %1675 = vmatpush1.msra.mxu0 %v1502
      %1676 = vmatprep.subr.mxu0 0.0
      %1677 = vmatpush1.msra.mxu0 %v1503
      %1678 = vmatprep.subr.mxu0 0.0
      %1679 = vmatpush1.msra.mxu0 %v1504
      %1680 = vmatprep.subr.mxu0 0.0
      %1681 = vmatpush1.msra.mxu0 %v1505
      %1682 = vmatprep.mubr.f32.mxu0 %v801
      %1683 = vmatmul.mubr.f32.gmra.mrb[0].mxu0 %v720
      %v1684 = vpop.f32.mrb[0].mxu0
      %v1685 = vadd.f32 0.0, %v1684
      %v1686 = vpop.f32.mrb[0].mxu0
      %1687 = vmatprep.mubr.f32.mxu0 %v803
      %1688 = vmatmul.mubr.f32.gmra.mrb[0].mxu0 %v721
      %v1689 = vpop.f32.mrb[0].mxu0
      %v1690 = vadd.f32 0.0, %v1689
      %v1691 = vpop.f32.mrb[0].mxu0
      %1692 = vmatprep.mubr.f32.mxu0 %v805
      %1693 = vmatmul.mubr.f32.gmra.mrb[0].mxu0 %v722
      %v1694 = vpop.f32.mrb[0].mxu0
      %v1695 = vadd.f32 0.0, %v1694
      %v1696 = vpop.f32.mrb[0].mxu0
      %1697 = vmatprep.mubr.f32.mxu0 %v807
      %1698 = vmatmul.mubr.f32.gmra.mrb[0].mxu0 %v723
      %v1699 = vpop.f32.mrb[0].mxu0
      %v1700 = vadd.f32 0.0, %v1699
      %v1701 = vpop.f32.mrb[0].mxu0
      %1702 = vmatprep.mubr.f32.mxu0 %v809
      %1703 = vmatmul.mubr.f32.gmra.mrb[0].mxu0 %v724
      %v1704 = vpop.f32.mrb[0].mxu0
      %v1705 = vadd.f32 0.0, %v1704
      %v1706 = vpop.f32.mrb[0].mxu0
      %1707 = vmatprep.mubr.f32.mxu0 %v811
      %1708 = vmatmul.mubr.f32.gmra.mrb[0].mxu0 %v725
      %v1709 = vpop.f32.mrb[0].mxu0
      %v1710 = vadd.f32 0.0, %v1709
      %v1711 = vpop.f32.mrb[0].mxu0
      %1712 = vmatprep.mubr.f32.mxu0 %v813
      %1713 = vmatmul.mubr.f32.gmra.mrb[0].mxu0 %v726
      %v1714 = vpop.f32.mrb[0].mxu0
      %v1715 = vadd.f32 0.0, %v1714
      %v1716 = vpop.f32.mrb[0].mxu0
      %1717 = vmatprep.mubr.f32.mxu0 %v815
      %1718 = vmatmul.mubr.f32.gmra.mrb[0].mxu0 %v727
      %v1719 = vpop.f32.mrb[0].mxu0
      %v1720 = vadd.f32 0.0, %v1719
      %v1721 = vpop.f32.mrb[0].mxu0
      %1722 = vmatprep.mubr.f32.mxu0 %v817
      %1723 = vmatmul.mubr.f32.gmra.mrb[0].mxu0 %v728
      %v1724 = vpop.f32.mrb[0].mxu0
      %v1725 = vadd.f32 0.0, %v1724
      %v1726 = vpop.f32.mrb[0].mxu0
      %1727 = vmatprep.mubr.f32.mxu0 %v819
      %1728 = vmatmul.mubr.f32.gmra.mrb[0].mxu0 %v729
      %v1729 = vpop.f32.mrb[0].mxu0
      %v1730 = vadd.f32 0.0, %v1729
      %v1731 = vpop.f32.mrb[0].mxu0
      %1732 = vmatprep.mubr.f32.mxu0 %v821
      %1733 = vmatmul.mubr.f32.gmra.mrb[0].mxu0 %v730
      %v1734 = vpop.f32.mrb[0].mxu0
      %v1735 = vadd.f32 0.0, %v1734
      %v1736 = vpop.f32.mrb[0].mxu0
      %1737 = vmatprep.mubr.f32.mxu0 %v823
      %1738 = vmatmul.mubr.f32.gmra.mrb[0].mxu0 %v731
      %v1739 = vpop.f32.mrb[0].mxu0
      %v1740 = vadd.f32 0.0, %v1739
      %v1741 = vpop.f32.mrb[0].mxu0
      %1742 = vmatprep.mubr.f32.mxu0 %v825
      %1743 = vmatmul.mubr.f32.gmra.mrb[0].mxu0 %v732
      %v1744 = vpop.f32.mrb[0].mxu0
      %v1745 = vadd.f32 0.0, %v1744
      %v1746 = vpop.f32.mrb[0].mxu0
      %1747 = vmatprep.mubr.f32.mxu0 %v827
      %1748 = vmatmul.mubr.f32.gmra.mrb[0].mxu0 %v733
      %v1749 = vpop.f32.mrb[0].mxu0
      %v1750 = vadd.f32 0.0, %v1749
      %v1751 = vpop.f32.mrb[0].mxu0
      %1752 = vmatprep.mubr.f32.mxu0 %v829
      %1753 = vmatmul.mubr.f32.gmra.mrb[0].mxu0 %v734
      %v1754 = vpop.f32.mrb[0].mxu0
      %v1755 = vadd.f32 0.0, %v1754
      %v1756 = vpop.f32.mrb[0].mxu0
      %1757 = vmatprep.mubr.f32.mxu0 %v831
      %1758 = vmatmul.mubr.f32.gmra.mrb[0].mxu0 %v735
      %v1759 = vpop.f32.mrb[0].mxu0
      %v1760 = vadd.f32 0.0, %v1759
      %v1761 = vpop.f32.mrb[0].mxu0
      %1762 = vmatprep.mubr.f32.mxu0 %v833
      %1763 = vmatmul.mubr.f32.gmra.mrb[0].mxu0 %v736
      %v1764 = vpop.f32.mrb[0].mxu0
      %v1765 = vadd.f32 0.0, %v1764
      %v1766 = vpop.f32.mrb[0].mxu0
      %1767 = vmatprep.mubr.f32.mxu0 %v835
      %1768 = vmatmul.mubr.f32.gmra.mrb[0].mxu0 %v737
      %v1769 = vpop.f32.mrb[0].mxu0
      %v1770 = vadd.f32 0.0, %v1769
      %v1771 = vpop.f32.mrb[0].mxu0
      %1772 = vmatprep.mubr.f32.mxu0 %v837
      %1773 = vmatmul.mubr.f32.gmra.mrb[0].mxu0 %v738
      %v1774 = vpop.f32.mrb[0].mxu0
      %v1775 = vadd.f32 0.0, %v1774
      %v1776 = vpop.f32.mrb[0].mxu0
      %1777 = vmatprep.mubr.f32.mxu0 %v839
      %1778 = vmatmul.mubr.f32.gmra.mrb[0].mxu0 %v739
      %v1779 = vpop.f32.mrb[0].mxu0
      %v1780 = vadd.f32 0.0, %v1779
      %v1781 = vpop.f32.mrb[0].mxu0
      %1782 = vmatprep.mubr.f32.mxu0 %v841
      %1783 = vmatmul.mubr.f32.gmra.mrb[0].mxu0 %v740
      %v1784 = vpop.f32.mrb[0].mxu0
      %v1785 = vadd.f32 0.0, %v1784
      %v1786 = vpop.f32.mrb[0].mxu0
      %1787 = vmatprep.mubr.f32.mxu0 %v843
      %1788 = vmatmul.mubr.f32.gmra.mrb[0].mxu0 %v741
      %v1789 = vpop.f32.mrb[0].mxu0
      %v1790 = vadd.f32 0.0, %v1789
      %v1791 = vpop.f32.mrb[0].mxu0
      %1792 = vmatprep.mubr.f32.mxu0 %v845
      %1793 = vmatmul.mubr.f32.gmra.mrb[0].mxu0 %v742
      %v1794 = vpop.f32.mrb[0].mxu0
      %v1795 = vadd.f32 0.0, %v1794
      %v1796 = vpop.f32.mrb[0].mxu0
      %1797 = vmatprep.mubr.f32.mxu0 %v847
      %1798 = vmatmul.mubr.f32.gmra.mrb[0].mxu0 %v743
      %v1799 = vpop.f32.mrb[0].mxu0
      %v1800 = vadd.f32 0.0, %v1799
      %v1801 = vpop.f32.mrb[0].mxu0
      %1802 = vmatprep.mubr.f32.mxu0 %v849
      %1803 = vmatmul.mubr.f32.gmra.mrb[0].mxu0 %v744
      %v1804 = vpop.f32.mrb[0].mxu0
      %v1805 = vadd.f32 0.0, %v1804
      %v1806 = vpop.f32.mrb[0].mxu0
      %1807 = vmatprep.mubr.f32.mxu0 %v851
      %1808 = vmatmul.mubr.f32.gmra.mrb[0].mxu0 %v745
      %v1809 = vpop.f32.mrb[0].mxu0
      %v1810 = vadd.f32 0.0, %v1809
      %v1811 = vpop.f32.mrb[0].mxu0
      %1812 = vmatprep.mubr.f32.mxu0 %v853
      %1813 = vmatmul.mubr.f32.gmra.mrb[0].mxu0 %v746
      %v1814 = vpop.f32.mrb[0].mxu0
      %v1815 = vadd.f32 0.0, %v1814
      %v1816 = vpop.f32.mrb[0].mxu0
      %1817 = vmatprep.mubr.f32.mxu0 %v855
      %1818 = vmatmul.mubr.f32.gmra.mrb[0].mxu0 %v747
      %v1819 = vpop.f32.mrb[0].mxu0
      %v1820 = vadd.f32 0.0, %v1819
      %v1821 = vpop.f32.mrb[0].mxu0
      %1822 = vmatprep.mubr.f32.mxu0 %v857
      %1823 = vmatmul.mubr.f32.gmra.mrb[0].mxu0 %v748
      %v1824 = vpop.f32.mrb[0].mxu0
      %v1825 = vadd.f32 0.0, %v1824
      %v1826 = vpop.f32.mrb[0].mxu0
      %1827 = vmatprep.mubr.f32.mxu0 %v859
      %1828 = vmatmul.mubr.f32.gmra.mrb[0].mxu0 %v749
      %v1829 = vpop.f32.mrb[0].mxu0
      %v1830 = vadd.f32 0.0, %v1829
      %v1831 = vpop.f32.mrb[0].mxu0
      %1832 = vmatprep.mubr.f32.mxu0 %v861
      %1833 = vmatmul.mubr.f32.gmra.mrb[0].mxu0 %v750
      %v1834 = vpop.f32.mrb[0].mxu0
      %v1835 = vadd.f32 0.0, %v1834
      %v1836 = vpop.f32.mrb[0].mxu0
      %1837 = vmatprep.mubr.f32.mxu0 %v863
      %1838 = vmatmul.mubr.f32.gmra.mrb[0].mxu0 %v751
      %v1839 = vpop.f32.mrb[0].mxu0
      %v1840 = vadd.f32 0.0, %v1839
      %v1841 = vpop.f32.mrb[0].mxu0
      %1842 = vmatprep.mubr.f32.mxu0 %v865
      %1843 = vmatmul.mubr.f32.gmra.mrb[0].mxu0 %v752
      %v1844 = vpop.f32.mrb[0].mxu0
      %v1845 = vadd.f32 0.0, %v1844
      %v1846 = vpop.f32.mrb[0].mxu0
      %1847 = vmatprep.mubr.f32.mxu0 %v867
      %1848 = vmatmul.mubr.f32.gmra.mrb[0].mxu0 %v753
      %v1849 = vpop.f32.mrb[0].mxu0
      %v1850 = vadd.f32 0.0, %v1849
      %v1851 = vpop.f32.mrb[0].mxu0
      %1852 = vmatprep.mubr.f32.mxu0 %v869
      %1853 = vmatmul.mubr.f32.gmra.mrb[0].mxu0 %v754
      %v1854 = vpop.f32.mrb[0].mxu0
      %v1855 = vadd.f32 0.0, %v1854
      %v1856 = vpop.f32.mrb[0].mxu0
      %1857 = vmatprep.mubr.f32.mxu0 %v871
      %1858 = vmatmul.mubr.f32.gmra.mrb[0].mxu0 %v755
      %v1859 = vpop.f32.mrb[0].mxu0
      %v1860 = vadd.f32 0.0, %v1859
      %v1861 = vpop.f32.mrb[0].mxu0
      %1862 = vdwg.mxu0
      %1863 = vmatprep.subr.mxu0 0.0
      %1864 = vmatpush1.msra.mxu0 %v1506
      %1865 = vmatprep.subr.mxu0 0.0
      %1866 = vmatpush1.msra.mxu0 %v1507
      %1867 = vmatprep.subr.mxu0 0.0
      %1868 = vmatpush1.msra.mxu0 %v1508
      %1869 = vmatprep.subr.mxu0 0.0
      %1870 = vmatpush1.msra.mxu0 %v1509
      %1871 = vmatprep.subr.mxu0 0.0
      %1872 = vmatpush1.msra.mxu0 %v1510
      %1873 = vmatprep.subr.mxu0 0.0
      %1874 = vmatpush1.msra.mxu0 %v1511
      %1875 = vmatprep.subr.mxu0 0.0
      %1876 = vmatpush1.msra.mxu0 %v1512
      %1877 = vmatprep.subr.mxu0 0.0
      %1878 = vmatpush1.msra.mxu0 %v1513
      %1879 = vmatprep.subr.mxu0 0.0
      %1880 = vmatpush1.msra.mxu0 %v1514
      %1881 = vmatprep.subr.mxu0 0.0
      %1882 = vmatpush1.msra.mxu0 %v1515
      %1883 = vmatprep.subr.mxu0 0.0
      %1884 = vmatpush1.msra.mxu0 %v1516
      %1885 = vmatprep.subr.mxu0 0.0
      %1886 = vmatpush1.msra.mxu0 %v1517
      %1887 = vmatprep.subr.mxu0 0.0
      %1888 = vmatpush1.msra.mxu0 %v1518
      %1889 = vmatprep.subr.mxu0 0.0
      %1890 = vmatpush1.msra.mxu0 %v1519
      %1891 = vmatprep.subr.mxu0 0.0
      %1892 = vmatpush1.msra.mxu0 %v1520
      %1893 = vmatprep.subr.mxu0 0.0
      %1894 = vmatpush1.msra.mxu0 %v1521
      %1895 = vmatprep.subr.mxu0 0.0
      %1896 = vmatpush1.msra.mxu0 %v1522
      %1897 = vmatprep.subr.mxu0 0.0
      %1898 = vmatpush1.msra.mxu0 %v1523
      %1899 = vmatprep.subr.mxu0 0.0
      %1900 = vmatpush1.msra.mxu0 %v1524
      %1901 = vmatprep.subr.mxu0 0.0
      %1902 = vmatpush1.msra.mxu0 %v1525
      %1903 = vmatprep.subr.mxu0 0.0
      %1904 = vmatpush1.msra.mxu0 %v1526
      %1905 = vmatprep.subr.mxu0 0.0
      %1906 = vmatpush1.msra.mxu0 %v1527
      %1907 = vmatprep.subr.mxu0 0.0
      %1908 = vmatpush1.msra.mxu0 %v1528
      %1909 = vmatprep.subr.mxu0 0.0
      %1910 = vmatpush1.msra.mxu0 %v1529
      %1911 = vmatprep.subr.mxu0 0.0
      %1912 = vmatpush1.msra.mxu0 %v1530
      %1913 = vmatprep.subr.mxu0 0.0
      %1914 = vmatpush1.msra.mxu0 %v1531
      %1915 = vmatprep.subr.mxu0 0.0
      %1916 = vmatpush1.msra.mxu0 %v1532
      %1917 = vmatprep.subr.mxu0 0.0
      %1918 = vmatpush1.msra.mxu0 %v1533
      %1919 = vmatprep.subr.mxu0 0.0
      %1920 = vmatpush1.msra.mxu0 %v1534
      %1921 = vmatprep.subr.mxu0 0.0
      %1922 = vmatpush1.msra.mxu0 %v1535
      %1923 = vmatprep.subr.mxu0 0.0
      %1924 = vmatpush1.msra.mxu0 %v1536
      %1925 = vmatprep.subr.mxu0 0.0
      %1926 = vmatpush1.msra.mxu0 %v1537
      %1927 = vmatprep.mubr.f32.mxu0 %v915
      %1928 = vmatmul.mubr.f32.gmra.mrb[0].mxu0 %v911
      %v1929 = vpop.f32.mrb[0].mxu0
      %v1930 = vadd.f32 %v1685, %v1929
      %v1931 = vpop.f32.mrb[0].mxu0
      %1932 = vmatprep.mubr.f32.mxu0 %v917
      %1933 = vmatmul.mubr.f32.gmra.mrb[0].mxu0 %v913
      %v1934 = vpop.f32.mrb[0].mxu0
      %v1935 = vadd.f32 %v1690, %v1934
      %v1936 = vpop.f32.mrb[0].mxu0
      %1937 = vmatprep.mubr.f32.mxu0 %v919
      %1938 = vmatmul.mubr.f32.gmra.mrb[0].mxu0 %v915
      %v1939 = vpop.f32.mrb[0].mxu0
      %v1940 = vadd.f32 %v1695, %v1939
      %v1941 = vpop.f32.mrb[0].mxu0
      %1942 = vmatprep.mubr.f32.mxu0 %v921
      %1943 = vmatmul.mubr.f32.gmra.mrb[0].mxu0 %v917
      %v1944 = vpop.f32.mrb[0].mxu0
      %v1945 = vadd.f32 %v1700, %v1944
      %v1946 = vpop.f32.mrb[0].mxu0
      %1947 = vmatprep.mubr.f32.mxu0 %v923
      %1948 = vmatmul.mubr.f32.gmra.mrb[0].mxu0 %v919
      %v1949 = vpop.f32.mrb[0].mxu0
      %v1950 = vadd.f32 %v1705, %v1949
      %v1951 = vpop.f32.mrb[0].mxu0
      %1952 = vmatprep.mubr.f32.mxu0 %v925
      %1953 = vmatmul.mubr.f32.gmra.mrb[0].mxu0 %v921
      %v1954 = vpop.f32.mrb[0].mxu0
      %v1955 = vadd.f32 %v1710, %v1954
      %v1956 = vpop.f32.mrb[0].mxu0
      %1957 = vmatprep.mubr.f32.mxu0 %v927
      %1958 = vmatmul.mubr.f32.gmra.mrb[0].mxu0 %v923
      %v1959 = vpop.f32.mrb[0].mxu0
      %v1960 = vadd.f32 %v1715, %v1959
      %v1961 = vpop.f32.mrb[0].mxu0
      %1962 = vmatprep.mubr.f32.mxu0 %v929
      %1963 = vmatmul.mubr.f32.gmra.mrb[0].mxu0 %v925
      %v1964 = vpop.f32.mrb[0].mxu0
      %v1965 = vadd.f32 %v1720, %v1964
      %v1966 = vpop.f32.mrb[0].mxu0
      %1967 = vmatprep.mubr.f32.mxu0 %v931
      %1968 = vmatmul.mubr.f32.gmra.mrb[0].mxu0 %v927
      %v1969 = vpop.f32.mrb[0].mxu0
      %v1970 = vadd.f32 %v1725, %v1969
      %v1971 = vpop.f32.mrb[0].mxu0
      %1972 = vmatprep.mubr.f32.mxu0 %v933
      %1973 = vmatmul.mubr.f32.gmra.mrb[0].mxu0 %v929
      %v1974 = vpop.f32.mrb[0].mxu0
      %v1975 = vadd.f32 %v1730, %v1974
      %v1976 = vpop.f32.mrb[0].mxu0
      %1977 = vmatprep.mubr.f32.mxu0 %v935
      %1978 = vmatmul.mubr.f32.gmra.mrb[0].mxu0 %v931
      %v1979 = vpop.f32.mrb[0].mxu0
      %v1980 = vadd.f32 %v1735, %v1979
      %v1981 = vpop.f32.mrb[0].mxu0
      %1982 = vmatprep.mubr.f32.mxu0 %v937
      %1983 = vmatmul.mubr.f32.gmra.mrb[0].mxu0 %v933
      %v1984 = vpop.f32.mrb[0].mxu0
      %v1985 = vadd.f32 %v1740, %v1984
      %v1986 = vpop.f32.mrb[0].mxu0
      %1987 = vmatprep.mubr.f32.mxu0 %v939
      %1988 = vmatmul.mubr.f32.gmra.mrb[0].mxu0 %v935
      %v1989 = vpop.f32.mrb[0].mxu0
      %v1990 = vadd.f32 %v1745, %v1989
      %v1991 = vpop.f32.mrb[0].mxu0
      %1992 = vmatprep.mubr.f32.mxu0 %v941
      %1993 = vmatmul.mubr.f32.gmra.mrb[0].mxu0 %v937
      %v1994 = vpop.f32.mrb[0].mxu0
      %v1995 = vadd.f32 %v1750, %v1994
      %v1996 = vpop.f32.mrb[0].mxu0
      %1997 = vmatprep.mubr.f32.mxu0 %v943
      %1998 = vmatmul.mubr.f32.gmra.mrb[0].mxu0 %v939
      %v1999 = vpop.f32.mrb[0].mxu0
      %v2000 = vadd.f32 %v1755, %v1999
      %v2001 = vpop.f32.mrb[0].mxu0
      %2002 = vmatprep.mubr.f32.mxu0 %v945
      %2003 = vmatmul.mubr.f32.gmra.mrb[0].mxu0 %v941
      %v2004 = vpop.f32.mrb[0].mxu0
      %v2005 = vadd.f32 %v1760, %v2004
      %v2006 = vpop.f32.mrb[0].mxu0
      %2007 = vmatprep.mubr.f32.mxu0 %v947
      %2008 = vmatmul.mubr.f32.gmra.mrb[0].mxu0 %v943
      %v2009 = vpop.f32.mrb[0].mxu0
      %v2010 = vadd.f32 %v1765, %v2009
      %v2011 = vpop.f32.mrb[0].mxu0
      %2012 = vmatprep.mubr.f32.mxu0 %v949
      %2013 = vmatmul.mubr.f32.gmra.mrb[0].mxu0 %v945
      %v2014 = vpop.f32.mrb[0].mxu0
      %v2015 = vadd.f32 %v1770, %v2014
      %v2016 = vpop.f32.mrb[0].mxu0
      %2017 = vmatprep.mubr.f32.mxu0 %v951
      %2018 = vmatmul.mubr.f32.gmra.mrb[0].mxu0 %v947
      %v2019 = vpop.f32.mrb[0].mxu0
      %v2020 = vadd.f32 %v1775, %v2019
      %v2021 = vpop.f32.mrb[0].mxu0
      %2022 = vmatprep.mubr.f32.mxu0 %v953
      %2023 = vmatmul.mubr.f32.gmra.mrb[0].mxu0 %v949
      %v2024 = vpop.f32.mrb[0].mxu0
      %v2025 = vadd.f32 %v1780, %v2024
      %v2026 = vpop.f32.mrb[0].mxu0
      %2027 = vmatprep.mubr.f32.mxu0 %v955
      %2028 = vmatmul.mubr.f32.gmra.mrb[0].mxu0 %v951
      %v2029 = vpop.f32.mrb[0].mxu0
      %v2030 = vadd.f32 %v1785, %v2029
      %v2031 = vpop.f32.mrb[0].mxu0
      %2032 = vmatprep.mubr.f32.mxu0 %v957
      %2033 = vmatmul.mubr.f32.gmra.mrb[0].mxu0 %v953
      %v2034 = vpop.f32.mrb[0].mxu0
      %v2035 = vadd.f32 %v1790, %v2034
      %v2036 = vpop.f32.mrb[0].mxu0
      %2037 = vmatprep.mubr.f32.mxu0 %v959
      %2038 = vmatmul.mubr.f32.gmra.mrb[0].mxu0 %v955
      %v2039 = vpop.f32.mrb[0].mxu0
      %v2040 = vadd.f32 %v1795, %v2039
      %v2041 = vpop.f32.mrb[0].mxu0
      %2042 = vmatprep.mubr.f32.mxu0 %v961
      %2043 = vmatmul.mubr.f32.gmra.mrb[0].mxu0 %v957
      %v2044 = vpop.f32.mrb[0].mxu0
      %v2045 = vadd.f32 %v1800, %v2044
      %v2046 = vpop.f32.mrb[0].mxu0
      %2047 = vmatprep.mubr.f32.mxu0 %v963
      %2048 = vmatmul.mubr.f32.gmra.mrb[0].mxu0 %v959
      %v2049 = vpop.f32.mrb[0].mxu0
      %v2050 = vadd.f32 %v1805, %v2049
      %v2051 = vpop.f32.mrb[0].mxu0
      %2052 = vmatprep.mubr.f32.mxu0 %v965
      %2053 = vmatmul.mubr.f32.gmra.mrb[0].mxu0 %v961
      %v2054 = vpop.f32.mrb[0].mxu0
      %v2055 = vadd.f32 %v1810, %v2054
      %v2056 = vpop.f32.mrb[0].mxu0
      %2057 = vmatprep.mubr.f32.mxu0 %v967
      %2058 = vmatmul.mubr.f32.gmra.mrb[0].mxu0 %v963
      %v2059 = vpop.f32.mrb[0].mxu0
      %v2060 = vadd.f32 %v1815, %v2059
      %v2061 = vpop.f32.mrb[0].mxu0
      %2062 = vmatprep.mubr.f32.mxu0 %v969
      %2063 = vmatmul.mubr.f32.gmra.mrb[0].mxu0 %v965
      %v2064 = vpop.f32.mrb[0].mxu0
      %v2065 = vadd.f32 %v1820, %v2064
      %v2066 = vpop.f32.mrb[0].mxu0
      %2067 = vmatprep.mubr.f32.mxu0 %v971
      %2068 = vmatmul.mubr.f32.gmra.mrb[0].mxu0 %v967
      %v2069 = vpop.f32.mrb[0].mxu0
      %v2070 = vadd.f32 %v1825, %v2069
      %v2071 = vpop.f32.mrb[0].mxu0
      %2072 = vmatprep.mubr.f32.mxu0 %v973
      %2073 = vmatmul.mubr.f32.gmra.mrb[0].mxu0 %v969
      %v2074 = vpop.f32.mrb[0].mxu0
      %v2075 = vadd.f32 %v1830, %v2074
      %v2076 = vpop.f32.mrb[0].mxu0
      %2077 = vmatprep.mubr.f32.mxu0 %v975
      %2078 = vmatmul.mubr.f32.gmra.mrb[0].mxu0 %v971
      %v2079 = vpop.f32.mrb[0].mxu0
      %v2080 = vadd.f32 %v1835, %v2079
      %v2081 = vpop.f32.mrb[0].mxu0
      %2082 = vmatprep.mubr.f32.mxu0 %v977
      %2083 = vmatmul.mubr.f32.gmra.mrb[0].mxu0 %v973
      %v2084 = vpop.f32.mrb[0].mxu0
      %v2085 = vadd.f32 %v1840, %v2084
      %v2086 = vpop.f32.mrb[0].mxu0
      %2087 = vmatprep.mubr.f32.mxu0 %v979
      %2088 = vmatmul.mubr.f32.gmra.mrb[0].mxu0 %v975
      %v2089 = vpop.f32.mrb[0].mxu0
      %v2090 = vadd.f32 %v1845, %v2089
      %v2091 = vpop.f32.mrb[0].mxu0
      %2092 = vmatprep.mubr.f32.mxu0 %v981
      %2093 = vmatmul.mubr.f32.gmra.mrb[0].mxu0 %v977
      %v2094 = vpop.f32.mrb[0].mxu0
      %v2095 = vadd.f32 %v1850, %v2094
      %v2096 = vpop.f32.mrb[0].mxu0
      %2097 = vmatprep.mubr.f32.mxu0 %v1021
      %2098 = vmatmul.mubr.f32.gmra.mrb[0].mxu0 %v979
      %v2099 = vpop.f32.mrb[0].mxu0
      %v2100 = vadd.f32 %v1855, %v2099
      %v2101 = vpop.f32.mrb[0].mxu0
      %2102 = vmatprep.mubr.f32.mxu0 %v1023
      %2103 = vmatmul.mubr.f32.gmra.mrb[0].mxu0 %v981
      %v2104 = vpop.f32.mrb[0].mxu0
      %v2105 = vadd.f32 %v1860, %v2104
      %v2106 = vpop.f32.mrb[0].mxu0
      %2107 = vdwg.mxu0
      %2108 = vmatprep.subr.mxu0 0.0
      %2109 = vmatpush1.msra.mxu0 %v1538
      %2110 = vmatprep.subr.mxu0 0.0
      %2111 = vmatpush1.msra.mxu0 %v1539
      %2112 = vmatprep.subr.mxu0 0.0
      %2113 = vmatpush1.msra.mxu0 %v1540
      %2114 = vmatprep.subr.mxu0 0.0
      %2115 = vmatpush1.msra.mxu0 %v1541
      %2116 = vmatprep.subr.mxu0 0.0
      %2117 = vmatpush1.msra.mxu0 %v1542
      %2118 = vmatprep.subr.mxu0 0.0
      %2119 = vmatpush1.msra.mxu0 %v1543
      %2120 = vmatprep.subr.mxu0 0.0
      %2121 = vmatpush1.msra.mxu0 %v1544
      %2122 = vmatprep.subr.mxu0 0.0
      %2123 = vmatpush1.msra.mxu0 %v1545
      %2124 = vmatprep.subr.mxu0 0.0
      %2125 = vmatpush1.msra.mxu0 %v1546
      %2126 = vmatprep.subr.mxu0 0.0
      %2127 = vmatpush1.msra.mxu0 %v1547
      %2128 = vmatprep.subr.mxu0 0.0
      %2129 = vmatpush1.msra.mxu0 %v1548
      %2130 = vmatprep.subr.mxu0 0.0
      %2131 = vmatpush1.msra.mxu0 %v1549
      %2132 = vmatprep.subr.mxu0 0.0
      %2133 = vmatpush1.msra.mxu0 %v1550
      %2134 = vmatprep.subr.mxu0 0.0
      %2135 = vmatpush1.msra.mxu0 %v1551
      %2136 = vmatprep.subr.mxu0 0.0
      %2137 = vmatpush1.msra.mxu0 %v1552
      %2138 = vmatprep.subr.mxu0 0.0
      %2139 = vmatpush1.msra.mxu0 %v1553
      %2140 = vmatprep.subr.mxu0 0.0
      %2141 = vmatpush1.msra.mxu0 %v1554
      %2142 = vmatprep.subr.mxu0 0.0
      %2143 = vmatpush1.msra.mxu0 %v1555
      %2144 = vmatprep.subr.mxu0 0.0
      %2145 = vmatpush1.msra.mxu0 %v1556
      %2146 = vmatprep.subr.mxu0 0.0
      %2147 = vmatpush1.msra.mxu0 %v1557
      %2148 = vmatprep.subr.mxu0 0.0
      %2149 = vmatpush1.msra.mxu0 %v1558
      %2150 = vmatprep.subr.mxu0 0.0
      %2151 = vmatpush1.msra.mxu0 %v1559
      %2152 = vmatprep.subr.mxu0 0.0
      %2153 = vmatpush1.msra.mxu0 %v1560
      %2154 = vmatprep.subr.mxu0 0.0
      %2155 = vmatpush1.msra.mxu0 %v1561
      %2156 = vmatprep.subr.mxu0 0.0
      %2157 = vmatpush1.msra.mxu0 %v1562
      %2158 = vmatprep.subr.mxu0 0.0
      %2159 = vmatpush1.msra.mxu0 %v1563
      %2160 = vmatprep.subr.mxu0 0.0
      %2161 = vmatpush1.msra.mxu0 %v1564
      %2162 = vmatprep.subr.mxu0 0.0
      %2163 = vmatpush1.msra.mxu0 %v1565
      %2164 = vmatprep.subr.mxu0 0.0
      %2165 = vmatpush1.msra.mxu0 %v1566
      %2166 = vmatprep.subr.mxu0 0.0
      %2167 = vmatpush1.msra.mxu0 %v1567
      %2168 = vmatprep.subr.mxu0 0.0
      %2169 = vmatpush1.msra.mxu0 %v1568
      %2170 = vmatprep.subr.mxu0 0.0
      %2171 = vmatpush1.msra.mxu0 %v1569
      %2172 = vmatprep.mubr.f32.mxu0 %v1139
      %2173 = vmatmul.mubr.f32.gmra.mrb[0].mxu0 %v1029
      %v2174 = vpop.f32.mrb[0].mxu0
      %v2175 = vadd.f32 %v1930, %v2174
      %v2176 = vpop.f32.mrb[0].mxu0
      %2177 = vmatprep.mubr.f32.mxu0 %v1141
      %2178 = vmatmul.mubr.f32.gmra.mrb[0].mxu0 %v1031
      %v2179 = vpop.f32.mrb[0].mxu0
      %v2180 = vadd.f32 %v1935, %v2179
      %v2181 = vpop.f32.mrb[0].mxu0
      %2182 = vmatprep.mubr.f32.mxu0 %v1143
      %2183 = vmatmul.mubr.f32.gmra.mrb[0].mxu0 %v1033
      %v2184 = vpop.f32.mrb[0].mxu0
      %v2185 = vadd.f32 %v1940, %v2184
      %v2186 = vpop.f32.mrb[0].mxu0
      %2187 = vmatprep.mubr.f32.mxu0 %v1145
      %2188 = vmatmul.mubr.f32.gmra.mrb[0].mxu0 %v1035
      %v2189 = vpop.f32.mrb[0].mxu0
      %v2190 = vadd.f32 %v1945, %v2189
      %v2191 = vpop.f32.mrb[0].mxu0
      %2192 = vmatprep.mubr.f32.mxu0 %v1147
      %2193 = vmatmul.mubr.f32.gmra.mrb[0].mxu0 %v1037
      %v2194 = vpop.f32.mrb[0].mxu0
      %v2195 = vadd.f32 %v1950, %v2194
      %v2196 = vpop.f32.mrb[0].mxu0
      %2197 = vmatprep.mubr.f32.mxu0 %v1149
      %2198 = vmatmul.mubr.f32.gmra.mrb[0].mxu0 %v1039
      %v2199 = vpop.f32.mrb[0].mxu0
      %v2200 = vadd.f32 %v1955, %v2199
      %v2201 = vpop.f32.mrb[0].mxu0
      %2202 = vmatprep.mubr.f32.mxu0 %v1151
      %2203 = vmatmul.mubr.f32.gmra.mrb[0].mxu0 %v1041
      %v2204 = vpop.f32.mrb[0].mxu0
      %v2205 = vadd.f32 %v1960, %v2204
      %v2206 = vpop.f32.mrb[0].mxu0
      %2207 = vmatprep.mubr.f32.mxu0 %v1153
      %2208 = vmatmul.mubr.f32.gmra.mrb[0].mxu0 %v1043
      %v2209 = vpop.f32.mrb[0].mxu0
      %v2210 = vadd.f32 %v1965, %v2209
      %v2211 = vpop.f32.mrb[0].mxu0
      %2212 = vmatprep.mubr.f32.mxu0 %v1155
      %2213 = vmatmul.mubr.f32.gmra.mrb[0].mxu0 %v1045
      %v2214 = vpop.f32.mrb[0].mxu0
      %v2215 = vadd.f32 %v1970, %v2214
      %v2216 = vpop.f32.mrb[0].mxu0
      %2217 = vmatprep.mubr.f32.mxu0 %v1157
      %2218 = vmatmul.mubr.f32.gmra.mrb[0].mxu0 %v1047
      %v2219 = vpop.f32.mrb[0].mxu0
      %v2220 = vadd.f32 %v1975, %v2219
      %v2221 = vpop.f32.mrb[0].mxu0
      %2222 = vmatprep.mubr.f32.mxu0 %v1159
      %2223 = vmatmul.mubr.f32.gmra.mrb[0].mxu0 %v1049
      %v2224 = vpop.f32.mrb[0].mxu0
      %v2225 = vadd.f32 %v1980, %v2224
      %v2226 = vpop.f32.mrb[0].mxu0
      %2227 = vmatprep.mubr.f32.mxu0 %v1161
      %2228 = vmatmul.mubr.f32.gmra.mrb[0].mxu0 %v1051
      %v2229 = vpop.f32.mrb[0].mxu0
      %v2230 = vadd.f32 %v1985, %v2229
      %v2231 = vpop.f32.mrb[0].mxu0
      %2232 = vmatprep.mubr.f32.mxu0 %v1163
      %2233 = vmatmul.mubr.f32.gmra.mrb[0].mxu0 %v1053
      %v2234 = vpop.f32.mrb[0].mxu0
      %v2235 = vadd.f32 %v1990, %v2234
      %v2236 = vpop.f32.mrb[0].mxu0
      %2237 = vmatprep.mubr.f32.mxu0 %v1165
      %2238 = vmatmul.mubr.f32.gmra.mrb[0].mxu0 %v1055
      %v2239 = vpop.f32.mrb[0].mxu0
      %v2240 = vadd.f32 %v1995, %v2239
      %v2241 = vpop.f32.mrb[0].mxu0
      %2242 = vmatprep.mubr.f32.mxu0 %v1167
      %2243 = vmatmul.mubr.f32.gmra.mrb[0].mxu0 %v1057
      %v2244 = vpop.f32.mrb[0].mxu0
      %v2245 = vadd.f32 %v2000, %v2244
      %v2246 = vpop.f32.mrb[0].mxu0
      %2247 = vmatprep.mubr.f32.mxu0 %v1169
      %2248 = vmatmul.mubr.f32.gmra.mrb[0].mxu0 %v1059
      %v2249 = vpop.f32.mrb[0].mxu0
      %v2250 = vadd.f32 %v2005, %v2249
      %v2251 = vpop.f32.mrb[0].mxu0
      %2252 = vmatprep.mubr.f32.mxu0 %v1171
      %2253 = vmatmul.mubr.f32.gmra.mrb[0].mxu0 %v1061
      %v2254 = vpop.f32.mrb[0].mxu0
      %v2255 = vadd.f32 %v2010, %v2254
      %v2256 = vpop.f32.mrb[0].mxu0
      %2257 = vmatprep.mubr.f32.mxu0 %v1173
      %2258 = vmatmul.mubr.f32.gmra.mrb[0].mxu0 %v1063
      %v2259 = vpop.f32.mrb[0].mxu0
      %v2260 = vadd.f32 %v2015, %v2259
      %v2261 = vpop.f32.mrb[0].mxu0
      %2262 = vmatprep.mubr.f32.mxu0 %v1175
      %2263 = vmatmul.mubr.f32.gmra.mrb[0].mxu0 %v1065
      %v2264 = vpop.f32.mrb[0].mxu0
      %v2265 = vadd.f32 %v2020, %v2264
      %v2266 = vpop.f32.mrb[0].mxu0
      %2267 = vmatprep.mubr.f32.mxu0 %v1177
      %2268 = vmatmul.mubr.f32.gmra.mrb[0].mxu0 %v1067
      %v2269 = vpop.f32.mrb[0].mxu0
      %v2270 = vadd.f32 %v2025, %v2269
      %v2271 = vpop.f32.mrb[0].mxu0
      %2272 = vmatprep.mubr.f32.mxu0 %v1179
      %2273 = vmatmul.mubr.f32.gmra.mrb[0].mxu0 %v1069
      %v2274 = vpop.f32.mrb[0].mxu0
      %v2275 = vadd.f32 %v2030, %v2274
      %v2276 = vpop.f32.mrb[0].mxu0
      %2277 = vmatprep.mubr.f32.mxu0 %v1181
      %2278 = vmatmul.mubr.f32.gmra.mrb[0].mxu0 %v1071
      %v2279 = vpop.f32.mrb[0].mxu0
      %v2280 = vadd.f32 %v2035, %v2279
      %v2281 = vpop.f32.mrb[0].mxu0
      %2282 = vmatprep.mubr.f32.mxu0 %v1183
      %2283 = vmatmul.mubr.f32.gmra.mrb[0].mxu0 %v1073
      %v2284 = vpop.f32.mrb[0].mxu0
      %v2285 = vadd.f32 %v2040, %v2284
      %v2286 = vpop.f32.mrb[0].mxu0
      %2287 = vmatprep.mubr.f32.mxu0 %v1185
      %2288 = vmatmul.mubr.f32.gmra.mrb[0].mxu0 %v1075
      %v2289 = vpop.f32.mrb[0].mxu0
      %v2290 = vadd.f32 %v2045, %v2289
      %v2291 = vpop.f32.mrb[0].mxu0
      %2292 = vmatprep.mubr.f32.mxu0 %v1187
      %2293 = vmatmul.mubr.f32.gmra.mrb[0].mxu0 %v1077
      %v2294 = vpop.f32.mrb[0].mxu0
      %v2295 = vadd.f32 %v2050, %v2294
      %v2296 = vpop.f32.mrb[0].mxu0
      %2297 = vmatprep.mubr.f32.mxu0 %v1189
      %2298 = vmatmul.mubr.f32.gmra.mrb[0].mxu0 %v1079
      %v2299 = vpop.f32.mrb[0].mxu0
      %v2300 = vadd.f32 %v2055, %v2299
      %v2301 = vpop.f32.mrb[0].mxu0
      %2302 = vmatprep.mubr.f32.mxu0 %v1191
      %2303 = vmatmul.mubr.f32.gmra.mrb[0].mxu0 %v1081
      %v2304 = vpop.f32.mrb[0].mxu0
      %v2305 = vadd.f32 %v2060, %v2304
      %v2306 = vpop.f32.mrb[0].mxu0
      %2307 = vmatprep.mubr.f32.mxu0 %v1193
      %2308 = vmatmul.mubr.f32.gmra.mrb[0].mxu0 %v1083
      %v2309 = vpop.f32.mrb[0].mxu0
      %v2310 = vadd.f32 %v2065, %v2309
      %v2311 = vpop.f32.mrb[0].mxu0
      %2312 = vmatprep.mubr.f32.mxu0 %v1195
      %2313 = vmatmul.mubr.f32.gmra.mrb[0].mxu0 %v1085
      %v2314 = vpop.f32.mrb[0].mxu0
      %v2315 = vadd.f32 %v2070, %v2314
      %v2316 = vpop.f32.mrb[0].mxu0
      %2317 = vmatprep.mubr.f32.mxu0 %v1197
      %2318 = vmatmul.mubr.f32.gmra.mrb[0].mxu0 %v1087
      %v2319 = vpop.f32.mrb[0].mxu0
      %v2320 = vadd.f32 %v2075, %v2319
      %v2321 = vpop.f32.mrb[0].mxu0
      %2322 = vmatprep.mubr.f32.mxu0 %v1199
      %2323 = vmatmul.mubr.f32.gmra.mrb[0].mxu0 %v1089
      %v2324 = vpop.f32.mrb[0].mxu0
      %v2325 = vadd.f32 %v2080, %v2324
      %v2326 = vpop.f32.mrb[0].mxu0
      %2327 = vmatprep.mubr.f32.mxu0 %v1201
      %2328 = vmatmul.mubr.f32.gmra.mrb[0].mxu0 %v1091
      %v2329 = vpop.f32.mrb[0].mxu0
      %v2330 = vadd.f32 %v2085, %v2329
      %v2331 = vpop.f32.mrb[0].mxu0
      %2332 = vmatprep.mubr.f32.mxu0 %v1203
      %2333 = vmatmul.mubr.f32.gmra.mrb[0].mxu0 %v1093
      %v2334 = vpop.f32.mrb[0].mxu0
      %v2335 = vadd.f32 %v2090, %v2334
      %v2336 = vpop.f32.mrb[0].mxu0
      %2337 = vmatprep.mubr.f32.mxu0 %v1205
      %2338 = vmatmul.mubr.f32.gmra.mrb[0].mxu0 %v1095
      %v2339 = vpop.f32.mrb[0].mxu0
      %v2340 = vadd.f32 %v2095, %v2339
      %v2341 = vpop.f32.mrb[0].mxu0
      %2342 = vmatprep.mubr.f32.mxu0 %v1207
      %2343 = vmatmul.mubr.f32.gmra.mrb[0].mxu0 %v1097
      %v2344 = vpop.f32.mrb[0].mxu0
      %v2345 = vadd.f32 %v2100, %v2344
      %v2346 = vpop.f32.mrb[0].mxu0
      %2347 = vmatprep.mubr.f32.mxu0 %v1209
      %2348 = vmatmul.mubr.f32.gmra.mrb[0].mxu0 %v1099
      %v2349 = vpop.f32.mrb[0].mxu0
      %v2350 = vadd.f32 %v2105, %v2349
      %v2351 = vpop.f32.mrb[0].mxu0
      %2352 = vdwg.mxu0
      %2353 = vmatprep.subr.mxu0 0.0
      %2354 = vmatpush1.msra.mxu0 %v1570
      %2355 = vmatprep.subr.mxu0 0.0
      %2356 = vmatpush1.msra.mxu0 %v1571
      %2357 = vmatprep.subr.mxu0 0.0
      %2358 = vmatpush1.msra.mxu0 %v1572
      %2359 = vmatprep.subr.mxu0 0.0
      %2360 = vmatpush1.msra.mxu0 %v1573
      %2361 = vmatprep.subr.mxu0 0.0
      %2362 = vmatpush1.msra.mxu0 %v1574
      %2363 = vmatprep.subr.mxu0 0.0
      %2364 = vmatpush1.msra.mxu0 %v1575
      %2365 = vmatprep.subr.mxu0 0.0
      %2366 = vmatpush1.msra.mxu0 %v1576
      %2367 = vmatprep.subr.mxu0 0.0
      %2368 = vmatpush1.msra.mxu0 %v1577
      %2369 = vmatprep.subr.mxu0 0.0
      %2370 = vmatpush1.msra.mxu0 %v1578
      %2371 = vmatprep.subr.mxu0 0.0
      %2372 = vmatpush1.msra.mxu0 %v1579
      %2373 = vmatprep.subr.mxu0 0.0
      %2374 = vmatpush1.msra.mxu0 %v1580
      %2375 = vmatprep.subr.mxu0 0.0
      %2376 = vmatpush1.msra.mxu0 %v1581
      %2377 = vmatprep.subr.mxu0 0.0
      %2378 = vmatpush1.msra.mxu0 %v1582
      %2379 = vmatprep.subr.mxu0 0.0
      %2380 = vmatpush1.msra.mxu0 %v1583
      %2381 = vmatprep.subr.mxu0 0.0
      %2382 = vmatpush1.msra.mxu0 %v1584
      %2383 = vmatprep.subr.mxu0 0.0
      %2384 = vmatpush1.msra.mxu0 %v1585
      %2385 = vmatprep.subr.mxu0 0.0
      %2386 = vmatpush1.msra.mxu0 %v1586
      %2387 = vmatprep.subr.mxu0 0.0
      %2388 = vmatpush1.msra.mxu0 %v1587
      %2389 = vmatprep.subr.mxu0 0.0
      %2390 = vmatpush1.msra.mxu0 %v1588
      %2391 = vmatprep.subr.mxu0 0.0
      %2392 = vmatpush1.msra.mxu0 %v1589
      %2393 = vmatprep.subr.mxu0 0.0
      %2394 = vmatpush1.msra.mxu0 %v1590
      %2395 = vmatprep.subr.mxu0 0.0
      %2396 = vmatpush1.msra.mxu0 %v1591
      %2397 = vmatprep.subr.mxu0 0.0
      %2398 = vmatpush1.msra.mxu0 %v1592
      %2399 = vmatprep.subr.mxu0 0.0
      %2400 = vmatpush1.msra.mxu0 %v1593
      %2401 = vmatprep.subr.mxu0 0.0
      %2402 = vmatpush1.msra.mxu0 %v1594
      %2403 = vmatprep.subr.mxu0 0.0
      %2404 = vmatpush1.msra.mxu0 %v1595
      %2405 = vmatprep.subr.mxu0 0.0
      %2406 = vmatpush1.msra.mxu0 %v1596
      %2407 = vmatprep.subr.mxu0 0.0
      %2408 = vmatpush1.msra.mxu0 %v1597
      %2409 = vmatprep.subr.mxu0 0.0
      %2410 = vmatpush1.msra.mxu0 %v1598
      %2411 = vmatprep.subr.mxu0 0.0
      %2412 = vmatpush1.msra.mxu0 %v1599
      %2413 = vmatprep.subr.mxu0 0.0
      %2414 = vmatpush1.msra.mxu0 %v1600
      %2415 = vmatprep.subr.mxu0 0.0
      %2416 = vmatpush1.msra.mxu0 %v1601
      %2417 = vmatprep.mubr.f32.mxu0 %v1257
      %2418 = vmatmul.mubr.f32.gmra.mrb[0].mxu0 %v1143
      %v2419 = vpop.f32.mrb[0].mxu0
      %v2420 = vadd.f32 %v2175, %v2419
      %v2421 = vpop.f32.mrb[0].mxu0
      %2422 = vmatprep.mubr.f32.mxu0 %v1259
      %2423 = vmatmul.mubr.f32.gmra.mrb[0].mxu0 %v1145
      %v2424 = vpop.f32.mrb[0].mxu0
      %v2425 = vadd.f32 %v2180, %v2424
      %v2426 = vpop.f32.mrb[0].mxu0
      %2427 = vmatprep.mubr.f32.mxu0 %v1261
      %2428 = vmatmul.mubr.f32.gmra.mrb[0].mxu0 %v1147
      %v2429 = vpop.f32.mrb[0].mxu0
      %v2430 = vadd.f32 %v2185, %v2429
      %v2431 = vpop.f32.mrb[0].mxu0
      %2432 = vmatprep.mubr.f32.mxu0 %v1263
      %2433 = vmatmul.mubr.f32.gmra.mrb[0].mxu0 %v1149
      %v2434 = vpop.f32.mrb[0].mxu0
      %v2435 = vadd.f32 %v2190, %v2434
      %v2436 = vpop.f32.mrb[0].mxu0
      %2437 = vmatprep.mubr.f32.mxu0 %v1265
      %2438 = vmatmul.mubr.f32.gmra.mrb[0].mxu0 %v1151
      %v2439 = vpop.f32.mrb[0].mxu0
      %v2440 = vadd.f32 %v2195, %v2439
      %v2441 = vpop.f32.mrb[0].mxu0
      %2442 = vmatprep.mubr.f32.mxu0 %v1267
      %2443 = vmatmul.mubr.f32.gmra.mrb[0].mxu0 %v1153
      %v2444 = vpop.f32.mrb[0].mxu0
      %v2445 = vadd.f32 %v2200, %v2444
      %v2446 = vpop.f32.mrb[0].mxu0
      %2447 = vmatprep.mubr.f32.mxu0 %v1269
      %2448 = vmatmul.mubr.f32.gmra.mrb[0].mxu0 %v1155
      %v2449 = vpop.f32.mrb[0].mxu0
      %v2450 = vadd.f32 %v2205, %v2449
      %v2451 = vpop.f32.mrb[0].mxu0
      %2452 = vmatprep.mubr.f32.mxu0 %v1271
      %2453 = vmatmul.mubr.f32.gmra.mrb[0].mxu0 %v1157
      %v2454 = vpop.f32.mrb[0].mxu0
      %v2455 = vadd.f32 %v2210, %v2454
      %v2456 = vpop.f32.mrb[0].mxu0
      %2457 = vmatprep.mubr.f32.mxu0 %v1273
      %2458 = vmatmul.mubr.f32.gmra.mrb[0].mxu0 %v1159
      %v2459 = vpop.f32.mrb[0].mxu0
      %v2460 = vadd.f32 %v2215, %v2459
      %v2461 = vpop.f32.mrb[0].mxu0
      %2462 = vmatprep.mubr.f32.mxu0 %v1275
      %2463 = vmatmul.mubr.f32.gmra.mrb[0].mxu0 %v1161
      %v2464 = vpop.f32.mrb[0].mxu0
      %v2465 = vadd.f32 %v2220, %v2464
      %v2466 = vpop.f32.mrb[0].mxu0
      %2467 = vmatprep.mubr.f32.mxu0 %v1277
      %2468 = vmatmul.mubr.f32.gmra.mrb[0].mxu0 %v1163
      %v2469 = vpop.f32.mrb[0].mxu0
      %v2470 = vadd.f32 %v2225, %v2469
      %v2471 = vpop.f32.mrb[0].mxu0
      %2472 = vmatprep.mubr.f32.mxu0 %v1279
      %2473 = vmatmul.mubr.f32.gmra.mrb[0].mxu0 %v1165
      %v2474 = vpop.f32.mrb[0].mxu0
      %v2475 = vadd.f32 %v2230, %v2474
      %v2476 = vpop.f32.mrb[0].mxu0
      %2477 = vmatprep.mubr.f32.mxu0 %v1281
      %2478 = vmatmul.mubr.f32.gmra.mrb[0].mxu0 %v1167
      %v2479 = vpop.f32.mrb[0].mxu0
      %v2480 = vadd.f32 %v2235, %v2479
      %v2481 = vpop.f32.mrb[0].mxu0
      %2482 = vmatprep.mubr.f32.mxu0 %v1283
      %2483 = vmatmul.mubr.f32.gmra.mrb[0].mxu0 %v1169
      %v2484 = vpop.f32.mrb[0].mxu0
      %v2485 = vadd.f32 %v2240, %v2484
      %v2486 = vpop.f32.mrb[0].mxu0
      %2487 = vmatprep.mubr.f32.mxu0 %v1285
      %2488 = vmatmul.mubr.f32.gmra.mrb[0].mxu0 %v1171
      %v2489 = vpop.f32.mrb[0].mxu0
      %v2490 = vadd.f32 %v2245, %v2489
      %v2491 = vpop.f32.mrb[0].mxu0
      %2492 = vmatprep.mubr.f32.mxu0 %v1287
      %2493 = vmatmul.mubr.f32.gmra.mrb[0].mxu0 %v1173
      %v2494 = vpop.f32.mrb[0].mxu0
      %v2495 = vadd.f32 %v2250, %v2494
      %v2496 = vpop.f32.mrb[0].mxu0
      %2497 = vmatprep.mubr.f32.mxu0 %v1289
      %2498 = vmatmul.mubr.f32.gmra.mrb[0].mxu0 %v1175
      %v2499 = vpop.f32.mrb[0].mxu0
      %v2500 = vadd.f32 %v2255, %v2499
      %v2501 = vpop.f32.mrb[0].mxu0
      %2502 = vmatprep.mubr.f32.mxu0 %v1291
      %2503 = vmatmul.mubr.f32.gmra.mrb[0].mxu0 %v1177
      %v2504 = vpop.f32.mrb[0].mxu0
      %v2505 = vadd.f32 %v2260, %v2504
      %v2506 = vpop.f32.mrb[0].mxu0
      %2507 = vmatprep.mubr.f32.mxu0 %v1293
      %2508 = vmatmul.mubr.f32.gmra.mrb[0].mxu0 %v1179
      %v2509 = vpop.f32.mrb[0].mxu0
      %v2510 = vadd.f32 %v2265, %v2509
      %v2511 = vpop.f32.mrb[0].mxu0
      %2512 = vmatprep.mubr.f32.mxu0 %v1295
      %2513 = vmatmul.mubr.f32.gmra.mrb[0].mxu0 %v1181
      %v2514 = vpop.f32.mrb[0].mxu0
      %v2515 = vadd.f32 %v2270, %v2514
      %v2516 = vpop.f32.mrb[0].mxu0
      %2517 = vmatprep.mubr.f32.mxu0 %v1297
      %2518 = vmatmul.mubr.f32.gmra.mrb[0].mxu0 %v1183
      %v2519 = vpop.f32.mrb[0].mxu0
      %v2520 = vadd.f32 %v2275, %v2519
      %v2521 = vpop.f32.mrb[0].mxu0
      %2522 = vmatprep.mubr.f32.mxu0 %v1299
      %2523 = vmatmul.mubr.f32.gmra.mrb[0].mxu0 %v1185
      %v2524 = vpop.f32.mrb[0].mxu0
      %v2525 = vadd.f32 %v2280, %v2524
      %v2526 = vpop.f32.mrb[0].mxu0
      %2527 = vmatprep.mubr.f32.mxu0 %v1301
      %2528 = vmatmul.mubr.f32.gmra.mrb[0].mxu0 %v1187
      %v2529 = vpop.f32.mrb[0].mxu0
      %v2530 = vadd.f32 %v2285, %v2529
      %v2531 = vpop.f32.mrb[0].mxu0
      %2532 = vmatprep.mubr.f32.mxu0 %v1303
      %2533 = vmatmul.mubr.f32.gmra.mrb[0].mxu0 %v1189
      %v2534 = vpop.f32.mrb[0].mxu0
      %v2535 = vadd.f32 %v2290, %v2534
      %v2536 = vpop.f32.mrb[0].mxu0
      %2537 = vmatprep.mubr.f32.mxu0 %v1305
      %2538 = vmatmul.mubr.f32.gmra.mrb[0].mxu0 %v1191
      %v2539 = vpop.f32.mrb[0].mxu0
      %v2540 = vadd.f32 %v2295, %v2539
      %v2541 = vpop.f32.mrb[0].mxu0
      %2542 = vmatprep.mubr.f32.mxu0 %v1307
      %2543 = vmatmul.mubr.f32.gmra.mrb[0].mxu0 %v1193
      %v2544 = vpop.f32.mrb[0].mxu0
      %v2545 = vadd.f32 %v2300, %v2544
      %v2546 = vpop.f32.mrb[0].mxu0
      %2547 = vmatprep.mubr.f32.mxu0 %v1309
      %2548 = vmatmul.mubr.f32.gmra.mrb[0].mxu0 %v1195
      %v2549 = vpop.f32.mrb[0].mxu0
      %v2550 = vadd.f32 %v2305, %v2549
      %v2551 = vpop.f32.mrb[0].mxu0
      %2552 = vmatprep.mubr.f32.mxu0 %v1311
      %2553 = vmatmul.mubr.f32.gmra.mrb[0].mxu0 %v1197
      %v2554 = vpop.f32.mrb[0].mxu0
      %v2555 = vadd.f32 %v2310, %v2554
      %v2556 = vpop.f32.mrb[0].mxu0
      %2557 = vmatprep.mubr.f32.mxu0 %v1313
      %2558 = vmatmul.mubr.f32.gmra.mrb[0].mxu0 %v1199
      %v2559 = vpop.f32.mrb[0].mxu0
      %v2560 = vadd.f32 %v2315, %v2559
      %v2561 = vpop.f32.mrb[0].mxu0
      %2562 = vmatprep.mubr.f32.mxu0 %v1315
      %2563 = vmatmul.mubr.f32.gmra.mrb[0].mxu0 %v1201
      %v2564 = vpop.f32.mrb[0].mxu0
      %v2565 = vadd.f32 %v2320, %v2564
      %v2566 = vpop.f32.mrb[0].mxu0
      %2567 = vmatprep.mubr.f32.mxu0 %v1317
      %2568 = vmatmul.mubr.f32.gmra.mrb[0].mxu0 %v1203
      %v2569 = vpop.f32.mrb[0].mxu0
      %v2570 = vadd.f32 %v2325, %v2569
      %v2571 = vpop.f32.mrb[0].mxu0
      %2572 = vmatprep.mubr.f32.mxu0 %v1319
      %2573 = vmatmul.mubr.f32.gmra.mrb[0].mxu0 %v1205
      %v2574 = vpop.f32.mrb[0].mxu0
      %v2575 = vadd.f32 %v2330, %v2574
      %v2576 = vpop.f32.mrb[0].mxu0
      %2577 = vmatprep.mubr.f32.mxu0 %v1321
      %2578 = vmatmul.mubr.f32.gmra.mrb[0].mxu0 %v1207
      %v2579 = vpop.f32.mrb[0].mxu0
      %v2580 = vadd.f32 %v2335, %v2579
      %v2581 = vpop.f32.mrb[0].mxu0
      %2582 = vmatprep.mubr.f32.mxu0 %v1323
      %2583 = vmatmul.mubr.f32.gmra.mrb[0].mxu0 %v1209
      %v2584 = vpop.f32.mrb[0].mxu0
      %v2585 = vadd.f32 %v2340, %v2584
      %v2586 = vpop.f32.mrb[0].mxu0
      %2587 = vmatprep.mubr.f32.mxu0 %v1325
      %2588 = vmatmul.mubr.f32.gmra.mrb[0].mxu0 %v1249
      %v2589 = vpop.f32.mrb[0].mxu0
      %v2590 = vadd.f32 %v2345, %v2589
      %v2591 = vpop.f32.mrb[0].mxu0
      %2592 = vmatprep.mubr.f32.mxu0 %v1327
      %2593 = vmatmul.mubr.f32.gmra.mrb[0].mxu0 %v1251
      %v2594 = vpop.f32.mrb[0].mxu0
      %v2595 = vadd.f32 %v2350, %v2594
      %v2596 = vpop.f32.mrb[0].mxu0
      %2597 = vdwg.mxu0
      %2598 = vmatprep.subr.mxu0 0.0
      %2599 = vmatpush1.msra.mxu0 %v1602
      %2600 = vmatprep.subr.mxu0 0.0
      %2601 = vmatpush1.msra.mxu0 %v1603
      %2602 = vmatprep.subr.mxu0 0.0
      %2603 = vmatpush1.msra.mxu0 %v1604
      %2604 = vmatprep.subr.mxu0 0.0
      %2605 = vmatpush1.msra.mxu0 %v1605
      %2606 = vmatprep.subr.mxu0 0.0
      %2607 = vmatpush1.msra.mxu0 %v1606
      %2608 = vmatprep.subr.mxu0 0.0
      %2609 = vmatpush1.msra.mxu0 %v1607
      %2610 = vmatprep.subr.mxu0 0.0
      %2611 = vmatpush1.msra.mxu0 %v1608
      %2612 = vmatprep.subr.mxu0 0.0
      %2613 = vmatpush1.msra.mxu0 %v1609
      %2614 = vmatprep.subr.mxu0 0.0
      %2615 = vmatpush1.msra.mxu0 %v1610
      %2616 = vmatprep.subr.mxu0 0.0
      %2617 = vmatpush1.msra.mxu0 %v1611
      %2618 = vmatprep.subr.mxu0 0.0
      %2619 = vmatpush1.msra.mxu0 %v1612
      %2620 = vmatprep.subr.mxu0 0.0
      %2621 = vmatpush1.msra.mxu0 %v1613
      %2622 = vmatprep.subr.mxu0 0.0
      %2623 = vmatpush1.msra.mxu0 %v1614
      %2624 = vmatprep.subr.mxu0 0.0
      %2625 = vmatpush1.msra.mxu0 %v1615
      %2626 = vmatprep.subr.mxu0 0.0
      %2627 = vmatpush1.msra.mxu0 %v1616
      %2628 = vmatprep.subr.mxu0 0.0
      %2629 = vmatpush1.msra.mxu0 %v1617
      %2630 = vmatprep.subr.mxu0 0.0
      %2631 = vmatpush1.msra.mxu0 0.0
      %2632 = vmatprep.subr.mxu0 0.0
      %2633 = vmatpush1.msra.mxu0 0.0
      %2634 = vmatprep.subr.mxu0 0.0
      %2635 = vmatpush1.msra.mxu0 0.0
      %2636 = vmatprep.subr.mxu0 0.0
      %2637 = vmatpush1.msra.mxu0 0.0
      %2638 = vmatprep.subr.mxu0 0.0
      %2639 = vmatpush1.msra.mxu0 0.0
      %2640 = vmatprep.subr.mxu0 0.0
      %2641 = vmatpush1.msra.mxu0 0.0
      %2642 = vmatprep.subr.mxu0 0.0
      %2643 = vmatpush1.msra.mxu0 0.0
      %2644 = vmatprep.subr.mxu0 0.0
      %2645 = vmatpush1.msra.mxu0 0.0
      %2646 = vmatprep.subr.mxu0 0.0
      %2647 = vmatpush1.msra.mxu0 0.0
      %2648 = vmatprep.subr.mxu0 0.0
      %2649 = vmatpush1.msra.mxu0 0.0
      %2650 = vmatprep.subr.mxu0 0.0
      %2651 = vmatpush1.msra.mxu0 0.0
      %2652 = vmatprep.subr.mxu0 0.0
      %2653 = vmatpush1.msra.mxu0 0.0
      %2654 = vmatprep.subr.mxu0 0.0
      %2655 = vmatpush1.msra.mxu0 0.0
      %2656 = vmatprep.subr.mxu0 0.0
      %2657 = vmatpush1.msra.mxu0 0.0
      %2658 = vmatprep.subr.mxu0 0.0
      %2659 = vmatpush1.msra.mxu0 0.0
      %2660 = vmatprep.subr.mxu0 0.0
      %2661 = vmatpush1.msra.mxu0 0.0
      %2662 = vmatprep.mubr.f32.mxu0 0.0
      %2663 = vmatmul.mubr.f32.gmra.mrb[0].mxu0 %v1367
      %v2664 = vpop.f32.mrb[0].mxu0
      %v2665 = vadd.f32 %v2420, %v2664
      %v2666 = vpop.f32.mrb[0].mxu0
      %2667 = vmatprep.mubr.f32.mxu0 0.0
      %2668 = vmatmul.mubr.f32.gmra.mrb[0].mxu0 %v1369
      %v2669 = vpop.f32.mrb[0].mxu0
      %v2670 = vadd.f32 %v2425, %v2669
      %v2671 = vpop.f32.mrb[0].mxu0
      %2672 = vmatprep.mubr.f32.mxu0 0.0
      %2673 = vmatmul.mubr.f32.gmra.mrb[0].mxu0 %v1371
      %v2674 = vpop.f32.mrb[0].mxu0
      %v2675 = vadd.f32 %v2430, %v2674
      %v2676 = vpop.f32.mrb[0].mxu0
      %2677 = vmatprep.mubr.f32.mxu0 0.0
      %2678 = vmatmul.mubr.f32.gmra.mrb[0].mxu0 %v1373
      %v2679 = vpop.f32.mrb[0].mxu0
      %v2680 = vadd.f32 %v2435, %v2679
      %v2681 = vpop.f32.mrb[0].mxu0
      %2682 = vmatprep.mubr.f32.mxu0 0.0
      %2683 = vmatmul.mubr.f32.gmra.mrb[0].mxu0 %v1375
      %v2684 = vpop.f32.mrb[0].mxu0
      %v2685 = vadd.f32 %v2440, %v2684
      %v2686 = vpop.f32.mrb[0].mxu0
      %2687 = vmatprep.mubr.f32.mxu0 0.0
      %2688 = vmatmul.mubr.f32.gmra.mrb[0].mxu0 %v1377
      %v2689 = vpop.f32.mrb[0].mxu0
      %v2690 = vadd.f32 %v2445, %v2689
      %v2691 = vpop.f32.mrb[0].mxu0
      %2692 = vmatprep.mubr.f32.mxu0 0.0
      %2693 = vmatmul.mubr.f32.gmra.mrb[0].mxu0 %v1379
      %v2694 = vpop.f32.mrb[0].mxu0
      %v2695 = vadd.f32 %v2450, %v2694
      %v2696 = vpop.f32.mrb[0].mxu0
      %2697 = vmatprep.mubr.f32.mxu0 0.0
      %2698 = vmatmul.mubr.f32.gmra.mrb[0].mxu0 %v1381
      %v2699 = vpop.f32.mrb[0].mxu0
      %v2700 = vadd.f32 %v2455, %v2699
      %v2701 = vpop.f32.mrb[0].mxu0
      %2702 = vmatprep.mubr.f32.mxu0 0.0
      %2703 = vmatmul.mubr.f32.gmra.mrb[0].mxu0 %v1383
      %v2704 = vpop.f32.mrb[0].mxu0
      %v2705 = vadd.f32 %v2460, %v2704
      %v2706 = vpop.f32.mrb[0].mxu0
      %2707 = vmatprep.mubr.f32.mxu0 0.0
      %2708 = vmatmul.mubr.f32.gmra.mrb[0].mxu0 %v1385
      %v2709 = vpop.f32.mrb[0].mxu0
      %v2710 = vadd.f32 %v2465, %v2709
      %v2711 = vpop.f32.mrb[0].mxu0
      %2712 = vmatprep.mubr.f32.mxu0 0.0
      %2713 = vmatmul.mubr.f32.gmra.mrb[0].mxu0 %v1387
      %v2714 = vpop.f32.mrb[0].mxu0
      %v2715 = vadd.f32 %v2470, %v2714
      %v2716 = vpop.f32.mrb[0].mxu0
      %2717 = vmatprep.mubr.f32.mxu0 0.0
      %2718 = vmatmul.mubr.f32.gmra.mrb[0].mxu0 %v1389
      %v2719 = vpop.f32.mrb[0].mxu0
      %v2720 = vadd.f32 %v2475, %v2719
      %v2721 = vpop.f32.mrb[0].mxu0
      %2722 = vmatprep.mubr.f32.mxu0 0.0
      %2723 = vmatmul.mubr.f32.gmra.mrb[0].mxu0 %v1391
      %v2724 = vpop.f32.mrb[0].mxu0
      %v2725 = vadd.f32 %v2480, %v2724
      %v2726 = vpop.f32.mrb[0].mxu0
      %2727 = vmatprep.mubr.f32.mxu0 0.0
      %2728 = vmatmul.mubr.f32.gmra.mrb[0].mxu0 %v1393
      %v2729 = vpop.f32.mrb[0].mxu0
      %v2730 = vadd.f32 %v2485, %v2729
      %v2731 = vpop.f32.mrb[0].mxu0
      %2732 = vmatprep.mubr.f32.mxu0 0.0
      %2733 = vmatmul.mubr.f32.gmra.mrb[0].mxu0 %v1395
      %v2734 = vpop.f32.mrb[0].mxu0
      %v2735 = vadd.f32 %v2490, %v2734
      %v2736 = vpop.f32.mrb[0].mxu0
      %2737 = vmatprep.mubr.f32.mxu0 0.0
      %2738 = vmatmul.mubr.f32.gmra.mrb[0].mxu0 %v1397
      %v2739 = vpop.f32.mrb[0].mxu0
      %v2740 = vadd.f32 %v2495, %v2739
      %v2741 = vpop.f32.mrb[0].mxu0
      %2742 = vmatprep.mubr.f32.mxu0 0.0
      %2743 = vmatmul.mubr.f32.gmra.mrb[0].mxu0 %v1399
      %v2744 = vpop.f32.mrb[0].mxu0
      %v2745 = vadd.f32 %v2500, %v2744
      %v2746 = vpop.f32.mrb[0].mxu0
      %2747 = vmatprep.mubr.f32.mxu0 0.0
      %2748 = vmatmul.mubr.f32.gmra.mrb[0].mxu0 %v1401
      %v2749 = vpop.f32.mrb[0].mxu0
      %v2750 = vadd.f32 %v2505, %v2749
      %v2751 = vpop.f32.mrb[0].mxu0
      %2752 = vmatprep.mubr.f32.mxu0 0.0
      %2753 = vmatmul.mubr.f32.gmra.mrb[0].mxu0 %v1403
      %v2754 = vpop.f32.mrb[0].mxu0
      %v2755 = vadd.f32 %v2510, %v2754
      %v2756 = vpop.f32.mrb[0].mxu0
      %2757 = vmatprep.mubr.f32.mxu0 0.0
      %2758 = vmatmul.mubr.f32.gmra.mrb[0].mxu0 %v1405
      %v2759 = vpop.f32.mrb[0].mxu0
      %v2760 = vadd.f32 %v2515, %v2759
      %v2761 = vpop.f32.mrb[0].mxu0
      %2762 = vmatprep.mubr.f32.mxu0 0.0
      %2763 = vmatmul.mubr.f32.gmra.mrb[0].mxu0 %v1407
      %v2764 = vpop.f32.mrb[0].mxu0
      %v2765 = vadd.f32 %v2520, %v2764
      %v2766 = vpop.f32.mrb[0].mxu0
      %2767 = vmatprep.mubr.f32.mxu0 0.0
      %2768 = vmatmul.mubr.f32.gmra.mrb[0].mxu0 %v1409
      %v2769 = vpop.f32.mrb[0].mxu0
      %v2770 = vadd.f32 %v2525, %v2769
      %v2771 = vpop.f32.mrb[0].mxu0
      %2772 = vmatprep.mubr.f32.mxu0 0.0
      %2773 = vmatmul.mubr.f32.gmra.mrb[0].mxu0 %v1411
      %v2774 = vpop.f32.mrb[0].mxu0
      %v2775 = vadd.f32 %v2530, %v2774
      %v2776 = vpop.f32.mrb[0].mxu0
      %2777 = vmatprep.mubr.f32.mxu0 0.0
      %2778 = vmatmul.mubr.f32.gmra.mrb[0].mxu0 %v1413
      %v2779 = vpop.f32.mrb[0].mxu0
      %v2780 = vadd.f32 %v2535, %v2779
      %v2781 = vpop.f32.mrb[0].mxu0
      %2782 = vmatprep.mubr.f32.mxu0 0.0
      %2783 = vmatmul.mubr.f32.gmra.mrb[0].mxu0 %v1415
      %v2784 = vpop.f32.mrb[0].mxu0
      %v2785 = vadd.f32 %v2540, %v2784
      %v2786 = vpop.f32.mrb[0].mxu0
      %2787 = vmatprep.mubr.f32.mxu0 0.0
      %2788 = vmatmul.mubr.f32.gmra.mrb[0].mxu0 %v1417
      %v2789 = vpop.f32.mrb[0].mxu0
      %v2790 = vadd.f32 %v2545, %v2789
      %v2791 = vpop.f32.mrb[0].mxu0
      %2792 = vmatprep.mubr.f32.mxu0 0.0
      %2793 = vmatmul.mubr.f32.gmra.mrb[0].mxu0 %v1419
      %v2794 = vpop.f32.mrb[0].mxu0
      %v2795 = vadd.f32 %v2550, %v2794
      %v2796 = vpop.f32.mrb[0].mxu0
      %2797 = vmatprep.mubr.f32.mxu0 0.0
      %2798 = vmatmul.mubr.f32.gmra.mrb[0].mxu0 %v1421
      %v2799 = vpop.f32.mrb[0].mxu0
      %v2800 = vadd.f32 %v2555, %v2799
      %v2801 = vpop.f32.mrb[0].mxu0
      %2802 = vmatprep.mubr.f32.mxu0 0.0
      %2803 = vmatmul.mubr.f32.gmra.mrb[0].mxu0 %v1423
      %v2804 = vpop.f32.mrb[0].mxu0
      %v2805 = vadd.f32 %v2560, %v2804
      %v2806 = vpop.f32.mrb[0].mxu0
      %2807 = vmatprep.mubr.f32.mxu0 0.0
      %2808 = vmatmul.mubr.f32.gmra.mrb[0].mxu0 %v1425
      %v2809 = vpop.f32.mrb[0].mxu0
      %v2810 = vadd.f32 %v2565, %v2809
      %v2811 = vpop.f32.mrb[0].mxu0
      %2812 = vmatprep.mubr.f32.mxu0 0.0
      %2813 = vmatmul.mubr.f32.gmra.mrb[0].mxu0 %v1427
      %v2814 = vpop.f32.mrb[0].mxu0
      %v2815 = vadd.f32 %v2570, %v2814
      %v2816 = vpop.f32.mrb[0].mxu0
      %2817 = vmatprep.mubr.f32.mxu0 0.0
      %2818 = vmatmul.mubr.f32.gmra.mrb[0].mxu0 %v1429
      %v2819 = vpop.f32.mrb[0].mxu0
      %v2820 = vadd.f32 %v2575, %v2819
      %v2821 = vpop.f32.mrb[0].mxu0
      %2822 = vmatprep.mubr.f32.mxu0 0.0
      %2823 = vmatmul.mubr.f32.gmra.mrb[0].mxu0 %v1431
      %v2824 = vpop.f32.mrb[0].mxu0
      %v2825 = vadd.f32 %v2580, %v2824
      %v2826 = vpop.f32.mrb[0].mxu0
      %2827 = vmatprep.mubr.f32.mxu0 0.0
      %2828 = vmatmul.mubr.f32.gmra.mrb[0].mxu0 %v1433
      %v2829 = vpop.f32.mrb[0].mxu0
      %v2830 = vadd.f32 %v2585, %v2829
      %v2831 = vpop.f32.mrb[0].mxu0
      %2832 = vmatprep.mubr.f32.mxu0 0.0
      %2833 = vmatmul.mubr.f32.gmra.mrb[0].mxu0 %v1435
      %v2834 = vpop.f32.mrb[0].mxu0
      %v2835 = vadd.f32 %v2590, %v2834
      %v2836 = vpop.f32.mrb[0].mxu0
      %2837 = vmatprep.mubr.f32.mxu0 0.0
      %2838 = vmatmul.mubr.f32.gmra.mrb[0].mxu0 %v1437
      %v2839 = vpop.f32.mrb[0].mxu0
      %v2840 = vadd.f32 %v2595, %v2839
      %v2841 = vpop.f32.mrb[0].mxu0
      %2842 = vdwg.mxu0
      %v2843 = vrot.slane %v528, 3
      %v2844 = vrot.slane %v533, 3
      %v2845 = vsel %vm1026, %v2843, %v2844
      %v2846 = vrot.slane %v538, 3
      %v2847 = vsel %vm1026, %v2844, %v2846
      %v2848 = vrot.slane %v543, 3
      %v2849 = vsel %vm1026, %v2846, %v2848
      %v2850 = vrot.slane %v548, 3
      %v2851 = vsel %vm1026, %v2848, %v2850
      %v2852 = vrot.slane %v553, 3
      %v2853 = vsel %vm1026, %v2850, %v2852
      %v2854 = vrot.slane %v558, 3
      %v2855 = vsel %vm1026, %v2852, %v2854
      %v2856 = vrot.slane %v563, 3
      %v2857 = vsel %vm1026, %v2854, %v2856
      %v2858 = vrot.slane %v568, 3
      %v2859 = vsel %vm1026, %v2856, %v2858
      %v2860 = vrot.slane %v573, 3
      %v2861 = vsel %vm1026, %v2858, %v2860
      %v2862 = vrot.slane %v578, 3
      %v2863 = vsel %vm1026, %v2860, %v2862
      %v2864 = vrot.slane %v583, 3
      %v2865 = vsel %vm1026, %v2862, %v2864
      %v2866 = vrot.slane %v588, 3
      %v2867 = vsel %vm1026, %v2864, %v2866
      %v2868 = vrot.slane %v593, 3
      %v2869 = vsel %vm1026, %v2866, %v2868
      %v2870 = vrot.slane %v598, 3
      %v2871 = vsel %vm1026, %v2868, %v2870
      %v2872 = vrot.slane %v603, 3
      %v2873 = vsel %vm1026, %v2870, %v2872
      %v2874 = vrot.slane %v608, 3
      %v2875 = vsel %vm1026, %v2872, %v2874
      %v2876 = vrot.slane %v613, 3
      %v2877 = vsel %vm1026, %v2874, %v2876
      %v2878 = vrot.slane %v618, 3
      %v2879 = vsel %vm1026, %v2876, %v2878
      %v2880 = vrot.slane %v623, 3
      %v2881 = vsel %vm1026, %v2878, %v2880
      %v2882 = vrot.slane %v628, 3
      %v2883 = vsel %vm1026, %v2880, %v2882
      %v2884 = vrot.slane %v633, 3
      %v2885 = vsel %vm1026, %v2882, %v2884
      %v2886 = vrot.slane %v638, 3
      %v2887 = vsel %vm1026, %v2884, %v2886
      %v2888 = vrot.slane %v643, 3
      %v2889 = vsel %vm1026, %v2886, %v2888
      %v2890 = vrot.slane %v648, 3
      %v2891 = vsel %vm1026, %v2888, %v2890
      %v2892 = vrot.slane %v653, 3
      %v2893 = vsel %vm1026, %v2890, %v2892
      %v2894 = vrot.slane %v658, 3
      %v2895 = vsel %vm1026, %v2892, %v2894
      %v2896 = vrot.slane %v663, 3
      %v2897 = vsel %vm1026, %v2894, %v2896
      %v2898 = vrot.slane %v668, 3
      %v2899 = vsel %vm1026, %v2896, %v2898
      %v2900 = vrot.slane %v673, 3
      %v2901 = vsel %vm1026, %v2898, %v2900
      %v2902 = vrot.slane %v678, 3
      %v2903 = vsel %vm1026, %v2900, %v2902
      %v2904 = vrot.slane %v683, 3
      %v2905 = vsel %vm1026, %v2902, %v2904
      %v2906 = vrot.slane %v688, 3
      %v2907 = vsel %vm1026, %v2904, %v2906
      %v2908 = vrot.slane %v693, 3
      %v2909 = vsel %vm1026, %v2906, %v2908
      %v2910 = vrot.slane %v698, 3
      %v2911 = vsel %vm1026, %v2908, %v2910
      %v2912 = vrot.slane %v703, 3
      %v2913 = vsel %vm1026, %v2910, %v2912
      %v2914 = vrot.slane %v708, 3
      %v2915 = vsel %vm1026, %v2912, %v2914
      %v2952 = vmul.f32 %v2665, %v2845
      %v2953 = vmul.f32 %v2670, %v2847
      %v2954 = vmul.f32 %v2675, %v2849
      %v2955 = vmul.f32 %v2680, %v2851
      %v2956 = vmul.f32 %v2685, %v2853
      %v2957 = vmul.f32 %v2690, %v2855
      %v2958 = vmul.f32 %v2695, %v2857
      %v2959 = vmul.f32 %v2700, %v2859
      %v2960 = vmul.f32 %v2705, %v2861
      %v2961 = vmul.f32 %v2710, %v2863
      %v2962 = vmul.f32 %v2715, %v2865
      %v2963 = vmul.f32 %v2720, %v2867
      %v2964 = vmul.f32 %v2725, %v2869
      %v2965 = vmul.f32 %v2730, %v2871
      %v2966 = vmul.f32 %v2735, %v2873
      %v2967 = vmul.f32 %v2740, %v2875
      %v2968 = vmul.f32 %v2745, %v2877
      %v2969 = vmul.f32 %v2750, %v2879
      %v2970 = vmul.f32 %v2755, %v2881
      %v2971 = vmul.f32 %v2760, %v2883
      %v2972 = vmul.f32 %v2765, %v2885
      %v2973 = vmul.f32 %v2770, %v2887
      %v2974 = vmul.f32 %v2775, %v2889
      %v2975 = vmul.f32 %v2780, %v2891
      %v2976 = vmul.f32 %v2785, %v2893
      %v2977 = vmul.f32 %v2790, %v2895
      %v2978 = vmul.f32 %v2795, %v2897
      %v2979 = vmul.f32 %v2800, %v2899
      %v2980 = vmul.f32 %v2805, %v2901
      %v2981 = vmul.f32 %v2810, %v2903
      %v2982 = vmul.f32 %v2815, %v2905
      %v2983 = vmul.f32 %v2820, %v2907
      %v2984 = vmul.f32 %v2825, %v2909
      %v2985 = vmul.f32 %v2830, %v2911
      %v2986 = vmul.f32 %v2835, %v2913
      %v2987 = vmul.f32 %v2840, %v2915
      %v3024 = vrot.slane %v2952, 5
      %v3025 = vrot.slane %v2953, 5
      %v3026 = vsel %vm1254, %v3024, %v3025
      %v3027 = vrot.slane %v2954, 5
      %v3028 = vsel %vm1254, %v3025, %v3027
      %v3029 = vrot.slane %v2955, 5
      %v3030 = vsel %vm1254, %v3027, %v3029
      %v3031 = vrot.slane %v2956, 5
      %v3032 = vsel %vm1254, %v3029, %v3031
      %v3033 = vrot.slane %v2957, 5
      %v3034 = vsel %vm1254, %v3031, %v3033
      %v3035 = vrot.slane %v2958, 5
      %v3036 = vsel %vm1254, %v3033, %v3035
      %v3037 = vrot.slane %v2959, 5
      %v3038 = vsel %vm1254, %v3035, %v3037
      %v3039 = vrot.slane %v2960, 5
      %v3040 = vsel %vm1254, %v3037, %v3039
      %v3041 = vrot.slane %v2961, 5
      %v3042 = vsel %vm1254, %v3039, %v3041
      %v3043 = vrot.slane %v2962, 5
      %v3044 = vsel %vm1254, %v3041, %v3043
      %v3045 = vrot.slane %v2963, 5
      %v3046 = vsel %vm1254, %v3043, %v3045
      %v3047 = vrot.slane %v2964, 5
      %v3048 = vsel %vm1254, %v3045, %v3047
      %v3049 = vrot.slane %v2965, 5
      %v3050 = vsel %vm1254, %v3047, %v3049
      %v3051 = vrot.slane %v2966, 5
      %v3052 = vsel %vm1254, %v3049, %v3051
      %v3053 = vrot.slane %v2967, 5
      %v3054 = vsel %vm1254, %v3051, %v3053
      %v3055 = vrot.slane %v2968, 5
      %v3056 = vsel %vm1254, %v3053, %v3055
      %v3057 = vrot.slane %v2969, 5
      %v3058 = vsel %vm1254, %v3055, %v3057
      %v3059 = vrot.slane %v2970, 5
      %v3060 = vsel %vm1254, %v3057, %v3059
      %v3061 = vrot.slane %v2971, 5
      %v3062 = vsel %vm1254, %v3059, %v3061
      %v3063 = vrot.slane %v2972, 5
      %v3064 = vsel %vm1254, %v3061, %v3063
      %v3065 = vrot.slane %v2973, 5
      %v3066 = vsel %vm1254, %v3063, %v3065
      %v3067 = vrot.slane %v2974, 5
      %v3068 = vsel %vm1254, %v3065, %v3067
      %v3069 = vrot.slane %v2975, 5
      %v3070 = vsel %vm1254, %v3067, %v3069
      %v3071 = vrot.slane %v2976, 5
      %v3072 = vsel %vm1254, %v3069, %v3071
      %v3073 = vrot.slane %v2977, 5
      %v3074 = vsel %vm1254, %v3071, %v3073
      %v3075 = vrot.slane %v2978, 5
      %v3076 = vsel %vm1254, %v3073, %v3075
      %v3077 = vrot.slane %v2979, 5
      %v3078 = vsel %vm1254, %v3075, %v3077
      %v3079 = vrot.slane %v2980, 5
      %v3080 = vsel %vm1254, %v3077, %v3079
      %v3081 = vrot.slane %v2981, 5
      %v3082 = vsel %vm1254, %v3079, %v3081
      %v3083 = vrot.slane %v2982, 5
      %v3084 = vsel %vm1254, %v3081, %v3083
      %v3085 = vrot.slane %v2983, 5
      %v3086 = vsel %vm1254, %v3083, %v3085
      %v3087 = vrot.slane %v2984, 5
      %v3088 = vsel %vm1254, %v3085, %v3087
      %v3089 = vrot.slane %v2985, 5
      %v3090 = vsel %vm1254, %v3087, %v3089
      %v3091 = vrot.slane %v2986, 5
      %v3092 = vsel %vm1254, %v3089, %v3091
      %v3093 = vrot.slane %v2987, 5
      %v3094 = vsel %vm1254, %v3091, %v3093
      %v3132 = vsel %vm1254, 0.0, %v3024
      %v3133 = vsel %vm1254, %v3093, 0.0
      %3134 = vst [vmem:[%s289] sm:$0xff] 0.0
      %3135 = vst [vmem:[%s289 + $0x8] sm:$0xff] 0.0
      %3136 = vst [vmem:[%s289 + $0x10] sm:$0xff] %v3132
      %3137 = vst [vmem:[%s289 + $0x18] sm:$0xff] %v3026
      %3138 = vst [vmem:[%s289 + $0x20] sm:$0xff] %v3028
      %3139 = vst [vmem:[%s289 + $0x28] sm:$0xff] %v3030
      %3140 = vst [vmem:[%s289 + $0x30] sm:$0xff] %v3032
      %3141 = vst [vmem:[%s289 + $0x38] sm:$0xff] %v3034
      %3142 = vst [vmem:[%s289 + $0x40] sm:$0xff] %v3036
      %3143 = vst [vmem:[%s289 + $0x48] sm:$0xff] %v3038
      %3144 = vst [vmem:[%s289 + $0x50] sm:$0xff] %v3040
      %3145 = vst [vmem:[%s289 + $0x58] sm:$0xff] %v3042
      %3146 = vst [vmem:[%s289 + $0x60] sm:$0xff] %v3044
      %3147 = vst [vmem:[%s289 + $0x68] sm:$0xff] %v3046
      %3148 = vst [vmem:[%s289 + $0x70] sm:$0xff] %v3048
      %3149 = vst [vmem:[%s289 + $0x78] sm:$0xff] %v3050
      %3150 = vst [vmem:[%s289 + $0x80] sm:$0xff] %v3052
      %3151 = vst [vmem:[%s289 + $0x88] sm:$0xff] %v3054
      %3152 = vst [vmem:[%s289 + $0x90] sm:$0xff] %v3056
      %3153 = vst [vmem:[%s289 + $0x98] sm:$0xff] %v3058
      %3154 = vst [vmem:[%s289 + $0xa0] sm:$0xff] %v3060
      %3155 = vst [vmem:[%s289 + $0xa8] sm:$0xff] %v3062
      %3156 = vst [vmem:[%s289 + $0xb0] sm:$0xff] %v3064
      %3157 = vst [vmem:[%s289 + $0xb8] sm:$0xff] %v3066
      %3158 = vst [vmem:[%s289 + $0xc0] sm:$0xff] %v3068
      %3159 = vst [vmem:[%s289 + $0xc8] sm:$0xff] %v3070
      %3160 = vst [vmem:[%s289 + $0xd0] sm:$0xff] %v3072
      %3161 = vst [vmem:[%s289 + $0xd8] sm:$0xff] %v3074
      %3162 = vst [vmem:[%s289 + $0xe0] sm:$0xff] %v3076
      %3163 = vst [vmem:[%s289 + $0xe8] sm:$0xff] %v3078
      %3164 = vst [vmem:[%s289 + $0xf0] sm:$0xff] %v3080
      %3165 = vst [vmem:[%s289 + $0xf8] sm:$0xff] %v3082
      %3166 = vst [vmem:[%s289 + $0x100] sm:$0xff] %v3084
      %3167 = vst [vmem:[%s289 + $0x108] sm:$0xff] %v3086
      %3168 = vst [vmem:[%s289 + $0x110] sm:$0xff] %v3088
      %3169 = vst [vmem:[%s289 + $0x118] sm:$0xff] %v3090
      %3170 = vst [vmem:[%s289 + $0x120] sm:$0xff] %v3092
      %3171 = vst [vmem:[%s289 + $0x128] sm:$0xff] %v3094
      %3172 = vst [vmem:[%s289 + $0x130] sm:$0xff] %v3133
      %3173 = vst [vmem:[%s289 + $0x138] sm:$0xff] 0.0
      %3174 = vst [vmem:[%s289 + $0x140] sm:$0xff] 0.0
      %v3175 = vadd.f32 %v2952, %v2953
      %v3176 = vadd.f32 %v3175, %v2954
      %v3177 = vadd.f32 %v3176, %v2955
      %v3178 = vadd.f32 %v3177, %v2956
      %v3179 = vadd.f32 %v3178, %v2957
      %v3180 = vadd.f32 %v3179, %v2958
      %v3181 = vadd.f32 %v3180, %v2959
      %v3182 = vadd.f32 %v3181, %v2960
      %v3183 = vadd.f32 %v3182, %v2961
      %v3184 = vadd.f32 %v3183, %v2962
      %v3185 = vadd.f32 %v3184, %v2963
      %v3186 = vadd.f32 %v3185, %v2964
      %v3187 = vadd.f32 %v3186, %v2965
      %v3188 = vadd.f32 %v3187, %v2966
      %v3189 = vadd.f32 %v3188, %v2967
      %v3190 = vadd.f32 %v3189, %v2968
      %v3191 = vadd.f32 %v3190, %v2969
      %v3192 = vadd.f32 %v3191, %v2970
      %v3193 = vadd.f32 %v3192, %v2971
      %v3194 = vadd.f32 %v3193, %v2972
      %v3195 = vadd.f32 %v3194, %v2973
      %v3196 = vadd.f32 %v3195, %v2974
      %v3197 = vadd.f32 %v3196, %v2975
      %v3198 = vadd.f32 %v3197, %v2976
      %v3199 = vadd.f32 %v3198, %v2977
      %v3200 = vadd.f32 %v3199, %v2978
      %v3201 = vadd.f32 %v3200, %v2979
      %v3202 = vadd.f32 %v3201, %v2980
      %v3203 = vadd.f32 %v3202, %v2981
      %v3204 = vadd.f32 %v3203, %v2982
      %v3205 = vadd.f32 %v3204, %v2983
      %v3206 = vadd.f32 %v3205, %v2984
      %v3207 = vadd.f32 %v3206, %v2985
      %v3208 = vadd.f32 %v3207, %v2986
      %v3209 = vadd.f32 %v3208, %v2987
      %v3210 = vrot.slane %v3209, 4
      %v3211 = vadd.f32 %v3209, %v3210
      %v3212 = vrot.slane %v3211, 2
      %v3213 = vadd.f32 %v3211, %v3212
      %v3214 = vrot.slane %v3213, 1
      %v3215 = vadd.f32 %v3213, %v3214
      %3216 = vst [vmem:[%s292] sm:$0x1] %v3215
      %v3217 = vmul.f32 %v2952, %v2952
      %v3218 = vmul.f32 %v2953, %v2953
      %v3219 = vmul.f32 %v2954, %v2954
      %v3220 = vmul.f32 %v2955, %v2955
      %v3221 = vmul.f32 %v2956, %v2956
      %v3222 = vmul.f32 %v2957, %v2957
      %v3223 = vmul.f32 %v2958, %v2958
      %v3224 = vmul.f32 %v2959, %v2959
      %v3225 = vmul.f32 %v2960, %v2960
      %v3226 = vmul.f32 %v2961, %v2961
      %v3227 = vmul.f32 %v2962, %v2962
      %v3228 = vmul.f32 %v2963, %v2963
      %v3229 = vmul.f32 %v2964, %v2964
      %v3230 = vmul.f32 %v2965, %v2965
      %v3231 = vmul.f32 %v2966, %v2966
      %v3232 = vmul.f32 %v2967, %v2967
      %v3233 = vmul.f32 %v2968, %v2968
      %v3234 = vmul.f32 %v2969, %v2969
      %v3235 = vmul.f32 %v2970, %v2970
      %v3236 = vmul.f32 %v2971, %v2971
      %v3237 = vmul.f32 %v2972, %v2972
      %v3238 = vmul.f32 %v2973, %v2973
      %v3239 = vmul.f32 %v2974, %v2974
      %v3240 = vmul.f32 %v2975, %v2975
      %v3241 = vmul.f32 %v2976, %v2976
      %v3242 = vmul.f32 %v2977, %v2977
      %v3243 = vmul.f32 %v2978, %v2978
      %v3244 = vmul.f32 %v2979, %v2979
      %v3245 = vmul.f32 %v2980, %v2980
      %v3246 = vmul.f32 %v2981, %v2981
      %v3247 = vmul.f32 %v2982, %v2982
      %v3248 = vmul.f32 %v2983, %v2983
      %v3249 = vmul.f32 %v2984, %v2984
      %v3250 = vmul.f32 %v2985, %v2985
      %v3251 = vmul.f32 %v2986, %v2986
      %v3252 = vmul.f32 %v2987, %v2987
      %v3253 = vadd.f32 %v3217, %v3218
      %v3254 = vadd.f32 %v3253, %v3219
      %v3255 = vadd.f32 %v3254, %v3220
      %v3256 = vadd.f32 %v3255, %v3221
      %v3257 = vadd.f32 %v3256, %v3222
      %v3258 = vadd.f32 %v3257, %v3223
      %v3259 = vadd.f32 %v3258, %v3224
      %v3260 = vadd.f32 %v3259, %v3225
      %v3261 = vadd.f32 %v3260, %v3226
      %v3262 = vadd.f32 %v3261, %v3227
      %v3263 = vadd.f32 %v3262, %v3228
      %v3264 = vadd.f32 %v3263, %v3229
      %v3265 = vadd.f32 %v3264, %v3230
      %v3266 = vadd.f32 %v3265, %v3231
      %v3267 = vadd.f32 %v3266, %v3232
      %v3268 = vadd.f32 %v3267, %v3233
      %v3269 = vadd.f32 %v3268, %v3234
      %v3270 = vadd.f32 %v3269, %v3235
      %v3271 = vadd.f32 %v3270, %v3236
      %v3272 = vadd.f32 %v3271, %v3237
      %v3273 = vadd.f32 %v3272, %v3238
      %v3274 = vadd.f32 %v3273, %v3239
      %v3275 = vadd.f32 %v3274, %v3240
      %v3276 = vadd.f32 %v3275, %v3241
      %v3277 = vadd.f32 %v3276, %v3242
      %v3278 = vadd.f32 %v3277, %v3243
      %v3279 = vadd.f32 %v3278, %v3244
      %v3280 = vadd.f32 %v3279, %v3245
      %v3281 = vadd.f32 %v3280, %v3246
      %v3282 = vadd.f32 %v3281, %v3247
      %v3283 = vadd.f32 %v3282, %v3248
      %v3284 = vadd.f32 %v3283, %v3249
      %v3285 = vadd.f32 %v3284, %v3250
      %v3286 = vadd.f32 %v3285, %v3251
      %v3287 = vadd.f32 %v3286, %v3252
      %v3288 = vrot.slane %v3287, 4
      %v3289 = vadd.f32 %v3287, %v3288
      %v3290 = vrot.slane %v3289, 2
      %v3291 = vadd.f32 %v3289, %v3290
      %v3292 = vrot.slane %v3291, 1
      %v3293 = vadd.f32 %v3291, %v3292
      %3294 = vst [vmem:[%s295] sm:$0x1] %v3293
      %p3295 = scmp.lt.s32.totalorder %s19, 1
      %s3296 = scalar_select %p3295, %s19, 1
      %s3297 = smul.addr %s3296, 41
      %s3298 = smul.addr %s3297, 8
      %s3299 = scalar_lea.vmem %s5, %s3298
      %p3300 = scmp.lt.s32.totalorder %s19, 1
      %s3301 = scalar_select %p3300, %s19, 1
      %s3302 = scalar_lea.vmem %s6, %s3301
      %p3303 = scmp.lt.s32.totalorder %s19, 1
      %s3304 = scalar_select %p3303, %s19, 1
      %s3305 = scalar_lea.vmem %s7, %s3304
      // Predicated region
      $region41: #{bottleneck_forward.5} parent=39 // pred_check
        %p3306 = pneg %p147
      $region42: #{bottleneck_forward.5} parent=39 // pred_check_branch
        %3308 = sbr.rel (%p3306) target = $region44
      $region43: #{bottleneck_forward.5} parent=39 // pred_region
        _
      $region44: #{bottleneck_forward.5} parent=39 // pred_fallthru
        _
      // Predicated region
      $region45: #{bottleneck_forward.5} parent=39 // pred_check
        %p3309 = pneg %p173
      $region46: #{bottleneck_forward.5} parent=39 // pred_check_branch
        %3311 = sbr.rel (%p3309) target = $region48
      $region47: #{bottleneck_forward.5} parent=39 // pred_region
        _
      $region48: #{bottleneck_forward.5} parent=39 // pred_fallthru
        _
      // Predicated region
      $region49: #{bottleneck_forward.5} parent=39 // pred_check
        %p3312 = pneg %p199
      $region50: #{bottleneck_forward.5} parent=39 // pred_check_branch
        %3314 = sbr.rel (%p3312) target = $region52
      $region51: #{bottleneck_forward.5} parent=39 // pred_region
        _
      $region52: #{bottleneck_forward.5} parent=39 // pred_fallthru
        _
    $region40: #{bottleneck_forward.5} parent=5 // pred_fallthru
      _
    %p3315 = scmp.le.s32.totalorder 2, %s14
    // Predicated region
    $region53: #{bottleneck_forward.5} parent=5 // pred_check
      %p3316 = pneg %p3315
    $region54: #{bottleneck_forward.5} parent=5 // pred_check_branch
      %3318 = sbr.rel (%p3316) target = $region56
    $region55: #{bottleneck_forward.5} parent=5 // pred_region
      %s3319 = ssub.s32 %s14, 2
      // Predicated region
      $region57: #{bottleneck_forward.5} parent=55 // pred_check
        %p3320 = pneg %p153
      $region58: #{bottleneck_forward.5} parent=55 // pred_check_branch
        %3322 = sbr.rel (%p3320) target = $region60
      $region59: #{bottleneck_forward.5} parent=55 // pred_region
        %p3323 = scmp.lt.s32.totalorder %s20, 1
        %s3324 = scalar_select %p3323, %s20, 1
        %s3325 = smul.addr %s3324, 41
        %s3326 = smul.addr %s3325, 8
        %s3327 = scalar_lea.vmem %s5, %s3326
      $region60: #{bottleneck_forward.5} parent=55 // pred_fallthru
        _
      // Predicated region
      $region61: #{bottleneck_forward.5} parent=55 // pred_check
        %p3328 = pneg %p179
      $region62: #{bottleneck_forward.5} parent=55 // pred_check_branch
        %3330 = sbr.rel (%p3328) target = $region64
      $region63: #{bottleneck_forward.5} parent=55 // pred_region
        %p3331 = scmp.lt.s32.totalorder %s20, 1
        %s3332 = scalar_select %p3331, %s20, 1
        %s3333 = scalar_lea.vmem %s6, %s3332
      $region64: #{bottleneck_forward.5} parent=55 // pred_fallthru
        _
      // Predicated region
      $region65: #{bottleneck_forward.5} parent=55 // pred_check
        %p3334 = pneg %p205
      $region66: #{bottleneck_forward.5} parent=55 // pred_check_branch
        %3336 = sbr.rel (%p3334) target = $region68
      $region67: #{bottleneck_forward.5} parent=55 // pred_region
        %p3337 = scmp.lt.s32.totalorder %s20, 1
        %s3338 = scalar_select %p3337, %s20, 1
        %s3339 = scalar_lea.vmem %s7, %s3338
      $region68: #{bottleneck_forward.5} parent=55 // pred_fallthru
        _
    $region56: #{bottleneck_forward.5} parent=5 // pred_fallthru
      _
  $region6: #{bottleneck_forward.5} parent=0 // loop_footer
    %s18 = sadd.s32 1, %s14
  $region7: #{bottleneck_forward.5} parent=0 // loop_footer_branch
    %13 = sbr.rel target = $region3
  $region8: #{bottleneck_forward.5} parent=0 // loop_exit
    _

</llo_original>
